<compile_context>
chip_gen: v7x
topology: tpu7x:2x2x1
jax: 0.10.0
libtpu: 0.0.40
codegen_flags: <defaults>
</compile_context>

<pallas_src>
import functools
import numpy as np
import jax
import jax.numpy as jnp
from jax.experimental import pallas as pl
from jax.experimental.pallas import tpu as pltpu

INV_SQRT2 = float(1.0 / np.sqrt(2.0))


# ----------------------------- in-kernel math helpers -----------------------------
def _erf_approx(v):
    # Abramowitz & Stegun 7.1.26 rational approximation, |err| <= 1.5e-7.
    a1, a2, a3, a4, a5 = 0.254829592, -0.284496736, 1.421413741, -1.453152027, 1.061405429
    pc = 0.3275911
    sgn = jnp.where(v >= 0.0, 1.0, -1.0)
    av = jnp.abs(v)
    t = 1.0 / (1.0 + pc * av)
    poly = ((((a5 * t + a4) * t + a3) * t + a2) * t + a1) * t
    return sgn * (1.0 - poly * jnp.exp(-av * av))


def _gelu(v):
    # exact (erf-based) GELU, matching torch.nn.GELU() default
    return 0.5 * v * (1.0 + _erf_approx(v * INV_SQRT2))


def _sigmoid(v):
    return 1.0 / (1.0 + jnp.exp(-v))


# ----------------------------- constant matrices (built in the wrapper) -----------------------------
def _reflect(i, n):
    if i < 0:
        return -i
    if i >= n:
        return 2 * n - 2 - i
    return i


def _avg_matrix_right(n, k):
    # (x @ M)[r, w] == (1/k) sum_j x[r, reflect(w - k//2 + j)]   (reflect-padded AvgPool along W)
    p = k // 2
    m = np.zeros((n, n), np.float32)
    for w in range(n):
        for j in range(k):
            m[_reflect(w - p + j, n), w] += 1.0 / k
    return m


def _avg_matrix_left(n, k):
    # (M @ x)[h, w] == (1/k) sum_j x[reflect(h - k//2 + j), w]   (reflect-padded AvgPool along H)
    p = k // 2
    m = np.zeros((n, n), np.float32)
    for h in range(n):
        for j in range(k):
            m[h, _reflect(h - p + j, n)] += 1.0 / k
    return m


def _tap_matrices_right(n, k):
    # T[j] such that (x @ T[j])[r, w] == x[r, reflect(w - k//2 + j)]
    p = k // 2
    t = np.zeros((k, n, n), np.float32)
    for w in range(n):
        for j in range(k):
            t[j, _reflect(w - p + j, n), w] = 1.0
    return t


def _tap_matrices_left(n, k):
    # T[j] such that (T[j] @ x)[h, w] == x[reflect(h - k//2 + j), w]
    p = k // 2
    t = np.zeros((k, n, n), np.float32)
    for h in range(n):
        for j in range(k):
            t[j, h, _reflect(h - p + j, n)] = 1.0
    return t


def _shift_w_matrices(n):
    # S[kw] so that (A2 @ S[kw])[r, w] == A2[r, w + kw - 1], zero outside [0, n)
    s = np.zeros((3, n, n), np.float32)
    for kw in range(3):
        for w in range(n):
            wp = w + kw - 1
            if 0 <= wp < n:
                s[kw, wp, w] = 1.0
    return s


def _shift_h_matrices(n):
    # D[kh][h, hp] == 1  iff  hp == h + kh - 1  (zero-pad 3x3 conv row offsets)
    d = np.zeros((3, n, n), np.float32)
    for kh in range(3):
        for h in range(n):
            hp = h + kh - 1
            if 0 <= hp < n:
                d[kh, h, hp] = 1.0
    return d


def _stacked_conv_mats(w, H):
    # w: (Cout, Cin, 3, 3) -> (3, Cout*H, Cin*H);  M[kw] = sum_kh kron(w[:,:,kh,kw], D[kh])
    # so that  conv(x) = sum_kw M[kw] @ (x_stacked @ S[kw])   (zero padding implicit).
    dh = _shift_h_matrices(H)
    mats = []
    for kw in range(3):
        m = sum(jnp.kron(w[:, :, kh, kw], jnp.asarray(dh[kh])) for kh in range(3))
        mats.append(m)
    return jnp.stack(mats).astype(jnp.float32)


def _rep_rows(v, H):
    # per-channel vector (C,) -> stacked column (C*H, 1)
    return jnp.repeat(v.astype(jnp.float32), H).reshape(-1, 1)


# ----------------------------- fused ResBlock kernel -----------------------------
def _resblock_kernel(x_ref, s_ref, m1_ref, b1_ref, m2_ref, b2_ref, *rest,
                     C, H, W, Ch, use_filter):
    if use_filter:
        (mw_ref, mhS_ref, segC_ref, expC_ref, p_ref, wc_ref, bc_ref,
         tw11_ref, th11_ref, wfh11_ref, wfw11_ref, g11_ref, bt11_ref,
         tw7_ref, th7_ref, wfh7_ref, wfw7_ref, g7_ref, bt7_ref,
         o_ref, mid_ref) = rest
    else:
        o_ref, mid_ref = rest

    CH = C * H
    ChH = Ch * H
    f32 = jnp.float32

    x2 = x_ref[0].astype(f32)                     # (C*H, W) channel-stacked activation

    def conv3x3(a2, m_ref, b_ref):
        # 3x3 zero-padded conv + bias, entirely as 6 MXU dots in stacked space.
        acc = jnp.zeros((CH, W), f32)
        for kw in range(3):
            shifted = jnp.dot(a2, s_ref[kw], preferred_element_type=f32)        # column shift
            acc = acc + jnp.dot(m_ref[kw], shifted, preferred_element_type=f32)  # row shift + channel mix
        return acc + b_ref[...]

    a = _gelu(conv3x3(x2, m1_ref, b1_ref))        # conv1 + GELU

    if use_filter:
        # ---------------- SpecAtte ----------------
        segC = segC_ref[...]                      # (C, C*H)   per-channel segment mean over H
        expC = expC_ref[...]                      # (C*H, C)   expand back to rows

        def strip(i, pool_w, pool_h):
            # per-channel strip params live as lane-columns of the (C*H, 18) table
            def pc(j):
                col = i * 6 + j
                return p_ref[:, col:col + 1]      # (C*H, 1)
            vl, vh, hl, hh, gm, bt = pc(0), pc(1), pc(2), pc(3), pc(4), pc(5)
            hori_l = pool_w(a)
            hori_out = hl * hori_l + (hh + 1.0) * (a - hori_l)
            vert_l = pool_h(hori_out)
            vert_out = vl * vert_l + (vh + 1.0) * (hori_out - vert_l)
            return a * bt + vert_out * gm

        # global strip attention: lane-mean + two skinny segment-mean matmuls
        s_sum = strip(
            0,
            lambda t: jnp.mean(t, axis=1, keepdims=True),
            lambda t: jnp.dot(expC, jnp.dot(segC, t, preferred_element_type=f32),
                              preferred_element_type=f32))
        # local strip attention (k=7 -> matrices index 0, k=11 -> index 1)
        for i, ki in ((1, 0), (2, 1)):
            mw = mw_ref[ki]
            mh = mhS_ref[ki]
            s_sum = s_sum + strip(
                i,
                lambda t, mw=mw: jnp.dot(t, mw, preferred_element_type=f32),
                lambda t, mh=mh: jnp.dot(mh, t, preferred_element_type=f32))

        # 1x1 conv over channels as one MXU dot (kron(Wc, I_H) built in the wrapper)
        spec = jnp.dot(wc_ref[...], s_sum, preferred_element_type=f32) + bc_ref[...]

        # ---------------- cubic attention on channel halves ----------------
        def cubic(z2, K, tw_ref, thS_ref, wfh_ref, wfw_ref, g_ref, bt_ref):
            # gate = sigmoid(one matvec of the per-channel global mean)
            gate1 = _sigmoid(jnp.dot(wfh_ref[...],
                                     jnp.mean(z2, axis=1, keepdims=True),
                                     preferred_element_type=f32))              # (K, 1)
            tsum = jnp.zeros((W, W), f32)
            for j in range(K):
                tsum = tsum + gate1[j:j + 1, 0:1] * tw_ref[j]
            o1 = jnp.dot(z2, tsum, preferred_element_type=f32)                 # blur along W

            gate2 = _sigmoid(jnp.dot(wfw_ref[...],
                                     jnp.mean(o1, axis=1, keepdims=True),
                                     preferred_element_type=f32))              # (K, 1)
            ssum = jnp.zeros((ChH, ChH), f32)
            for j in range(K):
                ssum = ssum + gate2[j:j + 1, 0:1] * thS_ref[j]
            o2 = jnp.dot(ssum, o1, preferred_element_type=f32)                 # blur along H

            return g_ref[...] * o2 + bt_ref[...] * z2

        mid_ref[0:ChH, :] = cubic(spec[0:ChH, :], 11, tw11_ref, th11_ref,
                                  wfh11_ref, wfw11_ref, g11_ref, bt11_ref)
        mid_ref[ChH:, :] = cubic(spec[ChH:, :], 7, tw7_ref, th7_ref,
                                 wfh7_ref, wfw7_ref, g7_ref, bt7_ref)
        mid = mid_ref[...]
    else:
        mid = a

    # conv2 + residual
    o_ref[0] = (conv3x3(mid, m2_ref, b2_ref) + x2).astype(o_ref.dtype)


def _const_spec(a):
    nd = a.ndim
    return pl.BlockSpec(a.shape, lambda n, _nd=nd: (0,) * _nd)


# ----------------------------- ResBlock forward (wrapper) -----------------------------
def resblock_forward(x, p, use_filter=True):
    N, C, H, W = x.shape
    Ch = C // 2
    CH = C * H
    ChH = Ch * H
    f32 = jnp.float32

    # free HBM reshapes: channel-stacked layout (N, C*H, W)
    x2 = x.astype(f32).reshape(N, CH, W)

    # --- constants (pure numpy) ---
    s_mats = jnp.asarray(_shift_w_matrices(W))                                    # (3, W, W)
    mw = jnp.asarray(np.stack([_avg_matrix_right(W, 7), _avg_matrix_right(W, 11)]))   # (2, W, W)
    eyeC = np.eye(C, dtype=np.float32)
    eyeCh = np.eye(Ch, dtype=np.float32)
    mhS = jnp.asarray(np.stack([np.kron(eyeC, _avg_matrix_left(H, k)) for k in (7, 11)]))  # (2, CH, CH)
    segC = jnp.asarray(np.kron(eyeC, np.full((1, H), 1.0 / H, np.float32)))       # (C, CH)
    expC = jnp.asarray(np.kron(eyeC, np.ones((H, 1), np.float32)))                # (CH, C)
    tw11 = jnp.asarray(_tap_matrices_right(W, 11))                                # (11, W, W)
    tw7 = jnp.asarray(_tap_matrices_right(W, 7))                                  # (7, W, W)
    th11 = jnp.asarray(np.stack([np.kron(eyeCh, t) for t in _tap_matrices_left(H, 11)]))   # (11, ChH, ChH)
    th7 = jnp.asarray(np.stack([np.kron(eyeCh, t) for t in _tap_matrices_left(H, 7)]))     # (7, ChH, ChH)

    # --- parameter-derived stacked operators (tiny wrapper-side jnp ops) ---
    m1 = _stacked_conv_mats(p['conv1_w'], H)                                      # (3, CH, CH)
    m2 = _stacked_conv_mats(p['conv2_w'], H)                                      # (3, CH, CH)
    b1 = _rep_rows(p['conv1_b'], H)                                               # (CH, 1)
    b2 = _rep_rows(p['conv2_b'], H)                                               # (CH, 1)

    inputs = [x2, s_mats, m1, b1, m2, b2]
    if use_filter:
        # strip params packed as lane-columns: (C*H, 18), column = strip_idx*6 + param_idx
        sp_flat = p['spec_params'].astype(f32).reshape(18, C)
        sp2 = jnp.repeat(sp_flat, H, axis=1).T                                    # (CH, 18)
        wcS = jnp.kron(p['spec_conv_w'].astype(f32), jnp.eye(H, dtype=f32))       # (CH, CH)
        bc = _rep_rows(p['spec_conv_b'], H)                                       # (CH, 1)
        # gate weights folded with the per-channel H-mean: (K, Ch) -> (K, Ch*H)/H
        wfh11S = jnp.repeat(p['c11_wfh'].astype(f32), H, axis=1) / H
        wfw11S = jnp.repeat(p['c11_wfw'].astype(f32), H, axis=1) / H
        wfh7S = jnp.repeat(p['c7_wfh'].astype(f32), H, axis=1) / H
        wfw7S = jnp.repeat(p['c7_wfw'].astype(f32), H, axis=1) / H
        g11 = _rep_rows(p['c11_gamma'], H)
        bt11 = _rep_rows(p['c11_beta'], H)
        g7 = _rep_rows(p['c7_gamma'], H)
        bt7 = _rep_rows(p['c7_beta'], H)
        inputs += [mw, mhS, segC, expC, sp2, wcS, bc,
                   tw11, th11, wfh11S, wfw11S, g11, bt11,
                   tw7, th7, wfh7S, wfw7S, g7, bt7]

    in_specs = [pl.BlockSpec((1, CH, W), lambda n: (n, 0, 0))]
    in_specs += [_const_spec(a) for a in inputs[1:]]

    kern = functools.partial(_resblock_kernel, C=C, H=H, W=W, Ch=Ch, use_filter=use_filter)

    out2 = pl.pallas_call(
        kern,
        out_shape=jax.ShapeDtypeStruct((N, CH, W), f32),
        grid=(N,),
        in_specs=in_specs,
        out_specs=pl.BlockSpec((1, CH, W), lambda n: (n, 0, 0)),
        scratch_shapes=[pltpu.VMEM((CH, W), jnp.float32)],
        compiler_params=pltpu.CompilerParams(dimension_semantics=("parallel",)),
    )(*inputs)

    return out2.reshape(N, C, H, W)


# ----------------------------- parameters -----------------------------
def init_params(key, C):
    ks = jax.random.split(key, 16)

    def rn(k, shape, scale=0.1):
        return scale * jax.random.normal(k, shape, jnp.float32)

    Ch = C // 2
    p = {
        'conv1_w': rn(ks[0], (C, C, 3, 3)), 'conv1_b': rn(ks[1], (C,)),
        'conv2_w': rn(ks[2], (C, C, 3, 3)), 'conv2_b': rn(ks[3], (C,)),
        # [global, local7, local11] x [vert_low, vert_high, hori_low, hori_high, gamma, beta] x C
        'spec_params': rn(ks[4], (3, 6, C)),
        'spec_conv_w': rn(ks[5], (C, C)), 'spec_conv_b': rn(ks[6], (C,)),
        'c11_wfh': rn(ks[7], (11, Ch)), 'c11_wfw': rn(ks[8], (11, Ch)),
        'c11_gamma': rn(ks[9], (Ch,)), 'c11_beta': 1.0 + rn(ks[10], (Ch,)),
        'c7_wfh': rn(ks[11], (7, Ch)), 'c7_wfw': rn(ks[12], (7, Ch)),
        'c7_gamma': rn(ks[13], (Ch,)), 'c7_beta': 1.0 + rn(ks[14], (Ch,)),
    }
    return p


# ----------------------------- pure-JAX reference (numerical check) -----------------------------
def _ref_pool_w(t, k):
    if k is None:
        return jnp.mean(t, axis=3, keepdims=True)
    pd = k // 2
    tp = jnp.pad(t, ((0, 0), (0, 0), (0, 0), (pd, pd)), mode='reflect')
    return sum(tp[..., j:j + t.shape[3]] for j in range(k)) / k


def _ref_pool_h(t, k):
    if k is None:
        return jnp.mean(t, axis=2, keepdims=True)
    pd = k // 2
    tp = jnp.pad(t, ((0, 0), (0, 0), (pd, pd), (0, 0)), mode='reflect')
    return sum(tp[:, :, j:j + t.shape[2], :] for j in range(k)) / k


def _ref_strip(x, prm, k):
    vl, vh, hl, hh, gm, bt = [prm[j].reshape(1, -1, 1, 1) for j in range(6)]
    hori_l = _ref_pool_w(x, k)
    hori_out = hl * hori_l + (hh + 1.0) * (x - hori_l)
    vert_l = _ref_pool_h(hori_out, k)
    vert_out = vl * vert_l + (vh + 1.0) * (hori_out - vert_l)
    return x * bt + vert_out * gm


def _ref_spatial_strip(x, wf, k, horiz):
    f = jax.nn.sigmoid(jnp.mean(x, axis=(2, 3)) @ wf.T)  # (N, K)
    pd = k // 2
    if horiz:
        xp = jnp.pad(x, ((0, 0), (0, 0), (0, 0), (pd, pd)), mode='reflect')
        taps = [xp[..., j:j + x.shape[3]] for j in range(k)]
    else:
        xp = jnp.pad(x, ((0, 0), (0, 0), (pd, pd), (0, 0)), mode='reflect')
        taps = [xp[:, :, j:j + x.shape[2], :] for j in range(k)]
    return sum(f[:, j].reshape(-1, 1, 1, 1) * taps[j] for j in range(k))


def _ref_cubic(x, wfh, wfw, gamma, beta, k):
    o = _ref_spatial_strip(x, wfh, k, True)
    o = _ref_spatial_strip(o, wfw, k, False)
    return gamma.reshape(1, -1, 1, 1) * o + beta.reshape(1, -1, 1, 1) * x


def ref_resblock(x, p, use_filter=True):
    C = x.shape[1]

    def conv3(inp, w, b):
        o = jax.lax.conv_general_dilated(inp, w, (1, 1), ((1, 1), (1, 1)),
                                         dimension_numbers=('NCHW', 'OIHW', 'NCHW'))
        return o + b.reshape(1, -1, 1, 1)

    out = jax.nn.gelu(conv3(x, p['conv1_w'], p['conv1_b']), approximate=False)
    if use_filter:
        s = (_ref_strip(out, p['spec_params'][0], None)
             + _ref_strip(out, p['spec_params'][1], 7)
             + _ref_strip(out, p['spec_params'][2], 11))
        out = jnp.einsum('oc,nchw->nohw', p['spec_conv_w'], s) + p['spec_conv_b'].reshape(1, -1, 1, 1)
        h1, h2 = out[:, : C // 2], out[:, C // 2:]
        o11 = _ref_cubic(h1, p['c11_wfh'], p['c11_wfw'], p['c11_gamma'], p['c11_beta'], 11)
        o7 = _ref_cubic(h2, p['c7_wfh'], p['c7_wfw'], p['c7_gamma'], p['c7_beta'], 7)
        out = jnp.concatenate([o11, o7], axis=1)
    out = conv3(out, p['conv2_w'], p['conv2_b'])
    return out + x


if __name__ == "__main__":
    key = jax.random.PRNGKey(0)
    kx, kp = jax.random.split(key)
    N, C, H, W = 2, 4, 16, 16          # in_channel == out_channel == 4 (residual requires it)
    x = jax.random.normal(kx, (N, C, H, W), jnp.float32)
    params = init_params(kp, C)

    out = jax.block_until_ready(resblock_forward(x, params, use_filter=True))
    ref = jax.block_until_ready(ref_resblock(x, params, use_filter=True))

    assert out.shape == (N, C, H, W)
    np.testing.assert_allclose(np.asarray(out), np.asarray(ref), rtol=2e-3, atol=2e-3)
    print("KERNEL_OK")
</pallas_src>

<mosaic_0001>
module attributes {stable_mosaic.version = 11 : i64} {
  func.func @_resblock_kernel(%arg0: i32, %arg1: memref<1x64x16xf32, #tpu.memory_space<vmem>>, %arg2: memref<3x16x16xf32, #tpu.memory_space<vmem>>, %arg3: memref<3x64x64xf32, #tpu.memory_space<vmem>>, %arg4: memref<64x1xf32, #tpu.memory_space<vmem>>, %arg5: memref<3x64x64xf32, #tpu.memory_space<vmem>>, %arg6: memref<64x1xf32, #tpu.memory_space<vmem>>, %arg7: memref<2x16x16xf32, #tpu.memory_space<vmem>>, %arg8: memref<2x64x64xf32, #tpu.memory_space<vmem>>, %arg9: memref<4x64xf32, #tpu.memory_space<vmem>>, %arg10: memref<64x4xf32, #tpu.memory_space<vmem>>, %arg11: memref<64x18xf32, #tpu.memory_space<vmem>>, %arg12: memref<64x64xf32, #tpu.memory_space<vmem>>, %arg13: memref<64x1xf32, #tpu.memory_space<vmem>>, %arg14: memref<11x16x16xf32, #tpu.memory_space<vmem>>, %arg15: memref<11x32x32xf32, #tpu.memory_space<vmem>>, %arg16: memref<11x32xf32, #tpu.memory_space<vmem>>, %arg17: memref<11x32xf32, #tpu.memory_space<vmem>>, %arg18: memref<32x1xf32, #tpu.memory_space<vmem>>, %arg19: memref<32x1xf32, #tpu.memory_space<vmem>>, %arg20: memref<7x16x16xf32, #tpu.memory_space<vmem>>, %arg21: memref<7x32x32xf32, #tpu.memory_space<vmem>>, %arg22: memref<7x32xf32, #tpu.memory_space<vmem>>, %arg23: memref<7x32xf32, #tpu.memory_space<vmem>>, %arg24: memref<32x1xf32, #tpu.memory_space<vmem>>, %arg25: memref<32x1xf32, #tpu.memory_space<vmem>>, %arg26: memref<1x64x16xf32, #tpu.memory_space<vmem>>, %arg27: memref<64x16xf32, #tpu.memory_space<vmem>>) attributes {dimension_semantics = [#tpu.dimension_semantics<parallel>], iteration_bounds = array<i64: 2>, scalar_prefetch = 0 : i64, scratch_operands = 1 : i64, tpu.core_type = #tpu.core_type<tc>, window_params = [{transform_indices = @transform_0, window_bounds = array<i64: 1, 64, 16>}, {pipeline_mode = #tpu.pipeline_mode<synchronous>, transform_indices = @transform_1, window_bounds = array<i64: 3, 16, 16>}, {pipeline_mode = #tpu.pipeline_mode<synchronous>, transform_indices = @transform_2, window_bounds = array<i64: 3, 64, 64>}, {pipeline_mode = #tpu.pipeline_mode<synchronous>, transform_indices = @transform_3, window_bounds = array<i64: 64, 1>}, {pipeline_mode = #tpu.pipeline_mode<synchronous>, transform_indices = @transform_4, window_bounds = array<i64: 3, 64, 64>}, {pipeline_mode = #tpu.pipeline_mode<synchronous>, transform_indices = @transform_5, window_bounds = array<i64: 64, 1>}, {pipeline_mode = #tpu.pipeline_mode<synchronous>, transform_indices = @transform_6, window_bounds = array<i64: 2, 16, 16>}, {pipeline_mode = #tpu.pipeline_mode<synchronous>, transform_indices = @transform_7, window_bounds = array<i64: 2, 64, 64>}, {pipeline_mode = #tpu.pipeline_mode<synchronous>, transform_indices = @transform_8, window_bounds = array<i64: 4, 64>}, {pipeline_mode = #tpu.pipeline_mode<synchronous>, transform_indices = @transform_9, window_bounds = array<i64: 64, 4>}, {pipeline_mode = #tpu.pipeline_mode<synchronous>, transform_indices = @transform_10, window_bounds = array<i64: 64, 18>}, {pipeline_mode = #tpu.pipeline_mode<synchronous>, transform_indices = @transform_11, window_bounds = array<i64: 64, 64>}, {pipeline_mode = #tpu.pipeline_mode<synchronous>, transform_indices = @transform_12, window_bounds = array<i64: 64, 1>}, {pipeline_mode = #tpu.pipeline_mode<synchronous>, transform_indices = @transform_13, window_bounds = array<i64: 11, 16, 16>}, {pipeline_mode = #tpu.pipeline_mode<synchronous>, transform_indices = @transform_14, window_bounds = array<i64: 11, 32, 32>}, {pipeline_mode = #tpu.pipeline_mode<synchronous>, transform_indices = @transform_15, window_bounds = array<i64: 11, 32>}, {pipeline_mode = #tpu.pipeline_mode<synchronous>, transform_indices = @transform_16, window_bounds = array<i64: 11, 32>}, {pipeline_mode = #tpu.pipeline_mode<synchronous>, transform_indices = @transform_17, window_bounds = array<i64: 32, 1>}, {pipeline_mode = #tpu.pipeline_mode<synchronous>, transform_indices = @transform_18, window_bounds = array<i64: 32, 1>}, {pipeline_mode = #tpu.pipeline_mode<synchronous>, transform_indices = @transform_19, window_bounds = array<i64: 7, 16, 16>}, {pipeline_mode = #tpu.pipeline_mode<synchronous>, transform_indices = @transform_20, window_bounds = array<i64: 7, 32, 32>}, {pipeline_mode = #tpu.pipeline_mode<synchronous>, transform_indices = @transform_21, window_bounds = array<i64: 7, 32>}, {pipeline_mode = #tpu.pipeline_mode<synchronous>, transform_indices = @transform_22, window_bounds = array<i64: 7, 32>}, {pipeline_mode = #tpu.pipeline_mode<synchronous>, transform_indices = @transform_23, window_bounds = array<i64: 32, 1>}, {pipeline_mode = #tpu.pipeline_mode<synchronous>, transform_indices = @transform_24, window_bounds = array<i64: 32, 1>}, {transform_indices = @transform_25, window_bounds = array<i64: 1, 64, 16>}]} {
    %c0 = arith.constant 0 : index
    %c0_0 = arith.constant 0 : index
    %c0_1 = arith.constant 0 : index
    %0 = vector.load %arg1[%c0, %c0_0, %c0_1] : memref<1x64x16xf32, #tpu.memory_space<vmem>>, vector<1x64x16xf32>
    %1 = vector.shape_cast %0 : vector<1x64x16xf32> to vector<64x16xf32>
    %cst = arith.constant 0.000000e+00 : f32
    %2 = vector.broadcast %cst : f32 to vector<64x16xf32>
    %c0_2 = arith.constant 0 : index
    %c0_3 = arith.constant 0 : index
    %c0_4 = arith.constant 0 : index
    %3 = vector.load %arg2[%c0_2, %c0_3, %c0_4] : memref<3x16x16xf32, #tpu.memory_space<vmem>>, vector<1x16x16xf32>
    %4 = vector.shape_cast %3 : vector<1x16x16xf32> to vector<16x16xf32>
    %cst_5 = arith.constant dense<0.000000e+00> : vector<64x16xf32>
    %5 = tpu.matmul %1, %4, %cst_5 {dimension_numbers = #tpu.dot_dimension_numbers<[1], [0], [0], [1], [0, 0, 1, 1], [], []>} : vector<64x16xf32>, vector<16x16xf32>, vector<64x16xf32> -> vector<64x16xf32>
    %c0_6 = arith.constant 0 : index
    %c0_7 = arith.constant 0 : index
    %c0_8 = arith.constant 0 : index
    %6 = vector.load %arg3[%c0_6, %c0_7, %c0_8] : memref<3x64x64xf32, #tpu.memory_space<vmem>>, vector<1x64x64xf32>
    %7 = vector.shape_cast %6 : vector<1x64x64xf32> to vector<64x64xf32>
    %cst_9 = arith.constant dense<0.000000e+00> : vector<64x16xf32>
    %8 = tpu.matmul %7, %5, %cst_9 {dimension_numbers = #tpu.dot_dimension_numbers<[1], [0], [0], [1], [0, 0, 1, 1], [], []>} : vector<64x64xf32>, vector<64x16xf32>, vector<64x16xf32> -> vector<64x16xf32>
    %9 = arith.addf %2, %8 : vector<64x16xf32>
    %c1 = arith.constant 1 : index
    %c0_10 = arith.constant 0 : index
    %c0_11 = arith.constant 0 : index
    %10 = vector.load %arg2[%c1, %c0_10, %c0_11] : memref<3x16x16xf32, #tpu.memory_space<vmem>>, vector<1x16x16xf32>
    %11 = vector.shape_cast %10 : vector<1x16x16xf32> to vector<16x16xf32>
    %cst_12 = arith.constant dense<0.000000e+00> : vector<64x16xf32>
    %12 = tpu.matmul %1, %11, %cst_12 {dimension_numbers = #tpu.dot_dimension_numbers<[1], [0], [0], [1], [0, 0, 1, 1], [], []>} : vector<64x16xf32>, vector<16x16xf32>, vector<64x16xf32> -> vector<64x16xf32>
    %c1_13 = arith.constant 1 : index
    %c0_14 = arith.constant 0 : index
    %c0_15 = arith.constant 0 : index
    %13 = vector.load %arg3[%c1_13, %c0_14, %c0_15] : memref<3x64x64xf32, #tpu.memory_space<vmem>>, vector<1x64x64xf32>
    %14 = vector.shape_cast %13 : vector<1x64x64xf32> to vector<64x64xf32>
    %cst_16 = arith.constant dense<0.000000e+00> : vector<64x16xf32>
    %15 = tpu.matmul %14, %12, %cst_16 {dimension_numbers = #tpu.dot_dimension_numbers<[1], [0], [0], [1], [0, 0, 1, 1], [], []>} : vector<64x64xf32>, vector<64x16xf32>, vector<64x16xf32> -> vector<64x16xf32>
    %16 = arith.addf %9, %15 : vector<64x16xf32>
    %c2 = arith.constant 2 : index
    %c0_17 = arith.constant 0 : index
    %c0_18 = arith.constant 0 : index
    %17 = vector.load %arg2[%c2, %c0_17, %c0_18] : memref<3x16x16xf32, #tpu.memory_space<vmem>>, vector<1x16x16xf32>
    %18 = vector.shape_cast %17 : vector<1x16x16xf32> to vector<16x16xf32>
    %cst_19 = arith.constant dense<0.000000e+00> : vector<64x16xf32>
    %19 = tpu.matmul %1, %18, %cst_19 {dimension_numbers = #tpu.dot_dimension_numbers<[1], [0], [0], [1], [0, 0, 1, 1], [], []>} : vector<64x16xf32>, vector<16x16xf32>, vector<64x16xf32> -> vector<64x16xf32>
    %c2_20 = arith.constant 2 : index
    %c0_21 = arith.constant 0 : index
    %c0_22 = arith.constant 0 : index
    %20 = vector.load %arg3[%c2_20, %c0_21, %c0_22] : memref<3x64x64xf32, #tpu.memory_space<vmem>>, vector<1x64x64xf32>
    %21 = vector.shape_cast %20 : vector<1x64x64xf32> to vector<64x64xf32>
    %cst_23 = arith.constant dense<0.000000e+00> : vector<64x16xf32>
    %22 = tpu.matmul %21, %19, %cst_23 {dimension_numbers = #tpu.dot_dimension_numbers<[1], [0], [0], [1], [0, 0, 1, 1], [], []>} : vector<64x64xf32>, vector<64x16xf32>, vector<64x16xf32> -> vector<64x16xf32>
    %23 = arith.addf %16, %22 : vector<64x16xf32>
    %c0_24 = arith.constant 0 : index
    %c0_25 = arith.constant 0 : index
    %24 = vector.load %arg4[%c0_24, %c0_25] : memref<64x1xf32, #tpu.memory_space<vmem>>, vector<64x1xf32>
    %25 = vector.broadcast %24 : vector<64x1xf32> to vector<64x16xf32>
    %26 = arith.addf %23, %25 : vector<64x16xf32>
    %cst_26 = arith.constant 5.000000e-01 : f32
    %27 = vector.broadcast %cst_26 : f32 to vector<64x16xf32>
    %28 = arith.mulf %27, %26 : vector<64x16xf32>
    %cst_27 = arith.constant 0.707106769 : f32
    %29 = vector.broadcast %cst_27 : f32 to vector<64x16xf32>
    %30 = arith.mulf %26, %29 : vector<64x16xf32>
    %cst_28 = arith.constant 0.000000e+00 : f32
    %31 = vector.broadcast %cst_28 : f32 to vector<64x16xf32>
    %32 = arith.cmpf oge, %30, %31 : vector<64x16xf32>
    %cst_29 = arith.constant 1.000000e+00 : f32
    %cst_30 = arith.constant -1.000000e+00 : f32
    %33 = vector.broadcast %cst_29 : f32 to vector<64x16xf32>
    %34 = vector.broadcast %cst_30 : f32 to vector<64x16xf32>
    %35 = arith.select %32, %33, %34 : vector<64x16xi1>, vector<64x16xf32>
    %36 = math.absf %30 : vector<64x16xf32>
    %cst_31 = arith.constant 0.327591091 : f32
    %37 = vector.broadcast %cst_31 : f32 to vector<64x16xf32>
    %38 = arith.mulf %37, %36 : vector<64x16xf32>
    %cst_32 = arith.constant 1.000000e+00 : f32
    %39 = vector.broadcast %cst_32 : f32 to vector<64x16xf32>
    %40 = arith.addf %39, %38 : vector<64x16xf32>
    %cst_33 = arith.constant 1.000000e+00 : f32
    %41 = vector.broadcast %cst_33 : f32 to vector<64x16xf32>
    %42 = arith.divf %41, %40 : vector<64x16xf32>
    %cst_34 = arith.constant 1.06140542 : f32
    %43 = vector.broadcast %cst_34 : f32 to vector<64x16xf32>
    %44 = arith.mulf %43, %42 : vector<64x16xf32>
    %cst_35 = arith.constant -1.45315206 : f32
    %45 = vector.broadcast %cst_35 : f32 to vector<64x16xf32>
    %46 = arith.addf %44, %45 : vector<64x16xf32>
    %47 = arith.mulf %46, %42 : vector<64x16xf32>
    %cst_36 = arith.constant 1.42141378 : f32
    %48 = vector.broadcast %cst_36 : f32 to vector<64x16xf32>
    %49 = arith.addf %47, %48 : vector<64x16xf32>
    %50 = arith.mulf %49, %42 : vector<64x16xf32>
    %cst_37 = arith.constant -0.284496725 : f32
    %51 = vector.broadcast %cst_37 : f32 to vector<64x16xf32>
    %52 = arith.addf %50, %51 : vector<64x16xf32>
    %53 = arith.mulf %52, %42 : vector<64x16xf32>
    %cst_38 = arith.constant 0.254829586 : f32
    %54 = vector.broadcast %cst_38 : f32 to vector<64x16xf32>
    %55 = arith.addf %53, %54 : vector<64x16xf32>
    %56 = arith.mulf %55, %42 : vector<64x16xf32>
    %cst_39 = arith.constant 0.000000e+00 : f32
    %57 = vector.broadcast %cst_39 : f32 to vector<64x16xf32>
    %58 = arith.subf %57, %36 : vector<64x16xf32>
    %59 = arith.mulf %58, %36 : vector<64x16xf32>
    %60 = math.exp %59 : vector<64x16xf32>
    %61 = arith.mulf %56, %60 : vector<64x16xf32>
    %cst_40 = arith.constant 1.000000e+00 : f32
    %62 = vector.broadcast %cst_40 : f32 to vector<64x16xf32>
    %63 = arith.subf %62, %61 : vector<64x16xf32>
    %64 = arith.mulf %35, %63 : vector<64x16xf32>
    %cst_41 = arith.constant 1.000000e+00 : f32
    %65 = vector.broadcast %cst_41 : f32 to vector<64x16xf32>
    %66 = arith.addf %65, %64 : vector<64x16xf32>
    %67 = arith.mulf %28, %66 : vector<64x16xf32>
    %c0_42 = arith.constant 0 : index
    %c0_43 = arith.constant 0 : index
    %68 = vector.load %arg9[%c0_42, %c0_43] : memref<4x64xf32, #tpu.memory_space<vmem>>, vector<4x64xf32>
    %c0_44 = arith.constant 0 : index
    %c0_45 = arith.constant 0 : index
    %69 = vector.load %arg10[%c0_44, %c0_45] : memref<64x4xf32, #tpu.memory_space<vmem>>, vector<64x4xf32>
    %c0_46 = arith.constant 0 : index
    %c0_47 = arith.constant 0 : index
    %70 = vector.load %arg11[%c0_46, %c0_47] : memref<64x18xf32, #tpu.memory_space<vmem>>, vector<64x1xf32>
    %c0_48 = arith.constant 0 : index
    %c1_49 = arith.constant 1 : index
    %71 = vector.load %arg11[%c0_48, %c1_49] : memref<64x18xf32, #tpu.memory_space<vmem>>, vector<64x1xf32>
    %c0_50 = arith.constant 0 : index
    %c2_51 = arith.constant 2 : index
    %72 = vector.load %arg11[%c0_50, %c2_51] : memref<64x18xf32, #tpu.memory_space<vmem>>, vector<64x1xf32>
    %c0_52 = arith.constant 0 : index
    %c3 = arith.constant 3 : index
    %73 = vector.load %arg11[%c0_52, %c3] : memref<64x18xf32, #tpu.memory_space<vmem>>, vector<64x1xf32>
    %c0_53 = arith.constant 0 : index
    %c4 = arith.constant 4 : index
    %74 = vector.load %arg11[%c0_53, %c4] : memref<64x18xf32, #tpu.memory_space<vmem>>, vector<64x1xf32>
    %c0_54 = arith.constant 0 : index
    %c5 = arith.constant 5 : index
    %75 = vector.load %arg11[%c0_54, %c5] : memref<64x18xf32, #tpu.memory_space<vmem>>, vector<64x1xf32>
    %cst_55 = arith.constant dense<0.000000e+00> : vector<64xf32>
    %76 = vector.multi_reduction <add>, %67, %cst_55 [1] : vector<64x16xf32> to vector<64xf32>
    %77 = vector.shape_cast %76 : vector<64xf32> to vector<64x1xf32>
    %cst_56 = arith.constant 1.600000e+01 : f32
    %78 = vector.broadcast %cst_56 : f32 to vector<64x1xf32>
    %79 = arith.divf %77, %78 : vector<64x1xf32>
    %80 = arith.mulf %72, %79 : vector<64x1xf32>
    %cst_57 = arith.constant 1.000000e+00 : f32
    %81 = vector.broadcast %cst_57 : f32 to vector<64x1xf32>
    %82 = arith.addf %73, %81 : vector<64x1xf32>
    %83 = vector.broadcast %79 : vector<64x1xf32> to vector<64x16xf32>
    %84 = arith.subf %67, %83 : vector<64x16xf32>
    %85 = vector.broadcast %82 : vector<64x1xf32> to vector<64x16xf32>
    %86 = arith.mulf %85, %84 : vector<64x16xf32>
    %87 = vector.broadcast %80 : vector<64x1xf32> to vector<64x16xf32>
    %88 = arith.addf %87, %86 : vector<64x16xf32>
    %cst_58 = arith.constant dense<0.000000e+00> : vector<4x16xf32>
    %89 = tpu.matmul %68, %88, %cst_58 {dimension_numbers = #tpu.dot_dimension_numbers<[1], [0], [0], [1], [0, 0, 1, 1], [], []>} : vector<4x64xf32>, vector<64x16xf32>, vector<4x16xf32> -> vector<4x16xf32>
    %cst_59 = arith.constant dense<0.000000e+00> : vector<64x16xf32>
    %90 = tpu.matmul %69, %89, %cst_59 {dimension_numbers = #tpu.dot_dimension_numbers<[1], [0], [0], [1], [0, 0, 1, 1], [], []>} : vector<64x4xf32>, vector<4x16xf32>, vector<64x16xf32> -> vector<64x16xf32>
    %91 = vector.broadcast %70 : vector<64x1xf32> to vector<64x16xf32>
    %92 = arith.mulf %91, %90 : vector<64x16xf32>
    %cst_60 = arith.constant 1.000000e+00 : f32
    %93 = vector.broadcast %cst_60 : f32 to vector<64x1xf32>
    %94 = arith.addf %71, %93 : vector<64x1xf32>
    %95 = arith.subf %88, %90 : vector<64x16xf32>
    %96 = vector.broadcast %94 : vector<64x1xf32> to vector<64x16xf32>
    %97 = arith.mulf %96, %95 : vector<64x16xf32>
    %98 = arith.addf %92, %97 : vector<64x16xf32>
    %99 = vector.broadcast %75 : vector<64x1xf32> to vector<64x16xf32>
    %100 = arith.mulf %67, %99 : vector<64x16xf32>
    %101 = vector.broadcast %74 : vector<64x1xf32> to vector<64x16xf32>
    %102 = arith.mulf %98, %101 : vector<64x16xf32>
    %103 = arith.addf %100, %102 : vector<64x16xf32>
    %c0_61 = arith.constant 0 : index
    %c0_62 = arith.constant 0 : index
    %c0_63 = arith.constant 0 : index
    %104 = vector.load %arg7[%c0_61, %c0_62, %c0_63] : memref<2x16x16xf32, #tpu.memory_space<vmem>>, vector<1x16x16xf32>
    %105 = vector.shape_cast %104 : vector<1x16x16xf32> to vector<16x16xf32>
    %c0_64 = arith.constant 0 : index
    %c0_65 = arith.constant 0 : index
    %c0_66 = arith.constant 0 : index
    %106 = vector.load %arg8[%c0_64, %c0_65, %c0_66] : memref<2x64x64xf32, #tpu.memory_space<vmem>>, vector<1x64x64xf32>
    %107 = vector.shape_cast %106 : vector<1x64x64xf32> to vector<64x64xf32>
    %c0_67 = arith.constant 0 : index
    %c6 = arith.constant 6 : index
    %108 = vector.load %arg11[%c0_67, %c6] : memref<64x18xf32, #tpu.memory_space<vmem>>, vector<64x1xf32>
    %c0_68 = arith.constant 0 : index
    %c7 = arith.constant 7 : index
    %109 = vector.load %arg11[%c0_68, %c7] : memref<64x18xf32, #tpu.memory_space<vmem>>, vector<64x1xf32>
    %c0_69 = arith.constant 0 : index
    %c8 = arith.constant 8 : index
    %110 = vector.load %arg11[%c0_69, %c8] : memref<64x18xf32, #tpu.memory_space<vmem>>, vector<64x1xf32>
    %c0_70 = arith.constant 0 : index
    %c9 = arith.constant 9 : index
    %111 = vector.load %arg11[%c0_70, %c9] : memref<64x18xf32, #tpu.memory_space<vmem>>, vector<64x1xf32>
    %c0_71 = arith.constant 0 : index
    %c10 = arith.constant 10 : index
    %112 = vector.load %arg11[%c0_71, %c10] : memref<64x18xf32, #tpu.memory_space<vmem>>, vector<64x1xf32>
    %c0_72 = arith.constant 0 : index
    %c11 = arith.constant 11 : index
    %113 = vector.load %arg11[%c0_72, %c11] : memref<64x18xf32, #tpu.memory_space<vmem>>, vector<64x1xf32>
    %cst_73 = arith.constant dense<0.000000e+00> : vector<64x16xf32>
    %114 = tpu.matmul %67, %105, %cst_73 {dimension_numbers = #tpu.dot_dimension_numbers<[1], [0], [0], [1], [0, 0, 1, 1], [], []>} : vector<64x16xf32>, vector<16x16xf32>, vector<64x16xf32> -> vector<64x16xf32>
    %115 = vector.broadcast %110 : vector<64x1xf32> to vector<64x16xf32>
    %116 = arith.mulf %115, %114 : vector<64x16xf32>
    %cst_74 = arith.constant 1.000000e+00 : f32
    %117 = vector.broadcast %cst_74 : f32 to vector<64x1xf32>
    %118 = arith.addf %111, %117 : vector<64x1xf32>
    %119 = arith.subf %67, %114 : vector<64x16xf32>
    %120 = vector.broadcast %118 : vector<64x1xf32> to vector<64x16xf32>
    %121 = arith.mulf %120, %119 : vector<64x16xf32>
    %122 = arith.addf %116, %121 : vector<64x16xf32>
    %cst_75 = arith.constant dense<0.000000e+00> : vector<64x16xf32>
    %123 = tpu.matmul %107, %122, %cst_75 {dimension_numbers = #tpu.dot_dimension_numbers<[1], [0], [0], [1], [0, 0, 1, 1], [], []>} : vector<64x64xf32>, vector<64x16xf32>, vector<64x16xf32> -> vector<64x16xf32>
    %124 = vector.broadcast %108 : vector<64x1xf32> to vector<64x16xf32>
    %125 = arith.mulf %124, %123 : vector<64x16xf32>
    %cst_76 = arith.constant 1.000000e+00 : f32
    %126 = vector.broadcast %cst_76 : f32 to vector<64x1xf32>
    %127 = arith.addf %109, %126 : vector<64x1xf32>
    %128 = arith.subf %122, %123 : vector<64x16xf32>
    %129 = vector.broadcast %127 : vector<64x1xf32> to vector<64x16xf32>
    %130 = arith.mulf %129, %128 : vector<64x16xf32>
    %131 = arith.addf %125, %130 : vector<64x16xf32>
    %132 = vector.broadcast %113 : vector<64x1xf32> to vector<64x16xf32>
    %133 = arith.mulf %67, %132 : vector<64x16xf32>
    %134 = vector.broadcast %112 : vector<64x1xf32> to vector<64x16xf32>
    %135 = arith.mulf %131, %134 : vector<64x16xf32>
    %136 = arith.addf %133, %135 : vector<64x16xf32>
    %137 = arith.addf %103, %136 : vector<64x16xf32>
    %c1_77 = arith.constant 1 : index
    %c0_78 = arith.constant 0 : index
    %c0_79 = arith.constant 0 : index
    %138 = vector.load %arg7[%c1_77, %c0_78, %c0_79] : memref<2x16x16xf32, #tpu.memory_space<vmem>>, vector<1x16x16xf32>
    %139 = vector.shape_cast %138 : vector<1x16x16xf32> to vector<16x16xf32>
    %c1_80 = arith.constant 1 : index
    %c0_81 = arith.constant 0 : index
    %c0_82 = arith.constant 0 : index
    %140 = vector.load %arg8[%c1_80, %c0_81, %c0_82] : memref<2x64x64xf32, #tpu.memory_space<vmem>>, vector<1x64x64xf32>
    %141 = vector.shape_cast %140 : vector<1x64x64xf32> to vector<64x64xf32>
    %c0_83 = arith.constant 0 : index
    %c12 = arith.constant 12 : index
    %142 = vector.load %arg11[%c0_83, %c12] : memref<64x18xf32, #tpu.memory_space<vmem>>, vector<64x1xf32>
    %c0_84 = arith.constant 0 : index
    %c13 = arith.constant 13 : index
    %143 = vector.load %arg11[%c0_84, %c13] : memref<64x18xf32, #tpu.memory_space<vmem>>, vector<64x1xf32>
    %c0_85 = arith.constant 0 : index
    %c14 = arith.constant 14 : index
    %144 = vector.load %arg11[%c0_85, %c14] : memref<64x18xf32, #tpu.memory_space<vmem>>, vector<64x1xf32>
    %c0_86 = arith.constant 0 : index
    %c15 = arith.constant 15 : index
    %145 = vector.load %arg11[%c0_86, %c15] : memref<64x18xf32, #tpu.memory_space<vmem>>, vector<64x1xf32>
    %c0_87 = arith.constant 0 : index
    %c16 = arith.constant 16 : index
    %146 = vector.load %arg11[%c0_87, %c16] : memref<64x18xf32, #tpu.memory_space<vmem>>, vector<64x1xf32>
    %c0_88 = arith.constant 0 : index
    %c17 = arith.constant 17 : index
    %147 = vector.load %arg11[%c0_88, %c17] : memref<64x18xf32, #tpu.memory_space<vmem>>, vector<64x1xf32>
    %cst_89 = arith.constant dense<0.000000e+00> : vector<64x16xf32>
    %148 = tpu.matmul %67, %139, %cst_89 {dimension_numbers = #tpu.dot_dimension_numbers<[1], [0], [0], [1], [0, 0, 1, 1], [], []>} : vector<64x16xf32>, vector<16x16xf32>, vector<64x16xf32> -> vector<64x16xf32>
    %149 = vector.broadcast %144 : vector<64x1xf32> to vector<64x16xf32>
    %150 = arith.mulf %149, %148 : vector<64x16xf32>
    %cst_90 = arith.constant 1.000000e+00 : f32
    %151 = vector.broadcast %cst_90 : f32 to vector<64x1xf32>
    %152 = arith.addf %145, %151 : vector<64x1xf32>
    %153 = arith.subf %67, %148 : vector<64x16xf32>
    %154 = vector.broadcast %152 : vector<64x1xf32> to vector<64x16xf32>
    %155 = arith.mulf %154, %153 : vector<64x16xf32>
    %156 = arith.addf %150, %155 : vector<64x16xf32>
    %cst_91 = arith.constant dense<0.000000e+00> : vector<64x16xf32>
    %157 = tpu.matmul %141, %156, %cst_91 {dimension_numbers = #tpu.dot_dimension_numbers<[1], [0], [0], [1], [0, 0, 1, 1], [], []>} : vector<64x64xf32>, vector<64x16xf32>, vector<64x16xf32> -> vector<64x16xf32>
    %158 = vector.broadcast %142 : vector<64x1xf32> to vector<64x16xf32>
    %159 = arith.mulf %158, %157 : vector<64x16xf32>
    %cst_92 = arith.constant 1.000000e+00 : f32
    %160 = vector.broadcast %cst_92 : f32 to vector<64x1xf32>
    %161 = arith.addf %143, %160 : vector<64x1xf32>
    %162 = arith.subf %156, %157 : vector<64x16xf32>
    %163 = vector.broadcast %161 : vector<64x1xf32> to vector<64x16xf32>
    %164 = arith.mulf %163, %162 : vector<64x16xf32>
    %165 = arith.addf %159, %164 : vector<64x16xf32>
    %166 = vector.broadcast %147 : vector<64x1xf32> to vector<64x16xf32>
    %167 = arith.mulf %67, %166 : vector<64x16xf32>
    %168 = vector.broadcast %146 : vector<64x1xf32> to vector<64x16xf32>
    %169 = arith.mulf %165, %168 : vector<64x16xf32>
    %170 = arith.addf %167, %169 : vector<64x16xf32>
    %171 = arith.addf %137, %170 : vector<64x16xf32>
    %c0_93 = arith.constant 0 : index
    %c0_94 = arith.constant 0 : index
    %172 = vector.load %arg12[%c0_93, %c0_94] : memref<64x64xf32, #tpu.memory_space<vmem>>, vector<64x64xf32>
    %cst_95 = arith.constant dense<0.000000e+00> : vector<64x16xf32>
    %173 = tpu.matmul %172, %171, %cst_95 {dimension_numbers = #tpu.dot_dimension_numbers<[1], [0], [0], [1], [0, 0, 1, 1], [], []>} : vector<64x64xf32>, vector<64x16xf32>, vector<64x16xf32> -> vector<64x16xf32>
    %c0_96 = arith.constant 0 : index
    %c0_97 = arith.constant 0 : index
    %174 = vector.load %arg13[%c0_96, %c0_97] : memref<64x1xf32, #tpu.memory_space<vmem>>, vector<64x1xf32>
    %175 = vector.broadcast %174 : vector<64x1xf32> to vector<64x16xf32>
    %176 = arith.addf %173, %175 : vector<64x16xf32>
    %177 = vector.extract_strided_slice %176 {offsets = [0, 0], sizes = [32, 16], strides = [1, 1]} : vector<64x16xf32> to vector<32x16xf32>
    %c0_98 = arith.constant 0 : index
    %c0_99 = arith.constant 0 : index
    %178 = vector.load %arg16[%c0_98, %c0_99] : memref<11x32xf32, #tpu.memory_space<vmem>>, vector<11x32xf32>
    %cst_100 = arith.constant dense<0.000000e+00> : vector<32xf32>
    %179 = vector.multi_reduction <add>, %177, %cst_100 [1] : vector<32x16xf32> to vector<32xf32>
    %180 = vector.shape_cast %179 : vector<32xf32> to vector<32x1xf32>
    %cst_101 = arith.constant 1.600000e+01 : f32
    %181 = vector.broadcast %cst_101 : f32 to vector<32x1xf32>
    %182 = arith.divf %180, %181 : vector<32x1xf32>
    %cst_102 = arith.constant dense<0.000000e+00> : vector<11x1xf32>
    %183 = tpu.matmul %178, %182, %cst_102 {dimension_numbers = #tpu.dot_dimension_numbers<[1], [0], [0], [1], [0, 0, 1, 1], [], []>} : vector<11x32xf32>, vector<32x1xf32>, vector<11x1xf32> -> vector<11x1xf32>
    %cst_103 = arith.constant 0.000000e+00 : f32
    %184 = vector.broadcast %cst_103 : f32 to vector<11x1xf32>
    %185 = arith.subf %184, %183 : vector<11x1xf32>
    %186 = math.exp %185 : vector<11x1xf32>
    %cst_104 = arith.constant 1.000000e+00 : f32
    %187 = vector.broadcast %cst_104 : f32 to vector<11x1xf32>
    %188 = arith.addf %187, %186 : vector<11x1xf32>
    %cst_105 = arith.constant 1.000000e+00 : f32
    %189 = vector.broadcast %cst_105 : f32 to vector<11x1xf32>
    %190 = arith.divf %189, %188 : vector<11x1xf32>
    %cst_106 = arith.constant 0.000000e+00 : f32
    %191 = vector.broadcast %cst_106 : f32 to vector<16x16xf32>
    %192 = vector.extract_strided_slice %190 {offsets = [0, 0], sizes = [1, 1], strides = [1, 1]} : vector<11x1xf32> to vector<1x1xf32>
    %c0_107 = arith.constant 0 : index
    %c0_108 = arith.constant 0 : index
    %c0_109 = arith.constant 0 : index
    %193 = vector.load %arg14[%c0_107, %c0_108, %c0_109] : memref<11x16x16xf32, #tpu.memory_space<vmem>>, vector<1x16x16xf32>
    %194 = vector.shape_cast %193 : vector<1x16x16xf32> to vector<16x16xf32>
    %195 = vector.broadcast %192 : vector<1x1xf32> to vector<16x16xf32>
    %196 = arith.mulf %195, %194 : vector<16x16xf32>
    %197 = arith.addf %191, %196 : vector<16x16xf32>
    %198 = vector.extract_strided_slice %190 {offsets = [1, 0], sizes = [1, 1], strides = [1, 1]} : vector<11x1xf32> to vector<1x1xf32>
    %c1_110 = arith.constant 1 : index
    %c0_111 = arith.constant 0 : index
    %c0_112 = arith.constant 0 : index
    %199 = vector.load %arg14[%c1_110, %c0_111, %c0_112] : memref<11x16x16xf32, #tpu.memory_space<vmem>>, vector<1x16x16xf32>
    %200 = vector.shape_cast %199 : vector<1x16x16xf32> to vector<16x16xf32>
    %201 = vector.broadcast %198 : vector<1x1xf32> to vector<16x16xf32>
    %202 = arith.mulf %201, %200 : vector<16x16xf32>
    %203 = arith.addf %197, %202 : vector<16x16xf32>
    %204 = vector.extract_strided_slice %190 {offsets = [2, 0], sizes = [1, 1], strides = [1, 1]} : vector<11x1xf32> to vector<1x1xf32>
    %c2_113 = arith.constant 2 : index
    %c0_114 = arith.constant 0 : index
    %c0_115 = arith.constant 0 : index
    %205 = vector.load %arg14[%c2_113, %c0_114, %c0_115] : memref<11x16x16xf32, #tpu.memory_space<vmem>>, vector<1x16x16xf32>
    %206 = vector.shape_cast %205 : vector<1x16x16xf32> to vector<16x16xf32>
    %207 = vector.broadcast %204 : vector<1x1xf32> to vector<16x16xf32>
    %208 = arith.mulf %207, %206 : vector<16x16xf32>
    %209 = arith.addf %203, %208 : vector<16x16xf32>
    %210 = vector.extract_strided_slice %190 {offsets = [3, 0], sizes = [1, 1], strides = [1, 1]} : vector<11x1xf32> to vector<1x1xf32>
    %c3_116 = arith.constant 3 : index
    %c0_117 = arith.constant 0 : index
    %c0_118 = arith.constant 0 : index
    %211 = vector.load %arg14[%c3_116, %c0_117, %c0_118] : memref<11x16x16xf32, #tpu.memory_space<vmem>>, vector<1x16x16xf32>
    %212 = vector.shape_cast %211 : vector<1x16x16xf32> to vector<16x16xf32>
    %213 = vector.broadcast %210 : vector<1x1xf32> to vector<16x16xf32>
    %214 = arith.mulf %213, %212 : vector<16x16xf32>
    %215 = arith.addf %209, %214 : vector<16x16xf32>
    %216 = vector.extract_strided_slice %190 {offsets = [4, 0], sizes = [1, 1], strides = [1, 1]} : vector<11x1xf32> to vector<1x1xf32>
    %c4_119 = arith.constant 4 : index
    %c0_120 = arith.constant 0 : index
    %c0_121 = arith.constant 0 : index
    %217 = vector.load %arg14[%c4_119, %c0_120, %c0_121] : memref<11x16x16xf32, #tpu.memory_space<vmem>>, vector<1x16x16xf32>
    %218 = vector.shape_cast %217 : vector<1x16x16xf32> to vector<16x16xf32>
    %219 = vector.broadcast %216 : vector<1x1xf32> to vector<16x16xf32>
    %220 = arith.mulf %219, %218 : vector<16x16xf32>
    %221 = arith.addf %215, %220 : vector<16x16xf32>
    %222 = vector.extract_strided_slice %190 {offsets = [5, 0], sizes = [1, 1], strides = [1, 1]} : vector<11x1xf32> to vector<1x1xf32>
    %c5_122 = arith.constant 5 : index
    %c0_123 = arith.constant 0 : index
    %c0_124 = arith.constant 0 : index
    %223 = vector.load %arg14[%c5_122, %c0_123, %c0_124] : memref<11x16x16xf32, #tpu.memory_space<vmem>>, vector<1x16x16xf32>
    %224 = vector.shape_cast %223 : vector<1x16x16xf32> to vector<16x16xf32>
    %225 = vector.broadcast %222 : vector<1x1xf32> to vector<16x16xf32>
    %226 = arith.mulf %225, %224 : vector<16x16xf32>
    %227 = arith.addf %221, %226 : vector<16x16xf32>
    %228 = vector.extract_strided_slice %190 {offsets = [6, 0], sizes = [1, 1], strides = [1, 1]} : vector<11x1xf32> to vector<1x1xf32>
    %c6_125 = arith.constant 6 : index
    %c0_126 = arith.constant 0 : index
    %c0_127 = arith.constant 0 : index
    %229 = vector.load %arg14[%c6_125, %c0_126, %c0_127] : memref<11x16x16xf32, #tpu.memory_space<vmem>>, vector<1x16x16xf32>
    %230 = vector.shape_cast %229 : vector<1x16x16xf32> to vector<16x16xf32>
    %231 = vector.broadcast %228 : vector<1x1xf32> to vector<16x16xf32>
    %232 = arith.mulf %231, %230 : vector<16x16xf32>
    %233 = arith.addf %227, %232 : vector<16x16xf32>
    %234 = vector.extract_strided_slice %190 {offsets = [7, 0], sizes = [1, 1], strides = [1, 1]} : vector<11x1xf32> to vector<1x1xf32>
    %c7_128 = arith.constant 7 : index
    %c0_129 = arith.constant 0 : index
    %c0_130 = arith.constant 0 : index
    %235 = vector.load %arg14[%c7_128, %c0_129, %c0_130] : memref<11x16x16xf32, #tpu.memory_space<vmem>>, vector<1x16x16xf32>
    %236 = vector.shape_cast %235 : vector<1x16x16xf32> to vector<16x16xf32>
    %237 = vector.broadcast %234 : vector<1x1xf32> to vector<16x16xf32>
    %238 = arith.mulf %237, %236 : vector<16x16xf32>
    %239 = arith.addf %233, %238 : vector<16x16xf32>
    %240 = vector.extract_strided_slice %190 {offsets = [8, 0], sizes = [1, 1], strides = [1, 1]} : vector<11x1xf32> to vector<1x1xf32>
    %c8_131 = arith.constant 8 : index
    %c0_132 = arith.constant 0 : index
    %c0_133 = arith.constant 0 : index
    %241 = vector.load %arg14[%c8_131, %c0_132, %c0_133] : memref<11x16x16xf32, #tpu.memory_space<vmem>>, vector<1x16x16xf32>
    %242 = vector.shape_cast %241 : vector<1x16x16xf32> to vector<16x16xf32>
    %243 = vector.broadcast %240 : vector<1x1xf32> to vector<16x16xf32>
    %244 = arith.mulf %243, %242 : vector<16x16xf32>
    %245 = arith.addf %239, %244 : vector<16x16xf32>
    %246 = vector.extract_strided_slice %190 {offsets = [9, 0], sizes = [1, 1], strides = [1, 1]} : vector<11x1xf32> to vector<1x1xf32>
    %c9_134 = arith.constant 9 : index
    %c0_135 = arith.constant 0 : index
    %c0_136 = arith.constant 0 : index
    %247 = vector.load %arg14[%c9_134, %c0_135, %c0_136] : memref<11x16x16xf32, #tpu.memory_space<vmem>>, vector<1x16x16xf32>
    %248 = vector.shape_cast %247 : vector<1x16x16xf32> to vector<16x16xf32>
    %249 = vector.broadcast %246 : vector<1x1xf32> to vector<16x16xf32>
    %250 = arith.mulf %249, %248 : vector<16x16xf32>
    %251 = arith.addf %245, %250 : vector<16x16xf32>
    %252 = vector.extract_strided_slice %190 {offsets = [10, 0], sizes = [1, 1], strides = [1, 1]} : vector<11x1xf32> to vector<1x1xf32>
    %c10_137 = arith.constant 10 : index
    %c0_138 = arith.constant 0 : index
    %c0_139 = arith.constant 0 : index
    %253 = vector.load %arg14[%c10_137, %c0_138, %c0_139] : memref<11x16x16xf32, #tpu.memory_space<vmem>>, vector<1x16x16xf32>
    %254 = vector.shape_cast %253 : vector<1x16x16xf32> to vector<16x16xf32>
    %255 = vector.broadcast %252 : vector<1x1xf32> to vector<16x16xf32>
    %256 = arith.mulf %255, %254 : vector<16x16xf32>
    %257 = arith.addf %251, %256 : vector<16x16xf32>
    %cst_140 = arith.constant dense<0.000000e+00> : vector<32x16xf32>
    %258 = tpu.matmul %177, %257, %cst_140 {dimension_numbers = #tpu.dot_dimension_numbers<[1], [0], [0], [1], [0, 0, 1, 1], [], []>} : vector<32x16xf32>, vector<16x16xf32>, vector<32x16xf32> -> vector<32x16xf32>
    %c0_141 = arith.constant 0 : index
    %c0_142 = arith.constant 0 : index
    %259 = vector.load %arg17[%c0_141, %c0_142] : memref<11x32xf32, #tpu.memory_space<vmem>>, vector<11x32xf32>
    %cst_143 = arith.constant dense<0.000000e+00> : vector<32xf32>
    %260 = vector.multi_reduction <add>, %258, %cst_143 [1] : vector<32x16xf32> to vector<32xf32>
    %261 = vector.shape_cast %260 : vector<32xf32> to vector<32x1xf32>
    %cst_144 = arith.constant 1.600000e+01 : f32
    %262 = vector.broadcast %cst_144 : f32 to vector<32x1xf32>
    %263 = arith.divf %261, %262 : vector<32x1xf32>
    %cst_145 = arith.constant dense<0.000000e+00> : vector<11x1xf32>
    %264 = tpu.matmul %259, %263, %cst_145 {dimension_numbers = #tpu.dot_dimension_numbers<[1], [0], [0], [1], [0, 0, 1, 1], [], []>} : vector<11x32xf32>, vector<32x1xf32>, vector<11x1xf32> -> vector<11x1xf32>
    %cst_146 = arith.constant 0.000000e+00 : f32
    %265 = vector.broadcast %cst_146 : f32 to vector<11x1xf32>
    %266 = arith.subf %265, %264 : vector<11x1xf32>
    %267 = math.exp %266 : vector<11x1xf32>
    %cst_147 = arith.constant 1.000000e+00 : f32
    %268 = vector.broadcast %cst_147 : f32 to vector<11x1xf32>
    %269 = arith.addf %268, %267 : vector<11x1xf32>
    %cst_148 = arith.constant 1.000000e+00 : f32
    %270 = vector.broadcast %cst_148 : f32 to vector<11x1xf32>
    %271 = arith.divf %270, %269 : vector<11x1xf32>
    %cst_149 = arith.constant 0.000000e+00 : f32
    %272 = vector.broadcast %cst_149 : f32 to vector<32x32xf32>
    %273 = vector.extract_strided_slice %271 {offsets = [0, 0], sizes = [1, 1], strides = [1, 1]} : vector<11x1xf32> to vector<1x1xf32>
    %c0_150 = arith.constant 0 : index
    %c0_151 = arith.constant 0 : index
    %c0_152 = arith.constant 0 : index
    %274 = vector.load %arg15[%c0_150, %c0_151, %c0_152] : memref<11x32x32xf32, #tpu.memory_space<vmem>>, vector<1x32x32xf32>
    %275 = vector.shape_cast %274 : vector<1x32x32xf32> to vector<32x32xf32>
    %276 = vector.broadcast %273 : vector<1x1xf32> to vector<32x32xf32>
    %277 = arith.mulf %276, %275 : vector<32x32xf32>
    %278 = arith.addf %272, %277 : vector<32x32xf32>
    %279 = vector.extract_strided_slice %271 {offsets = [1, 0], sizes = [1, 1], strides = [1, 1]} : vector<11x1xf32> to vector<1x1xf32>
    %c1_153 = arith.constant 1 : index
    %c0_154 = arith.constant 0 : index
    %c0_155 = arith.constant 0 : index
    %280 = vector.load %arg15[%c1_153, %c0_154, %c0_155] : memref<11x32x32xf32, #tpu.memory_space<vmem>>, vector<1x32x32xf32>
    %281 = vector.shape_cast %280 : vector<1x32x32xf32> to vector<32x32xf32>
    %282 = vector.broadcast %279 : vector<1x1xf32> to vector<32x32xf32>
    %283 = arith.mulf %282, %281 : vector<32x32xf32>
    %284 = arith.addf %278, %283 : vector<32x32xf32>
    %285 = vector.extract_strided_slice %271 {offsets = [2, 0], sizes = [1, 1], strides = [1, 1]} : vector<11x1xf32> to vector<1x1xf32>
    %c2_156 = arith.constant 2 : index
    %c0_157 = arith.constant 0 : index
    %c0_158 = arith.constant 0 : index
    %286 = vector.load %arg15[%c2_156, %c0_157, %c0_158] : memref<11x32x32xf32, #tpu.memory_space<vmem>>, vector<1x32x32xf32>
    %287 = vector.shape_cast %286 : vector<1x32x32xf32> to vector<32x32xf32>
    %288 = vector.broadcast %285 : vector<1x1xf32> to vector<32x32xf32>
    %289 = arith.mulf %288, %287 : vector<32x32xf32>
    %290 = arith.addf %284, %289 : vector<32x32xf32>
    %291 = vector.extract_strided_slice %271 {offsets = [3, 0], sizes = [1, 1], strides = [1, 1]} : vector<11x1xf32> to vector<1x1xf32>
    %c3_159 = arith.constant 3 : index
    %c0_160 = arith.constant 0 : index
    %c0_161 = arith.constant 0 : index
    %292 = vector.load %arg15[%c3_159, %c0_160, %c0_161] : memref<11x32x32xf32, #tpu.memory_space<vmem>>, vector<1x32x32xf32>
    %293 = vector.shape_cast %292 : vector<1x32x32xf32> to vector<32x32xf32>
    %294 = vector.broadcast %291 : vector<1x1xf32> to vector<32x32xf32>
    %295 = arith.mulf %294, %293 : vector<32x32xf32>
    %296 = arith.addf %290, %295 : vector<32x32xf32>
    %297 = vector.extract_strided_slice %271 {offsets = [4, 0], sizes = [1, 1], strides = [1, 1]} : vector<11x1xf32> to vector<1x1xf32>
    %c4_162 = arith.constant 4 : index
    %c0_163 = arith.constant 0 : index
    %c0_164 = arith.constant 0 : index
    %298 = vector.load %arg15[%c4_162, %c0_163, %c0_164] : memref<11x32x32xf32, #tpu.memory_space<vmem>>, vector<1x32x32xf32>
    %299 = vector.shape_cast %298 : vector<1x32x32xf32> to vector<32x32xf32>
    %300 = vector.broadcast %297 : vector<1x1xf32> to vector<32x32xf32>
    %301 = arith.mulf %300, %299 : vector<32x32xf32>
    %302 = arith.addf %296, %301 : vector<32x32xf32>
    %303 = vector.extract_strided_slice %271 {offsets = [5, 0], sizes = [1, 1], strides = [1, 1]} : vector<11x1xf32> to vector<1x1xf32>
    %c5_165 = arith.constant 5 : index
    %c0_166 = arith.constant 0 : index
    %c0_167 = arith.constant 0 : index
    %304 = vector.load %arg15[%c5_165, %c0_166, %c0_167] : memref<11x32x32xf32, #tpu.memory_space<vmem>>, vector<1x32x32xf32>
    %305 = vector.shape_cast %304 : vector<1x32x32xf32> to vector<32x32xf32>
    %306 = vector.broadcast %303 : vector<1x1xf32> to vector<32x32xf32>
    %307 = arith.mulf %306, %305 : vector<32x32xf32>
    %308 = arith.addf %302, %307 : vector<32x32xf32>
    %309 = vector.extract_strided_slice %271 {offsets = [6, 0], sizes = [1, 1], strides = [1, 1]} : vector<11x1xf32> to vector<1x1xf32>
    %c6_168 = arith.constant 6 : index
    %c0_169 = arith.constant 0 : index
    %c0_170 = arith.constant 0 : index
    %310 = vector.load %arg15[%c6_168, %c0_169, %c0_170] : memref<11x32x32xf32, #tpu.memory_space<vmem>>, vector<1x32x32xf32>
    %311 = vector.shape_cast %310 : vector<1x32x32xf32> to vector<32x32xf32>
    %312 = vector.broadcast %309 : vector<1x1xf32> to vector<32x32xf32>
    %313 = arith.mulf %312, %311 : vector<32x32xf32>
    %314 = arith.addf %308, %313 : vector<32x32xf32>
    %315 = vector.extract_strided_slice %271 {offsets = [7, 0], sizes = [1, 1], strides = [1, 1]} : vector<11x1xf32> to vector<1x1xf32>
    %c7_171 = arith.constant 7 : index
    %c0_172 = arith.constant 0 : index
    %c0_173 = arith.constant 0 : index
    %316 = vector.load %arg15[%c7_171, %c0_172, %c0_173] : memref<11x32x32xf32, #tpu.memory_space<vmem>>, vector<1x32x32xf32>
    %317 = vector.shape_cast %316 : vector<1x32x32xf32> to vector<32x32xf32>
    %318 = vector.broadcast %315 : vector<1x1xf32> to vector<32x32xf32>
    %319 = arith.mulf %318, %317 : vector<32x32xf32>
    %320 = arith.addf %314, %319 : vector<32x32xf32>
    %321 = vector.extract_strided_slice %271 {offsets = [8, 0], sizes = [1, 1], strides = [1, 1]} : vector<11x1xf32> to vector<1x1xf32>
    %c8_174 = arith.constant 8 : index
    %c0_175 = arith.constant 0 : index
    %c0_176 = arith.constant 0 : index
    %322 = vector.load %arg15[%c8_174, %c0_175, %c0_176] : memref<11x32x32xf32, #tpu.memory_space<vmem>>, vector<1x32x32xf32>
    %323 = vector.shape_cast %322 : vector<1x32x32xf32> to vector<32x32xf32>
    %324 = vector.broadcast %321 : vector<1x1xf32> to vector<32x32xf32>
    %325 = arith.mulf %324, %323 : vector<32x32xf32>
    %326 = arith.addf %320, %325 : vector<32x32xf32>
    %327 = vector.extract_strided_slice %271 {offsets = [9, 0], sizes = [1, 1], strides = [1, 1]} : vector<11x1xf32> to vector<1x1xf32>
    %c9_177 = arith.constant 9 : index
    %c0_178 = arith.constant 0 : index
    %c0_179 = arith.constant 0 : index
    %328 = vector.load %arg15[%c9_177, %c0_178, %c0_179] : memref<11x32x32xf32, #tpu.memory_space<vmem>>, vector<1x32x32xf32>
    %329 = vector.shape_cast %328 : vector<1x32x32xf32> to vector<32x32xf32>
    %330 = vector.broadcast %327 : vector<1x1xf32> to vector<32x32xf32>
    %331 = arith.mulf %330, %329 : vector<32x32xf32>
    %332 = arith.addf %326, %331 : vector<32x32xf32>
    %333 = vector.extract_strided_slice %271 {offsets = [10, 0], sizes = [1, 1], strides = [1, 1]} : vector<11x1xf32> to vector<1x1xf32>
    %c10_180 = arith.constant 10 : index
    %c0_181 = arith.constant 0 : index
    %c0_182 = arith.constant 0 : index
    %334 = vector.load %arg15[%c10_180, %c0_181, %c0_182] : memref<11x32x32xf32, #tpu.memory_space<vmem>>, vector<1x32x32xf32>
    %335 = vector.shape_cast %334 : vector<1x32x32xf32> to vector<32x32xf32>
    %336 = vector.broadcast %333 : vector<1x1xf32> to vector<32x32xf32>
    %337 = arith.mulf %336, %335 : vector<32x32xf32>
    %338 = arith.addf %332, %337 : vector<32x32xf32>
    %cst_183 = arith.constant dense<0.000000e+00> : vector<32x16xf32>
    %339 = tpu.matmul %338, %258, %cst_183 {dimension_numbers = #tpu.dot_dimension_numbers<[1], [0], [0], [1], [0, 0, 1, 1], [], []>} : vector<32x32xf32>, vector<32x16xf32>, vector<32x16xf32> -> vector<32x16xf32>
    %c0_184 = arith.constant 0 : index
    %c0_185 = arith.constant 0 : index
    %340 = vector.load %arg18[%c0_184, %c0_185] : memref<32x1xf32, #tpu.memory_space<vmem>>, vector<32x1xf32>
    %341 = vector.broadcast %340 : vector<32x1xf32> to vector<32x16xf32>
    %342 = arith.mulf %341, %339 : vector<32x16xf32>
    %c0_186 = arith.constant 0 : index
    %c0_187 = arith.constant 0 : index
    %343 = vector.load %arg19[%c0_186, %c0_187] : memref<32x1xf32, #tpu.memory_space<vmem>>, vector<32x1xf32>
    %344 = vector.broadcast %343 : vector<32x1xf32> to vector<32x16xf32>
    %345 = arith.mulf %344, %177 : vector<32x16xf32>
    %346 = arith.addf %342, %345 : vector<32x16xf32>
    %c0_188 = arith.constant 0 : index
    %c0_189 = arith.constant 0 : index
    %347 = vector.load %arg27[%c0_188, %c0_189] : memref<64x16xf32, #tpu.memory_space<vmem>>, vector<32x16xf32>
    tpu.vector_store %arg27[%c0_188, %c0_189], %346 {strides = array<i32>} : memref<64x16xf32, #tpu.memory_space<vmem>>, vector<32x16xf32>,
    %348 = vector.extract_strided_slice %176 {offsets = [32, 0], sizes = [32, 16], strides = [1, 1]} : vector<64x16xf32> to vector<32x16xf32>
    %c0_190 = arith.constant 0 : index
    %c0_191 = arith.constant 0 : index
    %349 = vector.load %arg22[%c0_190, %c0_191] : memref<7x32xf32, #tpu.memory_space<vmem>>, vector<7x32xf32>
    %cst_192 = arith.constant dense<0.000000e+00> : vector<32xf32>
    %350 = vector.multi_reduction <add>, %348, %cst_192 [1] : vector<32x16xf32> to vector<32xf32>
    %351 = vector.shape_cast %350 : vector<32xf32> to vector<32x1xf32>
    %cst_193 = arith.constant 1.600000e+01 : f32
    %352 = vector.broadcast %cst_193 : f32 to vector<32x1xf32>
    %353 = arith.divf %351, %352 : vector<32x1xf32>
    %cst_194 = arith.constant dense<0.000000e+00> : vector<7x1xf32>
    %354 = tpu.matmul %349, %353, %cst_194 {dimension_numbers = #tpu.dot_dimension_numbers<[1], [0], [0], [1], [0, 0, 1, 1], [], []>} : vector<7x32xf32>, vector<32x1xf32>, vector<7x1xf32> -> vector<7x1xf32>
    %cst_195 = arith.constant 0.000000e+00 : f32
    %355 = vector.broadcast %cst_195 : f32 to vector<7x1xf32>
    %356 = arith.subf %355, %354 : vector<7x1xf32>
    %357 = math.exp %356 : vector<7x1xf32>
    %cst_196 = arith.constant 1.000000e+00 : f32
    %358 = vector.broadcast %cst_196 : f32 to vector<7x1xf32>
    %359 = arith.addf %358, %357 : vector<7x1xf32>
    %cst_197 = arith.constant 1.000000e+00 : f32
    %360 = vector.broadcast %cst_197 : f32 to vector<7x1xf32>
    %361 = arith.divf %360, %359 : vector<7x1xf32>
    %cst_198 = arith.constant 0.000000e+00 : f32
    %362 = vector.broadcast %cst_198 : f32 to vector<16x16xf32>
    %363 = vector.extract_strided_slice %361 {offsets = [0, 0], sizes = [1, 1], strides = [1, 1]} : vector<7x1xf32> to vector<1x1xf32>
    %c0_199 = arith.constant 0 : index
    %c0_200 = arith.constant 0 : index
    %c0_201 = arith.constant 0 : index
    %364 = vector.load %arg20[%c0_199, %c0_200, %c0_201] : memref<7x16x16xf32, #tpu.memory_space<vmem>>, vector<1x16x16xf32>
    %365 = vector.shape_cast %364 : vector<1x16x16xf32> to vector<16x16xf32>
    %366 = vector.broadcast %363 : vector<1x1xf32> to vector<16x16xf32>
    %367 = arith.mulf %366, %365 : vector<16x16xf32>
    %368 = arith.addf %362, %367 : vector<16x16xf32>
    %369 = vector.extract_strided_slice %361 {offsets = [1, 0], sizes = [1, 1], strides = [1, 1]} : vector<7x1xf32> to vector<1x1xf32>
    %c1_202 = arith.constant 1 : index
    %c0_203 = arith.constant 0 : index
    %c0_204 = arith.constant 0 : index
    %370 = vector.load %arg20[%c1_202, %c0_203, %c0_204] : memref<7x16x16xf32, #tpu.memory_space<vmem>>, vector<1x16x16xf32>
    %371 = vector.shape_cast %370 : vector<1x16x16xf32> to vector<16x16xf32>
    %372 = vector.broadcast %369 : vector<1x1xf32> to vector<16x16xf32>
    %373 = arith.mulf %372, %371 : vector<16x16xf32>
    %374 = arith.addf %368, %373 : vector<16x16xf32>
    %375 = vector.extract_strided_slice %361 {offsets = [2, 0], sizes = [1, 1], strides = [1, 1]} : vector<7x1xf32> to vector<1x1xf32>
    %c2_205 = arith.constant 2 : index
    %c0_206 = arith.constant 0 : index
    %c0_207 = arith.constant 0 : index
    %376 = vector.load %arg20[%c2_205, %c0_206, %c0_207] : memref<7x16x16xf32, #tpu.memory_space<vmem>>, vector<1x16x16xf32>
    %377 = vector.shape_cast %376 : vector<1x16x16xf32> to vector<16x16xf32>
    %378 = vector.broadcast %375 : vector<1x1xf32> to vector<16x16xf32>
    %379 = arith.mulf %378, %377 : vector<16x16xf32>
    %380 = arith.addf %374, %379 : vector<16x16xf32>
    %381 = vector.extract_strided_slice %361 {offsets = [3, 0], sizes = [1, 1], strides = [1, 1]} : vector<7x1xf32> to vector<1x1xf32>
    %c3_208 = arith.constant 3 : index
    %c0_209 = arith.constant 0 : index
    %c0_210 = arith.constant 0 : index
    %382 = vector.load %arg20[%c3_208, %c0_209, %c0_210] : memref<7x16x16xf32, #tpu.memory_space<vmem>>, vector<1x16x16xf32>
    %383 = vector.shape_cast %382 : vector<1x16x16xf32> to vector<16x16xf32>
    %384 = vector.broadcast %381 : vector<1x1xf32> to vector<16x16xf32>
    %385 = arith.mulf %384, %383 : vector<16x16xf32>
    %386 = arith.addf %380, %385 : vector<16x16xf32>
    %387 = vector.extract_strided_slice %361 {offsets = [4, 0], sizes = [1, 1], strides = [1, 1]} : vector<7x1xf32> to vector<1x1xf32>
    %c4_211 = arith.constant 4 : index
    %c0_212 = arith.constant 0 : index
    %c0_213 = arith.constant 0 : index
    %388 = vector.load %arg20[%c4_211, %c0_212, %c0_213] : memref<7x16x16xf32, #tpu.memory_space<vmem>>, vector<1x16x16xf32>
    %389 = vector.shape_cast %388 : vector<1x16x16xf32> to vector<16x16xf32>
    %390 = vector.broadcast %387 : vector<1x1xf32> to vector<16x16xf32>
    %391 = arith.mulf %390, %389 : vector<16x16xf32>
    %392 = arith.addf %386, %391 : vector<16x16xf32>
    %393 = vector.extract_strided_slice %361 {offsets = [5, 0], sizes = [1, 1], strides = [1, 1]} : vector<7x1xf32> to vector<1x1xf32>
    %c5_214 = arith.constant 5 : index
    %c0_215 = arith.constant 0 : index
    %c0_216 = arith.constant 0 : index
    %394 = vector.load %arg20[%c5_214, %c0_215, %c0_216] : memref<7x16x16xf32, #tpu.memory_space<vmem>>, vector<1x16x16xf32>
    %395 = vector.shape_cast %394 : vector<1x16x16xf32> to vector<16x16xf32>
    %396 = vector.broadcast %393 : vector<1x1xf32> to vector<16x16xf32>
    %397 = arith.mulf %396, %395 : vector<16x16xf32>
    %398 = arith.addf %392, %397 : vector<16x16xf32>
    %399 = vector.extract_strided_slice %361 {offsets = [6, 0], sizes = [1, 1], strides = [1, 1]} : vector<7x1xf32> to vector<1x1xf32>
    %c6_217 = arith.constant 6 : index
    %c0_218 = arith.constant 0 : index
    %c0_219 = arith.constant 0 : index
    %400 = vector.load %arg20[%c6_217, %c0_218, %c0_219] : memref<7x16x16xf32, #tpu.memory_space<vmem>>, vector<1x16x16xf32>
    %401 = vector.shape_cast %400 : vector<1x16x16xf32> to vector<16x16xf32>
    %402 = vector.broadcast %399 : vector<1x1xf32> to vector<16x16xf32>
    %403 = arith.mulf %402, %401 : vector<16x16xf32>
    %404 = arith.addf %398, %403 : vector<16x16xf32>
    %cst_220 = arith.constant dense<0.000000e+00> : vector<32x16xf32>
    %405 = tpu.matmul %348, %404, %cst_220 {dimension_numbers = #tpu.dot_dimension_numbers<[1], [0], [0], [1], [0, 0, 1, 1], [], []>} : vector<32x16xf32>, vector<16x16xf32>, vector<32x16xf32> -> vector<32x16xf32>
    %c0_221 = arith.constant 0 : index
    %c0_222 = arith.constant 0 : index
    %406 = vector.load %arg23[%c0_221, %c0_222] : memref<7x32xf32, #tpu.memory_space<vmem>>, vector<7x32xf32>
    %cst_223 = arith.constant dense<0.000000e+00> : vector<32xf32>
    %407 = vector.multi_reduction <add>, %405, %cst_223 [1] : vector<32x16xf32> to vector<32xf32>
    %408 = vector.shape_cast %407 : vector<32xf32> to vector<32x1xf32>
    %cst_224 = arith.constant 1.600000e+01 : f32
    %409 = vector.broadcast %cst_224 : f32 to vector<32x1xf32>
    %410 = arith.divf %408, %409 : vector<32x1xf32>
    %cst_225 = arith.constant dense<0.000000e+00> : vector<7x1xf32>
    %411 = tpu.matmul %406, %410, %cst_225 {dimension_numbers = #tpu.dot_dimension_numbers<[1], [0], [0], [1], [0, 0, 1, 1], [], []>} : vector<7x32xf32>, vector<32x1xf32>, vector<7x1xf32> -> vector<7x1xf32>
    %cst_226 = arith.constant 0.000000e+00 : f32
    %412 = vector.broadcast %cst_226 : f32 to vector<7x1xf32>
    %413 = arith.subf %412, %411 : vector<7x1xf32>
    %414 = math.exp %413 : vector<7x1xf32>
    %cst_227 = arith.constant 1.000000e+00 : f32
    %415 = vector.broadcast %cst_227 : f32 to vector<7x1xf32>
    %416 = arith.addf %415, %414 : vector<7x1xf32>
    %cst_228 = arith.constant 1.000000e+00 : f32
    %417 = vector.broadcast %cst_228 : f32 to vector<7x1xf32>
    %418 = arith.divf %417, %416 : vector<7x1xf32>
    %cst_229 = arith.constant 0.000000e+00 : f32
    %419 = vector.broadcast %cst_229 : f32 to vector<32x32xf32>
    %420 = vector.extract_strided_slice %418 {offsets = [0, 0], sizes = [1, 1], strides = [1, 1]} : vector<7x1xf32> to vector<1x1xf32>
    %c0_230 = arith.constant 0 : index
    %c0_231 = arith.constant 0 : index
    %c0_232 = arith.constant 0 : index
    %421 = vector.load %arg21[%c0_230, %c0_231, %c0_232] : memref<7x32x32xf32, #tpu.memory_space<vmem>>, vector<1x32x32xf32>
    %422 = vector.shape_cast %421 : vector<1x32x32xf32> to vector<32x32xf32>
    %423 = vector.broadcast %420 : vector<1x1xf32> to vector<32x32xf32>
    %424 = arith.mulf %423, %422 : vector<32x32xf32>
    %425 = arith.addf %419, %424 : vector<32x32xf32>
    %426 = vector.extract_strided_slice %418 {offsets = [1, 0], sizes = [1, 1], strides = [1, 1]} : vector<7x1xf32> to vector<1x1xf32>
    %c1_233 = arith.constant 1 : index
    %c0_234 = arith.constant 0 : index
    %c0_235 = arith.constant 0 : index
    %427 = vector.load %arg21[%c1_233, %c0_234, %c0_235] : memref<7x32x32xf32, #tpu.memory_space<vmem>>, vector<1x32x32xf32>
    %428 = vector.shape_cast %427 : vector<1x32x32xf32> to vector<32x32xf32>
    %429 = vector.broadcast %426 : vector<1x1xf32> to vector<32x32xf32>
    %430 = arith.mulf %429, %428 : vector<32x32xf32>
    %431 = arith.addf %425, %430 : vector<32x32xf32>
    %432 = vector.extract_strided_slice %418 {offsets = [2, 0], sizes = [1, 1], strides = [1, 1]} : vector<7x1xf32> to vector<1x1xf32>
    %c2_236 = arith.constant 2 : index
    %c0_237 = arith.constant 0 : index
    %c0_238 = arith.constant 0 : index
    %433 = vector.load %arg21[%c2_236, %c0_237, %c0_238] : memref<7x32x32xf32, #tpu.memory_space<vmem>>, vector<1x32x32xf32>
    %434 = vector.shape_cast %433 : vector<1x32x32xf32> to vector<32x32xf32>
    %435 = vector.broadcast %432 : vector<1x1xf32> to vector<32x32xf32>
    %436 = arith.mulf %435, %434 : vector<32x32xf32>
    %437 = arith.addf %431, %436 : vector<32x32xf32>
    %438 = vector.extract_strided_slice %418 {offsets = [3, 0], sizes = [1, 1], strides = [1, 1]} : vector<7x1xf32> to vector<1x1xf32>
    %c3_239 = arith.constant 3 : index
    %c0_240 = arith.constant 0 : index
    %c0_241 = arith.constant 0 : index
    %439 = vector.load %arg21[%c3_239, %c0_240, %c0_241] : memref<7x32x32xf32, #tpu.memory_space<vmem>>, vector<1x32x32xf32>
    %440 = vector.shape_cast %439 : vector<1x32x32xf32> to vector<32x32xf32>
    %441 = vector.broadcast %438 : vector<1x1xf32> to vector<32x32xf32>
    %442 = arith.mulf %441, %440 : vector<32x32xf32>
    %443 = arith.addf %437, %442 : vector<32x32xf32>
    %444 = vector.extract_strided_slice %418 {offsets = [4, 0], sizes = [1, 1], strides = [1, 1]} : vector<7x1xf32> to vector<1x1xf32>
    %c4_242 = arith.constant 4 : index
    %c0_243 = arith.constant 0 : index
    %c0_244 = arith.constant 0 : index
    %445 = vector.load %arg21[%c4_242, %c0_243, %c0_244] : memref<7x32x32xf32, #tpu.memory_space<vmem>>, vector<1x32x32xf32>
    %446 = vector.shape_cast %445 : vector<1x32x32xf32> to vector<32x32xf32>
    %447 = vector.broadcast %444 : vector<1x1xf32> to vector<32x32xf32>
    %448 = arith.mulf %447, %446 : vector<32x32xf32>
    %449 = arith.addf %443, %448 : vector<32x32xf32>
    %450 = vector.extract_strided_slice %418 {offsets = [5, 0], sizes = [1, 1], strides = [1, 1]} : vector<7x1xf32> to vector<1x1xf32>
    %c5_245 = arith.constant 5 : index
    %c0_246 = arith.constant 0 : index
    %c0_247 = arith.constant 0 : index
    %451 = vector.load %arg21[%c5_245, %c0_246, %c0_247] : memref<7x32x32xf32, #tpu.memory_space<vmem>>, vector<1x32x32xf32>
    %452 = vector.shape_cast %451 : vector<1x32x32xf32> to vector<32x32xf32>
    %453 = vector.broadcast %450 : vector<1x1xf32> to vector<32x32xf32>
    %454 = arith.mulf %453, %452 : vector<32x32xf32>
    %455 = arith.addf %449, %454 : vector<32x32xf32>
    %456 = vector.extract_strided_slice %418 {offsets = [6, 0], sizes = [1, 1], strides = [1, 1]} : vector<7x1xf32> to vector<1x1xf32>
    %c6_248 = arith.constant 6 : index
    %c0_249 = arith.constant 0 : index
    %c0_250 = arith.constant 0 : index
    %457 = vector.load %arg21[%c6_248, %c0_249, %c0_250] : memref<7x32x32xf32, #tpu.memory_space<vmem>>, vector<1x32x32xf32>
    %458 = vector.shape_cast %457 : vector<1x32x32xf32> to vector<32x32xf32>
    %459 = vector.broadcast %456 : vector<1x1xf32> to vector<32x32xf32>
    %460 = arith.mulf %459, %458 : vector<32x32xf32>
    %461 = arith.addf %455, %460 : vector<32x32xf32>
    %cst_251 = arith.constant dense<0.000000e+00> : vector<32x16xf32>
    %462 = tpu.matmul %461, %405, %cst_251 {dimension_numbers = #tpu.dot_dimension_numbers<[1], [0], [0], [1], [0, 0, 1, 1], [], []>} : vector<32x32xf32>, vector<32x16xf32>, vector<32x16xf32> -> vector<32x16xf32>
    %c0_252 = arith.constant 0 : index
    %c0_253 = arith.constant 0 : index
    %463 = vector.load %arg24[%c0_252, %c0_253] : memref<32x1xf32, #tpu.memory_space<vmem>>, vector<32x1xf32>
    %464 = vector.broadcast %463 : vector<32x1xf32> to vector<32x16xf32>
    %465 = arith.mulf %464, %462 : vector<32x16xf32>
    %c0_254 = arith.constant 0 : index
    %c0_255 = arith.constant 0 : index
    %466 = vector.load %arg25[%c0_254, %c0_255] : memref<32x1xf32, #tpu.memory_space<vmem>>, vector<32x1xf32>
    %467 = vector.broadcast %466 : vector<32x1xf32> to vector<32x16xf32>
    %468 = arith.mulf %467, %348 : vector<32x16xf32>
    %469 = arith.addf %465, %468 : vector<32x16xf32>
    %c32 = arith.constant 32 : index
    %c0_256 = arith.constant 0 : index
    %470 = vector.load %arg27[%c32, %c0_256] : memref<64x16xf32, #tpu.memory_space<vmem>>, vector<32x16xf32>
    tpu.vector_store %arg27[%c32, %c0_256], %469 {strides = array<i32>} : memref<64x16xf32, #tpu.memory_space<vmem>>, vector<32x16xf32>,
    %c0_257 = arith.constant 0 : index
    %c0_258 = arith.constant 0 : index
    %471 = vector.load %arg27[%c0_257, %c0_258] : memref<64x16xf32, #tpu.memory_space<vmem>>, vector<64x16xf32>
    %cst_259 = arith.constant 0.000000e+00 : f32
    %472 = vector.broadcast %cst_259 : f32 to vector<64x16xf32>
    %c0_260 = arith.constant 0 : index
    %c0_261 = arith.constant 0 : index
    %c0_262 = arith.constant 0 : index
    %473 = vector.load %arg2[%c0_260, %c0_261, %c0_262] : memref<3x16x16xf32, #tpu.memory_space<vmem>>, vector<1x16x16xf32>
    %474 = vector.shape_cast %473 : vector<1x16x16xf32> to vector<16x16xf32>
    %cst_263 = arith.constant dense<0.000000e+00> : vector<64x16xf32>
    %475 = tpu.matmul %471, %474, %cst_263 {dimension_numbers = #tpu.dot_dimension_numbers<[1], [0], [0], [1], [0, 0, 1, 1], [], []>} : vector<64x16xf32>, vector<16x16xf32>, vector<64x16xf32> -> vector<64x16xf32>
    %c0_264 = arith.constant 0 : index
    %c0_265 = arith.constant 0 : index
    %c0_266 = arith.constant 0 : index
    %476 = vector.load %arg5[%c0_264, %c0_265, %c0_266] : memref<3x64x64xf32, #tpu.memory_space<vmem>>, vector<1x64x64xf32>
    %477 = vector.shape_cast %476 : vector<1x64x64xf32> to vector<64x64xf32>
    %cst_267 = arith.constant dense<0.000000e+00> : vector<64x16xf32>
    %478 = tpu.matmul %477, %475, %cst_267 {dimension_numbers = #tpu.dot_dimension_numbers<[1], [0], [0], [1], [0, 0, 1, 1], [], []>} : vector<64x64xf32>, vector<64x16xf32>, vector<64x16xf32> -> vector<64x16xf32>
    %479 = arith.addf %472, %478 : vector<64x16xf32>
    %c1_268 = arith.constant 1 : index
    %c0_269 = arith.constant 0 : index
    %c0_270 = arith.constant 0 : index
    %480 = vector.load %arg2[%c1_268, %c0_269, %c0_270] : memref<3x16x16xf32, #tpu.memory_space<vmem>>, vector<1x16x16xf32>
    %481 = vector.shape_cast %480 : vector<1x16x16xf32> to vector<16x16xf32>
    %cst_271 = arith.constant dense<0.000000e+00> : vector<64x16xf32>
    %482 = tpu.matmul %471, %481, %cst_271 {dimension_numbers = #tpu.dot_dimension_numbers<[1], [0], [0], [1], [0, 0, 1, 1], [], []>} : vector<64x16xf32>, vector<16x16xf32>, vector<64x16xf32> -> vector<64x16xf32>
    %c1_272 = arith.constant 1 : index
    %c0_273 = arith.constant 0 : index
    %c0_274 = arith.constant 0 : index
    %483 = vector.load %arg5[%c1_272, %c0_273, %c0_274] : memref<3x64x64xf32, #tpu.memory_space<vmem>>, vector<1x64x64xf32>
    %484 = vector.shape_cast %483 : vector<1x64x64xf32> to vector<64x64xf32>
    %cst_275 = arith.constant dense<0.000000e+00> : vector<64x16xf32>
    %485 = tpu.matmul %484, %482, %cst_275 {dimension_numbers = #tpu.dot_dimension_numbers<[1], [0], [0], [1], [0, 0, 1, 1], [], []>} : vector<64x64xf32>, vector<64x16xf32>, vector<64x16xf32> -> vector<64x16xf32>
    %486 = arith.addf %479, %485 : vector<64x16xf32>
    %c2_276 = arith.constant 2 : index
    %c0_277 = arith.constant 0 : index
    %c0_278 = arith.constant 0 : index
    %487 = vector.load %arg2[%c2_276, %c0_277, %c0_278] : memref<3x16x16xf32, #tpu.memory_space<vmem>>, vector<1x16x16xf32>
    %488 = vector.shape_cast %487 : vector<1x16x16xf32> to vector<16x16xf32>
    %cst_279 = arith.constant dense<0.000000e+00> : vector<64x16xf32>
    %489 = tpu.matmul %471, %488, %cst_279 {dimension_numbers = #tpu.dot_dimension_numbers<[1], [0], [0], [1], [0, 0, 1, 1], [], []>} : vector<64x16xf32>, vector<16x16xf32>, vector<64x16xf32> -> vector<64x16xf32>
    %c2_280 = arith.constant 2 : index
    %c0_281 = arith.constant 0 : index
    %c0_282 = arith.constant 0 : index
    %490 = vector.load %arg5[%c2_280, %c0_281, %c0_282] : memref<3x64x64xf32, #tpu.memory_space<vmem>>, vector<1x64x64xf32>
    %491 = vector.shape_cast %490 : vector<1x64x64xf32> to vector<64x64xf32>
    %cst_283 = arith.constant dense<0.000000e+00> : vector<64x16xf32>
    %492 = tpu.matmul %491, %489, %cst_283 {dimension_numbers = #tpu.dot_dimension_numbers<[1], [0], [0], [1], [0, 0, 1, 1], [], []>} : vector<64x64xf32>, vector<64x16xf32>, vector<64x16xf32> -> vector<64x16xf32>
    %493 = arith.addf %486, %492 : vector<64x16xf32>
    %c0_284 = arith.constant 0 : index
    %c0_285 = arith.constant 0 : index
    %494 = vector.load %arg6[%c0_284, %c0_285] : memref<64x1xf32, #tpu.memory_space<vmem>>, vector<64x1xf32>
    %495 = vector.broadcast %494 : vector<64x1xf32> to vector<64x16xf32>
    %496 = arith.addf %493, %495 : vector<64x16xf32>
    %497 = arith.addf %496, %1 : vector<64x16xf32>
    %c0_286 = arith.constant 0 : index
    %c0_287 = arith.constant 0 : index
    %c0_288 = arith.constant 0 : index
    %498 = vector.load %arg26[%c0_286, %c0_287, %c0_288] : memref<1x64x16xf32, #tpu.memory_space<vmem>>, vector<1x64x16xf32>
    %499 = vector.shape_cast %498 : vector<1x64x16xf32> to vector<64x16xf32>
    %500 = vector.shape_cast %497 : vector<64x16xf32> to vector<1x64x16xf32>
    tpu.vector_store %arg26[%c0_286, %c0_287, %c0_288], %500 {strides = array<i32>} : memref<1x64x16xf32, #tpu.memory_space<vmem>>, vector<1x64x16xf32>,
    return
  }
  func.func @transform_0(%arg0: i32) -> (i32, i32, i32) {
    %c0_i32 = arith.constant 0 : i32
    %c0_i32_0 = arith.constant 0 : i32
    %c0_i32_1 = arith.constant 0 : i32
    return %arg0, %c0_i32, %c0_i32_0 : i32, i32, i32
  }
  func.func @transform_1(%arg0: i32) -> (i32, i32, i32) {
    %c0_i32 = arith.constant 0 : i32
    %c0_i32_0 = arith.constant 0 : i32
    %c0_i32_1 = arith.constant 0 : i32
    %c0_i32_2 = arith.constant 0 : i32
    return %c0_i32, %c0_i32_0, %c0_i32_1 : i32, i32, i32
  }
  func.func @transform_2(%arg0: i32) -> (i32, i32, i32) {
    %c0_i32 = arith.constant 0 : i32
    %c0_i32_0 = arith.constant 0 : i32
    %c0_i32_1 = arith.constant 0 : i32
    %c0_i32_2 = arith.constant 0 : i32
    return %c0_i32, %c0_i32_0, %c0_i32_1 : i32, i32, i32
  }
  func.func @transform_3(%arg0: i32) -> (i32, i32) {
    %c0_i32 = arith.constant 0 : i32
    %c0_i32_0 = arith.constant 0 : i32
    %c0_i32_1 = arith.constant 0 : i32
    return %c0_i32, %c0_i32_0 : i32, i32
  }
  func.func @transform_4(%arg0: i32) -> (i32, i32, i32) {
    %c0_i32 = arith.constant 0 : i32
    %c0_i32_0 = arith.constant 0 : i32
    %c0_i32_1 = arith.constant 0 : i32
    %c0_i32_2 = arith.constant 0 : i32
    return %c0_i32, %c0_i32_0, %c0_i32_1 : i32, i32, i32
  }
  func.func @transform_5(%arg0: i32) -> (i32, i32) {
    %c0_i32 = arith.constant 0 : i32
    %c0_i32_0 = arith.constant 0 : i32
    %c0_i32_1 = arith.constant 0 : i32
    return %c0_i32, %c0_i32_0 : i32, i32
  }
  func.func @transform_6(%arg0: i32) -> (i32, i32, i32) {
    %c0_i32 = arith.constant 0 : i32
    %c0_i32_0 = arith.constant 0 : i32
    %c0_i32_1 = arith.constant 0 : i32
    %c0_i32_2 = arith.constant 0 : i32
    return %c0_i32, %c0_i32_0, %c0_i32_1 : i32, i32, i32
  }
  func.func @transform_7(%arg0: i32) -> (i32, i32, i32) {
    %c0_i32 = arith.constant 0 : i32
    %c0_i32_0 = arith.constant 0 : i32
    %c0_i32_1 = arith.constant 0 : i32
    %c0_i32_2 = arith.constant 0 : i32
    return %c0_i32, %c0_i32_0, %c0_i32_1 : i32, i32, i32
  }
  func.func @transform_8(%arg0: i32) -> (i32, i32) {
    %c0_i32 = arith.constant 0 : i32
    %c0_i32_0 = arith.constant 0 : i32
    %c0_i32_1 = arith.constant 0 : i32
    return %c0_i32, %c0_i32_0 : i32, i32
  }
  func.func @transform_9(%arg0: i32) -> (i32, i32) {
    %c0_i32 = arith.constant 0 : i32
    %c0_i32_0 = arith.constant 0 : i32
    %c0_i32_1 = arith.constant 0 : i32
    return %c0_i32, %c0_i32_0 : i32, i32
  }
  func.func @transform_10(%arg0: i32) -> (i32, i32) {
    %c0_i32 = arith.constant 0 : i32
    %c0_i32_0 = arith.constant 0 : i32
    %c0_i32_1 = arith.constant 0 : i32
    return %c0_i32, %c0_i32_0 : i32, i32
  }
  func.func @transform_11(%arg0: i32) -> (i32, i32) {
    %c0_i32 = arith.constant 0 : i32
    %c0_i32_0 = arith.constant 0 : i32
    %c0_i32_1 = arith.constant 0 : i32
    return %c0_i32, %c0_i32_0 : i32, i32
  }
  func.func @transform_12(%arg0: i32) -> (i32, i32) {
    %c0_i32 = arith.constant 0 : i32
    %c0_i32_0 = arith.constant 0 : i32
    %c0_i32_1 = arith.constant 0 : i32
    return %c0_i32, %c0_i32_0 : i32, i32
  }
  func.func @transform_13(%arg0: i32) -> (i32, i32, i32) {
    %c0_i32 = arith.constant 0 : i32
    %c0_i32_0 = arith.constant 0 : i32
    %c0_i32_1 = arith.constant 0 : i32
    %c0_i32_2 = arith.constant 0 : i32
    return %c0_i32, %c0_i32_0, %c0_i32_1 : i32, i32, i32
  }
  func.func @transform_14(%arg0: i32) -> (i32, i32, i32) {
    %c0_i32 = arith.constant 0 : i32
    %c0_i32_0 = arith.constant 0 : i32
    %c0_i32_1 = arith.constant 0 : i32
    %c0_i32_2 = arith.constant 0 : i32
    return %c0_i32, %c0_i32_0, %c0_i32_1 : i32, i32, i32
  }
  func.func @transform_15(%arg0: i32) -> (i32, i32) {
    %c0_i32 = arith.constant 0 : i32
    %c0_i32_0 = arith.constant 0 : i32
    %c0_i32_1 = arith.constant 0 : i32
    return %c0_i32, %c0_i32_0 : i32, i32
  }
  func.func @transform_16(%arg0: i32) -> (i32, i32) {
    %c0_i32 = arith.constant 0 : i32
    %c0_i32_0 = arith.constant 0 : i32
    %c0_i32_1 = arith.constant 0 : i32
    return %c0_i32, %c0_i32_0 : i32, i32
  }
  func.func @transform_17(%arg0: i32) -> (i32, i32) {
    %c0_i32 = arith.constant 0 : i32
    %c0_i32_0 = arith.constant 0 : i32
    %c0_i32_1 = arith.constant 0 : i32
    return %c0_i32, %c0_i32_0 : i32, i32
  }
  func.func @transform_18(%arg0: i32) -> (i32, i32) {
    %c0_i32 = arith.constant 0 : i32
    %c0_i32_0 = arith.constant 0 : i32
    %c0_i32_1 = arith.constant 0 : i32
    return %c0_i32, %c0_i32_0 : i32, i32
  }
  func.func @transform_19(%arg0: i32) -> (i32, i32, i32) {
    %c0_i32 = arith.constant 0 : i32
    %c0_i32_0 = arith.constant 0 : i32
    %c0_i32_1 = arith.constant 0 : i32
    %c0_i32_2 = arith.constant 0 : i32
    return %c0_i32, %c0_i32_0, %c0_i32_1 : i32, i32, i32
  }
  func.func @transform_20(%arg0: i32) -> (i32, i32, i32) {
    %c0_i32 = arith.constant 0 : i32
    %c0_i32_0 = arith.constant 0 : i32
    %c0_i32_1 = arith.constant 0 : i32
    %c0_i32_2 = arith.constant 0 : i32
    return %c0_i32, %c0_i32_0, %c0_i32_1 : i32, i32, i32
  }
  func.func @transform_21(%arg0: i32) -> (i32, i32) {
    %c0_i32 = arith.constant 0 : i32
    %c0_i32_0 = arith.constant 0 : i32
    %c0_i32_1 = arith.constant 0 : i32
    return %c0_i32, %c0_i32_0 : i32, i32
  }
  func.func @transform_22(%arg0: i32) -> (i32, i32) {
    %c0_i32 = arith.constant 0 : i32
    %c0_i32_0 = arith.constant 0 : i32
    %c0_i32_1 = arith.constant 0 : i32
    return %c0_i32, %c0_i32_0 : i32, i32
  }
  func.func @transform_23(%arg0: i32) -> (i32, i32) {
    %c0_i32 = arith.constant 0 : i32
    %c0_i32_0 = arith.constant 0 : i32
    %c0_i32_1 = arith.constant 0 : i32
    return %c0_i32, %c0_i32_0 : i32, i32
  }
  func.func @transform_24(%arg0: i32) -> (i32, i32) {
    %c0_i32 = arith.constant 0 : i32
    %c0_i32_0 = arith.constant 0 : i32
    %c0_i32_1 = arith.constant 0 : i32
    return %c0_i32, %c0_i32_0 : i32, i32
  }
  func.func @transform_25(%arg0: i32) -> (i32, i32, i32) {
    %c0_i32 = arith.constant 0 : i32
    %c0_i32_0 = arith.constant 0 : i32
    %c0_i32_1 = arith.constant 0 : i32
    return %arg0, %c0_i32, %c0_i32_0 : i32, i32, i32
  }
}

</mosaic_0001>

<llo_original>
// kernel: tpu_custom_call.1
$region0: #{tpu_custom_call.1}
  #allocation0 [shape = 'u32[]', space=smem, size = 0x4, offset = 0x4, fixed_abs, tag = 'smem constant byte address 0x4 - core index']
  #allocation1 [shape = 'u32[144,128]{1,0:T(1,128)}', space=vmem, size = 0x12000, scoped, tag = 'internal scratch']
  #allocation2 [shape = 'f32[64,16]{1,0:T(8,128)}', space=vmem, size = 0x8000, scoped, tag = 'scratch operand']
  %s0 = inlined_call_operand.vmem [shape: f32[2,64,16], index: 0, kind: input, shape index: {}]
  %s1 = inlined_call_operand.hbm [shape: f32[3,16,16], index: 1, kind: input, shape index: {}]
  %s2 = inlined_call_operand.hbm [shape: f32[3,64,64], index: 2, kind: input, shape index: {}]
  %s3 = inlined_call_operand.vmem [shape: f32[64,1], index: 3, kind: input, shape index: {}]
  %s4 = inlined_call_operand.hbm [shape: f32[3,64,64], index: 4, kind: input, shape index: {}]
  %s5 = inlined_call_operand.vmem [shape: f32[64,1], index: 5, kind: input, shape index: {}]
  %s6 = inlined_call_operand.hbm [shape: f32[2,16,16], index: 6, kind: input, shape index: {}]
  %s7 = inlined_call_operand.hbm [shape: f32[2,64,64], index: 7, kind: input, shape index: {}]
  %s8 = inlined_call_operand.vmem [shape: f32[4,64], index: 8, kind: input, shape index: {}]
  %s9 = inlined_call_operand.vmem [shape: f32[64,4], index: 9, kind: input, shape index: {}]
  %s10 = inlined_call_operand.vmem [shape: f32[64,18], index: 10, kind: input, shape index: {}]
  %s11 = inlined_call_operand.hbm [shape: f32[64,64], index: 11, kind: input, shape index: {}]
  %s12 = inlined_call_operand.vmem [shape: f32[64,1], index: 12, kind: input, shape index: {}]
  %s13 = inlined_call_operand.hbm [shape: f32[11,16,16], index: 13, kind: input, shape index: {}]
  %s14 = inlined_call_operand.vmem [shape: f32[11,32,32], index: 14, kind: input, shape index: {}]
  %s15 = inlined_call_operand.hbm [shape: f32[11,32], index: 15, kind: input, shape index: {}]
  %s16 = inlined_call_operand.hbm [shape: f32[11,32], index: 16, kind: input, shape index: {}]
  %s17 = inlined_call_operand.vmem [shape: f32[32,1], index: 17, kind: input, shape index: {}]
  %s18 = inlined_call_operand.vmem [shape: f32[32,1], index: 18, kind: input, shape index: {}]
  %s19 = inlined_call_operand.vmem [shape: f32[7,16,16], index: 19, kind: input, shape index: {}]
  %s20 = inlined_call_operand.vmem [shape: f32[7,32,32], index: 20, kind: input, shape index: {}]
  %s21 = inlined_call_operand.vmem [shape: f32[7,32], index: 21, kind: input, shape index: {}]
  %s22 = inlined_call_operand.vmem [shape: f32[7,32], index: 22, kind: input, shape index: {}]
  %s23 = inlined_call_operand.vmem [shape: f32[32,1], index: 23, kind: input, shape index: {}]
  %s24 = inlined_call_operand.vmem [shape: f32[32,1], index: 24, kind: input, shape index: {}]
  %s25 = inlined_call_operand.vmem [shape: f32[2,64,16], index: 25, kind: output, shape index: {}]
  %s26 = sld [smem:[#allocation0]]
  $region169: #{tpu_custom_call.1} parent=0
    _
  %s28 = ssub.s32 1, %s26
  %s29 = scalar_select 0, %s28, %s26
  $region1: #{tpu_custom_call.1} parent=0
    #allocation3 [shape = 'u8[24576]{0}', space=vmem, size = 0x6000, scoped, tag = 'input window, operand 1, single buffered']
    #allocation4 [shape = 's32[2]{0}', space=sflag, size = 0x8, scoped, tag = 'scoped memory for tpu_custom_call.1']
    #allocation5 [shape = 'u8[98304]{0}', space=vmem, size = 0x18000, scoped, tag = 'input window, operand 2, single buffered']
    #allocation6 [shape = 's32[1]{0}', space=sflag, size = 0x4, scoped, tag = 'scoped memory for tpu_custom_call.1']
    #allocation7 [shape = 'u8[98304]{0}', space=vmem, size = 0x18000, scoped, tag = 'input window, operand 4, single buffered']
    #allocation8 [shape = 'u8[16384]{0}', space=vmem, size = 0x4000, scoped, tag = 'input window, operand 6, single buffered']
    #allocation9 [shape = 's32[1]{0}', space=sflag, size = 0x4, scoped, tag = 'scoped memory for tpu_custom_call.1']
    #allocation10 [shape = 'u8[65536]{0}', space=vmem, size = 0x10000, scoped, tag = 'input window, operand 7, single buffered']
    #allocation11 [shape = 'u8[32768]{0}', space=vmem, size = 0x8000, scoped, tag = 'input window, operand 11, single buffered']
    #allocation12 [shape = 's32[1]{0}', space=sflag, size = 0x4, scoped, tag = 'scoped memory for tpu_custom_call.1']
    #allocation13 [shape = 'u8[90112]{0}', space=vmem, size = 0x16000, scoped, tag = 'input window, operand 13, single buffered']
    #allocation14 [shape = 'u8[8192]{0}', space=vmem, size = 0x2000, scoped, tag = 'input window, operand 15, single buffered']
    #allocation15 [shape = 's32[1]{0}', space=sflag, size = 0x4, scoped, tag = 'scoped memory for tpu_custom_call.1']
    #allocation16 [shape = 'u8[8192]{0}', space=vmem, size = 0x2000, scoped, tag = 'input window, operand 16, single buffered']
    %30 = vsyncpa [#allocation4], 0
    %31 = vsyncpa [#allocation6], 0
    %32 = vsyncpa [#allocation9], 0
    %33 = vsyncpa [#allocation12], 0
    %34 = vsyncpa [#allocation15], 0
    loop: start=0, step=1, limit=4
    $region2: #{tpu_custom_call.1} parent=1 // loop_pre_header
      _
    $region3: #{tpu_custom_call.1} parent=1 // loop_header
      %s36 = sphi 0, %s40
      %p37 = scmp.ge.s32.totalorder %s36, 4
      %s46 = sphi 0, %s48
      %s49 = sphi 0, %s46
      %s50 = sphi 0, %s49
      %s66 = sphi 0, %s50
      %s70 = sphi 0, %s70
      %s72 = sphi 0, %s70
      %s73 = sphi 0, %s72
      %s87 = sphi 0, %s73
      %s91 = sphi 0, %s91
      %s93 = sphi 0, %s91
      %s94 = sphi 0, %s93
      %s108 = sphi 0, %s94
      %s112 = sphi 0, %s112
      %s114 = sphi 0, %s112
      %s115 = sphi 0, %s114
      %s129 = sphi 0, %s115
      %s133 = sphi 0, %s133
      %s135 = sphi 0, %s133
      %s136 = sphi 0, %s135
      %s150 = sphi 0, %s136
      %s154 = sphi 0, %s154
      %s156 = sphi 0, %s154
      %s157 = sphi 0, %s156
      %s171 = sphi 0, %s157
      %s175 = sphi 0, %s175
      %s177 = sphi 0, %s175
      %s178 = sphi 0, %s177
      %s192 = sphi 0, %s178
      %s196 = sphi 0, %s196
      %s198 = sphi 0, %s196
      %s199 = sphi 0, %s198
      %s213 = sphi 0, %s199
      %s217 = sphi 0, %s217
      %s219 = sphi 0, %s217
      %s220 = sphi 0, %s219
      %s234 = sphi 0, %s220
      %s238 = sphi 0, %s238
      %s240 = sphi 0, %s238
      %s241 = sphi 0, %s240
      %s255 = sphi 0, %s241
      %s259 = sphi 0, %s259
      %s261 = sphi 0, %s259
      %s262 = sphi 0, %s261
      %s276 = sphi 0, %s262
      %s280 = sphi 0, %s280
      %s282 = sphi 0, %s280
      %s283 = sphi 0, %s282
      %s297 = sphi 0, %s283
      %s301 = sphi 0, %s301
      %s303 = sphi 0, %s301
      %s304 = sphi 0, %s303
      %s318 = sphi 0, %s304
      %s322 = sphi 0, %s322
      %s324 = sphi 0, %s322
      %s325 = sphi 0, %s324
      %s339 = sphi 0, %s325
      %s343 = sphi 0, %s343
      %s345 = sphi 0, %s343
      %s346 = sphi 0, %s345
      %s360 = sphi 0, %s346
      %s364 = sphi 0, %s364
      %s366 = sphi 0, %s364
      %s367 = sphi 0, %s366
      %s381 = sphi 0, %s367
      %s385 = sphi 0, %s385
      %s387 = sphi 0, %s385
      %s388 = sphi 0, %s387
      %s402 = sphi 0, %s388
      %s406 = sphi 0, %s406
      %s408 = sphi 0, %s406
      %s409 = sphi 0, %s408
      %s423 = sphi 0, %s409
      %s427 = sphi 0, %s427
      %s429 = sphi 0, %s427
      %s430 = sphi 0, %s429
      %s444 = sphi 0, %s430
      %s448 = sphi 0, %s448
      %s450 = sphi 0, %s448
      %s451 = sphi 0, %s450
      %s465 = sphi 0, %s451
      %s469 = sphi 0, %s469
      %s471 = sphi 0, %s469
      %s472 = sphi 0, %s471
      %s486 = sphi 0, %s472
      %s490 = sphi 0, %s490
      %s492 = sphi 0, %s490
      %s493 = sphi 0, %s492
      %s507 = sphi 0, %s493
      %s511 = sphi 0, %s511
      %s513 = sphi 0, %s511
      %s514 = sphi 0, %s513
      %s528 = sphi 0, %s514
      %s532 = sphi 0, %s532
      %s534 = sphi 0, %s532
      %s535 = sphi 0, %s534
      %s549 = sphi 0, %s535
      %s553 = sphi 0, %s553
      %s555 = sphi 0, %s553
      %s556 = sphi 0, %s555
      %s570 = sphi 0, %s556
      %s576 = sphi 0, %s578
      %s579 = sphi 0, %s576
      %s580 = sphi 0, %s579
      %s596 = sphi 0, %s580
    $region4: #{tpu_custom_call.1} parent=1 // loop_header_branch
      %39 = sbr.rel (%p37) target = $region8
    $region5: #{tpu_custom_call.1} parent=1 // loop_body
      %s41 = ssub.s32 %s36, 1
      %s42 = ssub.s32 %s36, 2
      %s43 = sadd.s32 %s36, 1
      %s44 = ssub.s32 %s36, %s43
      %p45 = scmp.eq.s32.totalorder %s44, 0
      %s47 = sadd.s32 %s46, 1
      %s48 = scalar_select %p45, %s46, %s47
      %p51 = pneg %p45
      %p52 = scmp.eq.s32.totalorder %s36, 1
      %p53 = por %p51, %p52
      %p54 = scmp.ne.s32.totalorder %s46, %s49
      %p55 = scmp.eq.s32.totalorder %s36, 0
      %p56 = por %p54, %p55
      %p57 = scmp.ne.s32.totalorder %s46, %s49
      %p58 = scmp.eq.s32.totalorder %s41, 1
      %p59 = por %p57, %p58
      %p60 = scmp.ne.s32.totalorder %s49, %s50
      %p61 = scmp.eq.s32.totalorder %s41, 0
      %p62 = por %p60, %p61
      %p63 = scmp.ne.s32.totalorder %s49, %s50
      %p64 = scmp.eq.s32.totalorder %s42, 1
      %p65 = por %p63, %p64
      %p67 = scmp.ne.s32.totalorder %s50, %s66
      %p68 = scmp.eq.s32.totalorder %s42, 0
      %p69 = por %p67, %p68
      %s71 = sadd.s32 %s70, 1
      %p74 = scmp.eq.s32.totalorder %s36, 1
      %p75 = scmp.ne.s32.totalorder %s70, %s72
      %p76 = scmp.eq.s32.totalorder %s36, 0
      %p77 = por %p75, %p76
      %p78 = scmp.ne.s32.totalorder %s70, %s72
      %p79 = scmp.eq.s32.totalorder %s41, 1
      %p80 = por %p78, %p79
      %p81 = scmp.ne.s32.totalorder %s72, %s73
      %p82 = scmp.eq.s32.totalorder %s41, 0
      %p83 = por %p81, %p82
      %p84 = scmp.ne.s32.totalorder %s72, %s73
      %p85 = scmp.eq.s32.totalorder %s42, 1
      %p86 = por %p84, %p85
      %p88 = scmp.ne.s32.totalorder %s73, %s87
      %p89 = scmp.eq.s32.totalorder %s42, 0
      %p90 = por %p88, %p89
      %s92 = sadd.s32 %s91, 1
      %p95 = scmp.eq.s32.totalorder %s36, 1
      %p96 = scmp.ne.s32.totalorder %s91, %s93
      %p97 = scmp.eq.s32.totalorder %s36, 0
      %p98 = por %p96, %p97
      %p99 = scmp.ne.s32.totalorder %s91, %s93
      %p100 = scmp.eq.s32.totalorder %s41, 1
      %p101 = por %p99, %p100
      %p102 = scmp.ne.s32.totalorder %s93, %s94
      %p103 = scmp.eq.s32.totalorder %s41, 0
      %p104 = por %p102, %p103
      %p105 = scmp.ne.s32.totalorder %s93, %s94
      %p106 = scmp.eq.s32.totalorder %s42, 1
      %p107 = por %p105, %p106
      %p109 = scmp.ne.s32.totalorder %s94, %s108
      %p110 = scmp.eq.s32.totalorder %s42, 0
      %p111 = por %p109, %p110
      %s113 = sadd.s32 %s112, 1
      %p116 = scmp.eq.s32.totalorder %s36, 1
      %p117 = scmp.ne.s32.totalorder %s112, %s114
      %p118 = scmp.eq.s32.totalorder %s36, 0
      %p119 = por %p117, %p118
      %p120 = scmp.ne.s32.totalorder %s112, %s114
      %p121 = scmp.eq.s32.totalorder %s41, 1
      %p122 = por %p120, %p121
      %p123 = scmp.ne.s32.totalorder %s114, %s115
      %p124 = scmp.eq.s32.totalorder %s41, 0
      %p125 = por %p123, %p124
      %p126 = scmp.ne.s32.totalorder %s114, %s115
      %p127 = scmp.eq.s32.totalorder %s42, 1
      %p128 = por %p126, %p127
      %p130 = scmp.ne.s32.totalorder %s115, %s129
      %p131 = scmp.eq.s32.totalorder %s42, 0
      %p132 = por %p130, %p131
      %s134 = sadd.s32 %s133, 1
      %p137 = scmp.eq.s32.totalorder %s36, 1
      %p138 = scmp.ne.s32.totalorder %s133, %s135
      %p139 = scmp.eq.s32.totalorder %s36, 0
      %p140 = por %p138, %p139
      %p141 = scmp.ne.s32.totalorder %s133, %s135
      %p142 = scmp.eq.s32.totalorder %s41, 1
      %p143 = por %p141, %p142
      %p144 = scmp.ne.s32.totalorder %s135, %s136
      %p145 = scmp.eq.s32.totalorder %s41, 0
      %p146 = por %p144, %p145
      %p147 = scmp.ne.s32.totalorder %s135, %s136
      %p148 = scmp.eq.s32.totalorder %s42, 1
      %p149 = por %p147, %p148
      %p151 = scmp.ne.s32.totalorder %s136, %s150
      %p152 = scmp.eq.s32.totalorder %s42, 0
      %p153 = por %p151, %p152
      %s155 = sadd.s32 %s154, 1
      %p158 = scmp.eq.s32.totalorder %s36, 1
      %p159 = scmp.ne.s32.totalorder %s154, %s156
      %p160 = scmp.eq.s32.totalorder %s36, 0
      %p161 = por %p159, %p160
      %p162 = scmp.ne.s32.totalorder %s154, %s156
      %p163 = scmp.eq.s32.totalorder %s41, 1
      %p164 = por %p162, %p163
      %p165 = scmp.ne.s32.totalorder %s156, %s157
      %p166 = scmp.eq.s32.totalorder %s41, 0
      %p167 = por %p165, %p166
      %p168 = scmp.ne.s32.totalorder %s156, %s157
      %p169 = scmp.eq.s32.totalorder %s42, 1
      %p170 = por %p168, %p169
      %p172 = scmp.ne.s32.totalorder %s157, %s171
      %p173 = scmp.eq.s32.totalorder %s42, 0
      %p174 = por %p172, %p173
      %s176 = sadd.s32 %s175, 1
      %p179 = scmp.eq.s32.totalorder %s36, 1
      %p180 = scmp.ne.s32.totalorder %s175, %s177
      %p181 = scmp.eq.s32.totalorder %s36, 0
      %p182 = por %p180, %p181
      %p183 = scmp.ne.s32.totalorder %s175, %s177
      %p184 = scmp.eq.s32.totalorder %s41, 1
      %p185 = por %p183, %p184
      %p186 = scmp.ne.s32.totalorder %s177, %s178
      %p187 = scmp.eq.s32.totalorder %s41, 0
      %p188 = por %p186, %p187
      %p189 = scmp.ne.s32.totalorder %s177, %s178
      %p190 = scmp.eq.s32.totalorder %s42, 1
      %p191 = por %p189, %p190
      %p193 = scmp.ne.s32.totalorder %s178, %s192
      %p194 = scmp.eq.s32.totalorder %s42, 0
      %p195 = por %p193, %p194
      %s197 = sadd.s32 %s196, 1
      %p200 = scmp.eq.s32.totalorder %s36, 1
      %p201 = scmp.ne.s32.totalorder %s196, %s198
      %p202 = scmp.eq.s32.totalorder %s36, 0
      %p203 = por %p201, %p202
      %p204 = scmp.ne.s32.totalorder %s196, %s198
      %p205 = scmp.eq.s32.totalorder %s41, 1
      %p206 = por %p204, %p205
      %p207 = scmp.ne.s32.totalorder %s198, %s199
      %p208 = scmp.eq.s32.totalorder %s41, 0
      %p209 = por %p207, %p208
      %p210 = scmp.ne.s32.totalorder %s198, %s199
      %p211 = scmp.eq.s32.totalorder %s42, 1
      %p212 = por %p210, %p211
      %p214 = scmp.ne.s32.totalorder %s199, %s213
      %p215 = scmp.eq.s32.totalorder %s42, 0
      %p216 = por %p214, %p215
      %s218 = sadd.s32 %s217, 1
      %p221 = scmp.eq.s32.totalorder %s36, 1
      %p222 = scmp.ne.s32.totalorder %s217, %s219
      %p223 = scmp.eq.s32.totalorder %s36, 0
      %p224 = por %p222, %p223
      %p225 = scmp.ne.s32.totalorder %s217, %s219
      %p226 = scmp.eq.s32.totalorder %s41, 1
      %p227 = por %p225, %p226
      %p228 = scmp.ne.s32.totalorder %s219, %s220
      %p229 = scmp.eq.s32.totalorder %s41, 0
      %p230 = por %p228, %p229
      %p231 = scmp.ne.s32.totalorder %s219, %s220
      %p232 = scmp.eq.s32.totalorder %s42, 1
      %p233 = por %p231, %p232
      %p235 = scmp.ne.s32.totalorder %s220, %s234
      %p236 = scmp.eq.s32.totalorder %s42, 0
      %p237 = por %p235, %p236
      %s239 = sadd.s32 %s238, 1
      %p242 = scmp.eq.s32.totalorder %s36, 1
      %p243 = scmp.ne.s32.totalorder %s238, %s240
      %p244 = scmp.eq.s32.totalorder %s36, 0
      %p245 = por %p243, %p244
      %p246 = scmp.ne.s32.totalorder %s238, %s240
      %p247 = scmp.eq.s32.totalorder %s41, 1
      %p248 = por %p246, %p247
      %p249 = scmp.ne.s32.totalorder %s240, %s241
      %p250 = scmp.eq.s32.totalorder %s41, 0
      %p251 = por %p249, %p250
      %p252 = scmp.ne.s32.totalorder %s240, %s241
      %p253 = scmp.eq.s32.totalorder %s42, 1
      %p254 = por %p252, %p253
      %p256 = scmp.ne.s32.totalorder %s241, %s255
      %p257 = scmp.eq.s32.totalorder %s42, 0
      %p258 = por %p256, %p257
      %s260 = sadd.s32 %s259, 1
      %p263 = scmp.eq.s32.totalorder %s36, 1
      %p264 = scmp.ne.s32.totalorder %s259, %s261
      %p265 = scmp.eq.s32.totalorder %s36, 0
      %p266 = por %p264, %p265
      %p267 = scmp.ne.s32.totalorder %s259, %s261
      %p268 = scmp.eq.s32.totalorder %s41, 1
      %p269 = por %p267, %p268
      %p270 = scmp.ne.s32.totalorder %s261, %s262
      %p271 = scmp.eq.s32.totalorder %s41, 0
      %p272 = por %p270, %p271
      %p273 = scmp.ne.s32.totalorder %s261, %s262
      %p274 = scmp.eq.s32.totalorder %s42, 1
      %p275 = por %p273, %p274
      %p277 = scmp.ne.s32.totalorder %s262, %s276
      %p278 = scmp.eq.s32.totalorder %s42, 0
      %p279 = por %p277, %p278
      %s281 = sadd.s32 %s280, 1
      %p284 = scmp.eq.s32.totalorder %s36, 1
      %p285 = scmp.ne.s32.totalorder %s280, %s282
      %p286 = scmp.eq.s32.totalorder %s36, 0
      %p287 = por %p285, %p286
      %p288 = scmp.ne.s32.totalorder %s280, %s282
      %p289 = scmp.eq.s32.totalorder %s41, 1
      %p290 = por %p288, %p289
      %p291 = scmp.ne.s32.totalorder %s282, %s283
      %p292 = scmp.eq.s32.totalorder %s41, 0
      %p293 = por %p291, %p292
      %p294 = scmp.ne.s32.totalorder %s282, %s283
      %p295 = scmp.eq.s32.totalorder %s42, 1
      %p296 = por %p294, %p295
      %p298 = scmp.ne.s32.totalorder %s283, %s297
      %p299 = scmp.eq.s32.totalorder %s42, 0
      %p300 = por %p298, %p299
      %s302 = sadd.s32 %s301, 1
      %p305 = scmp.eq.s32.totalorder %s36, 1
      %p306 = scmp.ne.s32.totalorder %s301, %s303
      %p307 = scmp.eq.s32.totalorder %s36, 0
      %p308 = por %p306, %p307
      %p309 = scmp.ne.s32.totalorder %s301, %s303
      %p310 = scmp.eq.s32.totalorder %s41, 1
      %p311 = por %p309, %p310
      %p312 = scmp.ne.s32.totalorder %s303, %s304
      %p313 = scmp.eq.s32.totalorder %s41, 0
      %p314 = por %p312, %p313
      %p315 = scmp.ne.s32.totalorder %s303, %s304
      %p316 = scmp.eq.s32.totalorder %s42, 1
      %p317 = por %p315, %p316
      %p319 = scmp.ne.s32.totalorder %s304, %s318
      %p320 = scmp.eq.s32.totalorder %s42, 0
      %p321 = por %p319, %p320
      %s323 = sadd.s32 %s322, 1
      %p326 = scmp.eq.s32.totalorder %s36, 1
      %p327 = scmp.ne.s32.totalorder %s322, %s324
      %p328 = scmp.eq.s32.totalorder %s36, 0
      %p329 = por %p327, %p328
      %p330 = scmp.ne.s32.totalorder %s322, %s324
      %p331 = scmp.eq.s32.totalorder %s41, 1
      %p332 = por %p330, %p331
      %p333 = scmp.ne.s32.totalorder %s324, %s325
      %p334 = scmp.eq.s32.totalorder %s41, 0
      %p335 = por %p333, %p334
      %p336 = scmp.ne.s32.totalorder %s324, %s325
      %p337 = scmp.eq.s32.totalorder %s42, 1
      %p338 = por %p336, %p337
      %p340 = scmp.ne.s32.totalorder %s325, %s339
      %p341 = scmp.eq.s32.totalorder %s42, 0
      %p342 = por %p340, %p341
      %s344 = sadd.s32 %s343, 1
      %p347 = scmp.eq.s32.totalorder %s36, 1
      %p348 = scmp.ne.s32.totalorder %s343, %s345
      %p349 = scmp.eq.s32.totalorder %s36, 0
      %p350 = por %p348, %p349
      %p351 = scmp.ne.s32.totalorder %s343, %s345
      %p352 = scmp.eq.s32.totalorder %s41, 1
      %p353 = por %p351, %p352
      %p354 = scmp.ne.s32.totalorder %s345, %s346
      %p355 = scmp.eq.s32.totalorder %s41, 0
      %p356 = por %p354, %p355
      %p357 = scmp.ne.s32.totalorder %s345, %s346
      %p358 = scmp.eq.s32.totalorder %s42, 1
      %p359 = por %p357, %p358
      %p361 = scmp.ne.s32.totalorder %s346, %s360
      %p362 = scmp.eq.s32.totalorder %s42, 0
      %p363 = por %p361, %p362
      %s365 = sadd.s32 %s364, 1
      %p368 = scmp.eq.s32.totalorder %s36, 1
      %p369 = scmp.ne.s32.totalorder %s364, %s366
      %p370 = scmp.eq.s32.totalorder %s36, 0
      %p371 = por %p369, %p370
      %p372 = scmp.ne.s32.totalorder %s364, %s366
      %p373 = scmp.eq.s32.totalorder %s41, 1
      %p374 = por %p372, %p373
      %p375 = scmp.ne.s32.totalorder %s366, %s367
      %p376 = scmp.eq.s32.totalorder %s41, 0
      %p377 = por %p375, %p376
      %p378 = scmp.ne.s32.totalorder %s366, %s367
      %p379 = scmp.eq.s32.totalorder %s42, 1
      %p380 = por %p378, %p379
      %p382 = scmp.ne.s32.totalorder %s367, %s381
      %p383 = scmp.eq.s32.totalorder %s42, 0
      %p384 = por %p382, %p383
      %s386 = sadd.s32 %s385, 1
      %p389 = scmp.eq.s32.totalorder %s36, 1
      %p390 = scmp.ne.s32.totalorder %s385, %s387
      %p391 = scmp.eq.s32.totalorder %s36, 0
      %p392 = por %p390, %p391
      %p393 = scmp.ne.s32.totalorder %s385, %s387
      %p394 = scmp.eq.s32.totalorder %s41, 1
      %p395 = por %p393, %p394
      %p396 = scmp.ne.s32.totalorder %s387, %s388
      %p397 = scmp.eq.s32.totalorder %s41, 0
      %p398 = por %p396, %p397
      %p399 = scmp.ne.s32.totalorder %s387, %s388
      %p400 = scmp.eq.s32.totalorder %s42, 1
      %p401 = por %p399, %p400
      %p403 = scmp.ne.s32.totalorder %s388, %s402
      %p404 = scmp.eq.s32.totalorder %s42, 0
      %p405 = por %p403, %p404
      %s407 = sadd.s32 %s406, 1
      %p410 = scmp.eq.s32.totalorder %s36, 1
      %p411 = scmp.ne.s32.totalorder %s406, %s408
      %p412 = scmp.eq.s32.totalorder %s36, 0
      %p413 = por %p411, %p412
      %p414 = scmp.ne.s32.totalorder %s406, %s408
      %p415 = scmp.eq.s32.totalorder %s41, 1
      %p416 = por %p414, %p415
      %p417 = scmp.ne.s32.totalorder %s408, %s409
      %p418 = scmp.eq.s32.totalorder %s41, 0
      %p419 = por %p417, %p418
      %p420 = scmp.ne.s32.totalorder %s408, %s409
      %p421 = scmp.eq.s32.totalorder %s42, 1
      %p422 = por %p420, %p421
      %p424 = scmp.ne.s32.totalorder %s409, %s423
      %p425 = scmp.eq.s32.totalorder %s42, 0
      %p426 = por %p424, %p425
      %s428 = sadd.s32 %s427, 1
      %p431 = scmp.eq.s32.totalorder %s36, 1
      %p432 = scmp.ne.s32.totalorder %s427, %s429
      %p433 = scmp.eq.s32.totalorder %s36, 0
      %p434 = por %p432, %p433
      %p435 = scmp.ne.s32.totalorder %s427, %s429
      %p436 = scmp.eq.s32.totalorder %s41, 1
      %p437 = por %p435, %p436
      %p438 = scmp.ne.s32.totalorder %s429, %s430
      %p439 = scmp.eq.s32.totalorder %s41, 0
      %p440 = por %p438, %p439
      %p441 = scmp.ne.s32.totalorder %s429, %s430
      %p442 = scmp.eq.s32.totalorder %s42, 1
      %p443 = por %p441, %p442
      %p445 = scmp.ne.s32.totalorder %s430, %s444
      %p446 = scmp.eq.s32.totalorder %s42, 0
      %p447 = por %p445, %p446
      %s449 = sadd.s32 %s448, 1
      %p452 = scmp.eq.s32.totalorder %s36, 1
      %p453 = scmp.ne.s32.totalorder %s448, %s450
      %p454 = scmp.eq.s32.totalorder %s36, 0
      %p455 = por %p453, %p454
      %p456 = scmp.ne.s32.totalorder %s448, %s450
      %p457 = scmp.eq.s32.totalorder %s41, 1
      %p458 = por %p456, %p457
      %p459 = scmp.ne.s32.totalorder %s450, %s451
      %p460 = scmp.eq.s32.totalorder %s41, 0
      %p461 = por %p459, %p460
      %p462 = scmp.ne.s32.totalorder %s450, %s451
      %p463 = scmp.eq.s32.totalorder %s42, 1
      %p464 = por %p462, %p463
      %p466 = scmp.ne.s32.totalorder %s451, %s465
      %p467 = scmp.eq.s32.totalorder %s42, 0
      %p468 = por %p466, %p467
      %s470 = sadd.s32 %s469, 1
      %p473 = scmp.eq.s32.totalorder %s36, 1
      %p474 = scmp.ne.s32.totalorder %s469, %s471
      %p475 = scmp.eq.s32.totalorder %s36, 0
      %p476 = por %p474, %p475
      %p477 = scmp.ne.s32.totalorder %s469, %s471
      %p478 = scmp.eq.s32.totalorder %s41, 1
      %p479 = por %p477, %p478
      %p480 = scmp.ne.s32.totalorder %s471, %s472
      %p481 = scmp.eq.s32.totalorder %s41, 0
      %p482 = por %p480, %p481
      %p483 = scmp.ne.s32.totalorder %s471, %s472
      %p484 = scmp.eq.s32.totalorder %s42, 1
      %p485 = por %p483, %p484
      %p487 = scmp.ne.s32.totalorder %s472, %s486
      %p488 = scmp.eq.s32.totalorder %s42, 0
      %p489 = por %p487, %p488
      %s491 = sadd.s32 %s490, 1
      %p494 = scmp.eq.s32.totalorder %s36, 1
      %p495 = scmp.ne.s32.totalorder %s490, %s492
      %p496 = scmp.eq.s32.totalorder %s36, 0
      %p497 = por %p495, %p496
      %p498 = scmp.ne.s32.totalorder %s490, %s492
      %p499 = scmp.eq.s32.totalorder %s41, 1
      %p500 = por %p498, %p499
      %p501 = scmp.ne.s32.totalorder %s492, %s493
      %p502 = scmp.eq.s32.totalorder %s41, 0
      %p503 = por %p501, %p502
      %p504 = scmp.ne.s32.totalorder %s492, %s493
      %p505 = scmp.eq.s32.totalorder %s42, 1
      %p506 = por %p504, %p505
      %p508 = scmp.ne.s32.totalorder %s493, %s507
      %p509 = scmp.eq.s32.totalorder %s42, 0
      %p510 = por %p508, %p509
      %s512 = sadd.s32 %s511, 1
      %p515 = scmp.eq.s32.totalorder %s36, 1
      %p516 = scmp.ne.s32.totalorder %s511, %s513
      %p517 = scmp.eq.s32.totalorder %s36, 0
      %p518 = por %p516, %p517
      %p519 = scmp.ne.s32.totalorder %s511, %s513
      %p520 = scmp.eq.s32.totalorder %s41, 1
      %p521 = por %p519, %p520
      %p522 = scmp.ne.s32.totalorder %s513, %s514
      %p523 = scmp.eq.s32.totalorder %s41, 0
      %p524 = por %p522, %p523
      %p525 = scmp.ne.s32.totalorder %s513, %s514
      %p526 = scmp.eq.s32.totalorder %s42, 1
      %p527 = por %p525, %p526
      %p529 = scmp.ne.s32.totalorder %s514, %s528
      %p530 = scmp.eq.s32.totalorder %s42, 0
      %p531 = por %p529, %p530
      %s533 = sadd.s32 %s532, 1
      %p536 = scmp.eq.s32.totalorder %s36, 1
      %p537 = scmp.ne.s32.totalorder %s532, %s534
      %p538 = scmp.eq.s32.totalorder %s36, 0
      %p539 = por %p537, %p538
      %p540 = scmp.ne.s32.totalorder %s532, %s534
      %p541 = scmp.eq.s32.totalorder %s41, 1
      %p542 = por %p540, %p541
      %p543 = scmp.ne.s32.totalorder %s534, %s535
      %p544 = scmp.eq.s32.totalorder %s41, 0
      %p545 = por %p543, %p544
      %p546 = scmp.ne.s32.totalorder %s534, %s535
      %p547 = scmp.eq.s32.totalorder %s42, 1
      %p548 = por %p546, %p547
      %p550 = scmp.ne.s32.totalorder %s535, %s549
      %p551 = scmp.eq.s32.totalorder %s42, 0
      %p552 = por %p550, %p551
      %s554 = sadd.s32 %s553, 1
      %p557 = scmp.eq.s32.totalorder %s36, 1
      %p558 = scmp.ne.s32.totalorder %s553, %s555
      %p559 = scmp.eq.s32.totalorder %s36, 0
      %p560 = por %p558, %p559
      %p561 = scmp.ne.s32.totalorder %s553, %s555
      %p562 = scmp.eq.s32.totalorder %s41, 1
      %p563 = por %p561, %p562
      %p564 = scmp.ne.s32.totalorder %s555, %s556
      %p565 = scmp.eq.s32.totalorder %s41, 0
      %p566 = por %p564, %p565
      %p567 = scmp.ne.s32.totalorder %s555, %s556
      %p568 = scmp.eq.s32.totalorder %s42, 1
      %p569 = por %p567, %p568
      %p571 = scmp.ne.s32.totalorder %s556, %s570
      %p572 = scmp.eq.s32.totalorder %s42, 0
      %p573 = por %p571, %p572
      %s574 = ssub.s32 %s36, %s43
      %p575 = scmp.eq.s32.totalorder %s574, 0
      %s577 = sadd.s32 %s576, 1
      %s578 = scalar_select %p575, %s576, %s577
      %p581 = pneg %p575
      %p582 = scmp.eq.s32.totalorder %s36, 1
      %p583 = por %p581, %p582
      %p584 = scmp.ne.s32.totalorder %s576, %s579
      %p585 = scmp.eq.s32.totalorder %s36, 0
      %p586 = por %p584, %p585
      %p587 = scmp.ne.s32.totalorder %s576, %s579
      %p588 = scmp.eq.s32.totalorder %s41, 1
      %p589 = por %p587, %p588
      %p590 = scmp.ne.s32.totalorder %s579, %s580
      %p591 = scmp.eq.s32.totalorder %s41, 0
      %p592 = por %p590, %p591
      %p593 = scmp.ne.s32.totalorder %s579, %s580
      %p594 = scmp.eq.s32.totalorder %s42, 1
      %p595 = por %p593, %p594
      %p597 = scmp.ne.s32.totalorder %s580, %s596
      %p598 = scmp.eq.s32.totalorder %s42, 0
      %p599 = por %p597, %p598
      %p600 = scmp.le.s32.totalorder 1, %s36
      %p601 = scmp.lt.s32.totalorder %s36, 3
      %p602 = pnand %p600, %p601
      %p603 = pneg %p602
      // Predicated region
      $region9: #{tpu_custom_call.1} parent=5 // pred_check
        _
      $region10: #{tpu_custom_call.1} parent=5 // pred_check_branch
        %605 = sbr.rel (%p602) target = $region12
      $region11: #{tpu_custom_call.1} parent=5 // pred_region
        %s606 = ssub.s32 %s36, 1
        // Predicated region
        $region13: #{tpu_custom_call.1} parent=11 // pred_check
          %p607 = pneg %p83
        $region14: #{tpu_custom_call.1} parent=11 // pred_check_branch
          %609 = sbr.rel (%p607) target = $region16
        $region15: #{tpu_custom_call.1} parent=11 // pred_region
          %s611 = ssub.s32 768, 768
          %612 = vsyncadd [#allocation4], %s611
          %s613 = sshll.u32 [#allocation3], 4
          %s614 = int_to_ptr.vmem [resolvable:$true] %s613
          %619 = dma.hbm_to_vmem [thread:$0]  %s1, 768, %s614, [#allocation4], 128, 128, 8
        $region16: #{tpu_custom_call.1} parent=11 // pred_fallthru
          _
        // Predicated region
        $region17: #{tpu_custom_call.1} parent=11 // pred_check
          %p620 = pneg %p104
        $region18: #{tpu_custom_call.1} parent=11 // pred_check_branch
          %622 = sbr.rel (%p620) target = $region20
        $region19: #{tpu_custom_call.1} parent=11 // pred_region
          %s624 = ssub.s32 3072, 3072
          %625 = vsyncadd [#allocation6], %s624
          %s626 = sshll.u32 [#allocation5], 4
          %s627 = int_to_ptr.vmem [resolvable:$true] %s626
          %632 = dma.hbm_to_vmem [thread:$0]  %s2, 3072, %s627, [#allocation6], 128, 128, 8
        $region20: #{tpu_custom_call.1} parent=11 // pred_fallthru
          _
        // Predicated region
        $region21: #{tpu_custom_call.1} parent=11 // pred_check
          %p633 = pneg %p125
        $region22: #{tpu_custom_call.1} parent=11 // pred_check_branch
          %635 = sbr.rel (%p633) target = $region24
        $region23: #{tpu_custom_call.1} parent=11 // pred_region
          _
        $region24: #{tpu_custom_call.1} parent=11 // pred_fallthru
          _
        // Predicated region
        $region25: #{tpu_custom_call.1} parent=11 // pred_check
          %p636 = pneg %p146
        $region26: #{tpu_custom_call.1} parent=11 // pred_check_branch
          %638 = sbr.rel (%p636) target = $region28
        $region27: #{tpu_custom_call.1} parent=11 // pred_region
          %s640 = ssub.s32 3072, 3072
          %641 = vsyncadd [#allocation6], %s640
          %s642 = sshll.u32 [#allocation7], 4
          %s643 = int_to_ptr.vmem [resolvable:$true] %s642
          %648 = dma.hbm_to_vmem [thread:$0]  %s4, 3072, %s643, [#allocation6], 128, 128, 8
        $region28: #{tpu_custom_call.1} parent=11 // pred_fallthru
          _
        // Predicated region
        $region29: #{tpu_custom_call.1} parent=11 // pred_check
          %p649 = pneg %p167
        $region30: #{tpu_custom_call.1} parent=11 // pred_check_branch
          %651 = sbr.rel (%p649) target = $region32
        $region31: #{tpu_custom_call.1} parent=11 // pred_region
          _
        $region32: #{tpu_custom_call.1} parent=11 // pred_fallthru
          _
        // Predicated region
        $region33: #{tpu_custom_call.1} parent=11 // pred_check
          %p652 = pneg %p188
        $region34: #{tpu_custom_call.1} parent=11 // pred_check_branch
          %654 = sbr.rel (%p652) target = $region36
        $region35: #{tpu_custom_call.1} parent=11 // pred_region
          %s656 = ssub.s32 512, 512
          %657 = vsyncadd [#allocation9], %s656
          %s658 = sshll.u32 [#allocation8], 4
          %s659 = int_to_ptr.vmem [resolvable:$true] %s658
          %664 = dma.hbm_to_vmem [thread:$0]  %s6, 512, %s659, [#allocation9], 128, 128, 8
        $region36: #{tpu_custom_call.1} parent=11 // pred_fallthru
          _
        // Predicated region
        $region37: #{tpu_custom_call.1} parent=11 // pred_check
          %p665 = pneg %p209
        $region38: #{tpu_custom_call.1} parent=11 // pred_check_branch
          %667 = sbr.rel (%p665) target = $region40
        $region39: #{tpu_custom_call.1} parent=11 // pred_region
          %s669 = ssub.s32 2048, 2048
          %670 = vsyncadd [#allocation9], %s669
          %s671 = sshll.u32 [#allocation10], 4
          %s672 = int_to_ptr.vmem [resolvable:$true] %s671
          %677 = dma.hbm_to_vmem [thread:$0]  %s7, 2048, %s672, [#allocation9], 128, 128, 8
        $region40: #{tpu_custom_call.1} parent=11 // pred_fallthru
          _
        // Predicated region
        $region41: #{tpu_custom_call.1} parent=11 // pred_check
          %p678 = pneg %p230
        $region42: #{tpu_custom_call.1} parent=11 // pred_check_branch
          %680 = sbr.rel (%p678) target = $region44
        $region43: #{tpu_custom_call.1} parent=11 // pred_region
          _
        $region44: #{tpu_custom_call.1} parent=11 // pred_fallthru
          _
        // Predicated region
        $region45: #{tpu_custom_call.1} parent=11 // pred_check
          %p681 = pneg %p251
        $region46: #{tpu_custom_call.1} parent=11 // pred_check_branch
          %683 = sbr.rel (%p681) target = $region48
        $region47: #{tpu_custom_call.1} parent=11 // pred_region
          _
        $region48: #{tpu_custom_call.1} parent=11 // pred_fallthru
          _
        // Predicated region
        $region49: #{tpu_custom_call.1} parent=11 // pred_check
          %p684 = pneg %p272
        $region50: #{tpu_custom_call.1} parent=11 // pred_check_branch
          %686 = sbr.rel (%p684) target = $region52
        $region51: #{tpu_custom_call.1} parent=11 // pred_region
          _
        $region52: #{tpu_custom_call.1} parent=11 // pred_fallthru
          _
        // Predicated region
        $region53: #{tpu_custom_call.1} parent=11 // pred_check
          %p687 = pneg %p293
        $region54: #{tpu_custom_call.1} parent=11 // pred_check_branch
          %689 = sbr.rel (%p687) target = $region56
        $region55: #{tpu_custom_call.1} parent=11 // pred_region
          %s691 = ssub.s32 1024, 1024
          %692 = vsyncadd [#allocation12], %s691
          %s693 = sshll.u32 [#allocation11], 4
          %s694 = int_to_ptr.vmem [resolvable:$true] %s693
          %699 = dma.hbm_to_vmem [thread:$0]  %s11, 1024, %s694, [#allocation12], 128, 128, 8
        $region56: #{tpu_custom_call.1} parent=11 // pred_fallthru
          _
        // Predicated region
        $region57: #{tpu_custom_call.1} parent=11 // pred_check
          %p700 = pneg %p314
        $region58: #{tpu_custom_call.1} parent=11 // pred_check_branch
          %702 = sbr.rel (%p700) target = $region60
        $region59: #{tpu_custom_call.1} parent=11 // pred_region
          _
        $region60: #{tpu_custom_call.1} parent=11 // pred_fallthru
          _
        // Predicated region
        $region61: #{tpu_custom_call.1} parent=11 // pred_check
          %p703 = pneg %p335
        $region62: #{tpu_custom_call.1} parent=11 // pred_check_branch
          %705 = sbr.rel (%p703) target = $region64
        $region63: #{tpu_custom_call.1} parent=11 // pred_region
          %s707 = ssub.s32 2816, 2816
          %708 = vsyncadd [#allocation12], %s707
          %s709 = sshll.u32 [#allocation13], 4
          %s710 = int_to_ptr.vmem [resolvable:$true] %s709
          %715 = dma.hbm_to_vmem [thread:$0]  %s13, 2816, %s710, [#allocation12], 128, 128, 8
        $region64: #{tpu_custom_call.1} parent=11 // pred_fallthru
          _
        // Predicated region
        $region65: #{tpu_custom_call.1} parent=11 // pred_check
          %p716 = pneg %p356
        $region66: #{tpu_custom_call.1} parent=11 // pred_check_branch
          %718 = sbr.rel (%p716) target = $region68
        $region67: #{tpu_custom_call.1} parent=11 // pred_region
          _
        $region68: #{tpu_custom_call.1} parent=11 // pred_fallthru
          _
        // Predicated region
        $region69: #{tpu_custom_call.1} parent=11 // pred_check
          %p719 = pneg %p377
        $region70: #{tpu_custom_call.1} parent=11 // pred_check_branch
          %721 = sbr.rel (%p719) target = $region72
        $region71: #{tpu_custom_call.1} parent=11 // pred_region
          %s723 = ssub.s32 256, 256
          %724 = vsyncadd [#allocation15], %s723
          %s725 = sshll.u32 [#allocation14], 4
          %s726 = int_to_ptr.vmem [resolvable:$true] %s725
          %731 = dma.hbm_to_vmem [thread:$0]  %s15, 256, %s726, [#allocation15], 128, 128, 8
        $region72: #{tpu_custom_call.1} parent=11 // pred_fallthru
          _
        // Predicated region
        $region73: #{tpu_custom_call.1} parent=11 // pred_check
          %p732 = pneg %p398
        $region74: #{tpu_custom_call.1} parent=11 // pred_check_branch
          %734 = sbr.rel (%p732) target = $region76
        $region75: #{tpu_custom_call.1} parent=11 // pred_region
          %s736 = ssub.s32 256, 256
          %737 = vsyncadd [#allocation15], %s736
          %s738 = sshll.u32 [#allocation16], 4
          %s739 = int_to_ptr.vmem [resolvable:$true] %s738
          %744 = dma.hbm_to_vmem [thread:$0]  %s16, 256, %s739, [#allocation15], 128, 128, 8
        $region76: #{tpu_custom_call.1} parent=11 // pred_fallthru
          _
        // Predicated region
        $region77: #{tpu_custom_call.1} parent=11 // pred_check
          %p745 = pneg %p419
        $region78: #{tpu_custom_call.1} parent=11 // pred_check_branch
          %747 = sbr.rel (%p745) target = $region80
        $region79: #{tpu_custom_call.1} parent=11 // pred_region
          _
        $region80: #{tpu_custom_call.1} parent=11 // pred_fallthru
          _
        // Predicated region
        $region81: #{tpu_custom_call.1} parent=11 // pred_check
          %p748 = pneg %p440
        $region82: #{tpu_custom_call.1} parent=11 // pred_check_branch
          %750 = sbr.rel (%p748) target = $region84
        $region83: #{tpu_custom_call.1} parent=11 // pred_region
          _
        $region84: #{tpu_custom_call.1} parent=11 // pred_fallthru
          _
        // Predicated region
        $region85: #{tpu_custom_call.1} parent=11 // pred_check
          %p751 = pneg %p461
        $region86: #{tpu_custom_call.1} parent=11 // pred_check_branch
          %753 = sbr.rel (%p751) target = $region88
        $region87: #{tpu_custom_call.1} parent=11 // pred_region
          _
        $region88: #{tpu_custom_call.1} parent=11 // pred_fallthru
          _
        // Predicated region
        $region89: #{tpu_custom_call.1} parent=11 // pred_check
          %p754 = pneg %p482
        $region90: #{tpu_custom_call.1} parent=11 // pred_check_branch
          %756 = sbr.rel (%p754) target = $region92
        $region91: #{tpu_custom_call.1} parent=11 // pred_region
          _
        $region92: #{tpu_custom_call.1} parent=11 // pred_fallthru
          _
        // Predicated region
        $region93: #{tpu_custom_call.1} parent=11 // pred_check
          %p757 = pneg %p503
        $region94: #{tpu_custom_call.1} parent=11 // pred_check_branch
          %759 = sbr.rel (%p757) target = $region96
        $region95: #{tpu_custom_call.1} parent=11 // pred_region
          _
        $region96: #{tpu_custom_call.1} parent=11 // pred_fallthru
          _
        // Predicated region
        $region97: #{tpu_custom_call.1} parent=11 // pred_check
          %p760 = pneg %p524
        $region98: #{tpu_custom_call.1} parent=11 // pred_check_branch
          %762 = sbr.rel (%p760) target = $region100
        $region99: #{tpu_custom_call.1} parent=11 // pred_region
          _
        $region100: #{tpu_custom_call.1} parent=11 // pred_fallthru
          _
        // Predicated region
        $region101: #{tpu_custom_call.1} parent=11 // pred_check
          %p763 = pneg %p545
        $region102: #{tpu_custom_call.1} parent=11 // pred_check_branch
          %765 = sbr.rel (%p763) target = $region104
        $region103: #{tpu_custom_call.1} parent=11 // pred_region
          _
        $region104: #{tpu_custom_call.1} parent=11 // pred_fallthru
          _
        // Predicated region
        $region105: #{tpu_custom_call.1} parent=11 // pred_check
          %p766 = pneg %p566
        $region106: #{tpu_custom_call.1} parent=11 // pred_check_branch
          %768 = sbr.rel (%p766) target = $region108
        $region107: #{tpu_custom_call.1} parent=11 // pred_region
          _
        $region108: #{tpu_custom_call.1} parent=11 // pred_fallthru
          _
      $region12: #{tpu_custom_call.1} parent=5 // pred_fallthru
        _
      %p769 = scmp.lt.s32.totalorder %s36, 2
      // Predicated region
      $region109: #{tpu_custom_call.1} parent=5 // pred_check
        %p770 = pneg %p769
      $region110: #{tpu_custom_call.1} parent=5 // pred_check_branch
        %772 = sbr.rel (%p770) target = $region112
      $region111: #{tpu_custom_call.1} parent=5 // pred_region
        // Predicated region
        $region113: #{tpu_custom_call.1} parent=111 // pred_check
          %p773 = pneg %p56
        $region114: #{tpu_custom_call.1} parent=111 // pred_check_branch
          %775 = sbr.rel (%p773) target = $region116
        $region115: #{tpu_custom_call.1} parent=111 // pred_region
          %p776 = scmp.lt.s32.totalorder %s36, 1
          %s777 = scalar_select %p776, %s36, 1
          %s778 = smul.addr %s777, 8
          %s779 = smul.addr %s778, 8
          %s780 = scalar_lea.vmem %s0, %s779
        $region116: #{tpu_custom_call.1} parent=111 // pred_fallthru
          _
      $region112: #{tpu_custom_call.1} parent=5 // pred_fallthru
        _
      %p781 = scmp.le.s32.totalorder 1, %s36
      %p782 = scmp.lt.s32.totalorder %s36, 3
      %p783 = pnand %p781, %p782
      %p784 = pneg %p783
      // Predicated region
      $region117: #{tpu_custom_call.1} parent=5 // pred_check
        _
      $region118: #{tpu_custom_call.1} parent=5 // pred_check_branch
        %786 = sbr.rel (%p783) target = $region120
      $region119: #{tpu_custom_call.1} parent=5 // pred_region
        %s787 = ssub.s32 %s36, 1
        // Predicated region
        $region121: #{tpu_custom_call.1} parent=119 // pred_check
          %p788 = pneg %p83
        $region122: #{tpu_custom_call.1} parent=119 // pred_check_branch
          %790 = sbr.rel (%p788) target = $region124
        $region123: #{tpu_custom_call.1} parent=119 // pred_region
          %791 = dma.done [#allocation4], 768
        $region124: #{tpu_custom_call.1} parent=119 // pred_fallthru
          _
        // Predicated region
        $region125: #{tpu_custom_call.1} parent=119 // pred_check
          %p792 = pneg %p104
        $region126: #{tpu_custom_call.1} parent=119 // pred_check_branch
          %794 = sbr.rel (%p792) target = $region128
        $region127: #{tpu_custom_call.1} parent=119 // pred_region
          %795 = dma.done [#allocation6], 3072
        $region128: #{tpu_custom_call.1} parent=119 // pred_fallthru
          _
        // Predicated region
        $region129: #{tpu_custom_call.1} parent=119 // pred_check
          %p796 = pneg %p146
        $region130: #{tpu_custom_call.1} parent=119 // pred_check_branch
          %798 = sbr.rel (%p796) target = $region132
        $region131: #{tpu_custom_call.1} parent=119 // pred_region
          %799 = dma.done [#allocation6], 3072
        $region132: #{tpu_custom_call.1} parent=119 // pred_fallthru
          _
        // Predicated region
        $region133: #{tpu_custom_call.1} parent=119 // pred_check
          %p800 = pneg %p188
        $region134: #{tpu_custom_call.1} parent=119 // pred_check_branch
          %802 = sbr.rel (%p800) target = $region136
        $region135: #{tpu_custom_call.1} parent=119 // pred_region
          %803 = dma.done [#allocation9], 512
        $region136: #{tpu_custom_call.1} parent=119 // pred_fallthru
          _
        // Predicated region
        $region137: #{tpu_custom_call.1} parent=119 // pred_check
          %p804 = pneg %p209
        $region138: #{tpu_custom_call.1} parent=119 // pred_check_branch
          %806 = sbr.rel (%p804) target = $region140
        $region139: #{tpu_custom_call.1} parent=119 // pred_region
          %807 = dma.done [#allocation9], 2048
        $region140: #{tpu_custom_call.1} parent=119 // pred_fallthru
          _
        // Predicated region
        $region141: #{tpu_custom_call.1} parent=119 // pred_check
          %p808 = pneg %p293
        $region142: #{tpu_custom_call.1} parent=119 // pred_check_branch
          %810 = sbr.rel (%p808) target = $region144
        $region143: #{tpu_custom_call.1} parent=119 // pred_region
          %811 = dma.done [#allocation12], 1024
        $region144: #{tpu_custom_call.1} parent=119 // pred_fallthru
          _
        // Predicated region
        $region145: #{tpu_custom_call.1} parent=119 // pred_check
          %p812 = pneg %p335
        $region146: #{tpu_custom_call.1} parent=119 // pred_check_branch
          %814 = sbr.rel (%p812) target = $region148
        $region147: #{tpu_custom_call.1} parent=119 // pred_region
          %815 = dma.done [#allocation12], 2816
        $region148: #{tpu_custom_call.1} parent=119 // pred_fallthru
          _
        // Predicated region
        $region149: #{tpu_custom_call.1} parent=119 // pred_check
          %p816 = pneg %p377
        $region150: #{tpu_custom_call.1} parent=119 // pred_check_branch
          %818 = sbr.rel (%p816) target = $region152
        $region151: #{tpu_custom_call.1} parent=119 // pred_region
          %819 = dma.done [#allocation15], 256
        $region152: #{tpu_custom_call.1} parent=119 // pred_fallthru
          _
        // Predicated region
        $region153: #{tpu_custom_call.1} parent=119 // pred_check
          %p820 = pneg %p398
        $region154: #{tpu_custom_call.1} parent=119 // pred_check_branch
          %822 = sbr.rel (%p820) target = $region156
        $region155: #{tpu_custom_call.1} parent=119 // pred_region
          %823 = dma.done [#allocation15], 256
        $region156: #{tpu_custom_call.1} parent=119 // pred_fallthru
          _
        %p824 = scmp.lt.s32.totalorder %s41, 1
        %s825 = scalar_select %p824, %s41, 1
        %s826 = smul.addr %s825, 8
        %s827 = smul.addr %s826, 8
        %s828 = scalar_lea.vmem %s0, %s827
        %p829 = pneg %p62
        %p830 = pneg %p59
        %p831 = pneg %p83
        %p832 = pneg %p80
        %p833 = pneg %p104
        %p834 = pneg %p101
        %p835 = pneg %p125
        %p836 = pneg %p122
        %p837 = pneg %p146
        %p838 = pneg %p143
        %p839 = pneg %p167
        %p840 = pneg %p164
        %p841 = pneg %p188
        %p842 = pneg %p185
        %p843 = pneg %p209
        %p844 = pneg %p206
        %p845 = pneg %p230
        %p846 = pneg %p227
        %p847 = pneg %p251
        %p848 = pneg %p248
        %p849 = pneg %p272
        %p850 = pneg %p269
        %p851 = pneg %p293
        %p852 = pneg %p290
        %p853 = pneg %p314
        %p854 = pneg %p311
        %p855 = pneg %p335
        %p856 = pneg %p332
        %p857 = pneg %p356
        %p858 = pneg %p353
        %p859 = pneg %p377
        %p860 = pneg %p374
        %p861 = pneg %p398
        %p862 = pneg %p395
        %p863 = pneg %p419
        %p864 = pneg %p416
        %p865 = pneg %p440
        %p866 = pneg %p437
        %p867 = pneg %p461
        %p868 = pneg %p458
        %p869 = pneg %p482
        %p870 = pneg %p479
        %p871 = pneg %p503
        %p872 = pneg %p500
        %p873 = pneg %p524
        %p874 = pneg %p521
        %p875 = pneg %p545
        %p876 = pneg %p542
        %p877 = pneg %p566
        %p878 = pneg %p563
        %p879 = pneg %p592
        %p880 = pneg %p589
        %p881 = scmp.lt.s32.totalorder %s41, 1
        %s882 = scalar_select %p881, %s41, 1
        %s883 = smul.addr %s882, 8
        %s884 = smul.addr %s883, 8
        %s885 = scalar_lea.vmem %s25, %s884
        %p886 = scmp.lt.s32.totalorder %s41, 1
        %s887 = scalar_select %p886, %s41, 1
        %s888 = smul.addr %s887, 8
        %s889 = smul.addr %s888, 8
        %s890 = scalar_lea.vmem %s0, %s889
        %p891 = scmp.lt.s32.totalorder %s41, 1
        %s892 = scalar_select %p891, %s41, 1
        %s893 = smul.addr %s892, 8
        %s894 = smul.addr %s893, 8
        %s895 = scalar_lea.vmem %s25, %s894
        %v896 = vld [vmem:[%s890] sm:$0xff]
        %v897 = vld [vmem:[%s890 + $0x8] sm:$0xff]
        %v898 = vld [vmem:[%s890 + $0x10] sm:$0xff]
        %v899 = vld [vmem:[%s890 + $0x18] sm:$0xff]
        %v900 = vld [vmem:[%s890 + $0x20] sm:$0xff]
        %v901 = vld [vmem:[%s890 + $0x28] sm:$0xff]
        %v902 = vld [vmem:[%s890 + $0x30] sm:$0xff]
        %v903 = vld [vmem:[%s890 + $0x38] sm:$0xff]
        %v904 = vld [vmem:[#allocation3] sm:$0xff]
        %v905 = vld [vmem:[#allocation3 + $0x8] sm:$0xff]
        %vm906 = vcmask 130048
        %v908 = vsel %vm906, %v896, 0
        %v911 = vsel %vm906, %v897, 0
        %v914 = vsel %vm906, %v898, 0
        %v917 = vsel %vm906, %v899, 0
        %v920 = vsel %vm906, %v900, 0
        %v923 = vsel %vm906, %v901, 0
        %v926 = vsel %vm906, %v902, 0
        %v929 = vsel %vm906, %v903, 0
        %931 = vmatprep.subr.mxu0 0.0
        %932 = vmatpush1.msra.mxu0 %v904
        %933 = vmatprep.subr.mxu0 0.0
        %934 = vmatpush1.msra.mxu0 %v905
        %935 = vmatprep.subr.mxu0 0.0
        %936 = vmatpush1.msra.mxu0 0.0
        %937 = vmatprep.subr.mxu0 0.0
        %938 = vmatpush1.msra.mxu0 0.0
        %939 = vmatprep.subr.mxu0 0.0
        %940 = vmatpush1.msra.mxu0 0.0
        %941 = vmatprep.subr.mxu0 0.0
        %942 = vmatpush1.msra.mxu0 0.0
        %943 = vmatprep.subr.mxu0 0.0
        %944 = vmatpush1.msra.mxu0 0.0
        %945 = vmatprep.subr.mxu0 0.0
        %946 = vmatpush1.msra.mxu0 0.0
        %947 = vmatprep.subr.mxu0 0.0
        %948 = vmatpush1.msra.mxu0 0.0
        %949 = vmatprep.subr.mxu0 0.0
        %950 = vmatpush1.msra.mxu0 0.0
        %951 = vmatprep.subr.mxu0 0.0
        %952 = vmatpush1.msra.mxu0 0.0
        %953 = vmatprep.subr.mxu0 0.0
        %954 = vmatpush1.msra.mxu0 0.0
        %955 = vmatprep.subr.mxu0 0.0
        %956 = vmatpush1.msra.mxu0 0.0
        %957 = vmatprep.subr.mxu0 0.0
        %958 = vmatpush1.msra.mxu0 0.0
        %959 = vmatprep.subr.mxu0 0.0
        %960 = vmatpush1.msra.mxu0 0.0
        %961 = vmatprep.subr.mxu0 0.0
        %962 = vmatpush1.msra.mxu0 0.0
        %963 = vmatprep.subr.mxu0 0.0
        %964 = vmatpush1.msra.mxu0 0.0
        %965 = vmatprep.subr.mxu0 0.0
        %966 = vmatpush1.msra.mxu0 0.0
        %967 = vmatprep.subr.mxu0 0.0
        %968 = vmatpush1.msra.mxu0 0.0
        %969 = vmatprep.subr.mxu0 0.0
        %970 = vmatpush1.msra.mxu0 0.0
        %971 = vmatprep.subr.mxu0 0.0
        %972 = vmatpush1.msra.mxu0 0.0
        %973 = vmatprep.subr.mxu0 0.0
        %974 = vmatpush1.msra.mxu0 0.0
        %975 = vmatprep.subr.mxu0 0.0
        %976 = vmatpush1.msra.mxu0 0.0
        %977 = vmatprep.subr.mxu0 0.0
        %978 = vmatpush1.msra.mxu0 0.0
        %979 = vmatprep.subr.mxu0 0.0
        %980 = vmatpush1.msra.mxu0 0.0
        %981 = vmatprep.subr.mxu0 0.0
        %982 = vmatpush1.msra.mxu0 0.0
        %983 = vmatprep.subr.mxu0 0.0
        %984 = vmatpush1.msra.mxu0 0.0
        %985 = vmatprep.subr.mxu0 0.0
        %986 = vmatpush1.msra.mxu0 0.0
        %987 = vmatprep.subr.mxu0 0.0
        %988 = vmatpush1.msra.mxu0 0.0
        %989 = vmatprep.subr.mxu0 0.0
        %990 = vmatpush1.msra.mxu0 0.0
        %991 = vmatprep.subr.mxu0 0.0
        %992 = vmatpush1.msra.mxu0 0.0
        %993 = vmatprep.subr.mxu0 0.0
        %994 = vmatpush1.msra.mxu0 0.0
        %995 = vmatprep.mubr.f32.mxu0 0.0
        %996 = vmatmul.mubr.f32.gmra.mrb[0].mxu0 %v908
        %v997 = vpop.f32.mrb[0].mxu0
        %v998 = vadd.f32 0.0, %v997
        %v999 = vpop.f32.mrb[0].mxu0
        %1000 = vmatprep.mubr.f32.mxu0 0.0
        %1001 = vmatmul.mubr.f32.gmra.mrb[0].mxu0 %v911
        %v1002 = vpop.f32.mrb[0].mxu0
        %v1003 = vadd.f32 0.0, %v1002
        %v1004 = vpop.f32.mrb[0].mxu0
        %1005 = vmatprep.mubr.f32.mxu0 0.0
        %1006 = vmatmul.mubr.f32.gmra.mrb[0].mxu0 %v914
        %v1007 = vpop.f32.mrb[0].mxu0
        %v1008 = vadd.f32 0.0, %v1007
        %v1009 = vpop.f32.mrb[0].mxu0
        %1010 = vmatprep.mubr.f32.mxu0 0.0
        %1011 = vmatmul.mubr.f32.gmra.mrb[0].mxu0 %v917
        %v1012 = vpop.f32.mrb[0].mxu0
        %v1013 = vadd.f32 0.0, %v1012
        %v1014 = vpop.f32.mrb[0].mxu0
        %1015 = vmatprep.mubr.f32.mxu0 0.0
        %1016 = vmatmul.mubr.f32.gmra.mrb[0].mxu0 %v920
        %v1017 = vpop.f32.mrb[0].mxu0
        %v1018 = vadd.f32 0.0, %v1017
        %v1019 = vpop.f32.mrb[0].mxu0
        %1020 = vmatprep.mubr.f32.mxu0 0.0
        %1021 = vmatmul.mubr.f32.gmra.mrb[0].mxu0 %v923
        %v1022 = vpop.f32.mrb[0].mxu0
        %v1023 = vadd.f32 0.0, %v1022
        %v1024 = vpop.f32.mrb[0].mxu0
        %1025 = vmatprep.mubr.f32.mxu0 0.0
        %1026 = vmatmul.mubr.f32.gmra.mrb[0].mxu0 %v926
        %v1027 = vpop.f32.mrb[0].mxu0
        %v1028 = vadd.f32 0.0, %v1027
        %v1029 = vpop.f32.mrb[0].mxu0
        %1030 = vmatprep.mubr.f32.mxu0 0.0
        %1031 = vmatmul.mubr.f32.gmra.mrb[0].mxu0 %v929
        %v1032 = vpop.f32.mrb[0].mxu0
        %v1033 = vadd.f32 0.0, %v1032
        %v1034 = vpop.f32.mrb[0].mxu0
        %1035 = vdwg.mxu0
        %v1036 = vld [vmem:[#allocation5] sm:$0xff]
        %v1037 = vld [vmem:[#allocation5 + $0x8] sm:$0xff]
        %v1038 = vld [vmem:[#allocation5 + $0x10] sm:$0xff]
        %v1039 = vld [vmem:[#allocation5 + $0x18] sm:$0xff]
        %v1040 = vld [vmem:[#allocation5 + $0x20] sm:$0xff]
        %v1041 = vld [vmem:[#allocation5 + $0x28] sm:$0xff]
        %v1042 = vld [vmem:[#allocation5 + $0x30] sm:$0xff]
        %v1043 = vld [vmem:[#allocation5 + $0x38] sm:$0xff]
        %s1044 = scalar_lea.vmem [#allocation3], 16
        %v1045 = vld [vmem:[%s1044] sm:$0xff]
        %v1046 = vld [vmem:[%s1044 + $0x8] sm:$0xff]
        %1047 = vmatprep.subr.mxu0 0.0
        %1048 = vmatpush1.msra.mxu0 %v1045
        %1049 = vmatprep.subr.mxu0 0.0
        %1050 = vmatpush1.msra.mxu0 %v1046
        %1051 = vmatprep.subr.mxu0 0.0
        %1052 = vmatpush1.msra.mxu0 0.0
        %1053 = vmatprep.subr.mxu0 0.0
        %1054 = vmatpush1.msra.mxu0 0.0
        %1055 = vmatprep.subr.mxu0 0.0
        %1056 = vmatpush1.msra.mxu0 0.0
        %1057 = vmatprep.subr.mxu0 0.0
        %1058 = vmatpush1.msra.mxu0 0.0
        %1059 = vmatprep.subr.mxu0 0.0
        %1060 = vmatpush1.msra.mxu0 0.0
        %1061 = vmatprep.subr.mxu0 0.0
        %1062 = vmatpush1.msra.mxu0 0.0
        %1063 = vmatprep.subr.mxu0 0.0
        %1064 = vmatpush1.msra.mxu0 0.0
        %1065 = vmatprep.subr.mxu0 0.0
        %1066 = vmatpush1.msra.mxu0 0.0
        %1067 = vmatprep.subr.mxu0 0.0
        %1068 = vmatpush1.msra.mxu0 0.0
        %1069 = vmatprep.subr.mxu0 0.0
        %1070 = vmatpush1.msra.mxu0 0.0
        %1071 = vmatprep.subr.mxu0 0.0
        %1072 = vmatpush1.msra.mxu0 0.0
        %1073 = vmatprep.subr.mxu0 0.0
        %1074 = vmatpush1.msra.mxu0 0.0
        %1075 = vmatprep.subr.mxu0 0.0
        %1076 = vmatpush1.msra.mxu0 0.0
        %1077 = vmatprep.subr.mxu0 0.0
        %1078 = vmatpush1.msra.mxu0 0.0
        %1079 = vmatprep.subr.mxu0 0.0
        %1080 = vmatpush1.msra.mxu0 0.0
        %1081 = vmatprep.subr.mxu0 0.0
        %1082 = vmatpush1.msra.mxu0 0.0
        %1083 = vmatprep.subr.mxu0 0.0
        %1084 = vmatpush1.msra.mxu0 0.0
        %1085 = vmatprep.subr.mxu0 0.0
        %1086 = vmatpush1.msra.mxu0 0.0
        %1087 = vmatprep.subr.mxu0 0.0
        %1088 = vmatpush1.msra.mxu0 0.0
        %1089 = vmatprep.subr.mxu0 0.0
        %1090 = vmatpush1.msra.mxu0 0.0
        %1091 = vmatprep.subr.mxu0 0.0
        %1092 = vmatpush1.msra.mxu0 0.0
        %1093 = vmatprep.subr.mxu0 0.0
        %1094 = vmatpush1.msra.mxu0 0.0
        %1095 = vmatprep.subr.mxu0 0.0
        %1096 = vmatpush1.msra.mxu0 0.0
        %1097 = vmatprep.subr.mxu0 0.0
        %1098 = vmatpush1.msra.mxu0 0.0
        %1099 = vmatprep.subr.mxu0 0.0
        %1100 = vmatpush1.msra.mxu0 0.0
        %1101 = vmatprep.subr.mxu0 0.0
        %1102 = vmatpush1.msra.mxu0 0.0
        %1103 = vmatprep.subr.mxu0 0.0
        %1104 = vmatpush1.msra.mxu0 0.0
        %1105 = vmatprep.subr.mxu0 0.0
        %1106 = vmatpush1.msra.mxu0 0.0
        %1107 = vmatprep.subr.mxu0 0.0
        %1108 = vmatpush1.msra.mxu0 0.0
        %1109 = vmatprep.subr.mxu0 0.0
        %1110 = vmatpush1.msra.mxu0 0.0
        %1111 = vmatprep.mubr.f32.mxu0 0.0
        %1112 = vmatmul.mubr.f32.gmra.mrb[0].mxu0 %v908
        %v1113 = vpop.f32.mrb[0].mxu0
        %v1114 = vadd.f32 0.0, %v1113
        %v1115 = vpop.f32.mrb[0].mxu0
        %1116 = vmatprep.mubr.f32.mxu0 0.0
        %1117 = vmatmul.mubr.f32.gmra.mrb[0].mxu0 %v911
        %v1118 = vpop.f32.mrb[0].mxu0
        %v1119 = vadd.f32 0.0, %v1118
        %v1120 = vpop.f32.mrb[0].mxu0
        %1121 = vmatprep.mubr.f32.mxu0 0.0
        %1122 = vmatmul.mubr.f32.gmra.mrb[0].mxu0 %v914
        %v1123 = vpop.f32.mrb[0].mxu0
        %v1124 = vadd.f32 0.0, %v1123
        %v1125 = vpop.f32.mrb[0].mxu0
        %1126 = vmatprep.mubr.f32.mxu0 0.0
        %1127 = vmatmul.mubr.f32.gmra.mrb[0].mxu0 %v917
        %v1128 = vpop.f32.mrb[0].mxu0
        %v1129 = vadd.f32 0.0, %v1128
        %v1130 = vpop.f32.mrb[0].mxu0
        %1131 = vmatprep.mubr.f32.mxu0 0.0
        %1132 = vmatmul.mubr.f32.gmra.mrb[0].mxu0 %v920
        %v1133 = vpop.f32.mrb[0].mxu0
        %v1134 = vadd.f32 0.0, %v1133
        %v1135 = vpop.f32.mrb[0].mxu0
        %1136 = vmatprep.mubr.f32.mxu0 0.0
        %1137 = vmatmul.mubr.f32.gmra.mrb[0].mxu0 %v923
        %v1138 = vpop.f32.mrb[0].mxu0
        %v1139 = vadd.f32 0.0, %v1138
        %v1140 = vpop.f32.mrb[0].mxu0
        %1141 = vmatprep.mubr.f32.mxu0 0.0
        %1142 = vmatmul.mubr.f32.gmra.mrb[0].mxu0 %v926
        %v1143 = vpop.f32.mrb[0].mxu0
        %v1144 = vadd.f32 0.0, %v1143
        %v1145 = vpop.f32.mrb[0].mxu0
        %1146 = vmatprep.mubr.f32.mxu0 0.0
        %1147 = vmatmul.mubr.f32.gmra.mrb[0].mxu0 %v929
        %v1148 = vpop.f32.mrb[0].mxu0
        %v1149 = vadd.f32 0.0, %v1148
        %v1150 = vpop.f32.mrb[0].mxu0
        %1151 = vdwg.mxu0
        %s1152 = scalar_lea.vmem [#allocation5], 64
        %v1153 = vld [vmem:[%s1152] sm:$0xff]
        %v1154 = vld [vmem:[%s1152 + $0x8] sm:$0xff]
        %v1155 = vld [vmem:[%s1152 + $0x10] sm:$0xff]
        %v1156 = vld [vmem:[%s1152 + $0x18] sm:$0xff]
        %v1157 = vld [vmem:[%s1152 + $0x20] sm:$0xff]
        %v1158 = vld [vmem:[%s1152 + $0x28] sm:$0xff]
        %v1159 = vld [vmem:[%s1152 + $0x30] sm:$0xff]
        %v1160 = vld [vmem:[%s1152 + $0x38] sm:$0xff]
        %vm1161 = vcmask 523264
        %v1163 = vsel %vm1161, %v1153, 0
        %v1166 = vsel %vm1161, %v1154, 0
        %v1169 = vsel %vm1161, %v1155, 0
        %v1172 = vsel %vm1161, %v1156, 0
        %v1175 = vsel %vm1161, %v1157, 0
        %v1178 = vsel %vm1161, %v1158, 0
        %v1181 = vsel %vm1161, %v1159, 0
        %v1184 = vsel %vm1161, %v1160, 0
        %1186 = vmatprep.subr.mxu0 0.0
        %1187 = vmatpush1.msra.mxu0 %v1114
        %1188 = vmatprep.subr.mxu0 0.0
        %1189 = vmatpush1.msra.mxu0 %v1119
        %1190 = vmatprep.subr.mxu0 0.0
        %1191 = vmatpush1.msra.mxu0 %v1124
        %1192 = vmatprep.subr.mxu0 0.0
        %1193 = vmatpush1.msra.mxu0 %v1129
        %1194 = vmatprep.subr.mxu0 0.0
        %1195 = vmatpush1.msra.mxu0 %v1134
        %1196 = vmatprep.subr.mxu0 0.0
        %1197 = vmatpush1.msra.mxu0 %v1139
        %1198 = vmatprep.subr.mxu0 0.0
        %1199 = vmatpush1.msra.mxu0 %v1144
        %1200 = vmatprep.subr.mxu0 0.0
        %1201 = vmatpush1.msra.mxu0 %v1149
        %1202 = vmatprep.subr.mxu0 0.0
        %1203 = vmatpush1.msra.mxu0 0.0
        %1204 = vmatprep.subr.mxu0 0.0
        %1205 = vmatpush1.msra.mxu0 0.0
        %1206 = vmatprep.subr.mxu0 0.0
        %1207 = vmatpush1.msra.mxu0 0.0
        %1208 = vmatprep.subr.mxu0 0.0
        %1209 = vmatpush1.msra.mxu0 0.0
        %1210 = vmatprep.subr.mxu0 0.0
        %1211 = vmatpush1.msra.mxu0 0.0
        %1212 = vmatprep.subr.mxu0 0.0
        %1213 = vmatpush1.msra.mxu0 0.0
        %1214 = vmatprep.subr.mxu0 0.0
        %1215 = vmatpush1.msra.mxu0 0.0
        %1216 = vmatprep.subr.mxu0 0.0
        %1217 = vmatpush1.msra.mxu0 0.0
        %1218 = vmatprep.subr.mxu0 0.0
        %1219 = vmatpush1.msra.mxu0 0.0
        %1220 = vmatprep.subr.mxu0 0.0
        %1221 = vmatpush1.msra.mxu0 0.0
        %1222 = vmatprep.subr.mxu0 0.0
        %1223 = vmatpush1.msra.mxu0 0.0
        %1224 = vmatprep.subr.mxu0 0.0
        %1225 = vmatpush1.msra.mxu0 0.0
        %1226 = vmatprep.subr.mxu0 0.0
        %1227 = vmatpush1.msra.mxu0 0.0
        %1228 = vmatprep.subr.mxu0 0.0
        %1229 = vmatpush1.msra.mxu0 0.0
        %1230 = vmatprep.subr.mxu0 0.0
        %1231 = vmatpush1.msra.mxu0 0.0
        %1232 = vmatprep.subr.mxu0 0.0
        %1233 = vmatpush1.msra.mxu0 0.0
        %1234 = vmatprep.subr.mxu0 0.0
        %1235 = vmatpush1.msra.mxu0 0.0
        %1236 = vmatprep.subr.mxu0 0.0
        %1237 = vmatpush1.msra.mxu0 0.0
        %1238 = vmatprep.subr.mxu0 0.0
        %1239 = vmatpush1.msra.mxu0 0.0
        %1240 = vmatprep.subr.mxu0 0.0
        %1241 = vmatpush1.msra.mxu0 0.0
        %1242 = vmatprep.subr.mxu0 0.0
        %1243 = vmatpush1.msra.mxu0 0.0
        %1244 = vmatprep.subr.mxu0 0.0
        %1245 = vmatpush1.msra.mxu0 0.0
        %1246 = vmatprep.subr.mxu0 0.0
        %1247 = vmatpush1.msra.mxu0 0.0
        %1248 = vmatprep.subr.mxu0 0.0
        %1249 = vmatpush1.msra.mxu0 0.0
        %1250 = vmatprep.mubr.f32.mxu0 0.0
        %1251 = vmatmul.mubr.f32.gmra.mrb[0].mxu0 %v1163
        %v1252 = vpop.f32.mrb[0].mxu0
        %v1253 = vadd.f32 0.0, %v1252
        %v1254 = vpop.f32.mrb[0].mxu0
        %1255 = vmatprep.mubr.f32.mxu0 0.0
        %1256 = vmatmul.mubr.f32.gmra.mrb[0].mxu0 %v1166
        %v1257 = vpop.f32.mrb[0].mxu0
        %v1258 = vadd.f32 0.0, %v1257
        %v1259 = vpop.f32.mrb[0].mxu0
        %1260 = vmatprep.mubr.f32.mxu0 0.0
        %1261 = vmatmul.mubr.f32.gmra.mrb[0].mxu0 %v1169
        %v1262 = vpop.f32.mrb[0].mxu0
        %v1263 = vadd.f32 0.0, %v1262
        %v1264 = vpop.f32.mrb[0].mxu0
        %1265 = vmatprep.mubr.f32.mxu0 0.0
        %1266 = vmatmul.mubr.f32.gmra.mrb[0].mxu0 %v1172
        %v1267 = vpop.f32.mrb[0].mxu0
        %v1268 = vadd.f32 0.0, %v1267
        %v1269 = vpop.f32.mrb[0].mxu0
        %1270 = vmatprep.mubr.f32.mxu0 0.0
        %1271 = vmatmul.mubr.f32.gmra.mrb[0].mxu0 %v1175
        %v1272 = vpop.f32.mrb[0].mxu0
        %v1273 = vadd.f32 0.0, %v1272
        %v1274 = vpop.f32.mrb[0].mxu0
        %1275 = vmatprep.mubr.f32.mxu0 0.0
        %1276 = vmatmul.mubr.f32.gmra.mrb[0].mxu0 %v1178
        %v1277 = vpop.f32.mrb[0].mxu0
        %v1278 = vadd.f32 0.0, %v1277
        %v1279 = vpop.f32.mrb[0].mxu0
        %1280 = vmatprep.mubr.f32.mxu0 0.0
        %1281 = vmatmul.mubr.f32.gmra.mrb[0].mxu0 %v1181
        %v1282 = vpop.f32.mrb[0].mxu0
        %v1283 = vadd.f32 0.0, %v1282
        %v1284 = vpop.f32.mrb[0].mxu0
        %1285 = vmatprep.mubr.f32.mxu0 0.0
        %1286 = vmatmul.mubr.f32.gmra.mrb[0].mxu0 %v1184
        %v1287 = vpop.f32.mrb[0].mxu0
        %v1288 = vadd.f32 0.0, %v1287
        %v1289 = vpop.f32.mrb[0].mxu0
        %1290 = vdwg.mxu0
        %v1292 = vsel %vm1161, %v1036, 0
        %v1295 = vsel %vm1161, %v1037, 0
        %v1298 = vsel %vm1161, %v1038, 0
        %v1301 = vsel %vm1161, %v1039, 0
        %v1304 = vsel %vm1161, %v1040, 0
        %v1307 = vsel %vm1161, %v1041, 0
        %v1310 = vsel %vm1161, %v1042, 0
        %v1313 = vsel %vm1161, %v1043, 0
        %1315 = vmatprep.subr.mxu0 0.0
        %1316 = vmatpush1.msra.mxu0 %v998
        %1317 = vmatprep.subr.mxu0 0.0
        %1318 = vmatpush1.msra.mxu0 %v1003
        %1319 = vmatprep.subr.mxu0 0.0
        %1320 = vmatpush1.msra.mxu0 %v1008
        %1321 = vmatprep.subr.mxu0 0.0
        %1322 = vmatpush1.msra.mxu0 %v1013
        %1323 = vmatprep.subr.mxu0 0.0
        %1324 = vmatpush1.msra.mxu0 %v1018
        %1325 = vmatprep.subr.mxu0 0.0
        %1326 = vmatpush1.msra.mxu0 %v1023
        %1327 = vmatprep.subr.mxu0 0.0
        %1328 = vmatpush1.msra.mxu0 %v1028
        %1329 = vmatprep.subr.mxu0 0.0
        %1330 = vmatpush1.msra.mxu0 %v1033
        %1331 = vmatprep.subr.mxu0 0.0
        %1332 = vmatpush1.msra.mxu0 0.0
        %1333 = vmatprep.subr.mxu0 0.0
        %1334 = vmatpush1.msra.mxu0 0.0
        %1335 = vmatprep.subr.mxu0 0.0
        %1336 = vmatpush1.msra.mxu0 0.0
        %1337 = vmatprep.subr.mxu0 0.0
        %1338 = vmatpush1.msra.mxu0 0.0
        %1339 = vmatprep.subr.mxu0 0.0
        %1340 = vmatpush1.msra.mxu0 0.0
        %1341 = vmatprep.subr.mxu0 0.0
        %1342 = vmatpush1.msra.mxu0 0.0
        %1343 = vmatprep.subr.mxu0 0.0
        %1344 = vmatpush1.msra.mxu0 0.0
        %1345 = vmatprep.subr.mxu0 0.0
        %1346 = vmatpush1.msra.mxu0 0.0
        %1347 = vmatprep.subr.mxu0 0.0
        %1348 = vmatpush1.msra.mxu0 0.0
        %1349 = vmatprep.subr.mxu0 0.0
        %1350 = vmatpush1.msra.mxu0 0.0
        %1351 = vmatprep.subr.mxu0 0.0
        %1352 = vmatpush1.msra.mxu0 0.0
        %1353 = vmatprep.subr.mxu0 0.0
        %1354 = vmatpush1.msra.mxu0 0.0
        %1355 = vmatprep.subr.mxu0 0.0
        %1356 = vmatpush1.msra.mxu0 0.0
        %1357 = vmatprep.subr.mxu0 0.0
        %1358 = vmatpush1.msra.mxu0 0.0
        %1359 = vmatprep.subr.mxu0 0.0
        %1360 = vmatpush1.msra.mxu0 0.0
        %1361 = vmatprep.subr.mxu0 0.0
        %1362 = vmatpush1.msra.mxu0 0.0
        %1363 = vmatprep.subr.mxu0 0.0
        %1364 = vmatpush1.msra.mxu0 0.0
        %1365 = vmatprep.subr.mxu0 0.0
        %1366 = vmatpush1.msra.mxu0 0.0
        %1367 = vmatprep.subr.mxu0 0.0
        %1368 = vmatpush1.msra.mxu0 0.0
        %1369 = vmatprep.subr.mxu0 0.0
        %1370 = vmatpush1.msra.mxu0 0.0
        %1371 = vmatprep.subr.mxu0 0.0
        %1372 = vmatpush1.msra.mxu0 0.0
        %1373 = vmatprep.subr.mxu0 0.0
        %1374 = vmatpush1.msra.mxu0 0.0
        %1375 = vmatprep.subr.mxu0 0.0
        %1376 = vmatpush1.msra.mxu0 0.0
        %1377 = vmatprep.subr.mxu0 0.0
        %1378 = vmatpush1.msra.mxu0 0.0
        %1379 = vmatprep.mubr.f32.mxu0 0.0
        %1380 = vmatmul.mubr.f32.gmra.mrb[0].mxu0 %v1292
        %v1381 = vpop.f32.mrb[0].mxu0
        %v1382 = vadd.f32 %v1253, %v1381
        %v1383 = vpop.f32.mrb[0].mxu0
        %1384 = vmatprep.mubr.f32.mxu0 0.0
        %1385 = vmatmul.mubr.f32.gmra.mrb[0].mxu0 %v1295
        %v1386 = vpop.f32.mrb[0].mxu0
        %v1387 = vadd.f32 %v1258, %v1386
        %v1388 = vpop.f32.mrb[0].mxu0
        %1389 = vmatprep.mubr.f32.mxu0 0.0
        %1390 = vmatmul.mubr.f32.gmra.mrb[0].mxu0 %v1298
        %v1391 = vpop.f32.mrb[0].mxu0
        %v1392 = vadd.f32 %v1263, %v1391
        %v1393 = vpop.f32.mrb[0].mxu0
        %1394 = vmatprep.mubr.f32.mxu0 0.0
        %1395 = vmatmul.mubr.f32.gmra.mrb[0].mxu0 %v1301
        %v1396 = vpop.f32.mrb[0].mxu0
        %v1397 = vadd.f32 %v1268, %v1396
        %v1398 = vpop.f32.mrb[0].mxu0
        %1399 = vmatprep.mubr.f32.mxu0 0.0
        %1400 = vmatmul.mubr.f32.gmra.mrb[0].mxu0 %v1304
        %v1401 = vpop.f32.mrb[0].mxu0
        %v1402 = vadd.f32 %v1273, %v1401
        %v1403 = vpop.f32.mrb[0].mxu0
        %1404 = vmatprep.mubr.f32.mxu0 0.0
        %1405 = vmatmul.mubr.f32.gmra.mrb[0].mxu0 %v1307
        %v1406 = vpop.f32.mrb[0].mxu0
        %v1407 = vadd.f32 %v1278, %v1406
        %v1408 = vpop.f32.mrb[0].mxu0
        %1409 = vmatprep.mubr.f32.mxu0 0.0
        %1410 = vmatmul.mubr.f32.gmra.mrb[0].mxu0 %v1310
        %v1411 = vpop.f32.mrb[0].mxu0
        %v1412 = vadd.f32 %v1283, %v1411
        %v1413 = vpop.f32.mrb[0].mxu0
        %1414 = vmatprep.mubr.f32.mxu0 0.0
        %1415 = vmatmul.mubr.f32.gmra.mrb[0].mxu0 %v1313
        %v1416 = vpop.f32.mrb[0].mxu0
        %v1417 = vadd.f32 %v1288, %v1416
        %v1418 = vpop.f32.mrb[0].mxu0
        %1419 = vdwg.mxu0
        %s1420 = scalar_lea.vmem [#allocation3], 32
        %v1421 = vld [vmem:[%s1420] sm:$0xff]
        %v1422 = vld [vmem:[%s1420 + $0x8] sm:$0xff]
        %1423 = vmatprep.subr.mxu0 0.0
        %1424 = vmatpush1.msra.mxu0 %v1421
        %1425 = vmatprep.subr.mxu0 0.0
        %1426 = vmatpush1.msra.mxu0 %v1422
        %1427 = vmatprep.subr.mxu0 0.0
        %1428 = vmatpush1.msra.mxu0 0.0
        %1429 = vmatprep.subr.mxu0 0.0
        %1430 = vmatpush1.msra.mxu0 0.0
        %1431 = vmatprep.subr.mxu0 0.0
        %1432 = vmatpush1.msra.mxu0 0.0
        %1433 = vmatprep.subr.mxu0 0.0
        %1434 = vmatpush1.msra.mxu0 0.0
        %1435 = vmatprep.subr.mxu0 0.0
        %1436 = vmatpush1.msra.mxu0 0.0
        %1437 = vmatprep.subr.mxu0 0.0
        %1438 = vmatpush1.msra.mxu0 0.0
        %1439 = vmatprep.subr.mxu0 0.0
        %1440 = vmatpush1.msra.mxu0 0.0
        %1441 = vmatprep.subr.mxu0 0.0
        %1442 = vmatpush1.msra.mxu0 0.0
        %1443 = vmatprep.subr.mxu0 0.0
        %1444 = vmatpush1.msra.mxu0 0.0
        %1445 = vmatprep.subr.mxu0 0.0
        %1446 = vmatpush1.msra.mxu0 0.0
        %1447 = vmatprep.subr.mxu0 0.0
        %1448 = vmatpush1.msra.mxu0 0.0
        %1449 = vmatprep.subr.mxu0 0.0
        %1450 = vmatpush1.msra.mxu0 0.0
        %1451 = vmatprep.subr.mxu0 0.0
        %1452 = vmatpush1.msra.mxu0 0.0
        %1453 = vmatprep.subr.mxu0 0.0
        %1454 = vmatpush1.msra.mxu0 0.0
        %1455 = vmatprep.subr.mxu0 0.0
        %1456 = vmatpush1.msra.mxu0 0.0
        %1457 = vmatprep.subr.mxu0 0.0
        %1458 = vmatpush1.msra.mxu0 0.0
        %1459 = vmatprep.subr.mxu0 0.0
        %1460 = vmatpush1.msra.mxu0 0.0
        %1461 = vmatprep.subr.mxu0 0.0
        %1462 = vmatpush1.msra.mxu0 0.0
        %1463 = vmatprep.subr.mxu0 0.0
        %1464 = vmatpush1.msra.mxu0 0.0
        %1465 = vmatprep.subr.mxu0 0.0
        %1466 = vmatpush1.msra.mxu0 0.0
        %1467 = vmatprep.subr.mxu0 0.0
        %1468 = vmatpush1.msra.mxu0 0.0
        %1469 = vmatprep.subr.mxu0 0.0
        %1470 = vmatpush1.msra.mxu0 0.0
        %1471 = vmatprep.subr.mxu0 0.0
        %1472 = vmatpush1.msra.mxu0 0.0
        %1473 = vmatprep.subr.mxu0 0.0
        %1474 = vmatpush1.msra.mxu0 0.0
        %1475 = vmatprep.subr.mxu0 0.0
        %1476 = vmatpush1.msra.mxu0 0.0
        %1477 = vmatprep.subr.mxu0 0.0
        %1478 = vmatpush1.msra.mxu0 0.0
        %1479 = vmatprep.subr.mxu0 0.0
        %1480 = vmatpush1.msra.mxu0 0.0
        %1481 = vmatprep.subr.mxu0 0.0
        %1482 = vmatpush1.msra.mxu0 0.0
        %1483 = vmatprep.subr.mxu0 0.0
        %1484 = vmatpush1.msra.mxu0 0.0
        %1485 = vmatprep.subr.mxu0 0.0
        %1486 = vmatpush1.msra.mxu0 0.0
        %1487 = vmatprep.mubr.f32.mxu0 0.0
        %1488 = vmatmul.mubr.f32.gmra.mrb[0].mxu0 %v908
        %v1489 = vpop.f32.mrb[0].mxu0
        %v1490 = vadd.f32 0.0, %v1489
        %v1491 = vpop.f32.mrb[0].mxu0
        %1492 = vmatprep.mubr.f32.mxu0 0.0
        %1493 = vmatmul.mubr.f32.gmra.mrb[0].mxu0 %v911
        %v1494 = vpop.f32.mrb[0].mxu0
        %v1495 = vadd.f32 0.0, %v1494
        %v1496 = vpop.f32.mrb[0].mxu0
        %1497 = vmatprep.mubr.f32.mxu0 0.0
        %1498 = vmatmul.mubr.f32.gmra.mrb[0].mxu0 %v914
        %v1499 = vpop.f32.mrb[0].mxu0
        %v1500 = vadd.f32 0.0, %v1499
        %v1501 = vpop.f32.mrb[0].mxu0
        %1502 = vmatprep.mubr.f32.mxu0 0.0
        %1503 = vmatmul.mubr.f32.gmra.mrb[0].mxu0 %v917
        %v1504 = vpop.f32.mrb[0].mxu0
        %v1505 = vadd.f32 0.0, %v1504
        %v1506 = vpop.f32.mrb[0].mxu0
        %1507 = vmatprep.mubr.f32.mxu0 0.0
        %1508 = vmatmul.mubr.f32.gmra.mrb[0].mxu0 %v920
        %v1509 = vpop.f32.mrb[0].mxu0
        %v1510 = vadd.f32 0.0, %v1509
        %v1511 = vpop.f32.mrb[0].mxu0
        %1512 = vmatprep.mubr.f32.mxu0 0.0
        %1513 = vmatmul.mubr.f32.gmra.mrb[0].mxu0 %v923
        %v1514 = vpop.f32.mrb[0].mxu0
        %v1515 = vadd.f32 0.0, %v1514
        %v1516 = vpop.f32.mrb[0].mxu0
        %1517 = vmatprep.mubr.f32.mxu0 0.0
        %1518 = vmatmul.mubr.f32.gmra.mrb[0].mxu0 %v926
        %v1519 = vpop.f32.mrb[0].mxu0
        %v1520 = vadd.f32 0.0, %v1519
        %v1521 = vpop.f32.mrb[0].mxu0
        %1522 = vmatprep.mubr.f32.mxu0 0.0
        %1523 = vmatmul.mubr.f32.gmra.mrb[0].mxu0 %v929
        %v1524 = vpop.f32.mrb[0].mxu0
        %v1525 = vadd.f32 0.0, %v1524
        %v1526 = vpop.f32.mrb[0].mxu0
        %1527 = vdwg.mxu0
        %s1528 = scalar_lea.vmem [#allocation5], 128
        %v1529 = vld [vmem:[%s1528] sm:$0xff]
        %v1530 = vld [vmem:[%s1528 + $0x8] sm:$0xff]
        %v1531 = vld [vmem:[%s1528 + $0x10] sm:$0xff]
        %v1532 = vld [vmem:[%s1528 + $0x18] sm:$0xff]
        %v1533 = vld [vmem:[%s1528 + $0x20] sm:$0xff]
        %v1534 = vld [vmem:[%s1528 + $0x28] sm:$0xff]
        %v1535 = vld [vmem:[%s1528 + $0x30] sm:$0xff]
        %v1536 = vld [vmem:[%s1528 + $0x38] sm:$0xff]
        %v1538 = vsel %vm1161, %v1529, 0
        %v1541 = vsel %vm1161, %v1530, 0
        %v1544 = vsel %vm1161, %v1531, 0
        %v1547 = vsel %vm1161, %v1532, 0
        %v1550 = vsel %vm1161, %v1533, 0
        %v1553 = vsel %vm1161, %v1534, 0
        %v1556 = vsel %vm1161, %v1535, 0
        %v1559 = vsel %vm1161, %v1536, 0
        %1561 = vmatprep.subr.mxu0 0.0
        %1562 = vmatpush1.msra.mxu0 %v1490
        %1563 = vmatprep.subr.mxu0 0.0
        %1564 = vmatpush1.msra.mxu0 %v1495
        %1565 = vmatprep.subr.mxu0 0.0
        %1566 = vmatpush1.msra.mxu0 %v1500
        %1567 = vmatprep.subr.mxu0 0.0
        %1568 = vmatpush1.msra.mxu0 %v1505
        %1569 = vmatprep.subr.mxu0 0.0
        %1570 = vmatpush1.msra.mxu0 %v1510
        %1571 = vmatprep.subr.mxu0 0.0
        %1572 = vmatpush1.msra.mxu0 %v1515
        %1573 = vmatprep.subr.mxu0 0.0
        %1574 = vmatpush1.msra.mxu0 %v1520
        %1575 = vmatprep.subr.mxu0 0.0
        %1576 = vmatpush1.msra.mxu0 %v1525
        %1577 = vmatprep.subr.mxu0 0.0
        %1578 = vmatpush1.msra.mxu0 0.0
        %1579 = vmatprep.subr.mxu0 0.0
        %1580 = vmatpush1.msra.mxu0 0.0
        %1581 = vmatprep.subr.mxu0 0.0
        %1582 = vmatpush1.msra.mxu0 0.0
        %1583 = vmatprep.subr.mxu0 0.0
        %1584 = vmatpush1.msra.mxu0 0.0
        %1585 = vmatprep.subr.mxu0 0.0
        %1586 = vmatpush1.msra.mxu0 0.0
        %1587 = vmatprep.subr.mxu0 0.0
        %1588 = vmatpush1.msra.mxu0 0.0
        %1589 = vmatprep.subr.mxu0 0.0
        %1590 = vmatpush1.msra.mxu0 0.0
        %1591 = vmatprep.subr.mxu0 0.0
        %1592 = vmatpush1.msra.mxu0 0.0
        %1593 = vmatprep.subr.mxu0 0.0
        %1594 = vmatpush1.msra.mxu0 0.0
        %1595 = vmatprep.subr.mxu0 0.0
        %1596 = vmatpush1.msra.mxu0 0.0
        %1597 = vmatprep.subr.mxu0 0.0
        %1598 = vmatpush1.msra.mxu0 0.0
        %1599 = vmatprep.subr.mxu0 0.0
        %1600 = vmatpush1.msra.mxu0 0.0
        %1601 = vmatprep.subr.mxu0 0.0
        %1602 = vmatpush1.msra.mxu0 0.0
        %1603 = vmatprep.subr.mxu0 0.0
        %1604 = vmatpush1.msra.mxu0 0.0
        %1605 = vmatprep.subr.mxu0 0.0
        %1606 = vmatpush1.msra.mxu0 0.0
        %1607 = vmatprep.subr.mxu0 0.0
        %1608 = vmatpush1.msra.mxu0 0.0
        %1609 = vmatprep.subr.mxu0 0.0
        %1610 = vmatpush1.msra.mxu0 0.0
        %1611 = vmatprep.subr.mxu0 0.0
        %1612 = vmatpush1.msra.mxu0 0.0
        %1613 = vmatprep.subr.mxu0 0.0
        %1614 = vmatpush1.msra.mxu0 0.0
        %1615 = vmatprep.subr.mxu0 0.0
        %1616 = vmatpush1.msra.mxu0 0.0
        %1617 = vmatprep.subr.mxu0 0.0
        %1618 = vmatpush1.msra.mxu0 0.0
        %1619 = vmatprep.subr.mxu0 0.0
        %1620 = vmatpush1.msra.mxu0 0.0
        %1621 = vmatprep.subr.mxu0 0.0
        %1622 = vmatpush1.msra.mxu0 0.0
        %1623 = vmatprep.subr.mxu0 0.0
        %1624 = vmatpush1.msra.mxu0 0.0
        %1625 = vmatprep.mubr.f32.mxu0 0.0
        %1626 = vmatmul.mubr.f32.gmra.mrb[0].mxu0 %v1538
        %v1627 = vpop.f32.mrb[0].mxu0
        %v1628 = vadd.f32 0.0, %v1627
        %v1629 = vpop.f32.mrb[0].mxu0
        %1630 = vmatprep.mubr.f32.mxu0 0.0
        %1631 = vmatmul.mubr.f32.gmra.mrb[0].mxu0 %v1541
        %v1632 = vpop.f32.mrb[0].mxu0
        %v1633 = vadd.f32 0.0, %v1632
        %v1634 = vpop.f32.mrb[0].mxu0
        %1635 = vmatprep.mubr.f32.mxu0 0.0
        %1636 = vmatmul.mubr.f32.gmra.mrb[0].mxu0 %v1544
        %v1637 = vpop.f32.mrb[0].mxu0
        %v1638 = vadd.f32 0.0, %v1637
        %v1639 = vpop.f32.mrb[0].mxu0
        %1640 = vmatprep.mubr.f32.mxu0 0.0
        %1641 = vmatmul.mubr.f32.gmra.mrb[0].mxu0 %v1547
        %v1642 = vpop.f32.mrb[0].mxu0
        %v1643 = vadd.f32 0.0, %v1642
        %v1644 = vpop.f32.mrb[0].mxu0
        %1645 = vmatprep.mubr.f32.mxu0 0.0
        %1646 = vmatmul.mubr.f32.gmra.mrb[0].mxu0 %v1550
        %v1647 = vpop.f32.mrb[0].mxu0
        %v1648 = vadd.f32 0.0, %v1647
        %v1649 = vpop.f32.mrb[0].mxu0
        %1650 = vmatprep.mubr.f32.mxu0 0.0
        %1651 = vmatmul.mubr.f32.gmra.mrb[0].mxu0 %v1553
        %v1652 = vpop.f32.mrb[0].mxu0
        %v1653 = vadd.f32 0.0, %v1652
        %v1654 = vpop.f32.mrb[0].mxu0
        %1655 = vmatprep.mubr.f32.mxu0 0.0
        %1656 = vmatmul.mubr.f32.gmra.mrb[0].mxu0 %v1556
        %v1657 = vpop.f32.mrb[0].mxu0
        %v1658 = vadd.f32 0.0, %v1657
        %v1659 = vpop.f32.mrb[0].mxu0
        %1660 = vmatprep.mubr.f32.mxu0 0.0
        %1661 = vmatmul.mubr.f32.gmra.mrb[0].mxu0 %v1559
        %v1662 = vpop.f32.mrb[0].mxu0
        %v1663 = vadd.f32 0.0, %v1662
        %v1664 = vpop.f32.mrb[0].mxu0
        %1665 = vdwg.mxu0
        %v1666 = vadd.f32 %v1382, %v1628
        %v1667 = vadd.f32 %v1387, %v1633
        %v1668 = vadd.f32 %v1392, %v1638
        %v1669 = vadd.f32 %v1397, %v1643
        %v1670 = vadd.f32 %v1402, %v1648
        %v1671 = vadd.f32 %v1407, %v1653
        %v1672 = vadd.f32 %v1412, %v1658
        %v1673 = vadd.f32 %v1417, %v1663
        %v1674 = vld [vmem:[%s3] sm:$0xff]
        %v1675 = vld [vmem:[%s3 + $0x8] sm:$0xff]
        %v1676 = vld [vmem:[%s3 + $0x10] sm:$0xff]
        %v1677 = vld [vmem:[%s3 + $0x18] sm:$0xff]
        %v1678 = vld [vmem:[%s3 + $0x20] sm:$0xff]
        %v1679 = vld [vmem:[%s3 + $0x28] sm:$0xff]
        %v1680 = vld [vmem:[%s3 + $0x30] sm:$0xff]
        %v1681 = vld [vmem:[%s3 + $0x38] sm:$0xff]
        %1683 = vset.pattern.permute.xlu0 0
        %1684 = vperm.xlu0 %1683, %v1674
        %v1685 = vpop.permute.xlu0 %1684
        %1688 = vset.pattern.permute.xlu0 0
        %1689 = vperm.xlu0 %1688, %v1675
        %v1690 = vpop.permute.xlu0 %1689
        %1693 = vset.pattern.permute.xlu0 0
        %1694 = vperm.xlu0 %1693, %v1676
        %v1695 = vpop.permute.xlu0 %1694
        %1698 = vset.pattern.permute.xlu0 0
        %1699 = vperm.xlu0 %1698, %v1677
        %v1700 = vpop.permute.xlu0 %1699
        %1703 = vset.pattern.permute.xlu0 0
        %1704 = vperm.xlu0 %1703, %v1678
        %v1705 = vpop.permute.xlu0 %1704
        %1708 = vset.pattern.permute.xlu0 0
        %1709 = vperm.xlu0 %1708, %v1679
        %v1710 = vpop.permute.xlu0 %1709
        %1713 = vset.pattern.permute.xlu0 0
        %1714 = vperm.xlu0 %1713, %v1680
        %v1715 = vpop.permute.xlu0 %1714
        %1718 = vset.pattern.permute.xlu0 0
        %1719 = vperm.xlu0 %1718, %v1681
        %v1720 = vpop.permute.xlu0 %1719
        %v1722 = vadd.f32 %v1666, %v1685
        %v1723 = vadd.f32 %v1667, %v1690
        %v1724 = vadd.f32 %v1668, %v1695
        %v1725 = vadd.f32 %v1669, %v1700
        %v1726 = vadd.f32 %v1670, %v1705
        %v1727 = vadd.f32 %v1671, %v1710
        %v1728 = vadd.f32 %v1672, %v1715
        %v1729 = vadd.f32 %v1673, %v1720
        %v1730 = vmul.f32 %v1722, 0.5
        %v1731 = vmul.f32 %v1723, 0.5
        %v1732 = vmul.f32 %v1724, 0.5
        %v1733 = vmul.f32 %v1725, 0.5
        %v1734 = vmul.f32 %v1726, 0.5
        %v1735 = vmul.f32 %v1727, 0.5
        %v1736 = vmul.f32 %v1728, 0.5
        %v1737 = vmul.f32 %v1729, 0.5
        %v1738 = vmul.f32 %v1722, 0.70710677
        %v1739 = vmul.f32 %v1723, 0.70710677
        %v1740 = vmul.f32 %v1724, 0.70710677
        %v1741 = vmul.f32 %v1725, 0.70710677
        %v1742 = vmul.f32 %v1726, 0.70710677
        %v1743 = vmul.f32 %v1727, 0.70710677
        %v1744 = vmul.f32 %v1728, 0.70710677
        %v1745 = vmul.f32 %v1729, 0.70710677
        %vm1746 = vcmp.ge.f32.partialorder %v1738, 0.0
        %vm1747 = vcmp.ge.f32.partialorder %v1739, 0.0
        %vm1748 = vcmp.ge.f32.partialorder %v1740, 0.0
        %vm1749 = vcmp.ge.f32.partialorder %v1741, 0.0
        %vm1750 = vcmp.ge.f32.partialorder %v1742, 0.0
        %vm1751 = vcmp.ge.f32.partialorder %v1743, 0.0
        %vm1752 = vcmp.ge.f32.partialorder %v1744, 0.0
        %vm1753 = vcmp.ge.f32.partialorder %v1745, 0.0
        %v1754 = vsel %vm1746, 1.0, -1.0
        %v1755 = vsel %vm1747, 1.0, -1.0
        %v1756 = vsel %vm1748, 1.0, -1.0
        %v1757 = vsel %vm1749, 1.0, -1.0
        %v1758 = vsel %vm1750, 1.0, -1.0
        %v1759 = vsel %vm1751, 1.0, -1.0
        %v1760 = vsel %vm1752, 1.0, -1.0
        %v1761 = vsel %vm1753, 1.0, -1.0
        %v1762 = vand.u32 2147483647, %v1738
        %v1763 = vand.u32 2147483647, %v1739
        %v1764 = vand.u32 2147483647, %v1740
        %v1765 = vand.u32 2147483647, %v1741
        %v1766 = vand.u32 2147483647, %v1742
        %v1767 = vand.u32 2147483647, %v1743
        %v1768 = vand.u32 2147483647, %v1744
        %v1769 = vand.u32 2147483647, %v1745
        %v1770 = vmul.f32 %v1762, 0.3275911
        %v1771 = vmul.f32 %v1763, 0.3275911
        %v1772 = vmul.f32 %v1764, 0.3275911
        %v1773 = vmul.f32 %v1765, 0.3275911
        %v1774 = vmul.f32 %v1766, 0.3275911
        %v1775 = vmul.f32 %v1767, 0.3275911
        %v1776 = vmul.f32 %v1768, 0.3275911
        %v1777 = vmul.f32 %v1769, 0.3275911
        %v1778 = vadd.f32 %v1770, 1.0
        %v1779 = vadd.f32 %v1771, 1.0
        %v1780 = vadd.f32 %v1772, 1.0
        %v1781 = vadd.f32 %v1773, 1.0
        %v1782 = vadd.f32 %v1774, 1.0
        %v1783 = vadd.f32 %v1775, 1.0
        %v1784 = vadd.f32 %v1776, 1.0
        %v1785 = vadd.f32 %v1777, 1.0
        %v1786 = vrcp.pop %v1778
        %v1787 = vmul.f32 1.0, %v1786
        %v1788 = vrcp.pop %v1779
        %v1789 = vmul.f32 1.0, %v1788
        %v1790 = vrcp.pop %v1780
        %v1791 = vmul.f32 1.0, %v1790
        %v1792 = vrcp.pop %v1781
        %v1793 = vmul.f32 1.0, %v1792
        %v1794 = vrcp.pop %v1782
        %v1795 = vmul.f32 1.0, %v1794
        %v1796 = vrcp.pop %v1783
        %v1797 = vmul.f32 1.0, %v1796
        %v1798 = vrcp.pop %v1784
        %v1799 = vmul.f32 1.0, %v1798
        %v1800 = vrcp.pop %v1785
        %v1801 = vmul.f32 1.0, %v1800
        %v1802 = vmul.f32 %v1787, 1.0614054
        %v1803 = vmul.f32 %v1789, 1.0614054
        %v1804 = vmul.f32 %v1791, 1.0614054
        %v1805 = vmul.f32 %v1793, 1.0614054
        %v1806 = vmul.f32 %v1795, 1.0614054
        %v1807 = vmul.f32 %v1797, 1.0614054
        %v1808 = vmul.f32 %v1799, 1.0614054
        %v1809 = vmul.f32 %v1801, 1.0614054
        %v1810 = vadd.f32 %v1802, -1.4531521
        %v1811 = vadd.f32 %v1803, -1.4531521
        %v1812 = vadd.f32 %v1804, -1.4531521
        %v1813 = vadd.f32 %v1805, -1.4531521
        %v1814 = vadd.f32 %v1806, -1.4531521
        %v1815 = vadd.f32 %v1807, -1.4531521
        %v1816 = vadd.f32 %v1808, -1.4531521
        %v1817 = vadd.f32 %v1809, -1.4531521
        %v1818 = vmul.f32 %v1810, %v1787
        %v1819 = vmul.f32 %v1811, %v1789
        %v1820 = vmul.f32 %v1812, %v1791
        %v1821 = vmul.f32 %v1813, %v1793
        %v1822 = vmul.f32 %v1814, %v1795
        %v1823 = vmul.f32 %v1815, %v1797
        %v1824 = vmul.f32 %v1816, %v1799
        %v1825 = vmul.f32 %v1817, %v1801
        %v1826 = vadd.f32 %v1818, 1.4214138
        %v1827 = vadd.f32 %v1819, 1.4214138
        %v1828 = vadd.f32 %v1820, 1.4214138
        %v1829 = vadd.f32 %v1821, 1.4214138
        %v1830 = vadd.f32 %v1822, 1.4214138
        %v1831 = vadd.f32 %v1823, 1.4214138
        %v1832 = vadd.f32 %v1824, 1.4214138
        %v1833 = vadd.f32 %v1825, 1.4214138
        %v1834 = vmul.f32 %v1826, %v1787
        %v1835 = vmul.f32 %v1827, %v1789
        %v1836 = vmul.f32 %v1828, %v1791
        %v1837 = vmul.f32 %v1829, %v1793
        %v1838 = vmul.f32 %v1830, %v1795
        %v1839 = vmul.f32 %v1831, %v1797
        %v1840 = vmul.f32 %v1832, %v1799
        %v1841 = vmul.f32 %v1833, %v1801
        %v1842 = vadd.f32 %v1834, -0.28449672
        %v1843 = vadd.f32 %v1835, -0.28449672
        %v1844 = vadd.f32 %v1836, -0.28449672
        %v1845 = vadd.f32 %v1837, -0.28449672
        %v1846 = vadd.f32 %v1838, -0.28449672
        %v1847 = vadd.f32 %v1839, -0.28449672
        %v1848 = vadd.f32 %v1840, -0.28449672
        %v1849 = vadd.f32 %v1841, -0.28449672
        %v1850 = vmul.f32 %v1842, %v1787
        %v1851 = vmul.f32 %v1843, %v1789
        %v1852 = vmul.f32 %v1844, %v1791
        %v1853 = vmul.f32 %v1845, %v1793
        %v1854 = vmul.f32 %v1846, %v1795
        %v1855 = vmul.f32 %v1847, %v1797
        %v1856 = vmul.f32 %v1848, %v1799
        %v1857 = vmul.f32 %v1849, %v1801
        %v1858 = vadd.f32 %v1850, 0.2548296
        %v1859 = vadd.f32 %v1851, 0.2548296
        %v1860 = vadd.f32 %v1852, 0.2548296
        %v1861 = vadd.f32 %v1853, 0.2548296
        %v1862 = vadd.f32 %v1854, 0.2548296
        %v1863 = vadd.f32 %v1855, 0.2548296
        %v1864 = vadd.f32 %v1856, 0.2548296
        %v1865 = vadd.f32 %v1857, 0.2548296
        %v1866 = vmul.f32 %v1858, %v1787
        %v1867 = vmul.f32 %v1859, %v1789
        %v1868 = vmul.f32 %v1860, %v1791
        %v1869 = vmul.f32 %v1861, %v1793
        %v1870 = vmul.f32 %v1862, %v1795
        %v1871 = vmul.f32 %v1863, %v1797
        %v1872 = vmul.f32 %v1864, %v1799
        %v1873 = vmul.f32 %v1865, %v1801
        %v1874 = vsub.f32 0.0, %v1762
        %v1875 = vsub.f32 0.0, %v1763
        %v1876 = vsub.f32 0.0, %v1764
        %v1877 = vsub.f32 0.0, %v1765
        %v1878 = vsub.f32 0.0, %v1766
        %v1879 = vsub.f32 0.0, %v1767
        %v1880 = vsub.f32 0.0, %v1768
        %v1881 = vsub.f32 0.0, %v1769
        %v1882 = vmul.f32 %v1874, %v1762
        %v1883 = vmul.f32 %v1875, %v1763
        %v1884 = vmul.f32 %v1876, %v1764
        %v1885 = vmul.f32 %v1877, %v1765
        %v1886 = vmul.f32 %v1878, %v1766
        %v1887 = vmul.f32 %v1879, %v1767
        %v1888 = vmul.f32 %v1880, %v1768
        %v1889 = vmul.f32 %v1881, %v1769
        %v1890 = vmul.f32 %v1882, 1.442695
        %v1891 = vpow.pop %v1890
        %v1892 = vmul.f32 %v1883, 1.442695
        %v1893 = vpow.pop %v1892
        %v1894 = vmul.f32 %v1884, 1.442695
        %v1895 = vpow.pop %v1894
        %v1896 = vmul.f32 %v1885, 1.442695
        %v1897 = vpow.pop %v1896
        %v1898 = vmul.f32 %v1886, 1.442695
        %v1899 = vpow.pop %v1898
        %v1900 = vmul.f32 %v1887, 1.442695
        %v1901 = vpow.pop %v1900
        %v1902 = vmul.f32 %v1888, 1.442695
        %v1903 = vpow.pop %v1902
        %v1904 = vmul.f32 %v1889, 1.442695
        %v1905 = vpow.pop %v1904
        %v1906 = vmul.f32 %v1866, %v1891
        %v1907 = vmul.f32 %v1867, %v1893
        %v1908 = vmul.f32 %v1868, %v1895
        %v1909 = vmul.f32 %v1869, %v1897
        %v1910 = vmul.f32 %v1870, %v1899
        %v1911 = vmul.f32 %v1871, %v1901
        %v1912 = vmul.f32 %v1872, %v1903
        %v1913 = vmul.f32 %v1873, %v1905
        %v1914 = vsub.f32 1.0, %v1906
        %v1915 = vsub.f32 1.0, %v1907
        %v1916 = vsub.f32 1.0, %v1908
        %v1917 = vsub.f32 1.0, %v1909
        %v1918 = vsub.f32 1.0, %v1910
        %v1919 = vsub.f32 1.0, %v1911
        %v1920 = vsub.f32 1.0, %v1912
        %v1921 = vsub.f32 1.0, %v1913
        %v1922 = vmul.f32 %v1754, %v1914
        %v1923 = vmul.f32 %v1755, %v1915
        %v1924 = vmul.f32 %v1756, %v1916
        %v1925 = vmul.f32 %v1757, %v1917
        %v1926 = vmul.f32 %v1758, %v1918
        %v1927 = vmul.f32 %v1759, %v1919
        %v1928 = vmul.f32 %v1760, %v1920
        %v1929 = vmul.f32 %v1761, %v1921
        %v1930 = vadd.f32 %v1922, 1.0
        %v1931 = vadd.f32 %v1923, 1.0
        %v1932 = vadd.f32 %v1924, 1.0
        %v1933 = vadd.f32 %v1925, 1.0
        %v1934 = vadd.f32 %v1926, 1.0
        %v1935 = vadd.f32 %v1927, 1.0
        %v1936 = vadd.f32 %v1928, 1.0
        %v1937 = vadd.f32 %v1929, 1.0
        %v1938 = vmul.f32 %v1730, %v1930
        %v1939 = vmul.f32 %v1731, %v1931
        %v1940 = vmul.f32 %v1732, %v1932
        %v1941 = vmul.f32 %v1733, %v1933
        %v1942 = vmul.f32 %v1734, %v1934
        %v1943 = vmul.f32 %v1735, %v1935
        %v1944 = vmul.f32 %v1736, %v1936
        %v1945 = vmul.f32 %v1737, %v1937
        %v1946 = vld [vmem:[%s8] sm:$0xf]
        %v1947 = vld [vmem:[%s9] sm:$0xff]
        %v1948 = vld [vmem:[%s9 + $0x8] sm:$0xff]
        %v1949 = vld [vmem:[%s9 + $0x10] sm:$0xff]
        %v1950 = vld [vmem:[%s9 + $0x18] sm:$0xff]
        %v1951 = vld [vmem:[%s9 + $0x20] sm:$0xff]
        %v1952 = vld [vmem:[%s9 + $0x28] sm:$0xff]
        %v1953 = vld [vmem:[%s9 + $0x30] sm:$0xff]
        %v1954 = vld [vmem:[%s9 + $0x38] sm:$0xff]
        %v1955 = vld [vmem:[%s10] sm:$0xff]
        %v1956 = vld [vmem:[%s10 + $0x8] sm:$0xff]
        %v1957 = vld [vmem:[%s10 + $0x10] sm:$0xff]
        %v1958 = vld [vmem:[%s10 + $0x18] sm:$0xff]
        %v1959 = vld [vmem:[%s10 + $0x20] sm:$0xff]
        %v1960 = vld [vmem:[%s10 + $0x28] sm:$0xff]
        %v1961 = vld [vmem:[%s10 + $0x30] sm:$0xff]
        %v1962 = vld [vmem:[%s10 + $0x38] sm:$0xff]
        %v1963 = vsel %vm906, %v1938, 0.0
        %1964 = vadd.xlane.f32.xlu0 %v1963
        %v1965 = vpop.xlane.xlu0 %1964
        %v1966 = vsel %vm906, %v1939, 0.0
        %1967 = vadd.xlane.f32.xlu0 %v1966
        %v1968 = vpop.xlane.xlu0 %1967
        %v1969 = vsel %vm906, %v1940, 0.0
        %1970 = vadd.xlane.f32.xlu0 %v1969
        %v1971 = vpop.xlane.xlu0 %1970
        %v1972 = vsel %vm906, %v1941, 0.0
        %1973 = vadd.xlane.f32.xlu0 %v1972
        %v1974 = vpop.xlane.xlu0 %1973
        %v1975 = vsel %vm906, %v1942, 0.0
        %1976 = vadd.xlane.f32.xlu0 %v1975
        %v1977 = vpop.xlane.xlu0 %1976
        %v1978 = vsel %vm906, %v1943, 0.0
        %1979 = vadd.xlane.f32.xlu0 %v1978
        %v1980 = vpop.xlane.xlu0 %1979
        %v1981 = vsel %vm906, %v1944, 0.0
        %1982 = vadd.xlane.f32.xlu0 %v1981
        %v1983 = vpop.xlane.xlu0 %1982
        %v1984 = vsel %vm906, %v1945, 0.0
        %1985 = vadd.xlane.f32.xlu0 %v1984
        %v1986 = vpop.xlane.xlu0 %1985
        %v1987 = vrcp.pop 16.0
        %v1988 = vmul.f32 %v1965, %v1987
        %v1989 = vmul.f32 %v1968, %v1987
        %v1990 = vmul.f32 %v1971, %v1987
        %v1991 = vmul.f32 %v1974, %v1987
        %v1992 = vmul.f32 %v1977, %v1987
        %v1993 = vmul.f32 %v1980, %v1987
        %v1994 = vmul.f32 %v1983, %v1987
        %v1995 = vmul.f32 %v1986, %v1987
        %v1996 = vmul.f32 %v1955, %v1988
        %v1997 = vmul.f32 %v1956, %v1989
        %v1998 = vmul.f32 %v1957, %v1990
        %v1999 = vmul.f32 %v1958, %v1991
        %v2000 = vmul.f32 %v1959, %v1992
        %v2001 = vmul.f32 %v1960, %v1993
        %v2002 = vmul.f32 %v1961, %v1994
        %v2003 = vmul.f32 %v1962, %v1995
        %v2004 = vadd.f32 %v1955, 1.0
        %v2005 = vadd.f32 %v1956, 1.0
        %v2006 = vadd.f32 %v1957, 1.0
        %v2007 = vadd.f32 %v1958, 1.0
        %v2008 = vadd.f32 %v1959, 1.0
        %v2009 = vadd.f32 %v1960, 1.0
        %v2010 = vadd.f32 %v1961, 1.0
        %v2011 = vadd.f32 %v1962, 1.0
        %v2012 = vsub.f32 %v1938, %v1988
        %v2013 = vsub.f32 %v1939, %v1989
        %v2014 = vsub.f32 %v1940, %v1990
        %v2015 = vsub.f32 %v1941, %v1991
        %v2016 = vsub.f32 %v1942, %v1992
        %v2017 = vsub.f32 %v1943, %v1993
        %v2018 = vsub.f32 %v1944, %v1994
        %v2019 = vsub.f32 %v1945, %v1995
        %2021 = vset.pattern.permute.xlu0 3
        %2022 = vperm.xlu0 %2021, %v2004
        %v2023 = vpop.permute.xlu0 %2022
        %2026 = vset.pattern.permute.xlu0 3
        %2027 = vperm.xlu0 %2026, %v2005
        %v2028 = vpop.permute.xlu0 %2027
        %2031 = vset.pattern.permute.xlu0 3
        %2032 = vperm.xlu0 %2031, %v2006
        %v2033 = vpop.permute.xlu0 %2032
        %2036 = vset.pattern.permute.xlu0 3
        %2037 = vperm.xlu0 %2036, %v2007
        %v2038 = vpop.permute.xlu0 %2037
        %2041 = vset.pattern.permute.xlu0 3
        %2042 = vperm.xlu0 %2041, %v2008
        %v2043 = vpop.permute.xlu0 %2042
        %2046 = vset.pattern.permute.xlu0 3
        %2047 = vperm.xlu0 %2046, %v2009
        %v2048 = vpop.permute.xlu0 %2047
        %2051 = vset.pattern.permute.xlu0 3
        %2052 = vperm.xlu0 %2051, %v2010
        %v2053 = vpop.permute.xlu0 %2052
        %2056 = vset.pattern.permute.xlu0 3
        %2057 = vperm.xlu0 %2056, %v2011
        %v2058 = vpop.permute.xlu0 %2057
        %v2060 = vmul.f32 %v2023, %v2012
        %v2061 = vmul.f32 %v2028, %v2013
        %v2062 = vmul.f32 %v2033, %v2014
        %v2063 = vmul.f32 %v2038, %v2015
        %v2064 = vmul.f32 %v2043, %v2016
        %v2065 = vmul.f32 %v2048, %v2017
        %v2066 = vmul.f32 %v2053, %v2018
        %v2067 = vmul.f32 %v2058, %v2019
        %2069 = vset.pattern.permute.xlu0 2
        %2070 = vperm.xlu0 %2069, %v1996
        %v2071 = vpop.permute.xlu0 %2070
        %2074 = vset.pattern.permute.xlu0 2
        %2075 = vperm.xlu0 %2074, %v1997
        %v2076 = vpop.permute.xlu0 %2075
        %2079 = vset.pattern.permute.xlu0 2
        %2080 = vperm.xlu0 %2079, %v1998
        %v2081 = vpop.permute.xlu0 %2080
        %2084 = vset.pattern.permute.xlu0 2
        %2085 = vperm.xlu0 %2084, %v1999
        %v2086 = vpop.permute.xlu0 %2085
        %2089 = vset.pattern.permute.xlu0 2
        %2090 = vperm.xlu0 %2089, %v2000
        %v2091 = vpop.permute.xlu0 %2090
        %2094 = vset.pattern.permute.xlu0 2
        %2095 = vperm.xlu0 %2094, %v2001
        %v2096 = vpop.permute.xlu0 %2095
        %2099 = vset.pattern.permute.xlu0 2
        %2100 = vperm.xlu0 %2099, %v2002
        %v2101 = vpop.permute.xlu0 %2100
        %2104 = vset.pattern.permute.xlu0 2
        %2105 = vperm.xlu0 %2104, %v2003
        %v2106 = vpop.permute.xlu0 %2105
        %v2108 = vadd.f32 %v2071, %v2060
        %v2109 = vadd.f32 %v2076, %v2061
        %v2110 = vadd.f32 %v2081, %v2062
        %v2111 = vadd.f32 %v2086, %v2063
        %v2112 = vadd.f32 %v2091, %v2064
        %v2113 = vadd.f32 %v2096, %v2065
        %v2114 = vadd.f32 %v2101, %v2066
        %v2115 = vadd.f32 %v2106, %v2067
        %v2117 = vsel %vm1161, %v1946, 0
        %2119 = vmatprep.subr.mxu0 0.0
        %2120 = vmatpush1.msra.mxu0 %v2108
        %2121 = vmatprep.subr.mxu0 0.0
        %2122 = vmatpush1.msra.mxu0 %v2109
        %2123 = vmatprep.subr.mxu0 0.0
        %2124 = vmatpush1.msra.mxu0 %v2110
        %2125 = vmatprep.subr.mxu0 0.0
        %2126 = vmatpush1.msra.mxu0 %v2111
        %2127 = vmatprep.subr.mxu0 0.0
        %2128 = vmatpush1.msra.mxu0 %v2112
        %2129 = vmatprep.subr.mxu0 0.0
        %2130 = vmatpush1.msra.mxu0 %v2113
        %2131 = vmatprep.subr.mxu0 0.0
        %2132 = vmatpush1.msra.mxu0 %v2114
        %2133 = vmatprep.subr.mxu0 0.0
        %2134 = vmatpush1.msra.mxu0 %v2115
        %2135 = vmatprep.subr.mxu0 0.0
        %2136 = vmatpush1.msra.mxu0 0.0
        %2137 = vmatprep.subr.mxu0 0.0
        %2138 = vmatpush1.msra.mxu0 0.0
        %2139 = vmatprep.subr.mxu0 0.0
        %2140 = vmatpush1.msra.mxu0 0.0
        %2141 = vmatprep.subr.mxu0 0.0
        %2142 = vmatpush1.msra.mxu0 0.0
        %2143 = vmatprep.subr.mxu0 0.0
        %2144 = vmatpush1.msra.mxu0 0.0
        %2145 = vmatprep.subr.mxu0 0.0
        %2146 = vmatpush1.msra.mxu0 0.0
        %2147 = vmatprep.subr.mxu0 0.0
        %2148 = vmatpush1.msra.mxu0 0.0
        %2149 = vmatprep.subr.mxu0 0.0
        %2150 = vmatpush1.msra.mxu0 0.0
        %2151 = vmatprep.subr.mxu0 0.0
        %2152 = vmatpush1.msra.mxu0 0.0
        %2153 = vmatprep.subr.mxu0 0.0
        %2154 = vmatpush1.msra.mxu0 0.0
        %2155 = vmatprep.subr.mxu0 0.0
        %2156 = vmatpush1.msra.mxu0 0.0
        %2157 = vmatprep.subr.mxu0 0.0
        %2158 = vmatpush1.msra.mxu0 0.0
        %2159 = vmatprep.subr.mxu0 0.0
        %2160 = vmatpush1.msra.mxu0 0.0
        %2161 = vmatprep.subr.mxu0 0.0
        %2162 = vmatpush1.msra.mxu0 0.0
        %2163 = vmatprep.subr.mxu0 0.0
        %2164 = vmatpush1.msra.mxu0 0.0
        %2165 = vmatprep.subr.mxu0 0.0
        %2166 = vmatpush1.msra.mxu0 0.0
        %2167 = vmatprep.subr.mxu0 0.0
        %2168 = vmatpush1.msra.mxu0 0.0
        %2169 = vmatprep.subr.mxu0 0.0
        %2170 = vmatpush1.msra.mxu0 0.0
        %2171 = vmatprep.subr.mxu0 0.0
        %2172 = vmatpush1.msra.mxu0 0.0
        %2173 = vmatprep.subr.mxu0 0.0
        %2174 = vmatpush1.msra.mxu0 0.0
        %2175 = vmatprep.subr.mxu0 0.0
        %2176 = vmatpush1.msra.mxu0 0.0
        %2177 = vmatprep.subr.mxu0 0.0
        %2178 = vmatpush1.msra.mxu0 0.0
        %2179 = vmatprep.subr.mxu0 0.0
        %2180 = vmatpush1.msra.mxu0 0.0
        %2181 = vmatprep.subr.mxu0 0.0
        %2182 = vmatpush1.msra.mxu0 0.0
        %2183 = vmatprep.mubr.f32.mxu0 0.0
        %2184 = vmatmul.mubr.f32.gmra.mrb[0].mxu0 %v2117
        %v2185 = vpop.f32.mrb[0].mxu0
        %v2186 = vadd.f32 0.0, %v2185
        %v2187 = vpop.f32.mrb[0].mxu0
        %2188 = vdwg.mxu0
        %vm2189 = vcmask 31744
        %v2191 = vsel %vm2189, %v1947, 0
        %v2194 = vsel %vm2189, %v1948, 0
        %v2197 = vsel %vm2189, %v1949, 0
        %v2200 = vsel %vm2189, %v1950, 0
        %v2203 = vsel %vm2189, %v1951, 0
        %v2206 = vsel %vm2189, %v1952, 0
        %v2209 = vsel %vm2189, %v1953, 0
        %v2212 = vsel %vm2189, %v1954, 0
        %vm2214 = vcmask 1043456
        %v2216 = vsel %vm2214, %v2186, 0
        %2218 = vmatprep.subr.mxu0 0.0
        %2219 = vmatpush1.msra.mxu0 %v2216
        %2220 = vmatprep.subr.mxu0 0.0
        %2221 = vmatpush1.msra.mxu0 0.0
        %2222 = vmatprep.subr.mxu0 0.0
        %2223 = vmatpush1.msra.mxu0 0.0
        %2224 = vmatprep.subr.mxu0 0.0
        %2225 = vmatpush1.msra.mxu0 0.0
        %2226 = vmatprep.subr.mxu0 0.0
        %2227 = vmatpush1.msra.mxu0 0.0
        %2228 = vmatprep.subr.mxu0 0.0
        %2229 = vmatpush1.msra.mxu0 0.0
        %2230 = vmatprep.subr.mxu0 0.0
        %2231 = vmatpush1.msra.mxu0 0.0
        %2232 = vmatprep.subr.mxu0 0.0
        %2233 = vmatpush1.msra.mxu0 0.0
        %2234 = vmatprep.subr.mxu0 0.0
        %2235 = vmatpush1.msra.mxu0 0.0
        %2236 = vmatprep.subr.mxu0 0.0
        %2237 = vmatpush1.msra.mxu0 0.0
        %2238 = vmatprep.subr.mxu0 0.0
        %2239 = vmatpush1.msra.mxu0 0.0
        %2240 = vmatprep.subr.mxu0 0.0
        %2241 = vmatpush1.msra.mxu0 0.0
        %2242 = vmatprep.subr.mxu0 0.0
        %2243 = vmatpush1.msra.mxu0 0.0
        %2244 = vmatprep.subr.mxu0 0.0
        %2245 = vmatpush1.msra.mxu0 0.0
        %2246 = vmatprep.subr.mxu0 0.0
        %2247 = vmatpush1.msra.mxu0 0.0
        %2248 = vmatprep.subr.mxu0 0.0
        %2249 = vmatpush1.msra.mxu0 0.0
        %2250 = vmatprep.subr.mxu0 0.0
        %2251 = vmatpush1.msra.mxu0 0.0
        %2252 = vmatprep.subr.mxu0 0.0
        %2253 = vmatpush1.msra.mxu0 0.0
        %2254 = vmatprep.subr.mxu0 0.0
        %2255 = vmatpush1.msra.mxu0 0.0
        %2256 = vmatprep.subr.mxu0 0.0
        %2257 = vmatpush1.msra.mxu0 0.0
        %2258 = vmatprep.subr.mxu0 0.0
        %2259 = vmatpush1.msra.mxu0 0.0
        %2260 = vmatprep.subr.mxu0 0.0
        %2261 = vmatpush1.msra.mxu0 0.0
        %2262 = vmatprep.subr.mxu0 0.0
        %2263 = vmatpush1.msra.mxu0 0.0
        %2264 = vmatprep.subr.mxu0 0.0
        %2265 = vmatpush1.msra.mxu0 0.0
        %2266 = vmatprep.subr.mxu0 0.0
        %2267 = vmatpush1.msra.mxu0 0.0
        %2268 = vmatprep.subr.mxu0 0.0
        %2269 = vmatpush1.msra.mxu0 0.0
        %2270 = vmatprep.subr.mxu0 0.0
        %2271 = vmatpush1.msra.mxu0 0.0
        %2272 = vmatprep.subr.mxu0 0.0
        %2273 = vmatpush1.msra.mxu0 0.0
        %2274 = vmatprep.subr.mxu0 0.0
        %2275 = vmatpush1.msra.mxu0 0.0
        %2276 = vmatprep.subr.mxu0 0.0
        %2277 = vmatpush1.msra.mxu0 0.0
        %2278 = vmatprep.subr.mxu0 0.0
        %2279 = vmatpush1.msra.mxu0 0.0
        %2280 = vmatprep.subr.mxu0 0.0
        %2281 = vmatpush1.msra.mxu0 0.0
        %2282 = vmatprep.mubr.f32.mxu0 0.0
        %2283 = vmatmul.mubr.f32.gmra.mrb[0].mxu0 %v2191
        %v2284 = vpop.f32.mrb[0].mxu0
        %v2285 = vadd.f32 0.0, %v2284
        %v2286 = vpop.f32.mrb[0].mxu0
        %2287 = vmatprep.mubr.f32.mxu0 0.0
        %2288 = vmatmul.mubr.f32.gmra.mrb[0].mxu0 %v2194
        %v2289 = vpop.f32.mrb[0].mxu0
        %v2290 = vadd.f32 0.0, %v2289
        %v2291 = vpop.f32.mrb[0].mxu0
        %2292 = vmatprep.mubr.f32.mxu0 0.0
        %2293 = vmatmul.mubr.f32.gmra.mrb[0].mxu0 %v2197
        %v2294 = vpop.f32.mrb[0].mxu0
        %v2295 = vadd.f32 0.0, %v2294
        %v2296 = vpop.f32.mrb[0].mxu0
        %2297 = vmatprep.mubr.f32.mxu0 0.0
        %2298 = vmatmul.mubr.f32.gmra.mrb[0].mxu0 %v2200
        %v2299 = vpop.f32.mrb[0].mxu0
        %v2300 = vadd.f32 0.0, %v2299
        %v2301 = vpop.f32.mrb[0].mxu0
        %2302 = vmatprep.mubr.f32.mxu0 0.0
        %2303 = vmatmul.mubr.f32.gmra.mrb[0].mxu0 %v2203
        %v2304 = vpop.f32.mrb[0].mxu0
        %v2305 = vadd.f32 0.0, %v2304
        %v2306 = vpop.f32.mrb[0].mxu0
        %2307 = vmatprep.mubr.f32.mxu0 0.0
        %2308 = vmatmul.mubr.f32.gmra.mrb[0].mxu0 %v2206
        %v2309 = vpop.f32.mrb[0].mxu0
        %v2310 = vadd.f32 0.0, %v2309
        %v2311 = vpop.f32.mrb[0].mxu0
        %2312 = vmatprep.mubr.f32.mxu0 0.0
        %2313 = vmatmul.mubr.f32.gmra.mrb[0].mxu0 %v2209
        %v2314 = vpop.f32.mrb[0].mxu0
        %v2315 = vadd.f32 0.0, %v2314
        %v2316 = vpop.f32.mrb[0].mxu0
        %2317 = vmatprep.mubr.f32.mxu0 0.0
        %2318 = vmatmul.mubr.f32.gmra.mrb[0].mxu0 %v2212
        %v2319 = vpop.f32.mrb[0].mxu0
        %v2320 = vadd.f32 0.0, %v2319
        %v2321 = vpop.f32.mrb[0].mxu0
        %2322 = vdwg.mxu0
        %2324 = vset.pattern.permute.xlu0 0
        %2325 = vperm.xlu0 %2324, %v1955
        %v2326 = vpop.permute.xlu0 %2325
        %2329 = vset.pattern.permute.xlu0 0
        %2330 = vperm.xlu0 %2329, %v1956
        %v2331 = vpop.permute.xlu0 %2330
        %2334 = vset.pattern.permute.xlu0 0
        %2335 = vperm.xlu0 %2334, %v1957
        %v2336 = vpop.permute.xlu0 %2335
        %2339 = vset.pattern.permute.xlu0 0
        %2340 = vperm.xlu0 %2339, %v1958
        %v2341 = vpop.permute.xlu0 %2340
        %2344 = vset.pattern.permute.xlu0 0
        %2345 = vperm.xlu0 %2344, %v1959
        %v2346 = vpop.permute.xlu0 %2345
        %2349 = vset.pattern.permute.xlu0 0
        %2350 = vperm.xlu0 %2349, %v1960
        %v2351 = vpop.permute.xlu0 %2350
        %2354 = vset.pattern.permute.xlu0 0
        %2355 = vperm.xlu0 %2354, %v1961
        %v2356 = vpop.permute.xlu0 %2355
        %2359 = vset.pattern.permute.xlu0 0
        %2360 = vperm.xlu0 %2359, %v1962
        %v2361 = vpop.permute.xlu0 %2360
        %v2363 = vmul.f32 %v2326, %v2285
        %v2364 = vmul.f32 %v2331, %v2290
        %v2365 = vmul.f32 %v2336, %v2295
        %v2366 = vmul.f32 %v2341, %v2300
        %v2367 = vmul.f32 %v2346, %v2305
        %v2368 = vmul.f32 %v2351, %v2310
        %v2369 = vmul.f32 %v2356, %v2315
        %v2370 = vmul.f32 %v2361, %v2320
        %v2371 = vsub.f32 %v2108, %v2285
        %v2372 = vsub.f32 %v2109, %v2290
        %v2373 = vsub.f32 %v2110, %v2295
        %v2374 = vsub.f32 %v2111, %v2300
        %v2375 = vsub.f32 %v2112, %v2305
        %v2376 = vsub.f32 %v2113, %v2310
        %v2377 = vsub.f32 %v2114, %v2315
        %v2378 = vsub.f32 %v2115, %v2320
        %2379 = vset.pattern.permute.xlu0 1
        %2380 = vperm.xlu0 %2379, %v2004
        %v2381 = vpop.permute.xlu0 %2380
        %2383 = vset.pattern.permute.xlu0 1
        %2384 = vperm.xlu0 %2383, %v2005
        %v2385 = vpop.permute.xlu0 %2384
        %2387 = vset.pattern.permute.xlu0 1
        %2388 = vperm.xlu0 %2387, %v2006
        %v2389 = vpop.permute.xlu0 %2388
        %2391 = vset.pattern.permute.xlu0 1
        %2392 = vperm.xlu0 %2391, %v2007
        %v2393 = vpop.permute.xlu0 %2392
        %2395 = vset.pattern.permute.xlu0 1
        %2396 = vperm.xlu0 %2395, %v2008
        %v2397 = vpop.permute.xlu0 %2396
        %2399 = vset.pattern.permute.xlu0 1
        %2400 = vperm.xlu0 %2399, %v2009
        %v2401 = vpop.permute.xlu0 %2400
        %2403 = vset.pattern.permute.xlu0 1
        %2404 = vperm.xlu0 %2403, %v2010
        %v2405 = vpop.permute.xlu0 %2404
        %2407 = vset.pattern.permute.xlu0 1
        %2408 = vperm.xlu0 %2407, %v2011
        %v2409 = vpop.permute.xlu0 %2408
        %v2411 = vmul.f32 %v2381, %v2371
        %v2412 = vmul.f32 %v2385, %v2372
        %v2413 = vmul.f32 %v2389, %v2373
        %v2414 = vmul.f32 %v2393, %v2374
        %v2415 = vmul.f32 %v2397, %v2375
        %v2416 = vmul.f32 %v2401, %v2376
        %v2417 = vmul.f32 %v2405, %v2377
        %v2418 = vmul.f32 %v2409, %v2378
        %v2419 = vadd.f32 %v2363, %v2411
        %v2420 = vadd.f32 %v2364, %v2412
        %v2421 = vadd.f32 %v2365, %v2413
        %v2422 = vadd.f32 %v2366, %v2414
        %v2423 = vadd.f32 %v2367, %v2415
        %v2424 = vadd.f32 %v2368, %v2416
        %v2425 = vadd.f32 %v2369, %v2417
        %v2426 = vadd.f32 %v2370, %v2418
        %2427 = vset.pattern.permute.xlu0 5
        %2428 = vperm.xlu0 %2427, %v1955
        %v2429 = vpop.permute.xlu0 %2428
        %2431 = vset.pattern.permute.xlu0 5
        %2432 = vperm.xlu0 %2431, %v1956
        %v2433 = vpop.permute.xlu0 %2432
        %2435 = vset.pattern.permute.xlu0 5
        %2436 = vperm.xlu0 %2435, %v1957
        %v2437 = vpop.permute.xlu0 %2436
        %2439 = vset.pattern.permute.xlu0 5
        %2440 = vperm.xlu0 %2439, %v1958
        %v2441 = vpop.permute.xlu0 %2440
        %2443 = vset.pattern.permute.xlu0 5
        %2444 = vperm.xlu0 %2443, %v1959
        %v2445 = vpop.permute.xlu0 %2444
        %2447 = vset.pattern.permute.xlu0 5
        %2448 = vperm.xlu0 %2447, %v1960
        %v2449 = vpop.permute.xlu0 %2448
        %2451 = vset.pattern.permute.xlu0 5
        %2452 = vperm.xlu0 %2451, %v1961
        %v2453 = vpop.permute.xlu0 %2452
        %2455 = vset.pattern.permute.xlu0 5
        %2456 = vperm.xlu0 %2455, %v1962
        %v2457 = vpop.permute.xlu0 %2456
        %v2459 = vmul.f32 %v1938, %v2429
        %v2460 = vmul.f32 %v1939, %v2433
        %v2461 = vmul.f32 %v1940, %v2437
        %v2462 = vmul.f32 %v1941, %v2441
        %v2463 = vmul.f32 %v1942, %v2445
        %v2464 = vmul.f32 %v1943, %v2449
        %v2465 = vmul.f32 %v1944, %v2453
        %v2466 = vmul.f32 %v1945, %v2457
        %2467 = vset.pattern.permute.xlu0 4
        %2468 = vperm.xlu0 %2467, %v1955
        %v2469 = vpop.permute.xlu0 %2468
        %2471 = vset.pattern.permute.xlu0 4
        %2472 = vperm.xlu0 %2471, %v1956
        %v2473 = vpop.permute.xlu0 %2472
        %2475 = vset.pattern.permute.xlu0 4
        %2476 = vperm.xlu0 %2475, %v1957
        %v2477 = vpop.permute.xlu0 %2476
        %2479 = vset.pattern.permute.xlu0 4
        %2480 = vperm.xlu0 %2479, %v1958
        %v2481 = vpop.permute.xlu0 %2480
        %2483 = vset.pattern.permute.xlu0 4
        %2484 = vperm.xlu0 %2483, %v1959
        %v2485 = vpop.permute.xlu0 %2484
        %2487 = vset.pattern.permute.xlu0 4
        %2488 = vperm.xlu0 %2487, %v1960
        %v2489 = vpop.permute.xlu0 %2488
        %2491 = vset.pattern.permute.xlu0 4
        %2492 = vperm.xlu0 %2491, %v1961
        %v2493 = vpop.permute.xlu0 %2492
        %2495 = vset.pattern.permute.xlu0 4
        %2496 = vperm.xlu0 %2495, %v1962
        %v2497 = vpop.permute.xlu0 %2496
        %v2499 = vmul.f32 %v2419, %v2469
        %v2500 = vmul.f32 %v2420, %v2473
        %v2501 = vmul.f32 %v2421, %v2477
        %v2502 = vmul.f32 %v2422, %v2481
        %v2503 = vmul.f32 %v2423, %v2485
        %v2504 = vmul.f32 %v2424, %v2489
        %v2505 = vmul.f32 %v2425, %v2493
        %v2506 = vmul.f32 %v2426, %v2497
        %v2507 = vadd.f32 %v2459, %v2499
        %v2508 = vadd.f32 %v2460, %v2500
        %v2509 = vadd.f32 %v2461, %v2501
        %v2510 = vadd.f32 %v2462, %v2502
        %v2511 = vadd.f32 %v2463, %v2503
        %v2512 = vadd.f32 %v2464, %v2504
        %v2513 = vadd.f32 %v2465, %v2505
        %v2514 = vadd.f32 %v2466, %v2506
        %v2515 = vld [vmem:[#allocation8] sm:$0xff]
        %v2516 = vld [vmem:[#allocation8 + $0x8] sm:$0xff]
        %v2517 = vld [vmem:[#allocation10] sm:$0xff]
        %v2518 = vld [vmem:[#allocation10 + $0x8] sm:$0xff]
        %v2519 = vld [vmem:[#allocation10 + $0x10] sm:$0xff]
        %v2520 = vld [vmem:[#allocation10 + $0x18] sm:$0xff]
        %v2521 = vld [vmem:[#allocation10 + $0x20] sm:$0xff]
        %v2522 = vld [vmem:[#allocation10 + $0x28] sm:$0xff]
        %v2523 = vld [vmem:[#allocation10 + $0x30] sm:$0xff]
        %v2524 = vld [vmem:[#allocation10 + $0x38] sm:$0xff]
        %v2526 = vsel %vm906, %v1938, 0
        %v2529 = vsel %vm906, %v1939, 0
        %v2532 = vsel %vm906, %v1940, 0
        %v2535 = vsel %vm906, %v1941, 0
        %v2538 = vsel %vm906, %v1942, 0
        %v2541 = vsel %vm906, %v1943, 0
        %v2544 = vsel %vm906, %v1944, 0
        %v2547 = vsel %vm906, %v1945, 0
        %2549 = vmatprep.subr.mxu0 0.0
        %2550 = vmatpush1.msra.mxu0 %v2515
        %2551 = vmatprep.subr.mxu0 0.0
        %2552 = vmatpush1.msra.mxu0 %v2516
        %2553 = vmatprep.subr.mxu0 0.0
        %2554 = vmatpush1.msra.mxu0 0.0
        %2555 = vmatprep.subr.mxu0 0.0
        %2556 = vmatpush1.msra.mxu0 0.0
        %2557 = vmatprep.subr.mxu0 0.0
        %2558 = vmatpush1.msra.mxu0 0.0
        %2559 = vmatprep.subr.mxu0 0.0
        %2560 = vmatpush1.msra.mxu0 0.0
        %2561 = vmatprep.subr.mxu0 0.0
        %2562 = vmatpush1.msra.mxu0 0.0
        %2563 = vmatprep.subr.mxu0 0.0
        %2564 = vmatpush1.msra.mxu0 0.0
        %2565 = vmatprep.subr.mxu0 0.0
        %2566 = vmatpush1.msra.mxu0 0.0
        %2567 = vmatprep.subr.mxu0 0.0
        %2568 = vmatpush1.msra.mxu0 0.0
        %2569 = vmatprep.subr.mxu0 0.0
        %2570 = vmatpush1.msra.mxu0 0.0
        %2571 = vmatprep.subr.mxu0 0.0
        %2572 = vmatpush1.msra.mxu0 0.0
        %2573 = vmatprep.subr.mxu0 0.0
        %2574 = vmatpush1.msra.mxu0 0.0
        %2575 = vmatprep.subr.mxu0 0.0
        %2576 = vmatpush1.msra.mxu0 0.0
        %2577 = vmatprep.subr.mxu0 0.0
        %2578 = vmatpush1.msra.mxu0 0.0
        %2579 = vmatprep.subr.mxu0 0.0
        %2580 = vmatpush1.msra.mxu0 0.0
        %2581 = vmatprep.subr.mxu0 0.0
        %2582 = vmatpush1.msra.mxu0 0.0
        %2583 = vmatprep.subr.mxu0 0.0
        %2584 = vmatpush1.msra.mxu0 0.0
        %2585 = vmatprep.subr.mxu0 0.0
        %2586 = vmatpush1.msra.mxu0 0.0
        %2587 = vmatprep.subr.mxu0 0.0
        %2588 = vmatpush1.msra.mxu0 0.0
        %2589 = vmatprep.subr.mxu0 0.0
        %2590 = vmatpush1.msra.mxu0 0.0
        %2591 = vmatprep.subr.mxu0 0.0
        %2592 = vmatpush1.msra.mxu0 0.0
        %2593 = vmatprep.subr.mxu0 0.0
        %2594 = vmatpush1.msra.mxu0 0.0
        %2595 = vmatprep.subr.mxu0 0.0
        %2596 = vmatpush1.msra.mxu0 0.0
        %2597 = vmatprep.subr.mxu0 0.0
        %2598 = vmatpush1.msra.mxu0 0.0
        %2599 = vmatprep.subr.mxu0 0.0
        %2600 = vmatpush1.msra.mxu0 0.0
        %2601 = vmatprep.subr.mxu0 0.0
        %2602 = vmatpush1.msra.mxu0 0.0
        %2603 = vmatprep.subr.mxu0 0.0
        %2604 = vmatpush1.msra.mxu0 0.0
        %2605 = vmatprep.subr.mxu0 0.0
        %2606 = vmatpush1.msra.mxu0 0.0
        %2607 = vmatprep.subr.mxu0 0.0
        %2608 = vmatpush1.msra.mxu0 0.0
        %2609 = vmatprep.subr.mxu0 0.0
        %2610 = vmatpush1.msra.mxu0 0.0
        %2611 = vmatprep.subr.mxu0 0.0
        %2612 = vmatpush1.msra.mxu0 0.0
        %2613 = vmatprep.mubr.f32.mxu0 0.0
        %2614 = vmatmul.mubr.f32.gmra.mrb[0].mxu0 %v2526
        %v2615 = vpop.f32.mrb[0].mxu0
        %v2616 = vadd.f32 0.0, %v2615
        %v2617 = vpop.f32.mrb[0].mxu0
        %2618 = vmatprep.mubr.f32.mxu0 0.0
        %2619 = vmatmul.mubr.f32.gmra.mrb[0].mxu0 %v2529
        %v2620 = vpop.f32.mrb[0].mxu0
        %v2621 = vadd.f32 0.0, %v2620
        %v2622 = vpop.f32.mrb[0].mxu0
        %2623 = vmatprep.mubr.f32.mxu0 0.0
        %2624 = vmatmul.mubr.f32.gmra.mrb[0].mxu0 %v2532
        %v2625 = vpop.f32.mrb[0].mxu0
        %v2626 = vadd.f32 0.0, %v2625
        %v2627 = vpop.f32.mrb[0].mxu0
        %2628 = vmatprep.mubr.f32.mxu0 0.0
        %2629 = vmatmul.mubr.f32.gmra.mrb[0].mxu0 %v2535
        %v2630 = vpop.f32.mrb[0].mxu0
        %v2631 = vadd.f32 0.0, %v2630
        %v2632 = vpop.f32.mrb[0].mxu0
        %2633 = vmatprep.mubr.f32.mxu0 0.0
        %2634 = vmatmul.mubr.f32.gmra.mrb[0].mxu0 %v2538
        %v2635 = vpop.f32.mrb[0].mxu0
        %v2636 = vadd.f32 0.0, %v2635
        %v2637 = vpop.f32.mrb[0].mxu0
        %2638 = vmatprep.mubr.f32.mxu0 0.0
        %2639 = vmatmul.mubr.f32.gmra.mrb[0].mxu0 %v2541
        %v2640 = vpop.f32.mrb[0].mxu0
        %v2641 = vadd.f32 0.0, %v2640
        %v2642 = vpop.f32.mrb[0].mxu0
        %2643 = vmatprep.mubr.f32.mxu0 0.0
        %2644 = vmatmul.mubr.f32.gmra.mrb[0].mxu0 %v2544
        %v2645 = vpop.f32.mrb[0].mxu0
        %v2646 = vadd.f32 0.0, %v2645
        %v2647 = vpop.f32.mrb[0].mxu0
        %2648 = vmatprep.mubr.f32.mxu0 0.0
        %2649 = vmatmul.mubr.f32.gmra.mrb[0].mxu0 %v2547
        %v2650 = vpop.f32.mrb[0].mxu0
        %v2651 = vadd.f32 0.0, %v2650
        %v2652 = vpop.f32.mrb[0].mxu0
        %2653 = vdwg.mxu0
        %2654 = vset.pattern.permute.xlu0 8
        %2655 = vperm.xlu0 %2654, %v1955
        %v2656 = vpop.permute.xlu0 %2655
        %2658 = vset.pattern.permute.xlu0 8
        %2659 = vperm.xlu0 %2658, %v1956
        %v2660 = vpop.permute.xlu0 %2659
        %2662 = vset.pattern.permute.xlu0 8
        %2663 = vperm.xlu0 %2662, %v1957
        %v2664 = vpop.permute.xlu0 %2663
        %2666 = vset.pattern.permute.xlu0 8
        %2667 = vperm.xlu0 %2666, %v1958
        %v2668 = vpop.permute.xlu0 %2667
        %2670 = vset.pattern.permute.xlu0 8
        %2671 = vperm.xlu0 %2670, %v1959
        %v2672 = vpop.permute.xlu0 %2671
        %2674 = vset.pattern.permute.xlu0 8
        %2675 = vperm.xlu0 %2674, %v1960
        %v2676 = vpop.permute.xlu0 %2675
        %2678 = vset.pattern.permute.xlu0 8
        %2679 = vperm.xlu0 %2678, %v1961
        %v2680 = vpop.permute.xlu0 %2679
        %2682 = vset.pattern.permute.xlu0 8
        %2683 = vperm.xlu0 %2682, %v1962
        %v2684 = vpop.permute.xlu0 %2683
        %v2686 = vmul.f32 %v2656, %v2616
        %v2687 = vmul.f32 %v2660, %v2621
        %v2688 = vmul.f32 %v2664, %v2626
        %v2689 = vmul.f32 %v2668, %v2631
        %v2690 = vmul.f32 %v2672, %v2636
        %v2691 = vmul.f32 %v2676, %v2641
        %v2692 = vmul.f32 %v2680, %v2646
        %v2693 = vmul.f32 %v2684, %v2651
        %v2694 = vsub.f32 %v1938, %v2616
        %v2695 = vsub.f32 %v1939, %v2621
        %v2696 = vsub.f32 %v1940, %v2626
        %v2697 = vsub.f32 %v1941, %v2631
        %v2698 = vsub.f32 %v1942, %v2636
        %v2699 = vsub.f32 %v1943, %v2641
        %v2700 = vsub.f32 %v1944, %v2646
        %v2701 = vsub.f32 %v1945, %v2651
        %2702 = vset.pattern.permute.xlu0 9
        %2703 = vperm.xlu0 %2702, %v2004
        %v2704 = vpop.permute.xlu0 %2703
        %2706 = vset.pattern.permute.xlu0 9
        %2707 = vperm.xlu0 %2706, %v2005
        %v2708 = vpop.permute.xlu0 %2707
        %2710 = vset.pattern.permute.xlu0 9
        %2711 = vperm.xlu0 %2710, %v2006
        %v2712 = vpop.permute.xlu0 %2711
        %2714 = vset.pattern.permute.xlu0 9
        %2715 = vperm.xlu0 %2714, %v2007
        %v2716 = vpop.permute.xlu0 %2715
        %2718 = vset.pattern.permute.xlu0 9
        %2719 = vperm.xlu0 %2718, %v2008
        %v2720 = vpop.permute.xlu0 %2719
        %2722 = vset.pattern.permute.xlu0 9
        %2723 = vperm.xlu0 %2722, %v2009
        %v2724 = vpop.permute.xlu0 %2723
        %2726 = vset.pattern.permute.xlu0 9
        %2727 = vperm.xlu0 %2726, %v2010
        %v2728 = vpop.permute.xlu0 %2727
        %2730 = vset.pattern.permute.xlu0 9
        %2731 = vperm.xlu0 %2730, %v2011
        %v2732 = vpop.permute.xlu0 %2731
        %v2734 = vmul.f32 %v2704, %v2694
        %v2735 = vmul.f32 %v2708, %v2695
        %v2736 = vmul.f32 %v2712, %v2696
        %v2737 = vmul.f32 %v2716, %v2697
        %v2738 = vmul.f32 %v2720, %v2698
        %v2739 = vmul.f32 %v2724, %v2699
        %v2740 = vmul.f32 %v2728, %v2700
        %v2741 = vmul.f32 %v2732, %v2701
        %v2742 = vadd.f32 %v2686, %v2734
        %v2743 = vadd.f32 %v2687, %v2735
        %v2744 = vadd.f32 %v2688, %v2736
        %v2745 = vadd.f32 %v2689, %v2737
        %v2746 = vadd.f32 %v2690, %v2738
        %v2747 = vadd.f32 %v2691, %v2739
        %v2748 = vadd.f32 %v2692, %v2740
        %v2749 = vadd.f32 %v2693, %v2741
        %v2751 = vsel %vm1161, %v2517, 0
        %v2754 = vsel %vm1161, %v2518, 0
        %v2757 = vsel %vm1161, %v2519, 0
        %v2760 = vsel %vm1161, %v2520, 0
        %v2763 = vsel %vm1161, %v2521, 0
        %v2766 = vsel %vm1161, %v2522, 0
        %v2769 = vsel %vm1161, %v2523, 0
        %v2772 = vsel %vm1161, %v2524, 0
        %2774 = vmatprep.subr.mxu0 0.0
        %2775 = vmatpush1.msra.mxu0 %v2742
        %2776 = vmatprep.subr.mxu0 0.0
        %2777 = vmatpush1.msra.mxu0 %v2743
        %2778 = vmatprep.subr.mxu0 0.0
        %2779 = vmatpush1.msra.mxu0 %v2744
        %2780 = vmatprep.subr.mxu0 0.0
        %2781 = vmatpush1.msra.mxu0 %v2745
        %2782 = vmatprep.subr.mxu0 0.0
        %2783 = vmatpush1.msra.mxu0 %v2746
        %2784 = vmatprep.subr.mxu0 0.0
        %2785 = vmatpush1.msra.mxu0 %v2747
        %2786 = vmatprep.subr.mxu0 0.0
        %2787 = vmatpush1.msra.mxu0 %v2748
        %2788 = vmatprep.subr.mxu0 0.0
        %2789 = vmatpush1.msra.mxu0 %v2749
        %2790 = vmatprep.subr.mxu0 0.0
        %2791 = vmatpush1.msra.mxu0 0.0
        %2792 = vmatprep.subr.mxu0 0.0
        %2793 = vmatpush1.msra.mxu0 0.0
        %2794 = vmatprep.subr.mxu0 0.0
        %2795 = vmatpush1.msra.mxu0 0.0
        %2796 = vmatprep.subr.mxu0 0.0
        %2797 = vmatpush1.msra.mxu0 0.0
        %2798 = vmatprep.subr.mxu0 0.0
        %2799 = vmatpush1.msra.mxu0 0.0
        %2800 = vmatprep.subr.mxu0 0.0
        %2801 = vmatpush1.msra.mxu0 0.0
        %2802 = vmatprep.subr.mxu0 0.0
        %2803 = vmatpush1.msra.mxu0 0.0
        %2804 = vmatprep.subr.mxu0 0.0
        %2805 = vmatpush1.msra.mxu0 0.0
        %2806 = vmatprep.subr.mxu0 0.0
        %2807 = vmatpush1.msra.mxu0 0.0
        %2808 = vmatprep.subr.mxu0 0.0
        %2809 = vmatpush1.msra.mxu0 0.0
        %2810 = vmatprep.subr.mxu0 0.0
        %2811 = vmatpush1.msra.mxu0 0.0
        %2812 = vmatprep.subr.mxu0 0.0
        %2813 = vmatpush1.msra.mxu0 0.0
        %2814 = vmatprep.subr.mxu0 0.0
        %2815 = vmatpush1.msra.mxu0 0.0
        %2816 = vmatprep.subr.mxu0 0.0
        %2817 = vmatpush1.msra.mxu0 0.0
        %2818 = vmatprep.subr.mxu0 0.0
        %2819 = vmatpush1.msra.mxu0 0.0
        %2820 = vmatprep.subr.mxu0 0.0
        %2821 = vmatpush1.msra.mxu0 0.0
        %2822 = vmatprep.subr.mxu0 0.0
        %2823 = vmatpush1.msra.mxu0 0.0
        %2824 = vmatprep.subr.mxu0 0.0
        %2825 = vmatpush1.msra.mxu0 0.0
        %2826 = vmatprep.subr.mxu0 0.0
        %2827 = vmatpush1.msra.mxu0 0.0
        %2828 = vmatprep.subr.mxu0 0.0
        %2829 = vmatpush1.msra.mxu0 0.0
        %2830 = vmatprep.subr.mxu0 0.0
        %2831 = vmatpush1.msra.mxu0 0.0
        %2832 = vmatprep.subr.mxu0 0.0
        %2833 = vmatpush1.msra.mxu0 0.0
        %2834 = vmatprep.subr.mxu0 0.0
        %2835 = vmatpush1.msra.mxu0 0.0
        %2836 = vmatprep.subr.mxu0 0.0
        %2837 = vmatpush1.msra.mxu0 0.0
        %2838 = vmatprep.mubr.f32.mxu0 0.0
        %2839 = vmatmul.mubr.f32.gmra.mrb[0].mxu0 %v2751
        %v2840 = vpop.f32.mrb[0].mxu0
        %v2841 = vadd.f32 0.0, %v2840
        %v2842 = vpop.f32.mrb[0].mxu0
        %2843 = vmatprep.mubr.f32.mxu0 0.0
        %2844 = vmatmul.mubr.f32.gmra.mrb[0].mxu0 %v2754
        %v2845 = vpop.f32.mrb[0].mxu0
        %v2846 = vadd.f32 0.0, %v2845
        %v2847 = vpop.f32.mrb[0].mxu0
        %2848 = vmatprep.mubr.f32.mxu0 0.0
        %2849 = vmatmul.mubr.f32.gmra.mrb[0].mxu0 %v2757
        %v2850 = vpop.f32.mrb[0].mxu0
        %v2851 = vadd.f32 0.0, %v2850
        %v2852 = vpop.f32.mrb[0].mxu0
        %2853 = vmatprep.mubr.f32.mxu0 0.0
        %2854 = vmatmul.mubr.f32.gmra.mrb[0].mxu0 %v2760
        %v2855 = vpop.f32.mrb[0].mxu0
        %v2856 = vadd.f32 0.0, %v2855
        %v2857 = vpop.f32.mrb[0].mxu0
        %2858 = vmatprep.mubr.f32.mxu0 0.0
        %2859 = vmatmul.mubr.f32.gmra.mrb[0].mxu0 %v2763
        %v2860 = vpop.f32.mrb[0].mxu0
        %v2861 = vadd.f32 0.0, %v2860
        %v2862 = vpop.f32.mrb[0].mxu0
        %2863 = vmatprep.mubr.f32.mxu0 0.0
        %2864 = vmatmul.mubr.f32.gmra.mrb[0].mxu0 %v2766
        %v2865 = vpop.f32.mrb[0].mxu0
        %v2866 = vadd.f32 0.0, %v2865
        %v2867 = vpop.f32.mrb[0].mxu0
        %2868 = vmatprep.mubr.f32.mxu0 0.0
        %2869 = vmatmul.mubr.f32.gmra.mrb[0].mxu0 %v2769
        %v2870 = vpop.f32.mrb[0].mxu0
        %v2871 = vadd.f32 0.0, %v2870
        %v2872 = vpop.f32.mrb[0].mxu0
        %2873 = vmatprep.mubr.f32.mxu0 0.0
        %2874 = vmatmul.mubr.f32.gmra.mrb[0].mxu0 %v2772
        %v2875 = vpop.f32.mrb[0].mxu0
        %v2876 = vadd.f32 0.0, %v2875
        %v2877 = vpop.f32.mrb[0].mxu0
        %2878 = vdwg.mxu0
        %2879 = vset.pattern.permute.xlu0 6
        %2880 = vperm.xlu0 %2879, %v1955
        %v2881 = vpop.permute.xlu0 %2880
        %2883 = vset.pattern.permute.xlu0 6
        %2884 = vperm.xlu0 %2883, %v1956
        %v2885 = vpop.permute.xlu0 %2884
        %2887 = vset.pattern.permute.xlu0 6
        %2888 = vperm.xlu0 %2887, %v1957
        %v2889 = vpop.permute.xlu0 %2888
        %2891 = vset.pattern.permute.xlu0 6
        %2892 = vperm.xlu0 %2891, %v1958
        %v2893 = vpop.permute.xlu0 %2892
        %2895 = vset.pattern.permute.xlu0 6
        %2896 = vperm.xlu0 %2895, %v1959
        %v2897 = vpop.permute.xlu0 %2896
        %2899 = vset.pattern.permute.xlu0 6
        %2900 = vperm.xlu0 %2899, %v1960
        %v2901 = vpop.permute.xlu0 %2900
        %2903 = vset.pattern.permute.xlu0 6
        %2904 = vperm.xlu0 %2903, %v1961
        %v2905 = vpop.permute.xlu0 %2904
        %2907 = vset.pattern.permute.xlu0 6
        %2908 = vperm.xlu0 %2907, %v1962
        %v2909 = vpop.permute.xlu0 %2908
        %v2911 = vmul.f32 %v2881, %v2841
        %v2912 = vmul.f32 %v2885, %v2846
        %v2913 = vmul.f32 %v2889, %v2851
        %v2914 = vmul.f32 %v2893, %v2856
        %v2915 = vmul.f32 %v2897, %v2861
        %v2916 = vmul.f32 %v2901, %v2866
        %v2917 = vmul.f32 %v2905, %v2871
        %v2918 = vmul.f32 %v2909, %v2876
        %v2919 = vsub.f32 %v2742, %v2841
        %v2920 = vsub.f32 %v2743, %v2846
        %v2921 = vsub.f32 %v2744, %v2851
        %v2922 = vsub.f32 %v2745, %v2856
        %v2923 = vsub.f32 %v2746, %v2861
        %v2924 = vsub.f32 %v2747, %v2866
        %v2925 = vsub.f32 %v2748, %v2871
        %v2926 = vsub.f32 %v2749, %v2876
        %2927 = vset.pattern.permute.xlu0 7
        %2928 = vperm.xlu0 %2927, %v2004
        %v2929 = vpop.permute.xlu0 %2928
        %2931 = vset.pattern.permute.xlu0 7
        %2932 = vperm.xlu0 %2931, %v2005
        %v2933 = vpop.permute.xlu0 %2932
        %2935 = vset.pattern.permute.xlu0 7
        %2936 = vperm.xlu0 %2935, %v2006
        %v2937 = vpop.permute.xlu0 %2936
        %2939 = vset.pattern.permute.xlu0 7
        %2940 = vperm.xlu0 %2939, %v2007
        %v2941 = vpop.permute.xlu0 %2940
        %2943 = vset.pattern.permute.xlu0 7
        %2944 = vperm.xlu0 %2943, %v2008
        %v2945 = vpop.permute.xlu0 %2944
        %2947 = vset.pattern.permute.xlu0 7
        %2948 = vperm.xlu0 %2947, %v2009
        %v2949 = vpop.permute.xlu0 %2948
        %2951 = vset.pattern.permute.xlu0 7
        %2952 = vperm.xlu0 %2951, %v2010
        %v2953 = vpop.permute.xlu0 %2952
        %2955 = vset.pattern.permute.xlu0 7
        %2956 = vperm.xlu0 %2955, %v2011
        %v2957 = vpop.permute.xlu0 %2956
        %v2959 = vmul.f32 %v2929, %v2919
        %v2960 = vmul.f32 %v2933, %v2920
        %v2961 = vmul.f32 %v2937, %v2921
        %v2962 = vmul.f32 %v2941, %v2922
        %v2963 = vmul.f32 %v2945, %v2923
        %v2964 = vmul.f32 %v2949, %v2924
        %v2965 = vmul.f32 %v2953, %v2925
        %v2966 = vmul.f32 %v2957, %v2926
        %v2967 = vadd.f32 %v2911, %v2959
        %v2968 = vadd.f32 %v2912, %v2960
        %v2969 = vadd.f32 %v2913, %v2961
        %v2970 = vadd.f32 %v2914, %v2962
        %v2971 = vadd.f32 %v2915, %v2963
        %v2972 = vadd.f32 %v2916, %v2964
        %v2973 = vadd.f32 %v2917, %v2965
        %v2974 = vadd.f32 %v2918, %v2966
        %2975 = vset.pattern.permute.xlu0 11
        %2976 = vperm.xlu0 %2975, %v1955
        %v2977 = vpop.permute.xlu0 %2976
        %2979 = vset.pattern.permute.xlu0 11
        %2980 = vperm.xlu0 %2979, %v1956
        %v2981 = vpop.permute.xlu0 %2980
        %2983 = vset.pattern.permute.xlu0 11
        %2984 = vperm.xlu0 %2983, %v1957
        %v2985 = vpop.permute.xlu0 %2984
        %2987 = vset.pattern.permute.xlu0 11
        %2988 = vperm.xlu0 %2987, %v1958
        %v2989 = vpop.permute.xlu0 %2988
        %2991 = vset.pattern.permute.xlu0 11
        %2992 = vperm.xlu0 %2991, %v1959
        %v2993 = vpop.permute.xlu0 %2992
        %2995 = vset.pattern.permute.xlu0 11
        %2996 = vperm.xlu0 %2995, %v1960
        %v2997 = vpop.permute.xlu0 %2996
        %2999 = vset.pattern.permute.xlu0 11
        %3000 = vperm.xlu0 %2999, %v1961
        %v3001 = vpop.permute.xlu0 %3000
        %3003 = vset.pattern.permute.xlu0 11
        %3004 = vperm.xlu0 %3003, %v1962
        %v3005 = vpop.permute.xlu0 %3004
        %v3007 = vmul.f32 %v1938, %v2977
        %v3008 = vmul.f32 %v1939, %v2981
        %v3009 = vmul.f32 %v1940, %v2985
        %v3010 = vmul.f32 %v1941, %v2989
        %v3011 = vmul.f32 %v1942, %v2993
        %v3012 = vmul.f32 %v1943, %v2997
        %v3013 = vmul.f32 %v1944, %v3001
        %v3014 = vmul.f32 %v1945, %v3005
        %3015 = vset.pattern.permute.xlu0 10
        %3016 = vperm.xlu0 %3015, %v1955
        %v3017 = vpop.permute.xlu0 %3016
        %3019 = vset.pattern.permute.xlu0 10
        %3020 = vperm.xlu0 %3019, %v1956
        %v3021 = vpop.permute.xlu0 %3020
        %3023 = vset.pattern.permute.xlu0 10
        %3024 = vperm.xlu0 %3023, %v1957
        %v3025 = vpop.permute.xlu0 %3024
        %3027 = vset.pattern.permute.xlu0 10
        %3028 = vperm.xlu0 %3027, %v1958
        %v3029 = vpop.permute.xlu0 %3028
        %3031 = vset.pattern.permute.xlu0 10
        %3032 = vperm.xlu0 %3031, %v1959
        %v3033 = vpop.permute.xlu0 %3032
        %3035 = vset.pattern.permute.xlu0 10
        %3036 = vperm.xlu0 %3035, %v1960
        %v3037 = vpop.permute.xlu0 %3036
        %3039 = vset.pattern.permute.xlu0 10
        %3040 = vperm.xlu0 %3039, %v1961
        %v3041 = vpop.permute.xlu0 %3040
        %3043 = vset.pattern.permute.xlu0 10
        %3044 = vperm.xlu0 %3043, %v1962
        %v3045 = vpop.permute.xlu0 %3044
        %v3047 = vmul.f32 %v2967, %v3017
        %v3048 = vmul.f32 %v2968, %v3021
        %v3049 = vmul.f32 %v2969, %v3025
        %v3050 = vmul.f32 %v2970, %v3029
        %v3051 = vmul.f32 %v2971, %v3033
        %v3052 = vmul.f32 %v2972, %v3037
        %v3053 = vmul.f32 %v2973, %v3041
        %v3054 = vmul.f32 %v2974, %v3045
        %v3055 = vadd.f32 %v3007, %v3047
        %v3056 = vadd.f32 %v3008, %v3048
        %v3057 = vadd.f32 %v3009, %v3049
        %v3058 = vadd.f32 %v3010, %v3050
        %v3059 = vadd.f32 %v3011, %v3051
        %v3060 = vadd.f32 %v3012, %v3052
        %v3061 = vadd.f32 %v3013, %v3053
        %v3062 = vadd.f32 %v3014, %v3054
        %v3063 = vadd.f32 %v2507, %v3055
        %v3064 = vadd.f32 %v2508, %v3056
        %v3065 = vadd.f32 %v2509, %v3057
        %v3066 = vadd.f32 %v2510, %v3058
        %v3067 = vadd.f32 %v2511, %v3059
        %v3068 = vadd.f32 %v2512, %v3060
        %v3069 = vadd.f32 %v2513, %v3061
        %v3070 = vadd.f32 %v2514, %v3062
        %s3071 = scalar_lea.vmem [#allocation8], 16
        %v3072 = vld [vmem:[%s3071] sm:$0xff]
        %v3073 = vld [vmem:[%s3071 + $0x8] sm:$0xff]
        %s3074 = scalar_lea.vmem [#allocation10], 64
        %v3075 = vld [vmem:[%s3074] sm:$0xff]
        %v3076 = vld [vmem:[%s3074 + $0x8] sm:$0xff]
        %v3077 = vld [vmem:[%s3074 + $0x10] sm:$0xff]
        %v3078 = vld [vmem:[%s3074 + $0x18] sm:$0xff]
        %v3079 = vld [vmem:[%s3074 + $0x20] sm:$0xff]
        %v3080 = vld [vmem:[%s3074 + $0x28] sm:$0xff]
        %v3081 = vld [vmem:[%s3074 + $0x30] sm:$0xff]
        %v3082 = vld [vmem:[%s3074 + $0x38] sm:$0xff]
        %3083 = vmatprep.subr.mxu0 0.0
        %3084 = vmatpush1.msra.mxu0 %v3072
        %3085 = vmatprep.subr.mxu0 0.0
        %3086 = vmatpush1.msra.mxu0 %v3073
        %3087 = vmatprep.subr.mxu0 0.0
        %3088 = vmatpush1.msra.mxu0 0.0
        %3089 = vmatprep.subr.mxu0 0.0
        %3090 = vmatpush1.msra.mxu0 0.0
        %3091 = vmatprep.subr.mxu0 0.0
        %3092 = vmatpush1.msra.mxu0 0.0
        %3093 = vmatprep.subr.mxu0 0.0
        %3094 = vmatpush1.msra.mxu0 0.0
        %3095 = vmatprep.subr.mxu0 0.0
        %3096 = vmatpush1.msra.mxu0 0.0
        %3097 = vmatprep.subr.mxu0 0.0
        %3098 = vmatpush1.msra.mxu0 0.0
        %3099 = vmatprep.subr.mxu0 0.0
        %3100 = vmatpush1.msra.mxu0 0.0
        %3101 = vmatprep.subr.mxu0 0.0
        %3102 = vmatpush1.msra.mxu0 0.0
        %3103 = vmatprep.subr.mxu0 0.0
        %3104 = vmatpush1.msra.mxu0 0.0
        %3105 = vmatprep.subr.mxu0 0.0
        %3106 = vmatpush1.msra.mxu0 0.0
        %3107 = vmatprep.subr.mxu0 0.0
        %3108 = vmatpush1.msra.mxu0 0.0
        %3109 = vmatprep.subr.mxu0 0.0
        %3110 = vmatpush1.msra.mxu0 0.0
        %3111 = vmatprep.subr.mxu0 0.0
        %3112 = vmatpush1.msra.mxu0 0.0
        %3113 = vmatprep.subr.mxu0 0.0
        %3114 = vmatpush1.msra.mxu0 0.0
        %3115 = vmatprep.subr.mxu0 0.0
        %3116 = vmatpush1.msra.mxu0 0.0
        %3117 = vmatprep.subr.mxu0 0.0
        %3118 = vmatpush1.msra.mxu0 0.0
        %3119 = vmatprep.subr.mxu0 0.0
        %3120 = vmatpush1.msra.mxu0 0.0
        %3121 = vmatprep.subr.mxu0 0.0
        %3122 = vmatpush1.msra.mxu0 0.0
        %3123 = vmatprep.subr.mxu0 0.0
        %3124 = vmatpush1.msra.mxu0 0.0
        %3125 = vmatprep.subr.mxu0 0.0
        %3126 = vmatpush1.msra.mxu0 0.0
        %3127 = vmatprep.subr.mxu0 0.0
        %3128 = vmatpush1.msra.mxu0 0.0
        %3129 = vmatprep.subr.mxu0 0.0
        %3130 = vmatpush1.msra.mxu0 0.0
        %3131 = vmatprep.subr.mxu0 0.0
        %3132 = vmatpush1.msra.mxu0 0.0
        %3133 = vmatprep.subr.mxu0 0.0
        %3134 = vmatpush1.msra.mxu0 0.0
        %3135 = vmatprep.subr.mxu0 0.0
        %3136 = vmatpush1.msra.mxu0 0.0
        %3137 = vmatprep.subr.mxu0 0.0
        %3138 = vmatpush1.msra.mxu0 0.0
        %3139 = vmatprep.subr.mxu0 0.0
        %3140 = vmatpush1.msra.mxu0 0.0
        %3141 = vmatprep.subr.mxu0 0.0
        %3142 = vmatpush1.msra.mxu0 0.0
        %3143 = vmatprep.subr.mxu0 0.0
        %3144 = vmatpush1.msra.mxu0 0.0
        %3145 = vmatprep.subr.mxu0 0.0
        %3146 = vmatpush1.msra.mxu0 0.0
        %3147 = vmatprep.mubr.f32.mxu0 0.0
        %3148 = vmatmul.mubr.f32.gmra.mrb[0].mxu0 %v2526
        %v3149 = vpop.f32.mrb[0].mxu0
        %v3150 = vadd.f32 0.0, %v3149
        %v3151 = vpop.f32.mrb[0].mxu0
        %3152 = vmatprep.mubr.f32.mxu0 0.0
        %3153 = vmatmul.mubr.f32.gmra.mrb[0].mxu0 %v2529
        %v3154 = vpop.f32.mrb[0].mxu0
        %v3155 = vadd.f32 0.0, %v3154
        %v3156 = vpop.f32.mrb[0].mxu0
        %3157 = vmatprep.mubr.f32.mxu0 0.0
        %3158 = vmatmul.mubr.f32.gmra.mrb[0].mxu0 %v2532
        %v3159 = vpop.f32.mrb[0].mxu0
        %v3160 = vadd.f32 0.0, %v3159
        %v3161 = vpop.f32.mrb[0].mxu0
        %3162 = vmatprep.mubr.f32.mxu0 0.0
        %3163 = vmatmul.mubr.f32.gmra.mrb[0].mxu0 %v2535
        %v3164 = vpop.f32.mrb[0].mxu0
        %v3165 = vadd.f32 0.0, %v3164
        %v3166 = vpop.f32.mrb[0].mxu0
        %3167 = vmatprep.mubr.f32.mxu0 0.0
        %3168 = vmatmul.mubr.f32.gmra.mrb[0].mxu0 %v2538
        %v3169 = vpop.f32.mrb[0].mxu0
        %v3170 = vadd.f32 0.0, %v3169
        %v3171 = vpop.f32.mrb[0].mxu0
        %3172 = vmatprep.mubr.f32.mxu0 0.0
        %3173 = vmatmul.mubr.f32.gmra.mrb[0].mxu0 %v2541
        %v3174 = vpop.f32.mrb[0].mxu0
        %v3175 = vadd.f32 0.0, %v3174
        %v3176 = vpop.f32.mrb[0].mxu0
        %3177 = vmatprep.mubr.f32.mxu0 0.0
        %3178 = vmatmul.mubr.f32.gmra.mrb[0].mxu0 %v2544
        %v3179 = vpop.f32.mrb[0].mxu0
        %v3180 = vadd.f32 0.0, %v3179
        %v3181 = vpop.f32.mrb[0].mxu0
        %3182 = vmatprep.mubr.f32.mxu0 0.0
        %3183 = vmatmul.mubr.f32.gmra.mrb[0].mxu0 %v2547
        %v3184 = vpop.f32.mrb[0].mxu0
        %v3185 = vadd.f32 0.0, %v3184
        %v3186 = vpop.f32.mrb[0].mxu0
        %3187 = vdwg.mxu0
        %3188 = vset.pattern.permute.xlu0 14
        %3189 = vperm.xlu0 %3188, %v1955
        %v3190 = vpop.permute.xlu0 %3189
        %3192 = vset.pattern.permute.xlu0 14
        %3193 = vperm.xlu0 %3192, %v1956
        %v3194 = vpop.permute.xlu0 %3193
        %3196 = vset.pattern.permute.xlu0 14
        %3197 = vperm.xlu0 %3196, %v1957
        %v3198 = vpop.permute.xlu0 %3197
        %3200 = vset.pattern.permute.xlu0 14
        %3201 = vperm.xlu0 %3200, %v1958
        %v3202 = vpop.permute.xlu0 %3201
        %3204 = vset.pattern.permute.xlu0 14
        %3205 = vperm.xlu0 %3204, %v1959
        %v3206 = vpop.permute.xlu0 %3205
        %3208 = vset.pattern.permute.xlu0 14
        %3209 = vperm.xlu0 %3208, %v1960
        %v3210 = vpop.permute.xlu0 %3209
        %3212 = vset.pattern.permute.xlu0 14
        %3213 = vperm.xlu0 %3212, %v1961
        %v3214 = vpop.permute.xlu0 %3213
        %3216 = vset.pattern.permute.xlu0 14
        %3217 = vperm.xlu0 %3216, %v1962
        %v3218 = vpop.permute.xlu0 %3217
        %v3220 = vmul.f32 %v3190, %v3150
        %v3221 = vmul.f32 %v3194, %v3155
        %v3222 = vmul.f32 %v3198, %v3160
        %v3223 = vmul.f32 %v3202, %v3165
        %v3224 = vmul.f32 %v3206, %v3170
        %v3225 = vmul.f32 %v3210, %v3175
        %v3226 = vmul.f32 %v3214, %v3180
        %v3227 = vmul.f32 %v3218, %v3185
        %v3228 = vsub.f32 %v1938, %v3150
        %v3229 = vsub.f32 %v1939, %v3155
        %v3230 = vsub.f32 %v1940, %v3160
        %v3231 = vsub.f32 %v1941, %v3165
        %v3232 = vsub.f32 %v1942, %v3170
        %v3233 = vsub.f32 %v1943, %v3175
        %v3234 = vsub.f32 %v1944, %v3180
        %v3235 = vsub.f32 %v1945, %v3185
        %3236 = vset.pattern.permute.xlu0 15
        %3237 = vperm.xlu0 %3236, %v2004
        %v3238 = vpop.permute.xlu0 %3237
        %3240 = vset.pattern.permute.xlu0 15
        %3241 = vperm.xlu0 %3240, %v2005
        %v3242 = vpop.permute.xlu0 %3241
        %3244 = vset.pattern.permute.xlu0 15
        %3245 = vperm.xlu0 %3244, %v2006
        %v3246 = vpop.permute.xlu0 %3245
        %3248 = vset.pattern.permute.xlu0 15
        %3249 = vperm.xlu0 %3248, %v2007
        %v3250 = vpop.permute.xlu0 %3249
        %3252 = vset.pattern.permute.xlu0 15
        %3253 = vperm.xlu0 %3252, %v2008
        %v3254 = vpop.permute.xlu0 %3253
        %3256 = vset.pattern.permute.xlu0 15
        %3257 = vperm.xlu0 %3256, %v2009
        %v3258 = vpop.permute.xlu0 %3257
        %3260 = vset.pattern.permute.xlu0 15
        %3261 = vperm.xlu0 %3260, %v2010
        %v3262 = vpop.permute.xlu0 %3261
        %3264 = vset.pattern.permute.xlu0 15
        %3265 = vperm.xlu0 %3264, %v2011
        %v3266 = vpop.permute.xlu0 %3265
        %v3268 = vmul.f32 %v3238, %v3228
        %v3269 = vmul.f32 %v3242, %v3229
        %v3270 = vmul.f32 %v3246, %v3230
        %v3271 = vmul.f32 %v3250, %v3231
        %v3272 = vmul.f32 %v3254, %v3232
        %v3273 = vmul.f32 %v3258, %v3233
        %v3274 = vmul.f32 %v3262, %v3234
        %v3275 = vmul.f32 %v3266, %v3235
        %v3276 = vadd.f32 %v3220, %v3268
        %v3277 = vadd.f32 %v3221, %v3269
        %v3278 = vadd.f32 %v3222, %v3270
        %v3279 = vadd.f32 %v3223, %v3271
        %v3280 = vadd.f32 %v3224, %v3272
        %v3281 = vadd.f32 %v3225, %v3273
        %v3282 = vadd.f32 %v3226, %v3274
        %v3283 = vadd.f32 %v3227, %v3275
        %v3285 = vsel %vm1161, %v3075, 0
        %v3288 = vsel %vm1161, %v3076, 0
        %v3291 = vsel %vm1161, %v3077, 0
        %v3294 = vsel %vm1161, %v3078, 0
        %v3297 = vsel %vm1161, %v3079, 0
        %v3300 = vsel %vm1161, %v3080, 0
        %v3303 = vsel %vm1161, %v3081, 0
        %v3306 = vsel %vm1161, %v3082, 0
        %3308 = vmatprep.subr.mxu0 0.0
        %3309 = vmatpush1.msra.mxu0 %v3276
        %3310 = vmatprep.subr.mxu0 0.0
        %3311 = vmatpush1.msra.mxu0 %v3277
        %3312 = vmatprep.subr.mxu0 0.0
        %3313 = vmatpush1.msra.mxu0 %v3278
        %3314 = vmatprep.subr.mxu0 0.0
        %3315 = vmatpush1.msra.mxu0 %v3279
        %3316 = vmatprep.subr.mxu0 0.0
        %3317 = vmatpush1.msra.mxu0 %v3280
        %3318 = vmatprep.subr.mxu0 0.0
        %3319 = vmatpush1.msra.mxu0 %v3281
        %3320 = vmatprep.subr.mxu0 0.0
        %3321 = vmatpush1.msra.mxu0 %v3282
        %3322 = vmatprep.subr.mxu0 0.0
        %3323 = vmatpush1.msra.mxu0 %v3283
        %3324 = vmatprep.subr.mxu0 0.0
        %3325 = vmatpush1.msra.mxu0 0.0
        %3326 = vmatprep.subr.mxu0 0.0
        %3327 = vmatpush1.msra.mxu0 0.0
        %3328 = vmatprep.subr.mxu0 0.0
        %3329 = vmatpush1.msra.mxu0 0.0
        %3330 = vmatprep.subr.mxu0 0.0
        %3331 = vmatpush1.msra.mxu0 0.0
        %3332 = vmatprep.subr.mxu0 0.0
        %3333 = vmatpush1.msra.mxu0 0.0
        %3334 = vmatprep.subr.mxu0 0.0
        %3335 = vmatpush1.msra.mxu0 0.0
        %3336 = vmatprep.subr.mxu0 0.0
        %3337 = vmatpush1.msra.mxu0 0.0
        %3338 = vmatprep.subr.mxu0 0.0
        %3339 = vmatpush1.msra.mxu0 0.0
        %3340 = vmatprep.subr.mxu0 0.0
        %3341 = vmatpush1.msra.mxu0 0.0
        %3342 = vmatprep.subr.mxu0 0.0
        %3343 = vmatpush1.msra.mxu0 0.0
        %3344 = vmatprep.subr.mxu0 0.0
        %3345 = vmatpush1.msra.mxu0 0.0
        %3346 = vmatprep.subr.mxu0 0.0
        %3347 = vmatpush1.msra.mxu0 0.0
        %3348 = vmatprep.subr.mxu0 0.0
        %3349 = vmatpush1.msra.mxu0 0.0
        %3350 = vmatprep.subr.mxu0 0.0
        %3351 = vmatpush1.msra.mxu0 0.0
        %3352 = vmatprep.subr.mxu0 0.0
        %3353 = vmatpush1.msra.mxu0 0.0
        %3354 = vmatprep.subr.mxu0 0.0
        %3355 = vmatpush1.msra.mxu0 0.0
        %3356 = vmatprep.subr.mxu0 0.0
        %3357 = vmatpush1.msra.mxu0 0.0
        %3358 = vmatprep.subr.mxu0 0.0
        %3359 = vmatpush1.msra.mxu0 0.0
        %3360 = vmatprep.subr.mxu0 0.0
        %3361 = vmatpush1.msra.mxu0 0.0
        %3362 = vmatprep.subr.mxu0 0.0
        %3363 = vmatpush1.msra.mxu0 0.0
        %3364 = vmatprep.subr.mxu0 0.0
        %3365 = vmatpush1.msra.mxu0 0.0
        %3366 = vmatprep.subr.mxu0 0.0
        %3367 = vmatpush1.msra.mxu0 0.0
        %3368 = vmatprep.subr.mxu0 0.0
        %3369 = vmatpush1.msra.mxu0 0.0
        %3370 = vmatprep.subr.mxu0 0.0
        %3371 = vmatpush1.msra.mxu0 0.0
        %3372 = vmatprep.mubr.f32.mxu0 0.0
        %3373 = vmatmul.mubr.f32.gmra.mrb[0].mxu0 %v3285
        %v3374 = vpop.f32.mrb[0].mxu0
        %v3375 = vadd.f32 0.0, %v3374
        %v3376 = vpop.f32.mrb[0].mxu0
        %3377 = vmatprep.mubr.f32.mxu0 0.0
        %3378 = vmatmul.mubr.f32.gmra.mrb[0].mxu0 %v3288
        %v3379 = vpop.f32.mrb[0].mxu0
        %v3380 = vadd.f32 0.0, %v3379
        %v3381 = vpop.f32.mrb[0].mxu0
        %3382 = vmatprep.mubr.f32.mxu0 0.0
        %3383 = vmatmul.mubr.f32.gmra.mrb[0].mxu0 %v3291
        %v3384 = vpop.f32.mrb[0].mxu0
        %v3385 = vadd.f32 0.0, %v3384
        %v3386 = vpop.f32.mrb[0].mxu0
        %3387 = vmatprep.mubr.f32.mxu0 0.0
        %3388 = vmatmul.mubr.f32.gmra.mrb[0].mxu0 %v3294
        %v3389 = vpop.f32.mrb[0].mxu0
        %v3390 = vadd.f32 0.0, %v3389
        %v3391 = vpop.f32.mrb[0].mxu0
        %3392 = vmatprep.mubr.f32.mxu0 0.0
        %3393 = vmatmul.mubr.f32.gmra.mrb[0].mxu0 %v3297
        %v3394 = vpop.f32.mrb[0].mxu0
        %v3395 = vadd.f32 0.0, %v3394
        %v3396 = vpop.f32.mrb[0].mxu0
        %3397 = vmatprep.mubr.f32.mxu0 0.0
        %3398 = vmatmul.mubr.f32.gmra.mrb[0].mxu0 %v3300
        %v3399 = vpop.f32.mrb[0].mxu0
        %v3400 = vadd.f32 0.0, %v3399
        %v3401 = vpop.f32.mrb[0].mxu0
        %3402 = vmatprep.mubr.f32.mxu0 0.0
        %3403 = vmatmul.mubr.f32.gmra.mrb[0].mxu0 %v3303
        %v3404 = vpop.f32.mrb[0].mxu0
        %v3405 = vadd.f32 0.0, %v3404
        %v3406 = vpop.f32.mrb[0].mxu0
        %3407 = vmatprep.mubr.f32.mxu0 0.0
        %3408 = vmatmul.mubr.f32.gmra.mrb[0].mxu0 %v3306
        %v3409 = vpop.f32.mrb[0].mxu0
        %v3410 = vadd.f32 0.0, %v3409
        %v3411 = vpop.f32.mrb[0].mxu0
        %3412 = vdwg.mxu0
        %3413 = vset.pattern.permute.xlu0 12
        %3414 = vperm.xlu0 %3413, %v1955
        %v3415 = vpop.permute.xlu0 %3414
        %3417 = vset.pattern.permute.xlu0 12
        %3418 = vperm.xlu0 %3417, %v1956
        %v3419 = vpop.permute.xlu0 %3418
        %3421 = vset.pattern.permute.xlu0 12
        %3422 = vperm.xlu0 %3421, %v1957
        %v3423 = vpop.permute.xlu0 %3422
        %3425 = vset.pattern.permute.xlu0 12
        %3426 = vperm.xlu0 %3425, %v1958
        %v3427 = vpop.permute.xlu0 %3426
        %3429 = vset.pattern.permute.xlu0 12
        %3430 = vperm.xlu0 %3429, %v1959
        %v3431 = vpop.permute.xlu0 %3430
        %3433 = vset.pattern.permute.xlu0 12
        %3434 = vperm.xlu0 %3433, %v1960
        %v3435 = vpop.permute.xlu0 %3434
        %3437 = vset.pattern.permute.xlu0 12
        %3438 = vperm.xlu0 %3437, %v1961
        %v3439 = vpop.permute.xlu0 %3438
        %3441 = vset.pattern.permute.xlu0 12
        %3442 = vperm.xlu0 %3441, %v1962
        %v3443 = vpop.permute.xlu0 %3442
        %v3445 = vmul.f32 %v3415, %v3375
        %v3446 = vmul.f32 %v3419, %v3380
        %v3447 = vmul.f32 %v3423, %v3385
        %v3448 = vmul.f32 %v3427, %v3390
        %v3449 = vmul.f32 %v3431, %v3395
        %v3450 = vmul.f32 %v3435, %v3400
        %v3451 = vmul.f32 %v3439, %v3405
        %v3452 = vmul.f32 %v3443, %v3410
        %v3453 = vsub.f32 %v3276, %v3375
        %v3454 = vsub.f32 %v3277, %v3380
        %v3455 = vsub.f32 %v3278, %v3385
        %v3456 = vsub.f32 %v3279, %v3390
        %v3457 = vsub.f32 %v3280, %v3395
        %v3458 = vsub.f32 %v3281, %v3400
        %v3459 = vsub.f32 %v3282, %v3405
        %v3460 = vsub.f32 %v3283, %v3410
        %3461 = vset.pattern.permute.xlu0 13
        %3462 = vperm.xlu0 %3461, %v2004
        %v3463 = vpop.permute.xlu0 %3462
        %3465 = vset.pattern.permute.xlu0 13
        %3466 = vperm.xlu0 %3465, %v2005
        %v3467 = vpop.permute.xlu0 %3466
        %3469 = vset.pattern.permute.xlu0 13
        %3470 = vperm.xlu0 %3469, %v2006
        %v3471 = vpop.permute.xlu0 %3470
        %3473 = vset.pattern.permute.xlu0 13
        %3474 = vperm.xlu0 %3473, %v2007
        %v3475 = vpop.permute.xlu0 %3474
        %3477 = vset.pattern.permute.xlu0 13
        %3478 = vperm.xlu0 %3477, %v2008
        %v3479 = vpop.permute.xlu0 %3478
        %3481 = vset.pattern.permute.xlu0 13
        %3482 = vperm.xlu0 %3481, %v2009
        %v3483 = vpop.permute.xlu0 %3482
        %3485 = vset.pattern.permute.xlu0 13
        %3486 = vperm.xlu0 %3485, %v2010
        %v3487 = vpop.permute.xlu0 %3486
        %3489 = vset.pattern.permute.xlu0 13
        %3490 = vperm.xlu0 %3489, %v2011
        %v3491 = vpop.permute.xlu0 %3490
        %v3493 = vmul.f32 %v3463, %v3453
        %v3494 = vmul.f32 %v3467, %v3454
        %v3495 = vmul.f32 %v3471, %v3455
        %v3496 = vmul.f32 %v3475, %v3456
        %v3497 = vmul.f32 %v3479, %v3457
        %v3498 = vmul.f32 %v3483, %v3458
        %v3499 = vmul.f32 %v3487, %v3459
        %v3500 = vmul.f32 %v3491, %v3460
        %v3501 = vadd.f32 %v3445, %v3493
        %v3502 = vadd.f32 %v3446, %v3494
        %v3503 = vadd.f32 %v3447, %v3495
        %v3504 = vadd.f32 %v3448, %v3496
        %v3505 = vadd.f32 %v3449, %v3497
        %v3506 = vadd.f32 %v3450, %v3498
        %v3507 = vadd.f32 %v3451, %v3499
        %v3508 = vadd.f32 %v3452, %v3500
        %3509 = vset.pattern.permute.xlu0 17
        %3510 = vperm.xlu0 %3509, %v1955
        %v3511 = vpop.permute.xlu0 %3510
        %3513 = vset.pattern.permute.xlu0 17
        %3514 = vperm.xlu0 %3513, %v1956
        %v3515 = vpop.permute.xlu0 %3514
        %3517 = vset.pattern.permute.xlu0 17
        %3518 = vperm.xlu0 %3517, %v1957
        %v3519 = vpop.permute.xlu0 %3518
        %3521 = vset.pattern.permute.xlu0 17
        %3522 = vperm.xlu0 %3521, %v1958
        %v3523 = vpop.permute.xlu0 %3522
        %3525 = vset.pattern.permute.xlu0 17
        %3526 = vperm.xlu0 %3525, %v1959
        %v3527 = vpop.permute.xlu0 %3526
        %3529 = vset.pattern.permute.xlu0 17
        %3530 = vperm.xlu0 %3529, %v1960
        %v3531 = vpop.permute.xlu0 %3530
        %3533 = vset.pattern.permute.xlu0 17
        %3534 = vperm.xlu0 %3533, %v1961
        %v3535 = vpop.permute.xlu0 %3534
        %3537 = vset.pattern.permute.xlu0 17
        %3538 = vperm.xlu0 %3537, %v1962
        %v3539 = vpop.permute.xlu0 %3538
        %v3541 = vmul.f32 %v1938, %v3511
        %v3542 = vmul.f32 %v1939, %v3515
        %v3543 = vmul.f32 %v1940, %v3519
        %v3544 = vmul.f32 %v1941, %v3523
        %v3545 = vmul.f32 %v1942, %v3527
        %v3546 = vmul.f32 %v1943, %v3531
        %v3547 = vmul.f32 %v1944, %v3535
        %v3548 = vmul.f32 %v1945, %v3539
        %3549 = vset.pattern.permute.xlu0 16
        %3550 = vperm.xlu0 %3549, %v1955
        %v3551 = vpop.permute.xlu0 %3550
        %3553 = vset.pattern.permute.xlu0 16
        %3554 = vperm.xlu0 %3553, %v1956
        %v3555 = vpop.permute.xlu0 %3554
        %3557 = vset.pattern.permute.xlu0 16
        %3558 = vperm.xlu0 %3557, %v1957
        %v3559 = vpop.permute.xlu0 %3558
        %3561 = vset.pattern.permute.xlu0 16
        %3562 = vperm.xlu0 %3561, %v1958
        %v3563 = vpop.permute.xlu0 %3562
        %3565 = vset.pattern.permute.xlu0 16
        %3566 = vperm.xlu0 %3565, %v1959
        %v3567 = vpop.permute.xlu0 %3566
        %3569 = vset.pattern.permute.xlu0 16
        %3570 = vperm.xlu0 %3569, %v1960
        %v3571 = vpop.permute.xlu0 %3570
        %3573 = vset.pattern.permute.xlu0 16
        %3574 = vperm.xlu0 %3573, %v1961
        %v3575 = vpop.permute.xlu0 %3574
        %3577 = vset.pattern.permute.xlu0 16
        %3578 = vperm.xlu0 %3577, %v1962
        %v3579 = vpop.permute.xlu0 %3578
        %v3581 = vmul.f32 %v3501, %v3551
        %v3582 = vmul.f32 %v3502, %v3555
        %v3583 = vmul.f32 %v3503, %v3559
        %v3584 = vmul.f32 %v3504, %v3563
        %v3585 = vmul.f32 %v3505, %v3567
        %v3586 = vmul.f32 %v3506, %v3571
        %v3587 = vmul.f32 %v3507, %v3575
        %v3588 = vmul.f32 %v3508, %v3579
        %v3589 = vadd.f32 %v3541, %v3581
        %v3590 = vadd.f32 %v3542, %v3582
        %v3591 = vadd.f32 %v3543, %v3583
        %v3592 = vadd.f32 %v3544, %v3584
        %v3593 = vadd.f32 %v3545, %v3585
        %v3594 = vadd.f32 %v3546, %v3586
        %v3595 = vadd.f32 %v3547, %v3587
        %v3596 = vadd.f32 %v3548, %v3588
        %v3597 = vadd.f32 %v3063, %v3589
        %v3598 = vadd.f32 %v3064, %v3590
        %v3599 = vadd.f32 %v3065, %v3591
        %v3600 = vadd.f32 %v3066, %v3592
        %v3601 = vadd.f32 %v3067, %v3593
        %v3602 = vadd.f32 %v3068, %v3594
        %v3603 = vadd.f32 %v3069, %v3595
        %v3604 = vadd.f32 %v3070, %v3596
        %v3605 = vld [vmem:[#allocation11] sm:$0xff]
        %v3606 = vld [vmem:[#allocation11 + $0x8] sm:$0xff]
        %v3607 = vld [vmem:[#allocation11 + $0x10] sm:$0xff]
        %v3608 = vld [vmem:[#allocation11 + $0x18] sm:$0xff]
        %v3609 = vld [vmem:[#allocation11 + $0x20] sm:$0xff]
        %v3610 = vld [vmem:[#allocation11 + $0x28] sm:$0xff]
        %v3611 = vld [vmem:[#allocation11 + $0x30] sm:$0xff]
        %v3612 = vld [vmem:[#allocation11 + $0x38] sm:$0xff]
        %v3613 = vld [vmem:[%s12] sm:$0xff]
        %v3614 = vld [vmem:[%s12 + $0x8] sm:$0xff]
        %v3615 = vld [vmem:[%s12 + $0x10] sm:$0xff]
        %v3616 = vld [vmem:[%s12 + $0x18] sm:$0xff]
        %v3617 = vld [vmem:[%s12 + $0x20] sm:$0xff]
        %v3618 = vld [vmem:[%s12 + $0x28] sm:$0xff]
        %v3619 = vld [vmem:[%s12 + $0x30] sm:$0xff]
        %v3620 = vld [vmem:[%s12 + $0x38] sm:$0xff]
        %3622 = vset.pattern.permute.xlu0 0
        %3623 = vperm.xlu0 %3622, %v3613
        %v3624 = vpop.permute.xlu0 %3623
        %3627 = vset.pattern.permute.xlu0 0
        %3628 = vperm.xlu0 %3627, %v3614
        %v3629 = vpop.permute.xlu0 %3628
        %3632 = vset.pattern.permute.xlu0 0
        %3633 = vperm.xlu0 %3632, %v3615
        %v3634 = vpop.permute.xlu0 %3633
        %3637 = vset.pattern.permute.xlu0 0
        %3638 = vperm.xlu0 %3637, %v3616
        %v3639 = vpop.permute.xlu0 %3638
        %3642 = vset.pattern.permute.xlu0 0
        %3643 = vperm.xlu0 %3642, %v3617
        %v3644 = vpop.permute.xlu0 %3643
        %3647 = vset.pattern.permute.xlu0 0
        %3648 = vperm.xlu0 %3647, %v3618
        %v3649 = vpop.permute.xlu0 %3648
        %3652 = vset.pattern.permute.xlu0 0
        %3653 = vperm.xlu0 %3652, %v3619
        %v3654 = vpop.permute.xlu0 %3653
        %3657 = vset.pattern.permute.xlu0 0
        %3658 = vperm.xlu0 %3657, %v3620
        %v3659 = vpop.permute.xlu0 %3658
        %v3662 = vsel %vm1161, %v3605, 0
        %v3665 = vsel %vm1161, %v3606, 0
        %v3668 = vsel %vm1161, %v3607, 0
        %v3671 = vsel %vm1161, %v3608, 0
        %v3674 = vsel %vm1161, %v3609, 0
        %v3677 = vsel %vm1161, %v3610, 0
        %v3680 = vsel %vm1161, %v3611, 0
        %v3683 = vsel %vm1161, %v3612, 0
        %3685 = vmatprep.subr.mxu0 0.0
        %3686 = vmatpush1.msra.mxu0 %v3597
        %3687 = vmatprep.subr.mxu0 0.0
        %3688 = vmatpush1.msra.mxu0 %v3598
        %3689 = vmatprep.subr.mxu0 0.0
        %3690 = vmatpush1.msra.mxu0 %v3599
        %3691 = vmatprep.subr.mxu0 0.0
        %3692 = vmatpush1.msra.mxu0 %v3600
        %3693 = vmatprep.subr.mxu0 0.0
        %3694 = vmatpush1.msra.mxu0 %v3601
        %3695 = vmatprep.subr.mxu0 0.0
        %3696 = vmatpush1.msra.mxu0 %v3602
        %3697 = vmatprep.subr.mxu0 0.0
        %3698 = vmatpush1.msra.mxu0 %v3603
        %3699 = vmatprep.subr.mxu0 0.0
        %3700 = vmatpush1.msra.mxu0 %v3604
        %3701 = vmatprep.subr.mxu0 0.0
        %3702 = vmatpush1.msra.mxu0 0.0
        %3703 = vmatprep.subr.mxu0 0.0
        %3704 = vmatpush1.msra.mxu0 0.0
        %3705 = vmatprep.subr.mxu0 0.0
        %3706 = vmatpush1.msra.mxu0 0.0
        %3707 = vmatprep.subr.mxu0 0.0
        %3708 = vmatpush1.msra.mxu0 0.0
        %3709 = vmatprep.subr.mxu0 0.0
        %3710 = vmatpush1.msra.mxu0 0.0
        %3711 = vmatprep.subr.mxu0 0.0
        %3712 = vmatpush1.msra.mxu0 0.0
        %3713 = vmatprep.subr.mxu0 0.0
        %3714 = vmatpush1.msra.mxu0 0.0
        %3715 = vmatprep.subr.mxu0 0.0
        %3716 = vmatpush1.msra.mxu0 0.0
        %3717 = vmatprep.subr.mxu0 0.0
        %3718 = vmatpush1.msra.mxu0 0.0
        %3719 = vmatprep.subr.mxu0 0.0
        %3720 = vmatpush1.msra.mxu0 0.0
        %3721 = vmatprep.subr.mxu0 0.0
        %3722 = vmatpush1.msra.mxu0 0.0
        %3723 = vmatprep.subr.mxu0 0.0
        %3724 = vmatpush1.msra.mxu0 0.0
        %3725 = vmatprep.subr.mxu0 0.0
        %3726 = vmatpush1.msra.mxu0 0.0
        %3727 = vmatprep.subr.mxu0 0.0
        %3728 = vmatpush1.msra.mxu0 0.0
        %3729 = vmatprep.subr.mxu0 0.0
        %3730 = vmatpush1.msra.mxu0 0.0
        %3731 = vmatprep.subr.mxu0 0.0
        %3732 = vmatpush1.msra.mxu0 0.0
        %3733 = vmatprep.subr.mxu0 0.0
        %3734 = vmatpush1.msra.mxu0 0.0
        %3735 = vmatprep.subr.mxu0 0.0
        %3736 = vmatpush1.msra.mxu0 0.0
        %3737 = vmatprep.subr.mxu0 0.0
        %3738 = vmatpush1.msra.mxu0 0.0
        %3739 = vmatprep.subr.mxu0 0.0
        %3740 = vmatpush1.msra.mxu0 0.0
        %3741 = vmatprep.subr.mxu0 0.0
        %3742 = vmatpush1.msra.mxu0 0.0
        %3743 = vmatprep.subr.mxu0 0.0
        %3744 = vmatpush1.msra.mxu0 0.0
        %3745 = vmatprep.subr.mxu0 0.0
        %3746 = vmatpush1.msra.mxu0 0.0
        %3747 = vmatprep.subr.mxu0 0.0
        %3748 = vmatpush1.msra.mxu0 0.0
        %3749 = vmatprep.mubr.f32.mxu0 0.0
        %3750 = vmatmul.mubr.f32.gmra.mrb[0].mxu0 %v3662
        %v3751 = vpop.f32.mrb[0].mxu0
        %v3752 = vadd.f32 %v3624, %v3751
        %v3753 = vpop.f32.mrb[0].mxu0
        %3754 = vmatprep.mubr.f32.mxu0 0.0
        %3755 = vmatmul.mubr.f32.gmra.mrb[0].mxu0 %v3665
        %v3756 = vpop.f32.mrb[0].mxu0
        %v3757 = vadd.f32 %v3629, %v3756
        %v3758 = vpop.f32.mrb[0].mxu0
        %3759 = vmatprep.mubr.f32.mxu0 0.0
        %3760 = vmatmul.mubr.f32.gmra.mrb[0].mxu0 %v3668
        %v3761 = vpop.f32.mrb[0].mxu0
        %v3762 = vadd.f32 %v3634, %v3761
        %v3763 = vpop.f32.mrb[0].mxu0
        %3764 = vmatprep.mubr.f32.mxu0 0.0
        %3765 = vmatmul.mubr.f32.gmra.mrb[0].mxu0 %v3671
        %v3766 = vpop.f32.mrb[0].mxu0
        %v3767 = vadd.f32 %v3639, %v3766
        %v3768 = vpop.f32.mrb[0].mxu0
        %3769 = vmatprep.mubr.f32.mxu0 0.0
        %3770 = vmatmul.mubr.f32.gmra.mrb[0].mxu0 %v3674
        %v3771 = vpop.f32.mrb[0].mxu0
        %v3772 = vadd.f32 %v3644, %v3771
        %v3773 = vpop.f32.mrb[0].mxu0
        %3774 = vmatprep.mubr.f32.mxu0 0.0
        %3775 = vmatmul.mubr.f32.gmra.mrb[0].mxu0 %v3677
        %v3776 = vpop.f32.mrb[0].mxu0
        %v3777 = vadd.f32 %v3649, %v3776
        %v3778 = vpop.f32.mrb[0].mxu0
        %3779 = vmatprep.mubr.f32.mxu0 0.0
        %3780 = vmatmul.mubr.f32.gmra.mrb[0].mxu0 %v3680
        %v3781 = vpop.f32.mrb[0].mxu0
        %v3782 = vadd.f32 %v3654, %v3781
        %v3783 = vpop.f32.mrb[0].mxu0
        %3784 = vmatprep.mubr.f32.mxu0 0.0
        %3785 = vmatmul.mubr.f32.gmra.mrb[0].mxu0 %v3683
        %v3786 = vpop.f32.mrb[0].mxu0
        %v3787 = vadd.f32 %v3659, %v3786
        %v3788 = vpop.f32.mrb[0].mxu0
        %3789 = vdwg.mxu0
        %v3790 = vld [vmem:[#allocation14] sm:$0xff]
        %v3791 = vld [vmem:[#allocation14 + $0x8] sm:$0x7]
        %v3792 = vsel %vm906, %v3752, 0.0
        %3793 = vadd.xlane.f32.xlu0 %v3792
        %v3794 = vpop.xlane.xlu0 %3793
        %v3795 = vsel %vm906, %v3757, 0.0
        %3796 = vadd.xlane.f32.xlu0 %v3795
        %v3797 = vpop.xlane.xlu0 %3796
        %v3798 = vsel %vm906, %v3762, 0.0
        %3799 = vadd.xlane.f32.xlu0 %v3798
        %v3800 = vpop.xlane.xlu0 %3799
        %v3801 = vsel %vm906, %v3767, 0.0
        %3802 = vadd.xlane.f32.xlu0 %v3801
        %v3803 = vpop.xlane.xlu0 %3802
        %v3804 = vmul.f32 %v3794, %v1987
        %v3805 = vmul.f32 %v3797, %v1987
        %v3806 = vmul.f32 %v3800, %v1987
        %v3807 = vmul.f32 %v3803, %v1987
        %vm3808 = vcmask 261120
        %v3810 = vsel %vm3808, %v3790, 0
        %v3813 = vsel %vm3808, %v3791, 0
        %3815 = vmatprep.subr.mxu0 0.0
        %3816 = vmatpush1.msra.mxu0 %v3804
        %3817 = vmatprep.subr.mxu0 0.0
        %3818 = vmatpush1.msra.mxu0 %v3805
        %3819 = vmatprep.subr.mxu0 0.0
        %3820 = vmatpush1.msra.mxu0 %v3806
        %3821 = vmatprep.subr.mxu0 0.0
        %3822 = vmatpush1.msra.mxu0 %v3807
        %3823 = vmatprep.subr.mxu0 0.0
        %3824 = vmatpush1.msra.mxu0 0.0
        %3825 = vmatprep.subr.mxu0 0.0
        %3826 = vmatpush1.msra.mxu0 0.0
        %3827 = vmatprep.subr.mxu0 0.0
        %3828 = vmatpush1.msra.mxu0 0.0
        %3829 = vmatprep.subr.mxu0 0.0
        %3830 = vmatpush1.msra.mxu0 0.0
        %3831 = vmatprep.subr.mxu0 0.0
        %3832 = vmatpush1.msra.mxu0 0.0
        %3833 = vmatprep.subr.mxu0 0.0
        %3834 = vmatpush1.msra.mxu0 0.0
        %3835 = vmatprep.subr.mxu0 0.0
        %3836 = vmatpush1.msra.mxu0 0.0
        %3837 = vmatprep.subr.mxu0 0.0
        %3838 = vmatpush1.msra.mxu0 0.0
        %3839 = vmatprep.subr.mxu0 0.0
        %3840 = vmatpush1.msra.mxu0 0.0
        %3841 = vmatprep.subr.mxu0 0.0
        %3842 = vmatpush1.msra.mxu0 0.0
        %3843 = vmatprep.subr.mxu0 0.0
        %3844 = vmatpush1.msra.mxu0 0.0
        %3845 = vmatprep.subr.mxu0 0.0
        %3846 = vmatpush1.msra.mxu0 0.0
        %3847 = vmatprep.subr.mxu0 0.0
        %3848 = vmatpush1.msra.mxu0 0.0
        %3849 = vmatprep.subr.mxu0 0.0
        %3850 = vmatpush1.msra.mxu0 0.0
        %3851 = vmatprep.subr.mxu0 0.0
        %3852 = vmatpush1.msra.mxu0 0.0
        %3853 = vmatprep.subr.mxu0 0.0
        %3854 = vmatpush1.msra.mxu0 0.0
        %3855 = vmatprep.subr.mxu0 0.0
        %3856 = vmatpush1.msra.mxu0 0.0
        %3857 = vmatprep.subr.mxu0 0.0
        %3858 = vmatpush1.msra.mxu0 0.0
        %3859 = vmatprep.subr.mxu0 0.0
        %3860 = vmatpush1.msra.mxu0 0.0
        %3861 = vmatprep.subr.mxu0 0.0
        %3862 = vmatpush1.msra.mxu0 0.0
        %3863 = vmatprep.subr.mxu0 0.0
        %3864 = vmatpush1.msra.mxu0 0.0
        %3865 = vmatprep.subr.mxu0 0.0
        %3866 = vmatpush1.msra.mxu0 0.0
        %3867 = vmatprep.subr.mxu0 0.0
        %3868 = vmatpush1.msra.mxu0 0.0
        %3869 = vmatprep.subr.mxu0 0.0
        %3870 = vmatpush1.msra.mxu0 0.0
        %3871 = vmatprep.subr.mxu0 0.0
        %3872 = vmatpush1.msra.mxu0 0.0
        %3873 = vmatprep.subr.mxu0 0.0
        %3874 = vmatpush1.msra.mxu0 0.0
        %3875 = vmatprep.subr.mxu0 0.0
        %3876 = vmatpush1.msra.mxu0 0.0
        %3877 = vmatprep.subr.mxu0 0.0
        %3878 = vmatpush1.msra.mxu0 0.0
        %3879 = vmatprep.mubr.f32.mxu0 0.0
        %3880 = vmatmul.mubr.f32.gmra.mrb[0].mxu0 %v3810
        %v3881 = vpop.f32.mrb[0].mxu0
        %v3882 = vadd.f32 0.0, %v3881
        %v3883 = vpop.f32.mrb[0].mxu0
        %3884 = vmatprep.mubr.f32.mxu0 0.0
        %3885 = vmatmul.mubr.f32.gmra.mrb[0].mxu0 %v3813
        %v3886 = vpop.f32.mrb[0].mxu0
        %v3887 = vadd.f32 0.0, %v3886
        %v3888 = vpop.f32.mrb[0].mxu0
        %3889 = vdwg.mxu0
        %v3890 = vsub.f32 0.0, %v3882
        %v3891 = vsub.f32 0.0, %v3887
        %v3892 = vmul.f32 %v3890, 1.442695
        %v3893 = vpow.pop %v3892
        %v3894 = vmul.f32 %v3891, 1.442695
        %v3895 = vpow.pop %v3894
        %v3896 = vadd.f32 %v3893, 1.0
        %v3897 = vadd.f32 %v3895, 1.0
        %v3898 = vrcp.pop %v3896
        %v3899 = vmul.f32 1.0, %v3898
        %v3900 = vrcp.pop %v3897
        %v3901 = vmul.f32 1.0, %v3900
        %v3902 = vld [vmem:[#allocation13] sm:$0xff]
        %v3903 = vld [vmem:[#allocation13 + $0x8] sm:$0xff]
        %s3905 = vtos %v3899
        %v3906 = vstv %s3905
        %v3908 = vmul.f32 %v3906, %v3902
        %v3909 = vmul.f32 %v3906, %v3903
        %v3910 = vadd.f32 %v3908, 0.0
        %v3911 = vadd.f32 %v3909, 0.0
        %s3912 = scalar_lea.vmem [#allocation13], 16
        %v3913 = vld [vmem:[%s3912] sm:$0xff]
        %v3914 = vld [vmem:[%s3912 + $0x8] sm:$0xff]
        %v3915 = vrot.slane %v3899, 1
        %s3916 = vtos %v3915
        %v3917 = vstv %s3916
        %v3919 = vmul.f32 %v3917, %v3913
        %v3920 = vmul.f32 %v3917, %v3914
        %v3921 = vadd.f32 %v3910, %v3919
        %v3922 = vadd.f32 %v3911, %v3920
        %s3923 = scalar_lea.vmem [#allocation13], 32
        %v3924 = vld [vmem:[%s3923] sm:$0xff]
        %v3925 = vld [vmem:[%s3923 + $0x8] sm:$0xff]
        %v3926 = vrot.slane %v3899, 2
        %s3927 = vtos %v3926
        %v3928 = vstv %s3927
        %v3930 = vmul.f32 %v3928, %v3924
        %v3931 = vmul.f32 %v3928, %v3925
        %v3932 = vadd.f32 %v3921, %v3930
        %v3933 = vadd.f32 %v3922, %v3931
        %s3934 = scalar_lea.vmem [#allocation13], 48
        %v3935 = vld [vmem:[%s3934] sm:$0xff]
        %v3936 = vld [vmem:[%s3934 + $0x8] sm:$0xff]
        %v3937 = vrot.slane %v3899, 3
        %s3938 = vtos %v3937
        %v3939 = vstv %s3938
        %v3941 = vmul.f32 %v3939, %v3935
        %v3942 = vmul.f32 %v3939, %v3936
        %v3943 = vadd.f32 %v3932, %v3941
        %v3944 = vadd.f32 %v3933, %v3942
        %s3945 = scalar_lea.vmem [#allocation13], 64
        %v3946 = vld [vmem:[%s3945] sm:$0xff]
        %v3947 = vld [vmem:[%s3945 + $0x8] sm:$0xff]
        %v3948 = vrot.slane %v3899, 4
        %s3949 = vtos %v3948
        %v3950 = vstv %s3949
        %v3952 = vmul.f32 %v3950, %v3946
        %v3953 = vmul.f32 %v3950, %v3947
        %v3954 = vadd.f32 %v3943, %v3952
        %v3955 = vadd.f32 %v3944, %v3953
        %s3956 = scalar_lea.vmem [#allocation13], 80
        %v3957 = vld [vmem:[%s3956] sm:$0xff]
        %v3958 = vld [vmem:[%s3956 + $0x8] sm:$0xff]
        %v3959 = vrot.slane %v3899, 5
        %s3960 = vtos %v3959
        %v3961 = vstv %s3960
        %v3963 = vmul.f32 %v3961, %v3957
        %v3964 = vmul.f32 %v3961, %v3958
        %v3965 = vadd.f32 %v3954, %v3963
        %v3966 = vadd.f32 %v3955, %v3964
        %s3967 = scalar_lea.vmem [#allocation13], 96
        %v3968 = vld [vmem:[%s3967] sm:$0xff]
        %v3969 = vld [vmem:[%s3967 + $0x8] sm:$0xff]
        %v3970 = vrot.slane %v3899, 6
        %s3971 = vtos %v3970
        %v3972 = vstv %s3971
        %v3974 = vmul.f32 %v3972, %v3968
        %v3975 = vmul.f32 %v3972, %v3969
        %v3976 = vadd.f32 %v3965, %v3974
        %v3977 = vadd.f32 %v3966, %v3975
        %s3978 = scalar_lea.vmem [#allocation13], 112
        %v3979 = vld [vmem:[%s3978] sm:$0xff]
        %v3980 = vld [vmem:[%s3978 + $0x8] sm:$0xff]
        %v3981 = vrot.slane %v3899, 7
        %s3982 = vtos %v3981
        %v3983 = vstv %s3982
        %v3985 = vmul.f32 %v3983, %v3979
        %v3986 = vmul.f32 %v3983, %v3980
        %v3987 = vadd.f32 %v3976, %v3985
        %v3988 = vadd.f32 %v3977, %v3986
        %s3989 = scalar_lea.vmem [#allocation13], 128
        %v3990 = vld [vmem:[%s3989] sm:$0xff]
        %v3991 = vld [vmem:[%s3989 + $0x8] sm:$0xff]
        %s3993 = vtos %v3901
        %v3994 = vstv %s3993
        %v3996 = vmul.f32 %v3994, %v3990
        %v3997 = vmul.f32 %v3994, %v3991
        %v3998 = vadd.f32 %v3987, %v3996
        %v3999 = vadd.f32 %v3988, %v3997
        %s4000 = scalar_lea.vmem [#allocation13], 144
        %v4001 = vld [vmem:[%s4000] sm:$0xff]
        %v4002 = vld [vmem:[%s4000 + $0x8] sm:$0xff]
        %v4003 = vrot.slane %v3901, 1
        %s4004 = vtos %v4003
        %v4005 = vstv %s4004
        %v4007 = vmul.f32 %v4005, %v4001
        %v4008 = vmul.f32 %v4005, %v4002
        %v4009 = vadd.f32 %v3998, %v4007
        %v4010 = vadd.f32 %v3999, %v4008
        %s4011 = scalar_lea.vmem [#allocation13], 160
        %v4012 = vld [vmem:[%s4011] sm:$0xff]
        %v4013 = vld [vmem:[%s4011 + $0x8] sm:$0xff]
        %v4014 = vrot.slane %v3901, 2
        %s4015 = vtos %v4014
        %v4016 = vstv %s4015
        %v4018 = vmul.f32 %v4016, %v4012
        %v4019 = vmul.f32 %v4016, %v4013
        %v4020 = vadd.f32 %v4009, %v4018
        %v4021 = vadd.f32 %v4010, %v4019
        %v4023 = vsel %vm906, %v3752, 0
        %v4026 = vsel %vm906, %v3757, 0
        %v4029 = vsel %vm906, %v3762, 0
        %v4032 = vsel %vm906, %v3767, 0
        %4034 = vmatprep.subr.mxu0 0.0
        %4035 = vmatpush1.msra.mxu0 %v4020
        %4036 = vmatprep.subr.mxu0 0.0
        %4037 = vmatpush1.msra.mxu0 %v4021
        %4038 = vmatprep.subr.mxu0 0.0
        %4039 = vmatpush1.msra.mxu0 0.0
        %4040 = vmatprep.subr.mxu0 0.0
        %4041 = vmatpush1.msra.mxu0 0.0
        %4042 = vmatprep.subr.mxu0 0.0
        %4043 = vmatpush1.msra.mxu0 0.0
        %4044 = vmatprep.subr.mxu0 0.0
        %4045 = vmatpush1.msra.mxu0 0.0
        %4046 = vmatprep.subr.mxu0 0.0
        %4047 = vmatpush1.msra.mxu0 0.0
        %4048 = vmatprep.subr.mxu0 0.0
        %4049 = vmatpush1.msra.mxu0 0.0
        %4050 = vmatprep.subr.mxu0 0.0
        %4051 = vmatpush1.msra.mxu0 0.0
        %4052 = vmatprep.subr.mxu0 0.0
        %4053 = vmatpush1.msra.mxu0 0.0
        %4054 = vmatprep.subr.mxu0 0.0
        %4055 = vmatpush1.msra.mxu0 0.0
        %4056 = vmatprep.subr.mxu0 0.0
        %4057 = vmatpush1.msra.mxu0 0.0
        %4058 = vmatprep.subr.mxu0 0.0
        %4059 = vmatpush1.msra.mxu0 0.0
        %4060 = vmatprep.subr.mxu0 0.0
        %4061 = vmatpush1.msra.mxu0 0.0
        %4062 = vmatprep.subr.mxu0 0.0
        %4063 = vmatpush1.msra.mxu0 0.0
        %4064 = vmatprep.subr.mxu0 0.0
        %4065 = vmatpush1.msra.mxu0 0.0
        %4066 = vmatprep.subr.mxu0 0.0
        %4067 = vmatpush1.msra.mxu0 0.0
        %4068 = vmatprep.subr.mxu0 0.0
        %4069 = vmatpush1.msra.mxu0 0.0
        %4070 = vmatprep.subr.mxu0 0.0
        %4071 = vmatpush1.msra.mxu0 0.0
        %4072 = vmatprep.subr.mxu0 0.0
        %4073 = vmatpush1.msra.mxu0 0.0
        %4074 = vmatprep.subr.mxu0 0.0
        %4075 = vmatpush1.msra.mxu0 0.0
        %4076 = vmatprep.subr.mxu0 0.0
        %4077 = vmatpush1.msra.mxu0 0.0
        %4078 = vmatprep.subr.mxu0 0.0
        %4079 = vmatpush1.msra.mxu0 0.0
        %4080 = vmatprep.subr.mxu0 0.0
        %4081 = vmatpush1.msra.mxu0 0.0
        %4082 = vmatprep.subr.mxu0 0.0
        %4083 = vmatpush1.msra.mxu0 0.0
        %4084 = vmatprep.subr.mxu0 0.0
        %4085 = vmatpush1.msra.mxu0 0.0
        %4086 = vmatprep.subr.mxu0 0.0
        %4087 = vmatpush1.msra.mxu0 0.0
        %4088 = vmatprep.subr.mxu0 0.0
        %4089 = vmatpush1.msra.mxu0 0.0
        %4090 = vmatprep.subr.mxu0 0.0
        %4091 = vmatpush1.msra.mxu0 0.0
        %4092 = vmatprep.subr.mxu0 0.0
        %4093 = vmatpush1.msra.mxu0 0.0
        %4094 = vmatprep.subr.mxu0 0.0
        %4095 = vmatpush1.msra.mxu0 0.0
        %4096 = vmatprep.subr.mxu0 0.0
        %4097 = vmatpush1.msra.mxu0 0.0
        %4098 = vmatprep.mubr.f32.mxu0 0.0
        %4099 = vmatmul.mubr.f32.gmra.mrb[0].mxu0 %v4023
        %v4100 = vpop.f32.mrb[0].mxu0
        %v4101 = vadd.f32 0.0, %v4100
        %v4102 = vpop.f32.mrb[0].mxu0
        %4103 = vmatprep.mubr.f32.mxu0 0.0
        %4104 = vmatmul.mubr.f32.gmra.mrb[0].mxu0 %v4026
        %v4105 = vpop.f32.mrb[0].mxu0
        %v4106 = vadd.f32 0.0, %v4105
        %v4107 = vpop.f32.mrb[0].mxu0
        %4108 = vmatprep.mubr.f32.mxu0 0.0
        %4109 = vmatmul.mubr.f32.gmra.mrb[0].mxu0 %v4029
        %v4110 = vpop.f32.mrb[0].mxu0
        %v4111 = vadd.f32 0.0, %v4110
        %v4112 = vpop.f32.mrb[0].mxu0
        %4113 = vmatprep.mubr.f32.mxu0 0.0
        %4114 = vmatmul.mubr.f32.gmra.mrb[0].mxu0 %v4032
        %v4115 = vpop.f32.mrb[0].mxu0
        %v4116 = vadd.f32 0.0, %v4115
        %v4117 = vpop.f32.mrb[0].mxu0
        %4118 = vdwg.mxu0
        %v4119 = vld [vmem:[#allocation16] sm:$0xff]
        %v4120 = vld [vmem:[#allocation16 + $0x8] sm:$0x7]
        %v4121 = vsel %vm906, %v4101, 0.0
        %4122 = vadd.xlane.f32.xlu0 %v4121
        %v4123 = vpop.xlane.xlu0 %4122
        %v4124 = vsel %vm906, %v4106, 0.0
        %4125 = vadd.xlane.f32.xlu0 %v4124
        %v4126 = vpop.xlane.xlu0 %4125
        %v4127 = vsel %vm906, %v4111, 0.0
        %4128 = vadd.xlane.f32.xlu0 %v4127
        %v4129 = vpop.xlane.xlu0 %4128
        %v4130 = vsel %vm906, %v4116, 0.0
        %4131 = vadd.xlane.f32.xlu0 %v4130
        %v4132 = vpop.xlane.xlu0 %4131
        %v4133 = vmul.f32 %v4123, %v1987
        %v4134 = vmul.f32 %v4126, %v1987
        %v4135 = vmul.f32 %v4129, %v1987
        %v4136 = vmul.f32 %v4132, %v1987
        %v4138 = vsel %vm3808, %v4119, 0
        %v4141 = vsel %vm3808, %v4120, 0
        %4143 = vmatprep.subr.mxu0 0.0
        %4144 = vmatpush1.msra.mxu0 %v4133
        %4145 = vmatprep.subr.mxu0 0.0
        %4146 = vmatpush1.msra.mxu0 %v4134
        %4147 = vmatprep.subr.mxu0 0.0
        %4148 = vmatpush1.msra.mxu0 %v4135
        %4149 = vmatprep.subr.mxu0 0.0
        %4150 = vmatpush1.msra.mxu0 %v4136
        %4151 = vmatprep.subr.mxu0 0.0
        %4152 = vmatpush1.msra.mxu0 0.0
        %4153 = vmatprep.subr.mxu0 0.0
        %4154 = vmatpush1.msra.mxu0 0.0
        %4155 = vmatprep.subr.mxu0 0.0
        %4156 = vmatpush1.msra.mxu0 0.0
        %4157 = vmatprep.subr.mxu0 0.0
        %4158 = vmatpush1.msra.mxu0 0.0
        %4159 = vmatprep.subr.mxu0 0.0
        %4160 = vmatpush1.msra.mxu0 0.0
        %4161 = vmatprep.subr.mxu0 0.0
        %4162 = vmatpush1.msra.mxu0 0.0
        %4163 = vmatprep.subr.mxu0 0.0
        %4164 = vmatpush1.msra.mxu0 0.0
        %4165 = vmatprep.subr.mxu0 0.0
        %4166 = vmatpush1.msra.mxu0 0.0
        %4167 = vmatprep.subr.mxu0 0.0
        %4168 = vmatpush1.msra.mxu0 0.0
        %4169 = vmatprep.subr.mxu0 0.0
        %4170 = vmatpush1.msra.mxu0 0.0
        %4171 = vmatprep.subr.mxu0 0.0
        %4172 = vmatpush1.msra.mxu0 0.0
        %4173 = vmatprep.subr.mxu0 0.0
        %4174 = vmatpush1.msra.mxu0 0.0
        %4175 = vmatprep.subr.mxu0 0.0
        %4176 = vmatpush1.msra.mxu0 0.0
        %4177 = vmatprep.subr.mxu0 0.0
        %4178 = vmatpush1.msra.mxu0 0.0
        %4179 = vmatprep.subr.mxu0 0.0
        %4180 = vmatpush1.msra.mxu0 0.0
        %4181 = vmatprep.subr.mxu0 0.0
        %4182 = vmatpush1.msra.mxu0 0.0
        %4183 = vmatprep.subr.mxu0 0.0
        %4184 = vmatpush1.msra.mxu0 0.0
        %4185 = vmatprep.subr.mxu0 0.0
        %4186 = vmatpush1.msra.mxu0 0.0
        %4187 = vmatprep.subr.mxu0 0.0
        %4188 = vmatpush1.msra.mxu0 0.0
        %4189 = vmatprep.subr.mxu0 0.0
        %4190 = vmatpush1.msra.mxu0 0.0
        %4191 = vmatprep.subr.mxu0 0.0
        %4192 = vmatpush1.msra.mxu0 0.0
        %4193 = vmatprep.subr.mxu0 0.0
        %4194 = vmatpush1.msra.mxu0 0.0
        %4195 = vmatprep.subr.mxu0 0.0
        %4196 = vmatpush1.msra.mxu0 0.0
        %4197 = vmatprep.subr.mxu0 0.0
        %4198 = vmatpush1.msra.mxu0 0.0
        %4199 = vmatprep.subr.mxu0 0.0
        %4200 = vmatpush1.msra.mxu0 0.0
        %4201 = vmatprep.subr.mxu0 0.0
        %4202 = vmatpush1.msra.mxu0 0.0
        %4203 = vmatprep.subr.mxu0 0.0
        %4204 = vmatpush1.msra.mxu0 0.0
        %4205 = vmatprep.subr.mxu0 0.0
        %4206 = vmatpush1.msra.mxu0 0.0
        %4207 = vmatprep.mubr.f32.mxu0 0.0
        %4208 = vmatmul.mubr.f32.gmra.mrb[0].mxu0 %v4138
        %v4209 = vpop.f32.mrb[0].mxu0
        %v4210 = vadd.f32 0.0, %v4209
        %v4211 = vpop.f32.mrb[0].mxu0
        %4212 = vmatprep.mubr.f32.mxu0 0.0
        %4213 = vmatmul.mubr.f32.gmra.mrb[0].mxu0 %v4141
        %v4214 = vpop.f32.mrb[0].mxu0
        %v4215 = vadd.f32 0.0, %v4214
        %v4216 = vpop.f32.mrb[0].mxu0
        %4217 = vdwg.mxu0
        %v4218 = vsub.f32 0.0, %v4210
        %v4219 = vsub.f32 0.0, %v4215
        %v4220 = vmul.f32 %v4218, 1.442695
        %v4221 = vpow.pop %v4220
        %v4222 = vmul.f32 %v4219, 1.442695
        %v4223 = vpow.pop %v4222
        %v4224 = vadd.f32 %v4221, 1.0
        %v4225 = vadd.f32 %v4223, 1.0
        %v4226 = vrcp.pop %v4224
        %v4227 = vmul.f32 1.0, %v4226
        %v4228 = vrcp.pop %v4225
        %v4229 = vmul.f32 1.0, %v4228
        %v4230 = vld [vmem:[%s14] sm:$0xff]
        %v4231 = vld [vmem:[%s14 + $0x8] sm:$0xff]
        %v4232 = vld [vmem:[%s14 + $0x10] sm:$0xff]
        %v4233 = vld [vmem:[%s14 + $0x18] sm:$0xff]
        %s4235 = vtos %v4227
        %v4236 = vstv %s4235
        %v4238 = vmul.f32 %v4236, %v4230
        %v4239 = vmul.f32 %v4236, %v4231
        %v4240 = vmul.f32 %v4236, %v4232
        %v4241 = vmul.f32 %v4236, %v4233
        %v4242 = vadd.f32 %v4238, 0.0
        %v4243 = vadd.f32 %v4239, 0.0
        %v4244 = vadd.f32 %v4240, 0.0
        %v4245 = vadd.f32 %v4241, 0.0
        %s4246 = scalar_lea.vmem %s14, 32
        %v4247 = vld [vmem:[%s4246] sm:$0xff]
        %v4248 = vld [vmem:[%s4246 + $0x8] sm:$0xff]
        %v4249 = vld [vmem:[%s4246 + $0x10] sm:$0xff]
        %v4250 = vld [vmem:[%s4246 + $0x18] sm:$0xff]
        %v4251 = vrot.slane %v4227, 1
        %s4252 = vtos %v4251
        %v4253 = vstv %s4252
        %v4255 = vmul.f32 %v4253, %v4247
        %v4256 = vmul.f32 %v4253, %v4248
        %v4257 = vmul.f32 %v4253, %v4249
        %v4258 = vmul.f32 %v4253, %v4250
        %v4259 = vadd.f32 %v4242, %v4255
        %v4260 = vadd.f32 %v4243, %v4256
        %v4261 = vadd.f32 %v4244, %v4257
        %v4262 = vadd.f32 %v4245, %v4258
        %s4263 = scalar_lea.vmem %s14, 64
        %v4264 = vld [vmem:[%s4263] sm:$0xff]
        %v4265 = vld [vmem:[%s4263 + $0x8] sm:$0xff]
        %v4266 = vld [vmem:[%s4263 + $0x10] sm:$0xff]
        %v4267 = vld [vmem:[%s4263 + $0x18] sm:$0xff]
        %v4268 = vrot.slane %v4227, 2
        %s4269 = vtos %v4268
        %v4270 = vstv %s4269
        %v4272 = vmul.f32 %v4270, %v4264
        %v4273 = vmul.f32 %v4270, %v4265
        %v4274 = vmul.f32 %v4270, %v4266
        %v4275 = vmul.f32 %v4270, %v4267
        %v4276 = vadd.f32 %v4259, %v4272
        %v4277 = vadd.f32 %v4260, %v4273
        %v4278 = vadd.f32 %v4261, %v4274
        %v4279 = vadd.f32 %v4262, %v4275
        %s4280 = scalar_lea.vmem %s14, 96
        %v4281 = vld [vmem:[%s4280] sm:$0xff]
        %v4282 = vld [vmem:[%s4280 + $0x8] sm:$0xff]
        %v4283 = vld [vmem:[%s4280 + $0x10] sm:$0xff]
        %v4284 = vld [vmem:[%s4280 + $0x18] sm:$0xff]
        %v4285 = vrot.slane %v4227, 3
        %s4286 = vtos %v4285
        %v4287 = vstv %s4286
        %v4289 = vmul.f32 %v4287, %v4281
        %v4290 = vmul.f32 %v4287, %v4282
        %v4291 = vmul.f32 %v4287, %v4283
        %v4292 = vmul.f32 %v4287, %v4284
        %v4293 = vadd.f32 %v4276, %v4289
        %v4294 = vadd.f32 %v4277, %v4290
        %v4295 = vadd.f32 %v4278, %v4291
        %v4296 = vadd.f32 %v4279, %v4292
        %s4297 = scalar_lea.vmem %s14, 128
        %v4298 = vld [vmem:[%s4297] sm:$0xff]
        %v4299 = vld [vmem:[%s4297 + $0x8] sm:$0xff]
        %v4300 = vld [vmem:[%s4297 + $0x10] sm:$0xff]
        %v4301 = vld [vmem:[%s4297 + $0x18] sm:$0xff]
        %v4302 = vrot.slane %v4227, 4
        %s4303 = vtos %v4302
        %v4304 = vstv %s4303
        %v4306 = vmul.f32 %v4304, %v4298
        %v4307 = vmul.f32 %v4304, %v4299
        %v4308 = vmul.f32 %v4304, %v4300
        %v4309 = vmul.f32 %v4304, %v4301
        %v4310 = vadd.f32 %v4293, %v4306
        %v4311 = vadd.f32 %v4294, %v4307
        %v4312 = vadd.f32 %v4295, %v4308
        %v4313 = vadd.f32 %v4296, %v4309
        %s4314 = scalar_lea.vmem %s14, 160
        %v4315 = vld [vmem:[%s4314] sm:$0xff]
        %v4316 = vld [vmem:[%s4314 + $0x8] sm:$0xff]
        %v4317 = vld [vmem:[%s4314 + $0x10] sm:$0xff]
        %v4318 = vld [vmem:[%s4314 + $0x18] sm:$0xff]
        %v4319 = vrot.slane %v4227, 5
        %s4320 = vtos %v4319
        %v4321 = vstv %s4320
        %v4323 = vmul.f32 %v4321, %v4315
        %v4324 = vmul.f32 %v4321, %v4316
        %v4325 = vmul.f32 %v4321, %v4317
        %v4326 = vmul.f32 %v4321, %v4318
        %v4327 = vadd.f32 %v4310, %v4323
        %v4328 = vadd.f32 %v4311, %v4324
        %v4329 = vadd.f32 %v4312, %v4325
        %v4330 = vadd.f32 %v4313, %v4326
        %s4331 = scalar_lea.vmem %s14, 192
        %v4332 = vld [vmem:[%s4331] sm:$0xff]
        %v4333 = vld [vmem:[%s4331 + $0x8] sm:$0xff]
        %v4334 = vld [vmem:[%s4331 + $0x10] sm:$0xff]
        %v4335 = vld [vmem:[%s4331 + $0x18] sm:$0xff]
        %v4336 = vrot.slane %v4227, 6
        %s4337 = vtos %v4336
        %v4338 = vstv %s4337
        %v4340 = vmul.f32 %v4338, %v4332
        %v4341 = vmul.f32 %v4338, %v4333
        %v4342 = vmul.f32 %v4338, %v4334
        %v4343 = vmul.f32 %v4338, %v4335
        %v4344 = vadd.f32 %v4327, %v4340
        %v4345 = vadd.f32 %v4328, %v4341
        %v4346 = vadd.f32 %v4329, %v4342
        %v4347 = vadd.f32 %v4330, %v4343
        %s4348 = scalar_lea.vmem %s14, 224
        %v4349 = vld [vmem:[%s4348] sm:$0xff]
        %v4350 = vld [vmem:[%s4348 + $0x8] sm:$0xff]
        %v4351 = vld [vmem:[%s4348 + $0x10] sm:$0xff]
        %v4352 = vld [vmem:[%s4348 + $0x18] sm:$0xff]
        %v4353 = vrot.slane %v4227, 7
        %s4354 = vtos %v4353
        %v4355 = vstv %s4354
        %v4357 = vmul.f32 %v4355, %v4349
        %v4358 = vmul.f32 %v4355, %v4350
        %v4359 = vmul.f32 %v4355, %v4351
        %v4360 = vmul.f32 %v4355, %v4352
        %v4361 = vadd.f32 %v4344, %v4357
        %v4362 = vadd.f32 %v4345, %v4358
        %v4363 = vadd.f32 %v4346, %v4359
        %v4364 = vadd.f32 %v4347, %v4360
        %s4365 = scalar_lea.vmem %s14, 256
        %v4366 = vld [vmem:[%s4365] sm:$0xff]
        %v4367 = vld [vmem:[%s4365 + $0x8] sm:$0xff]
        %v4368 = vld [vmem:[%s4365 + $0x10] sm:$0xff]
        %v4369 = vld [vmem:[%s4365 + $0x18] sm:$0xff]
        %s4371 = vtos %v4229
        %v4372 = vstv %s4371
        %v4374 = vmul.f32 %v4372, %v4366
        %v4375 = vmul.f32 %v4372, %v4367
        %v4376 = vmul.f32 %v4372, %v4368
        %v4377 = vmul.f32 %v4372, %v4369
        %v4378 = vadd.f32 %v4361, %v4374
        %v4379 = vadd.f32 %v4362, %v4375
        %v4380 = vadd.f32 %v4363, %v4376
        %v4381 = vadd.f32 %v4364, %v4377
        %s4382 = scalar_lea.vmem %s14, 288
        %v4383 = vld [vmem:[%s4382] sm:$0xff]
        %v4384 = vld [vmem:[%s4382 + $0x8] sm:$0xff]
        %v4385 = vld [vmem:[%s4382 + $0x10] sm:$0xff]
        %v4386 = vld [vmem:[%s4382 + $0x18] sm:$0xff]
        %v4387 = vrot.slane %v4229, 1
        %s4388 = vtos %v4387
        %v4389 = vstv %s4388
        %v4391 = vmul.f32 %v4389, %v4383
        %v4392 = vmul.f32 %v4389, %v4384
        %v4393 = vmul.f32 %v4389, %v4385
        %v4394 = vmul.f32 %v4389, %v4386
        %v4395 = vadd.f32 %v4378, %v4391
        %v4396 = vadd.f32 %v4379, %v4392
        %v4397 = vadd.f32 %v4380, %v4393
        %v4398 = vadd.f32 %v4381, %v4394
        %s4399 = scalar_lea.vmem %s14, 320
        %v4400 = vld [vmem:[%s4399] sm:$0xff]
        %v4401 = vld [vmem:[%s4399 + $0x8] sm:$0xff]
        %v4402 = vld [vmem:[%s4399 + $0x10] sm:$0xff]
        %v4403 = vld [vmem:[%s4399 + $0x18] sm:$0xff]
        %v4404 = vrot.slane %v4229, 2
        %s4405 = vtos %v4404
        %v4406 = vstv %s4405
        %v4408 = vmul.f32 %v4406, %v4400
        %v4409 = vmul.f32 %v4406, %v4401
        %v4410 = vmul.f32 %v4406, %v4402
        %v4411 = vmul.f32 %v4406, %v4403
        %v4412 = vadd.f32 %v4395, %v4408
        %v4413 = vadd.f32 %v4396, %v4409
        %v4414 = vadd.f32 %v4397, %v4410
        %v4415 = vadd.f32 %v4398, %v4411
        %v4417 = vsel %vm3808, %v4412, 0
        %v4420 = vsel %vm3808, %v4413, 0
        %v4423 = vsel %vm3808, %v4414, 0
        %v4426 = vsel %vm3808, %v4415, 0
        %4428 = vmatprep.subr.mxu0 0.0
        %4429 = vmatpush1.msra.mxu0 %v4101
        %4430 = vmatprep.subr.mxu0 0.0
        %4431 = vmatpush1.msra.mxu0 %v4106
        %4432 = vmatprep.subr.mxu0 0.0
        %4433 = vmatpush1.msra.mxu0 %v4111
        %4434 = vmatprep.subr.mxu0 0.0
        %4435 = vmatpush1.msra.mxu0 %v4116
        %4436 = vmatprep.subr.mxu0 0.0
        %4437 = vmatpush1.msra.mxu0 0.0
        %4438 = vmatprep.subr.mxu0 0.0
        %4439 = vmatpush1.msra.mxu0 0.0
        %4440 = vmatprep.subr.mxu0 0.0
        %4441 = vmatpush1.msra.mxu0 0.0
        %4442 = vmatprep.subr.mxu0 0.0
        %4443 = vmatpush1.msra.mxu0 0.0
        %4444 = vmatprep.subr.mxu0 0.0
        %4445 = vmatpush1.msra.mxu0 0.0
        %4446 = vmatprep.subr.mxu0 0.0
        %4447 = vmatpush1.msra.mxu0 0.0
        %4448 = vmatprep.subr.mxu0 0.0
        %4449 = vmatpush1.msra.mxu0 0.0
        %4450 = vmatprep.subr.mxu0 0.0
        %4451 = vmatpush1.msra.mxu0 0.0
        %4452 = vmatprep.subr.mxu0 0.0
        %4453 = vmatpush1.msra.mxu0 0.0
        %4454 = vmatprep.subr.mxu0 0.0
        %4455 = vmatpush1.msra.mxu0 0.0
        %4456 = vmatprep.subr.mxu0 0.0
        %4457 = vmatpush1.msra.mxu0 0.0
        %4458 = vmatprep.subr.mxu0 0.0
        %4459 = vmatpush1.msra.mxu0 0.0
        %4460 = vmatprep.subr.mxu0 0.0
        %4461 = vmatpush1.msra.mxu0 0.0
        %4462 = vmatprep.subr.mxu0 0.0
        %4463 = vmatpush1.msra.mxu0 0.0
        %4464 = vmatprep.subr.mxu0 0.0
        %4465 = vmatpush1.msra.mxu0 0.0
        %4466 = vmatprep.subr.mxu0 0.0
        %4467 = vmatpush1.msra.mxu0 0.0
        %4468 = vmatprep.subr.mxu0 0.0
        %4469 = vmatpush1.msra.mxu0 0.0
        %4470 = vmatprep.subr.mxu0 0.0
        %4471 = vmatpush1.msra.mxu0 0.0
        %4472 = vmatprep.subr.mxu0 0.0
        %4473 = vmatpush1.msra.mxu0 0.0
        %4474 = vmatprep.subr.mxu0 0.0
        %4475 = vmatpush1.msra.mxu0 0.0
        %4476 = vmatprep.subr.mxu0 0.0
        %4477 = vmatpush1.msra.mxu0 0.0
        %4478 = vmatprep.subr.mxu0 0.0
        %4479 = vmatpush1.msra.mxu0 0.0
        %4480 = vmatprep.subr.mxu0 0.0
        %4481 = vmatpush1.msra.mxu0 0.0
        %4482 = vmatprep.subr.mxu0 0.0
        %4483 = vmatpush1.msra.mxu0 0.0
        %4484 = vmatprep.subr.mxu0 0.0
        %4485 = vmatpush1.msra.mxu0 0.0
        %4486 = vmatprep.subr.mxu0 0.0
        %4487 = vmatpush1.msra.mxu0 0.0
        %4488 = vmatprep.subr.mxu0 0.0
        %4489 = vmatpush1.msra.mxu0 0.0
        %4490 = vmatprep.subr.mxu0 0.0
        %4491 = vmatpush1.msra.mxu0 0.0
        %4492 = vmatprep.mubr.f32.mxu0 0.0
        %4493 = vmatmul.mubr.f32.gmra.mrb[0].mxu0 %v4417
        %v4494 = vpop.f32.mrb[0].mxu0
        %v4495 = vadd.f32 0.0, %v4494
        %v4496 = vpop.f32.mrb[0].mxu0
        %4497 = vmatprep.mubr.f32.mxu0 0.0
        %4498 = vmatmul.mubr.f32.gmra.mrb[0].mxu0 %v4420
        %v4499 = vpop.f32.mrb[0].mxu0
        %v4500 = vadd.f32 0.0, %v4499
        %v4501 = vpop.f32.mrb[0].mxu0
        %4502 = vmatprep.mubr.f32.mxu0 0.0
        %4503 = vmatmul.mubr.f32.gmra.mrb[0].mxu0 %v4423
        %v4504 = vpop.f32.mrb[0].mxu0
        %v4505 = vadd.f32 0.0, %v4504
        %v4506 = vpop.f32.mrb[0].mxu0
        %4507 = vmatprep.mubr.f32.mxu0 0.0
        %4508 = vmatmul.mubr.f32.gmra.mrb[0].mxu0 %v4426
        %v4509 = vpop.f32.mrb[0].mxu0
        %v4510 = vadd.f32 0.0, %v4509
        %v4511 = vpop.f32.mrb[0].mxu0
        %4512 = vdwg.mxu0
        %v4513 = vld [vmem:[%s17] sm:$0xff]
        %v4514 = vld [vmem:[%s17 + $0x8] sm:$0xff]
        %v4515 = vld [vmem:[%s17 + $0x10] sm:$0xff]
        %v4516 = vld [vmem:[%s17 + $0x18] sm:$0xff]
        %4518 = vset.pattern.permute.xlu0 0
        %4519 = vperm.xlu0 %4518, %v4513
        %v4520 = vpop.permute.xlu0 %4519
        %4523 = vset.pattern.permute.xlu0 0
        %4524 = vperm.xlu0 %4523, %v4514
        %v4525 = vpop.permute.xlu0 %4524
        %4528 = vset.pattern.permute.xlu0 0
        %4529 = vperm.xlu0 %4528, %v4515
        %v4530 = vpop.permute.xlu0 %4529
        %4533 = vset.pattern.permute.xlu0 0
        %4534 = vperm.xlu0 %4533, %v4516
        %v4535 = vpop.permute.xlu0 %4534
        %v4537 = vmul.f32 %v4520, %v4495
        %v4538 = vmul.f32 %v4525, %v4500
        %v4539 = vmul.f32 %v4530, %v4505
        %v4540 = vmul.f32 %v4535, %v4510
        %v4541 = vld [vmem:[%s18] sm:$0xff]
        %v4542 = vld [vmem:[%s18 + $0x8] sm:$0xff]
        %v4543 = vld [vmem:[%s18 + $0x10] sm:$0xff]
        %v4544 = vld [vmem:[%s18 + $0x18] sm:$0xff]
        %4546 = vset.pattern.permute.xlu0 0
        %4547 = vperm.xlu0 %4546, %v4541
        %v4548 = vpop.permute.xlu0 %4547
        %4551 = vset.pattern.permute.xlu0 0
        %4552 = vperm.xlu0 %4551, %v4542
        %v4553 = vpop.permute.xlu0 %4552
        %4556 = vset.pattern.permute.xlu0 0
        %4557 = vperm.xlu0 %4556, %v4543
        %v4558 = vpop.permute.xlu0 %4557
        %4561 = vset.pattern.permute.xlu0 0
        %4562 = vperm.xlu0 %4561, %v4544
        %v4563 = vpop.permute.xlu0 %4562
        %v4565 = vmul.f32 %v4548, %v3752
        %v4566 = vmul.f32 %v4553, %v3757
        %v4567 = vmul.f32 %v4558, %v3762
        %v4568 = vmul.f32 %v4563, %v3767
        %v4569 = vadd.f32 %v4537, %v4565
        %v4570 = vadd.f32 %v4538, %v4566
        %v4571 = vadd.f32 %v4539, %v4567
        %v4572 = vadd.f32 %v4540, %v4568
        %4573 = vst.msk [vmem:[#allocation2] sm:$0xff] %vm906, %v4569
        %4574 = vst.msk [vmem:[#allocation2 + $0x8] sm:$0xff] %vm906, %v4570
        %4575 = vst.msk [vmem:[#allocation2 + $0x10] sm:$0xff] %vm906, %v4571
        %4576 = vst.msk [vmem:[#allocation2 + $0x18] sm:$0xff] %vm906, %v4572
        %v4577 = vld [vmem:[%s21] sm:$0x7f]
        %v4578 = vsel %vm906, %v3772, 0.0
        %4579 = vadd.xlane.f32.xlu0 %v4578
        %v4580 = vpop.xlane.xlu0 %4579
        %v4581 = vsel %vm906, %v3777, 0.0
        %4582 = vadd.xlane.f32.xlu0 %v4581
        %v4583 = vpop.xlane.xlu0 %4582
        %v4584 = vsel %vm906, %v3782, 0.0
        %4585 = vadd.xlane.f32.xlu0 %v4584
        %v4586 = vpop.xlane.xlu0 %4585
        %v4587 = vsel %vm906, %v3787, 0.0
        %4588 = vadd.xlane.f32.xlu0 %v4587
        %v4589 = vpop.xlane.xlu0 %4588
        %v4590 = vmul.f32 %v4580, %v1987
        %v4591 = vmul.f32 %v4583, %v1987
        %v4592 = vmul.f32 %v4586, %v1987
        %v4593 = vmul.f32 %v4589, %v1987
        %v4595 = vsel %vm3808, %v4577, 0
        %4597 = vmatprep.subr.mxu0 0.0
        %4598 = vmatpush1.msra.mxu0 %v4590
        %4599 = vmatprep.subr.mxu0 0.0
        %4600 = vmatpush1.msra.mxu0 %v4591
        %4601 = vmatprep.subr.mxu0 0.0
        %4602 = vmatpush1.msra.mxu0 %v4592
        %4603 = vmatprep.subr.mxu0 0.0
        %4604 = vmatpush1.msra.mxu0 %v4593
        %4605 = vmatprep.subr.mxu0 0.0
        %4606 = vmatpush1.msra.mxu0 0.0
        %4607 = vmatprep.subr.mxu0 0.0
        %4608 = vmatpush1.msra.mxu0 0.0
        %4609 = vmatprep.subr.mxu0 0.0
        %4610 = vmatpush1.msra.mxu0 0.0
        %4611 = vmatprep.subr.mxu0 0.0
        %4612 = vmatpush1.msra.mxu0 0.0
        %4613 = vmatprep.subr.mxu0 0.0
        %4614 = vmatpush1.msra.mxu0 0.0
        %4615 = vmatprep.subr.mxu0 0.0
        %4616 = vmatpush1.msra.mxu0 0.0
        %4617 = vmatprep.subr.mxu0 0.0
        %4618 = vmatpush1.msra.mxu0 0.0
        %4619 = vmatprep.subr.mxu0 0.0
        %4620 = vmatpush1.msra.mxu0 0.0
        %4621 = vmatprep.subr.mxu0 0.0
        %4622 = vmatpush1.msra.mxu0 0.0
        %4623 = vmatprep.subr.mxu0 0.0
        %4624 = vmatpush1.msra.mxu0 0.0
        %4625 = vmatprep.subr.mxu0 0.0
        %4626 = vmatpush1.msra.mxu0 0.0
        %4627 = vmatprep.subr.mxu0 0.0
        %4628 = vmatpush1.msra.mxu0 0.0
        %4629 = vmatprep.subr.mxu0 0.0
        %4630 = vmatpush1.msra.mxu0 0.0
        %4631 = vmatprep.subr.mxu0 0.0
        %4632 = vmatpush1.msra.mxu0 0.0
        %4633 = vmatprep.subr.mxu0 0.0
        %4634 = vmatpush1.msra.mxu0 0.0
        %4635 = vmatprep.subr.mxu0 0.0
        %4636 = vmatpush1.msra.mxu0 0.0
        %4637 = vmatprep.subr.mxu0 0.0
        %4638 = vmatpush1.msra.mxu0 0.0
        %4639 = vmatprep.subr.mxu0 0.0
        %4640 = vmatpush1.msra.mxu0 0.0
        %4641 = vmatprep.subr.mxu0 0.0
        %4642 = vmatpush1.msra.mxu0 0.0
        %4643 = vmatprep.subr.mxu0 0.0
        %4644 = vmatpush1.msra.mxu0 0.0
        %4645 = vmatprep.subr.mxu0 0.0
        %4646 = vmatpush1.msra.mxu0 0.0
        %4647 = vmatprep.subr.mxu0 0.0
        %4648 = vmatpush1.msra.mxu0 0.0
        %4649 = vmatprep.subr.mxu0 0.0
        %4650 = vmatpush1.msra.mxu0 0.0
        %4651 = vmatprep.subr.mxu0 0.0
        %4652 = vmatpush1.msra.mxu0 0.0
        %4653 = vmatprep.subr.mxu0 0.0
        %4654 = vmatpush1.msra.mxu0 0.0
        %4655 = vmatprep.subr.mxu0 0.0
        %4656 = vmatpush1.msra.mxu0 0.0
        %4657 = vmatprep.subr.mxu0 0.0
        %4658 = vmatpush1.msra.mxu0 0.0
        %4659 = vmatprep.subr.mxu0 0.0
        %4660 = vmatpush1.msra.mxu0 0.0
        %4661 = vmatprep.mubr.f32.mxu0 0.0
        %4662 = vmatmul.mubr.f32.gmra.mrb[0].mxu0 %v4595
        %v4663 = vpop.f32.mrb[0].mxu0
        %v4664 = vadd.f32 0.0, %v4663
        %v4665 = vpop.f32.mrb[0].mxu0
        %4666 = vdwg.mxu0
        %v4667 = vsub.f32 0.0, %v4664
        %v4668 = vmul.f32 %v4667, 1.442695
        %v4669 = vpow.pop %v4668
        %v4670 = vadd.f32 %v4669, 1.0
        %v4671 = vrcp.pop %v4670
        %v4672 = vmul.f32 1.0, %v4671
        %v4673 = vld [vmem:[%s19] sm:$0xff]
        %v4674 = vld [vmem:[%s19 + $0x8] sm:$0xff]
        %s4676 = vtos %v4672
        %v4677 = vstv %s4676
        %v4679 = vmul.f32 %v4677, %v4673
        %v4680 = vmul.f32 %v4677, %v4674
        %v4681 = vadd.f32 %v4679, 0.0
        %v4682 = vadd.f32 %v4680, 0.0
        %s4683 = scalar_lea.vmem %s19, 16
        %v4684 = vld [vmem:[%s4683] sm:$0xff]
        %v4685 = vld [vmem:[%s4683 + $0x8] sm:$0xff]
        %v4686 = vrot.slane %v4672, 1
        %s4687 = vtos %v4686
        %v4688 = vstv %s4687
        %v4690 = vmul.f32 %v4688, %v4684
        %v4691 = vmul.f32 %v4688, %v4685
        %v4692 = vadd.f32 %v4681, %v4690
        %v4693 = vadd.f32 %v4682, %v4691
        %s4694 = scalar_lea.vmem %s19, 32
        %v4695 = vld [vmem:[%s4694] sm:$0xff]
        %v4696 = vld [vmem:[%s4694 + $0x8] sm:$0xff]
        %v4697 = vrot.slane %v4672, 2
        %s4698 = vtos %v4697
        %v4699 = vstv %s4698
        %v4701 = vmul.f32 %v4699, %v4695
        %v4702 = vmul.f32 %v4699, %v4696
        %v4703 = vadd.f32 %v4692, %v4701
        %v4704 = vadd.f32 %v4693, %v4702
        %s4705 = scalar_lea.vmem %s19, 48
        %v4706 = vld [vmem:[%s4705] sm:$0xff]
        %v4707 = vld [vmem:[%s4705 + $0x8] sm:$0xff]
        %v4708 = vrot.slane %v4672, 3
        %s4709 = vtos %v4708
        %v4710 = vstv %s4709
        %v4712 = vmul.f32 %v4710, %v4706
        %v4713 = vmul.f32 %v4710, %v4707
        %v4714 = vadd.f32 %v4703, %v4712
        %v4715 = vadd.f32 %v4704, %v4713
        %s4716 = scalar_lea.vmem %s19, 64
        %v4717 = vld [vmem:[%s4716] sm:$0xff]
        %v4718 = vld [vmem:[%s4716 + $0x8] sm:$0xff]
        %v4719 = vrot.slane %v4672, 4
        %s4720 = vtos %v4719
        %v4721 = vstv %s4720
        %v4723 = vmul.f32 %v4721, %v4717
        %v4724 = vmul.f32 %v4721, %v4718
        %v4725 = vadd.f32 %v4714, %v4723
        %v4726 = vadd.f32 %v4715, %v4724
        %s4727 = scalar_lea.vmem %s19, 80
        %v4728 = vld [vmem:[%s4727] sm:$0xff]
        %v4729 = vld [vmem:[%s4727 + $0x8] sm:$0xff]
        %v4730 = vrot.slane %v4672, 5
        %s4731 = vtos %v4730
        %v4732 = vstv %s4731
        %v4734 = vmul.f32 %v4732, %v4728
        %v4735 = vmul.f32 %v4732, %v4729
        %v4736 = vadd.f32 %v4725, %v4734
        %v4737 = vadd.f32 %v4726, %v4735
        %s4738 = scalar_lea.vmem %s19, 96
        %v4739 = vld [vmem:[%s4738] sm:$0xff]
        %v4740 = vld [vmem:[%s4738 + $0x8] sm:$0xff]
        %v4741 = vrot.slane %v4672, 6
        %s4742 = vtos %v4741
        %v4743 = vstv %s4742
        %v4745 = vmul.f32 %v4743, %v4739
        %v4746 = vmul.f32 %v4743, %v4740
        %v4747 = vadd.f32 %v4736, %v4745
        %v4748 = vadd.f32 %v4737, %v4746
        %v4750 = vsel %vm906, %v3772, 0
        %v4753 = vsel %vm906, %v3777, 0
        %v4756 = vsel %vm906, %v3782, 0
        %v4759 = vsel %vm906, %v3787, 0
        %4761 = vmatprep.subr.mxu0 0.0
        %4762 = vmatpush1.msra.mxu0 %v4747
        %4763 = vmatprep.subr.mxu0 0.0
        %4764 = vmatpush1.msra.mxu0 %v4748
        %4765 = vmatprep.subr.mxu0 0.0
        %4766 = vmatpush1.msra.mxu0 0.0
        %4767 = vmatprep.subr.mxu0 0.0
        %4768 = vmatpush1.msra.mxu0 0.0
        %4769 = vmatprep.subr.mxu0 0.0
        %4770 = vmatpush1.msra.mxu0 0.0
        %4771 = vmatprep.subr.mxu0 0.0
        %4772 = vmatpush1.msra.mxu0 0.0
        %4773 = vmatprep.subr.mxu0 0.0
        %4774 = vmatpush1.msra.mxu0 0.0
        %4775 = vmatprep.subr.mxu0 0.0
        %4776 = vmatpush1.msra.mxu0 0.0
        %4777 = vmatprep.subr.mxu0 0.0
        %4778 = vmatpush1.msra.mxu0 0.0
        %4779 = vmatprep.subr.mxu0 0.0
        %4780 = vmatpush1.msra.mxu0 0.0
        %4781 = vmatprep.subr.mxu0 0.0
        %4782 = vmatpush1.msra.mxu0 0.0
        %4783 = vmatprep.subr.mxu0 0.0
        %4784 = vmatpush1.msra.mxu0 0.0
        %4785 = vmatprep.subr.mxu0 0.0
        %4786 = vmatpush1.msra.mxu0 0.0
        %4787 = vmatprep.subr.mxu0 0.0
        %4788 = vmatpush1.msra.mxu0 0.0
        %4789 = vmatprep.subr.mxu0 0.0
        %4790 = vmatpush1.msra.mxu0 0.0
        %4791 = vmatprep.subr.mxu0 0.0
        %4792 = vmatpush1.msra.mxu0 0.0
        %4793 = vmatprep.subr.mxu0 0.0
        %4794 = vmatpush1.msra.mxu0 0.0
        %4795 = vmatprep.subr.mxu0 0.0
        %4796 = vmatpush1.msra.mxu0 0.0
        %4797 = vmatprep.subr.mxu0 0.0
        %4798 = vmatpush1.msra.mxu0 0.0
        %4799 = vmatprep.subr.mxu0 0.0
        %4800 = vmatpush1.msra.mxu0 0.0
        %4801 = vmatprep.subr.mxu0 0.0
        %4802 = vmatpush1.msra.mxu0 0.0
        %4803 = vmatprep.subr.mxu0 0.0
        %4804 = vmatpush1.msra.mxu0 0.0
        %4805 = vmatprep.subr.mxu0 0.0
        %4806 = vmatpush1.msra.mxu0 0.0
        %4807 = vmatprep.subr.mxu0 0.0
        %4808 = vmatpush1.msra.mxu0 0.0
        %4809 = vmatprep.subr.mxu0 0.0
        %4810 = vmatpush1.msra.mxu0 0.0
        %4811 = vmatprep.subr.mxu0 0.0
        %4812 = vmatpush1.msra.mxu0 0.0
        %4813 = vmatprep.subr.mxu0 0.0
        %4814 = vmatpush1.msra.mxu0 0.0
        %4815 = vmatprep.subr.mxu0 0.0
        %4816 = vmatpush1.msra.mxu0 0.0
        %4817 = vmatprep.subr.mxu0 0.0
        %4818 = vmatpush1.msra.mxu0 0.0
        %4819 = vmatprep.subr.mxu0 0.0
        %4820 = vmatpush1.msra.mxu0 0.0
        %4821 = vmatprep.subr.mxu0 0.0
        %4822 = vmatpush1.msra.mxu0 0.0
        %4823 = vmatprep.subr.mxu0 0.0
        %4824 = vmatpush1.msra.mxu0 0.0
        %4825 = vmatprep.mubr.f32.mxu0 0.0
        %4826 = vmatmul.mubr.f32.gmra.mrb[0].mxu0 %v4750
        %v4827 = vpop.f32.mrb[0].mxu0
        %v4828 = vadd.f32 0.0, %v4827
        %v4829 = vpop.f32.mrb[0].mxu0
        %4830 = vmatprep.mubr.f32.mxu0 0.0
        %4831 = vmatmul.mubr.f32.gmra.mrb[0].mxu0 %v4753
        %v4832 = vpop.f32.mrb[0].mxu0
        %v4833 = vadd.f32 0.0, %v4832
        %v4834 = vpop.f32.mrb[0].mxu0
        %4835 = vmatprep.mubr.f32.mxu0 0.0
        %4836 = vmatmul.mubr.f32.gmra.mrb[0].mxu0 %v4756
        %v4837 = vpop.f32.mrb[0].mxu0
        %v4838 = vadd.f32 0.0, %v4837
        %v4839 = vpop.f32.mrb[0].mxu0
        %4840 = vmatprep.mubr.f32.mxu0 0.0
        %4841 = vmatmul.mubr.f32.gmra.mrb[0].mxu0 %v4759
        %v4842 = vpop.f32.mrb[0].mxu0
        %v4843 = vadd.f32 0.0, %v4842
        %v4844 = vpop.f32.mrb[0].mxu0
        %4845 = vdwg.mxu0
        %v4846 = vld [vmem:[%s22] sm:$0x7f]
        %v4847 = vsel %vm906, %v4828, 0.0
        %4848 = vadd.xlane.f32.xlu0 %v4847
        %v4849 = vpop.xlane.xlu0 %4848
        %v4850 = vsel %vm906, %v4833, 0.0
        %4851 = vadd.xlane.f32.xlu0 %v4850
        %v4852 = vpop.xlane.xlu0 %4851
        %v4853 = vsel %vm906, %v4838, 0.0
        %4854 = vadd.xlane.f32.xlu0 %v4853
        %v4855 = vpop.xlane.xlu0 %4854
        %v4856 = vsel %vm906, %v4843, 0.0
        %4857 = vadd.xlane.f32.xlu0 %v4856
        %v4858 = vpop.xlane.xlu0 %4857
        %v4859 = vmul.f32 %v4849, %v1987
        %v4860 = vmul.f32 %v4852, %v1987
        %v4861 = vmul.f32 %v4855, %v1987
        %v4862 = vmul.f32 %v4858, %v1987
        %v4864 = vsel %vm3808, %v4846, 0
        %4866 = vmatprep.subr.mxu0 0.0
        %4867 = vmatpush1.msra.mxu0 %v4859
        %4868 = vmatprep.subr.mxu0 0.0
        %4869 = vmatpush1.msra.mxu0 %v4860
        %4870 = vmatprep.subr.mxu0 0.0
        %4871 = vmatpush1.msra.mxu0 %v4861
        %4872 = vmatprep.subr.mxu0 0.0
        %4873 = vmatpush1.msra.mxu0 %v4862
        %4874 = vmatprep.subr.mxu0 0.0
        %4875 = vmatpush1.msra.mxu0 0.0
        %4876 = vmatprep.subr.mxu0 0.0
        %4877 = vmatpush1.msra.mxu0 0.0
        %4878 = vmatprep.subr.mxu0 0.0
        %4879 = vmatpush1.msra.mxu0 0.0
        %4880 = vmatprep.subr.mxu0 0.0
        %4881 = vmatpush1.msra.mxu0 0.0
        %4882 = vmatprep.subr.mxu0 0.0
        %4883 = vmatpush1.msra.mxu0 0.0
        %4884 = vmatprep.subr.mxu0 0.0
        %4885 = vmatpush1.msra.mxu0 0.0
        %4886 = vmatprep.subr.mxu0 0.0
        %4887 = vmatpush1.msra.mxu0 0.0
        %4888 = vmatprep.subr.mxu0 0.0
        %4889 = vmatpush1.msra.mxu0 0.0
        %4890 = vmatprep.subr.mxu0 0.0
        %4891 = vmatpush1.msra.mxu0 0.0
        %4892 = vmatprep.subr.mxu0 0.0
        %4893 = vmatpush1.msra.mxu0 0.0
        %4894 = vmatprep.subr.mxu0 0.0
        %4895 = vmatpush1.msra.mxu0 0.0
        %4896 = vmatprep.subr.mxu0 0.0
        %4897 = vmatpush1.msra.mxu0 0.0
        %4898 = vmatprep.subr.mxu0 0.0
        %4899 = vmatpush1.msra.mxu0 0.0
        %4900 = vmatprep.subr.mxu0 0.0
        %4901 = vmatpush1.msra.mxu0 0.0
        %4902 = vmatprep.subr.mxu0 0.0
        %4903 = vmatpush1.msra.mxu0 0.0
        %4904 = vmatprep.subr.mxu0 0.0
        %4905 = vmatpush1.msra.mxu0 0.0
        %4906 = vmatprep.subr.mxu0 0.0
        %4907 = vmatpush1.msra.mxu0 0.0
        %4908 = vmatprep.subr.mxu0 0.0
        %4909 = vmatpush1.msra.mxu0 0.0
        %4910 = vmatprep.subr.mxu0 0.0
        %4911 = vmatpush1.msra.mxu0 0.0
        %4912 = vmatprep.subr.mxu0 0.0
        %4913 = vmatpush1.msra.mxu0 0.0
        %4914 = vmatprep.subr.mxu0 0.0
        %4915 = vmatpush1.msra.mxu0 0.0
        %4916 = vmatprep.subr.mxu0 0.0
        %4917 = vmatpush1.msra.mxu0 0.0
        %4918 = vmatprep.subr.mxu0 0.0
        %4919 = vmatpush1.msra.mxu0 0.0
        %4920 = vmatprep.subr.mxu0 0.0
        %4921 = vmatpush1.msra.mxu0 0.0
        %4922 = vmatprep.subr.mxu0 0.0
        %4923 = vmatpush1.msra.mxu0 0.0
        %4924 = vmatprep.subr.mxu0 0.0
        %4925 = vmatpush1.msra.mxu0 0.0
        %4926 = vmatprep.subr.mxu0 0.0
        %4927 = vmatpush1.msra.mxu0 0.0
        %4928 = vmatprep.subr.mxu0 0.0
        %4929 = vmatpush1.msra.mxu0 0.0
        %4930 = vmatprep.mubr.f32.mxu0 0.0
        %4931 = vmatmul.mubr.f32.gmra.mrb[0].mxu0 %v4864
        %v4932 = vpop.f32.mrb[0].mxu0
        %v4933 = vadd.f32 0.0, %v4932
        %v4934 = vpop.f32.mrb[0].mxu0
        %4935 = vdwg.mxu0
        %v4936 = vsub.f32 0.0, %v4933
        %v4937 = vmul.f32 %v4936, 1.442695
        %v4938 = vpow.pop %v4937
        %v4939 = vadd.f32 %v4938, 1.0
        %v4940 = vrcp.pop %v4939
        %v4941 = vmul.f32 1.0, %v4940
        %v4942 = vld [vmem:[%s20] sm:$0xff]
        %v4943 = vld [vmem:[%s20 + $0x8] sm:$0xff]
        %v4944 = vld [vmem:[%s20 + $0x10] sm:$0xff]
        %v4945 = vld [vmem:[%s20 + $0x18] sm:$0xff]
        %s4947 = vtos %v4941
        %v4948 = vstv %s4947
        %v4950 = vmul.f32 %v4948, %v4942
        %v4951 = vmul.f32 %v4948, %v4943
        %v4952 = vmul.f32 %v4948, %v4944
        %v4953 = vmul.f32 %v4948, %v4945
        %v4954 = vadd.f32 %v4950, 0.0
        %v4955 = vadd.f32 %v4951, 0.0
        %v4956 = vadd.f32 %v4952, 0.0
        %v4957 = vadd.f32 %v4953, 0.0
        %s4958 = scalar_lea.vmem %s20, 32
        %v4959 = vld [vmem:[%s4958] sm:$0xff]
        %v4960 = vld [vmem:[%s4958 + $0x8] sm:$0xff]
        %v4961 = vld [vmem:[%s4958 + $0x10] sm:$0xff]
        %v4962 = vld [vmem:[%s4958 + $0x18] sm:$0xff]
        %v4963 = vrot.slane %v4941, 1
        %s4964 = vtos %v4963
        %v4965 = vstv %s4964
        %v4967 = vmul.f32 %v4965, %v4959
        %v4968 = vmul.f32 %v4965, %v4960
        %v4969 = vmul.f32 %v4965, %v4961
        %v4970 = vmul.f32 %v4965, %v4962
        %v4971 = vadd.f32 %v4954, %v4967
        %v4972 = vadd.f32 %v4955, %v4968
        %v4973 = vadd.f32 %v4956, %v4969
        %v4974 = vadd.f32 %v4957, %v4970
        %s4975 = scalar_lea.vmem %s20, 64
        %v4976 = vld [vmem:[%s4975] sm:$0xff]
        %v4977 = vld [vmem:[%s4975 + $0x8] sm:$0xff]
        %v4978 = vld [vmem:[%s4975 + $0x10] sm:$0xff]
        %v4979 = vld [vmem:[%s4975 + $0x18] sm:$0xff]
        %v4980 = vrot.slane %v4941, 2
        %s4981 = vtos %v4980
        %v4982 = vstv %s4981
        %v4984 = vmul.f32 %v4982, %v4976
        %v4985 = vmul.f32 %v4982, %v4977
        %v4986 = vmul.f32 %v4982, %v4978
        %v4987 = vmul.f32 %v4982, %v4979
        %v4988 = vadd.f32 %v4971, %v4984
        %v4989 = vadd.f32 %v4972, %v4985
        %v4990 = vadd.f32 %v4973, %v4986
        %v4991 = vadd.f32 %v4974, %v4987
        %s4992 = scalar_lea.vmem %s20, 96
        %v4993 = vld [vmem:[%s4992] sm:$0xff]
        %v4994 = vld [vmem:[%s4992 + $0x8] sm:$0xff]
        %v4995 = vld [vmem:[%s4992 + $0x10] sm:$0xff]
        %v4996 = vld [vmem:[%s4992 + $0x18] sm:$0xff]
        %v4997 = vrot.slane %v4941, 3
        %s4998 = vtos %v4997
        %v4999 = vstv %s4998
        %v5001 = vmul.f32 %v4999, %v4993
        %v5002 = vmul.f32 %v4999, %v4994
        %v5003 = vmul.f32 %v4999, %v4995
        %v5004 = vmul.f32 %v4999, %v4996
        %v5005 = vadd.f32 %v4988, %v5001
        %v5006 = vadd.f32 %v4989, %v5002
        %v5007 = vadd.f32 %v4990, %v5003
        %v5008 = vadd.f32 %v4991, %v5004
        %s5009 = scalar_lea.vmem %s20, 128
        %v5010 = vld [vmem:[%s5009] sm:$0xff]
        %v5011 = vld [vmem:[%s5009 + $0x8] sm:$0xff]
        %v5012 = vld [vmem:[%s5009 + $0x10] sm:$0xff]
        %v5013 = vld [vmem:[%s5009 + $0x18] sm:$0xff]
        %v5014 = vrot.slane %v4941, 4
        %s5015 = vtos %v5014
        %v5016 = vstv %s5015
        %v5018 = vmul.f32 %v5016, %v5010
        %v5019 = vmul.f32 %v5016, %v5011
        %v5020 = vmul.f32 %v5016, %v5012
        %v5021 = vmul.f32 %v5016, %v5013
        %v5022 = vadd.f32 %v5005, %v5018
        %v5023 = vadd.f32 %v5006, %v5019
        %v5024 = vadd.f32 %v5007, %v5020
        %v5025 = vadd.f32 %v5008, %v5021
        %s5026 = scalar_lea.vmem %s20, 160
        %v5027 = vld [vmem:[%s5026] sm:$0xff]
        %v5028 = vld [vmem:[%s5026 + $0x8] sm:$0xff]
        %v5029 = vld [vmem:[%s5026 + $0x10] sm:$0xff]
        %v5030 = vld [vmem:[%s5026 + $0x18] sm:$0xff]
        %v5031 = vrot.slane %v4941, 5
        %s5032 = vtos %v5031
        %v5033 = vstv %s5032
        %v5035 = vmul.f32 %v5033, %v5027
        %v5036 = vmul.f32 %v5033, %v5028
        %v5037 = vmul.f32 %v5033, %v5029
        %v5038 = vmul.f32 %v5033, %v5030
        %v5039 = vadd.f32 %v5022, %v5035
        %v5040 = vadd.f32 %v5023, %v5036
        %v5041 = vadd.f32 %v5024, %v5037
        %v5042 = vadd.f32 %v5025, %v5038
        %s5043 = scalar_lea.vmem %s20, 192
        %v5044 = vld [vmem:[%s5043] sm:$0xff]
        %v5045 = vld [vmem:[%s5043 + $0x8] sm:$0xff]
        %v5046 = vld [vmem:[%s5043 + $0x10] sm:$0xff]
        %v5047 = vld [vmem:[%s5043 + $0x18] sm:$0xff]
        %v5048 = vrot.slane %v4941, 6
        %s5049 = vtos %v5048
        %v5050 = vstv %s5049
        %v5052 = vmul.f32 %v5050, %v5044
        %v5053 = vmul.f32 %v5050, %v5045
        %v5054 = vmul.f32 %v5050, %v5046
        %v5055 = vmul.f32 %v5050, %v5047
        %v5056 = vadd.f32 %v5039, %v5052
        %v5057 = vadd.f32 %v5040, %v5053
        %v5058 = vadd.f32 %v5041, %v5054
        %v5059 = vadd.f32 %v5042, %v5055
        %v5061 = vsel %vm3808, %v5056, 0
        %v5064 = vsel %vm3808, %v5057, 0
        %v5067 = vsel %vm3808, %v5058, 0
        %v5070 = vsel %vm3808, %v5059, 0
        %5072 = vmatprep.subr.mxu0 0.0
        %5073 = vmatpush1.msra.mxu0 %v4828
        %5074 = vmatprep.subr.mxu0 0.0
        %5075 = vmatpush1.msra.mxu0 %v4833
        %5076 = vmatprep.subr.mxu0 0.0
        %5077 = vmatpush1.msra.mxu0 %v4838
        %5078 = vmatprep.subr.mxu0 0.0
        %5079 = vmatpush1.msra.mxu0 %v4843
        %5080 = vmatprep.subr.mxu0 0.0
        %5081 = vmatpush1.msra.mxu0 0.0
        %5082 = vmatprep.subr.mxu0 0.0
        %5083 = vmatpush1.msra.mxu0 0.0
        %5084 = vmatprep.subr.mxu0 0.0
        %5085 = vmatpush1.msra.mxu0 0.0
        %5086 = vmatprep.subr.mxu0 0.0
        %5087 = vmatpush1.msra.mxu0 0.0
        %5088 = vmatprep.subr.mxu0 0.0
        %5089 = vmatpush1.msra.mxu0 0.0
        %5090 = vmatprep.subr.mxu0 0.0
        %5091 = vmatpush1.msra.mxu0 0.0
        %5092 = vmatprep.subr.mxu0 0.0
        %5093 = vmatpush1.msra.mxu0 0.0
        %5094 = vmatprep.subr.mxu0 0.0
        %5095 = vmatpush1.msra.mxu0 0.0
        %5096 = vmatprep.subr.mxu0 0.0
        %5097 = vmatpush1.msra.mxu0 0.0
        %5098 = vmatprep.subr.mxu0 0.0
        %5099 = vmatpush1.msra.mxu0 0.0
        %5100 = vmatprep.subr.mxu0 0.0
        %5101 = vmatpush1.msra.mxu0 0.0
        %5102 = vmatprep.subr.mxu0 0.0
        %5103 = vmatpush1.msra.mxu0 0.0
        %5104 = vmatprep.subr.mxu0 0.0
        %5105 = vmatpush1.msra.mxu0 0.0
        %5106 = vmatprep.subr.mxu0 0.0
        %5107 = vmatpush1.msra.mxu0 0.0
        %5108 = vmatprep.subr.mxu0 0.0
        %5109 = vmatpush1.msra.mxu0 0.0
        %5110 = vmatprep.subr.mxu0 0.0
        %5111 = vmatpush1.msra.mxu0 0.0
        %5112 = vmatprep.subr.mxu0 0.0
        %5113 = vmatpush1.msra.mxu0 0.0
        %5114 = vmatprep.subr.mxu0 0.0
        %5115 = vmatpush1.msra.mxu0 0.0
        %5116 = vmatprep.subr.mxu0 0.0
        %5117 = vmatpush1.msra.mxu0 0.0
        %5118 = vmatprep.subr.mxu0 0.0
        %5119 = vmatpush1.msra.mxu0 0.0
        %5120 = vmatprep.subr.mxu0 0.0
        %5121 = vmatpush1.msra.mxu0 0.0
        %5122 = vmatprep.subr.mxu0 0.0
        %5123 = vmatpush1.msra.mxu0 0.0
        %5124 = vmatprep.subr.mxu0 0.0
        %5125 = vmatpush1.msra.mxu0 0.0
        %5126 = vmatprep.subr.mxu0 0.0
        %5127 = vmatpush1.msra.mxu0 0.0
        %5128 = vmatprep.subr.mxu0 0.0
        %5129 = vmatpush1.msra.mxu0 0.0
        %5130 = vmatprep.subr.mxu0 0.0
        %5131 = vmatpush1.msra.mxu0 0.0
        %5132 = vmatprep.subr.mxu0 0.0
        %5133 = vmatpush1.msra.mxu0 0.0
        %5134 = vmatprep.subr.mxu0 0.0
        %5135 = vmatpush1.msra.mxu0 0.0
        %5136 = vmatprep.mubr.f32.mxu0 0.0
        %5137 = vmatmul.mubr.f32.gmra.mrb[0].mxu0 %v5061
        %v5138 = vpop.f32.mrb[0].mxu0
        %v5139 = vadd.f32 0.0, %v5138
        %v5140 = vpop.f32.mrb[0].mxu0
        %5141 = vmatprep.mubr.f32.mxu0 0.0
        %5142 = vmatmul.mubr.f32.gmra.mrb[0].mxu0 %v5064
        %v5143 = vpop.f32.mrb[0].mxu0
        %v5144 = vadd.f32 0.0, %v5143
        %v5145 = vpop.f32.mrb[0].mxu0
        %5146 = vmatprep.mubr.f32.mxu0 0.0
        %5147 = vmatmul.mubr.f32.gmra.mrb[0].mxu0 %v5067
        %v5148 = vpop.f32.mrb[0].mxu0
        %v5149 = vadd.f32 0.0, %v5148
        %v5150 = vpop.f32.mrb[0].mxu0
        %5151 = vmatprep.mubr.f32.mxu0 0.0
        %5152 = vmatmul.mubr.f32.gmra.mrb[0].mxu0 %v5070
        %v5153 = vpop.f32.mrb[0].mxu0
        %v5154 = vadd.f32 0.0, %v5153
        %v5155 = vpop.f32.mrb[0].mxu0
        %5156 = vdwg.mxu0
        %v5157 = vld [vmem:[%s23] sm:$0xff]
        %v5158 = vld [vmem:[%s23 + $0x8] sm:$0xff]
        %v5159 = vld [vmem:[%s23 + $0x10] sm:$0xff]
        %v5160 = vld [vmem:[%s23 + $0x18] sm:$0xff]
        %5162 = vset.pattern.permute.xlu0 0
        %5163 = vperm.xlu0 %5162, %v5157
        %v5164 = vpop.permute.xlu0 %5163
        %5167 = vset.pattern.permute.xlu0 0
        %5168 = vperm.xlu0 %5167, %v5158
        %v5169 = vpop.permute.xlu0 %5168
        %5172 = vset.pattern.permute.xlu0 0
        %5173 = vperm.xlu0 %5172, %v5159
        %v5174 = vpop.permute.xlu0 %5173
        %5177 = vset.pattern.permute.xlu0 0
        %5178 = vperm.xlu0 %5177, %v5160
        %v5179 = vpop.permute.xlu0 %5178
        %v5181 = vmul.f32 %v5164, %v5139
        %v5182 = vmul.f32 %v5169, %v5144
        %v5183 = vmul.f32 %v5174, %v5149
        %v5184 = vmul.f32 %v5179, %v5154
        %v5185 = vld [vmem:[%s24] sm:$0xff]
        %v5186 = vld [vmem:[%s24 + $0x8] sm:$0xff]
        %v5187 = vld [vmem:[%s24 + $0x10] sm:$0xff]
        %v5188 = vld [vmem:[%s24 + $0x18] sm:$0xff]
        %5190 = vset.pattern.permute.xlu0 0
        %5191 = vperm.xlu0 %5190, %v5185
        %v5192 = vpop.permute.xlu0 %5191
        %5195 = vset.pattern.permute.xlu0 0
        %5196 = vperm.xlu0 %5195, %v5186
        %v5197 = vpop.permute.xlu0 %5196
        %5200 = vset.pattern.permute.xlu0 0
        %5201 = vperm.xlu0 %5200, %v5187
        %v5202 = vpop.permute.xlu0 %5201
        %5205 = vset.pattern.permute.xlu0 0
        %5206 = vperm.xlu0 %5205, %v5188
        %v5207 = vpop.permute.xlu0 %5206
        %v5209 = vmul.f32 %v5192, %v3772
        %v5210 = vmul.f32 %v5197, %v3777
        %v5211 = vmul.f32 %v5202, %v3782
        %v5212 = vmul.f32 %v5207, %v3787
        %v5213 = vadd.f32 %v5181, %v5209
        %v5214 = vadd.f32 %v5182, %v5210
        %v5215 = vadd.f32 %v5183, %v5211
        %v5216 = vadd.f32 %v5184, %v5212
        %5217 = vst.msk [vmem:[#allocation2 + $0x20] sm:$0xff] %vm906, %v5213
        %5218 = vst.msk [vmem:[#allocation2 + $0x28] sm:$0xff] %vm906, %v5214
        %5219 = vst.msk [vmem:[#allocation2 + $0x30] sm:$0xff] %vm906, %v5215
        %5220 = vst.msk [vmem:[#allocation2 + $0x38] sm:$0xff] %vm906, %v5216
        %v5221 = vld [vmem:[#allocation2] sm:$0xff]
        %v5222 = vld [vmem:[#allocation2 + $0x8] sm:$0xff]
        %v5223 = vld [vmem:[#allocation2 + $0x10] sm:$0xff]
        %v5224 = vld [vmem:[#allocation2 + $0x18] sm:$0xff]
        %v5225 = vld [vmem:[#allocation2 + $0x20] sm:$0xff]
        %v5226 = vld [vmem:[#allocation2 + $0x28] sm:$0xff]
        %v5227 = vld [vmem:[#allocation2 + $0x30] sm:$0xff]
        %v5228 = vld [vmem:[#allocation2 + $0x38] sm:$0xff]
        %v5229 = vld [vmem:[#allocation3] sm:$0xff]
        %v5230 = vld [vmem:[#allocation3 + $0x8] sm:$0xff]
        %v5232 = vsel %vm906, %v5221, 0
        %v5235 = vsel %vm906, %v5222, 0
        %v5238 = vsel %vm906, %v5223, 0
        %v5241 = vsel %vm906, %v5224, 0
        %v5244 = vsel %vm906, %v5225, 0
        %v5247 = vsel %vm906, %v5226, 0
        %v5250 = vsel %vm906, %v5227, 0
        %v5253 = vsel %vm906, %v5228, 0
        %5255 = vmatprep.subr.mxu0 0.0
        %5256 = vmatpush1.msra.mxu0 %v5229
        %5257 = vmatprep.subr.mxu0 0.0
        %5258 = vmatpush1.msra.mxu0 %v5230
        %5259 = vmatprep.subr.mxu0 0.0
        %5260 = vmatpush1.msra.mxu0 0.0
        %5261 = vmatprep.subr.mxu0 0.0
        %5262 = vmatpush1.msra.mxu0 0.0
        %5263 = vmatprep.subr.mxu0 0.0
        %5264 = vmatpush1.msra.mxu0 0.0
        %5265 = vmatprep.subr.mxu0 0.0
        %5266 = vmatpush1.msra.mxu0 0.0
        %5267 = vmatprep.subr.mxu0 0.0
        %5268 = vmatpush1.msra.mxu0 0.0
        %5269 = vmatprep.subr.mxu0 0.0
        %5270 = vmatpush1.msra.mxu0 0.0
        %5271 = vmatprep.subr.mxu0 0.0
        %5272 = vmatpush1.msra.mxu0 0.0
        %5273 = vmatprep.subr.mxu0 0.0
        %5274 = vmatpush1.msra.mxu0 0.0
        %5275 = vmatprep.subr.mxu0 0.0
        %5276 = vmatpush1.msra.mxu0 0.0
        %5277 = vmatprep.subr.mxu0 0.0
        %5278 = vmatpush1.msra.mxu0 0.0
        %5279 = vmatprep.subr.mxu0 0.0
        %5280 = vmatpush1.msra.mxu0 0.0
        %5281 = vmatprep.subr.mxu0 0.0
        %5282 = vmatpush1.msra.mxu0 0.0
        %5283 = vmatprep.subr.mxu0 0.0
        %5284 = vmatpush1.msra.mxu0 0.0
        %5285 = vmatprep.subr.mxu0 0.0
        %5286 = vmatpush1.msra.mxu0 0.0
        %5287 = vmatprep.subr.mxu0 0.0
        %5288 = vmatpush1.msra.mxu0 0.0
        %5289 = vmatprep.subr.mxu0 0.0
        %5290 = vmatpush1.msra.mxu0 0.0
        %5291 = vmatprep.subr.mxu0 0.0
        %5292 = vmatpush1.msra.mxu0 0.0
        %5293 = vmatprep.subr.mxu0 0.0
        %5294 = vmatpush1.msra.mxu0 0.0
        %5295 = vmatprep.subr.mxu0 0.0
        %5296 = vmatpush1.msra.mxu0 0.0
        %5297 = vmatprep.subr.mxu0 0.0
        %5298 = vmatpush1.msra.mxu0 0.0
        %5299 = vmatprep.subr.mxu0 0.0
        %5300 = vmatpush1.msra.mxu0 0.0
        %5301 = vmatprep.subr.mxu0 0.0
        %5302 = vmatpush1.msra.mxu0 0.0
        %5303 = vmatprep.subr.mxu0 0.0
        %5304 = vmatpush1.msra.mxu0 0.0
        %5305 = vmatprep.subr.mxu0 0.0
        %5306 = vmatpush1.msra.mxu0 0.0
        %5307 = vmatprep.subr.mxu0 0.0
        %5308 = vmatpush1.msra.mxu0 0.0
        %5309 = vmatprep.subr.mxu0 0.0
        %5310 = vmatpush1.msra.mxu0 0.0
        %5311 = vmatprep.subr.mxu0 0.0
        %5312 = vmatpush1.msra.mxu0 0.0
        %5313 = vmatprep.subr.mxu0 0.0
        %5314 = vmatpush1.msra.mxu0 0.0
        %5315 = vmatprep.subr.mxu0 0.0
        %5316 = vmatpush1.msra.mxu0 0.0
        %5317 = vmatprep.subr.mxu0 0.0
        %5318 = vmatpush1.msra.mxu0 0.0
        %5319 = vmatprep.mubr.f32.mxu0 0.0
        %5320 = vmatmul.mubr.f32.gmra.mrb[0].mxu0 %v5232
        %v5321 = vpop.f32.mrb[0].mxu0
        %v5322 = vadd.f32 0.0, %v5321
        %v5323 = vpop.f32.mrb[0].mxu0
        %5324 = vmatprep.mubr.f32.mxu0 0.0
        %5325 = vmatmul.mubr.f32.gmra.mrb[0].mxu0 %v5235
        %v5326 = vpop.f32.mrb[0].mxu0
        %v5327 = vadd.f32 0.0, %v5326
        %v5328 = vpop.f32.mrb[0].mxu0
        %5329 = vmatprep.mubr.f32.mxu0 0.0
        %5330 = vmatmul.mubr.f32.gmra.mrb[0].mxu0 %v5238
        %v5331 = vpop.f32.mrb[0].mxu0
        %v5332 = vadd.f32 0.0, %v5331
        %v5333 = vpop.f32.mrb[0].mxu0
        %5334 = vmatprep.mubr.f32.mxu0 0.0
        %5335 = vmatmul.mubr.f32.gmra.mrb[0].mxu0 %v5241
        %v5336 = vpop.f32.mrb[0].mxu0
        %v5337 = vadd.f32 0.0, %v5336
        %v5338 = vpop.f32.mrb[0].mxu0
        %5339 = vmatprep.mubr.f32.mxu0 0.0
        %5340 = vmatmul.mubr.f32.gmra.mrb[0].mxu0 %v5244
        %v5341 = vpop.f32.mrb[0].mxu0
        %v5342 = vadd.f32 0.0, %v5341
        %v5343 = vpop.f32.mrb[0].mxu0
        %5344 = vmatprep.mubr.f32.mxu0 0.0
        %5345 = vmatmul.mubr.f32.gmra.mrb[0].mxu0 %v5247
        %v5346 = vpop.f32.mrb[0].mxu0
        %v5347 = vadd.f32 0.0, %v5346
        %v5348 = vpop.f32.mrb[0].mxu0
        %5349 = vmatprep.mubr.f32.mxu0 0.0
        %5350 = vmatmul.mubr.f32.gmra.mrb[0].mxu0 %v5250
        %v5351 = vpop.f32.mrb[0].mxu0
        %v5352 = vadd.f32 0.0, %v5351
        %v5353 = vpop.f32.mrb[0].mxu0
        %5354 = vmatprep.mubr.f32.mxu0 0.0
        %5355 = vmatmul.mubr.f32.gmra.mrb[0].mxu0 %v5253
        %v5356 = vpop.f32.mrb[0].mxu0
        %v5357 = vadd.f32 0.0, %v5356
        %v5358 = vpop.f32.mrb[0].mxu0
        %5359 = vdwg.mxu0
        %v5360 = vld [vmem:[#allocation7] sm:$0xff]
        %v5361 = vld [vmem:[#allocation7 + $0x8] sm:$0xff]
        %v5362 = vld [vmem:[#allocation7 + $0x10] sm:$0xff]
        %v5363 = vld [vmem:[#allocation7 + $0x18] sm:$0xff]
        %v5364 = vld [vmem:[#allocation7 + $0x20] sm:$0xff]
        %v5365 = vld [vmem:[#allocation7 + $0x28] sm:$0xff]
        %v5366 = vld [vmem:[#allocation7 + $0x30] sm:$0xff]
        %v5367 = vld [vmem:[#allocation7 + $0x38] sm:$0xff]
        %v5368 = vld [vmem:[%s1044] sm:$0xff]
        %v5369 = vld [vmem:[%s1044 + $0x8] sm:$0xff]
        %5370 = vmatprep.subr.mxu0 0.0
        %5371 = vmatpush1.msra.mxu0 %v5368
        %5372 = vmatprep.subr.mxu0 0.0
        %5373 = vmatpush1.msra.mxu0 %v5369
        %5374 = vmatprep.subr.mxu0 0.0
        %5375 = vmatpush1.msra.mxu0 0.0
        %5376 = vmatprep.subr.mxu0 0.0
        %5377 = vmatpush1.msra.mxu0 0.0
        %5378 = vmatprep.subr.mxu0 0.0
        %5379 = vmatpush1.msra.mxu0 0.0
        %5380 = vmatprep.subr.mxu0 0.0
        %5381 = vmatpush1.msra.mxu0 0.0
        %5382 = vmatprep.subr.mxu0 0.0
        %5383 = vmatpush1.msra.mxu0 0.0
        %5384 = vmatprep.subr.mxu0 0.0
        %5385 = vmatpush1.msra.mxu0 0.0
        %5386 = vmatprep.subr.mxu0 0.0
        %5387 = vmatpush1.msra.mxu0 0.0
        %5388 = vmatprep.subr.mxu0 0.0
        %5389 = vmatpush1.msra.mxu0 0.0
        %5390 = vmatprep.subr.mxu0 0.0
        %5391 = vmatpush1.msra.mxu0 0.0
        %5392 = vmatprep.subr.mxu0 0.0
        %5393 = vmatpush1.msra.mxu0 0.0
        %5394 = vmatprep.subr.mxu0 0.0
        %5395 = vmatpush1.msra.mxu0 0.0
        %5396 = vmatprep.subr.mxu0 0.0
        %5397 = vmatpush1.msra.mxu0 0.0
        %5398 = vmatprep.subr.mxu0 0.0
        %5399 = vmatpush1.msra.mxu0 0.0
        %5400 = vmatprep.subr.mxu0 0.0
        %5401 = vmatpush1.msra.mxu0 0.0
        %5402 = vmatprep.subr.mxu0 0.0
        %5403 = vmatpush1.msra.mxu0 0.0
        %5404 = vmatprep.subr.mxu0 0.0
        %5405 = vmatpush1.msra.mxu0 0.0
        %5406 = vmatprep.subr.mxu0 0.0
        %5407 = vmatpush1.msra.mxu0 0.0
        %5408 = vmatprep.subr.mxu0 0.0
        %5409 = vmatpush1.msra.mxu0 0.0
        %5410 = vmatprep.subr.mxu0 0.0
        %5411 = vmatpush1.msra.mxu0 0.0
        %5412 = vmatprep.subr.mxu0 0.0
        %5413 = vmatpush1.msra.mxu0 0.0
        %5414 = vmatprep.subr.mxu0 0.0
        %5415 = vmatpush1.msra.mxu0 0.0
        %5416 = vmatprep.subr.mxu0 0.0
        %5417 = vmatpush1.msra.mxu0 0.0
        %5418 = vmatprep.subr.mxu0 0.0
        %5419 = vmatpush1.msra.mxu0 0.0
        %5420 = vmatprep.subr.mxu0 0.0
        %5421 = vmatpush1.msra.mxu0 0.0
        %5422 = vmatprep.subr.mxu0 0.0
        %5423 = vmatpush1.msra.mxu0 0.0
        %5424 = vmatprep.subr.mxu0 0.0
        %5425 = vmatpush1.msra.mxu0 0.0
        %5426 = vmatprep.subr.mxu0 0.0
        %5427 = vmatpush1.msra.mxu0 0.0
        %5428 = vmatprep.subr.mxu0 0.0
        %5429 = vmatpush1.msra.mxu0 0.0
        %5430 = vmatprep.subr.mxu0 0.0
        %5431 = vmatpush1.msra.mxu0 0.0
        %5432 = vmatprep.subr.mxu0 0.0
        %5433 = vmatpush1.msra.mxu0 0.0
        %5434 = vmatprep.mubr.f32.mxu0 0.0
        %5435 = vmatmul.mubr.f32.gmra.mrb[0].mxu0 %v5232
        %v5436 = vpop.f32.mrb[0].mxu0
        %v5437 = vadd.f32 0.0, %v5436
        %v5438 = vpop.f32.mrb[0].mxu0
        %5439 = vmatprep.mubr.f32.mxu0 0.0
        %5440 = vmatmul.mubr.f32.gmra.mrb[0].mxu0 %v5235
        %v5441 = vpop.f32.mrb[0].mxu0
        %v5442 = vadd.f32 0.0, %v5441
        %v5443 = vpop.f32.mrb[0].mxu0
        %5444 = vmatprep.mubr.f32.mxu0 0.0
        %5445 = vmatmul.mubr.f32.gmra.mrb[0].mxu0 %v5238
        %v5446 = vpop.f32.mrb[0].mxu0
        %v5447 = vadd.f32 0.0, %v5446
        %v5448 = vpop.f32.mrb[0].mxu0
        %5449 = vmatprep.mubr.f32.mxu0 0.0
        %5450 = vmatmul.mubr.f32.gmra.mrb[0].mxu0 %v5241
        %v5451 = vpop.f32.mrb[0].mxu0
        %v5452 = vadd.f32 0.0, %v5451
        %v5453 = vpop.f32.mrb[0].mxu0
        %5454 = vmatprep.mubr.f32.mxu0 0.0
        %5455 = vmatmul.mubr.f32.gmra.mrb[0].mxu0 %v5244
        %v5456 = vpop.f32.mrb[0].mxu0
        %v5457 = vadd.f32 0.0, %v5456
        %v5458 = vpop.f32.mrb[0].mxu0
        %5459 = vmatprep.mubr.f32.mxu0 0.0
        %5460 = vmatmul.mubr.f32.gmra.mrb[0].mxu0 %v5247
        %v5461 = vpop.f32.mrb[0].mxu0
        %v5462 = vadd.f32 0.0, %v5461
        %v5463 = vpop.f32.mrb[0].mxu0
        %5464 = vmatprep.mubr.f32.mxu0 0.0
        %5465 = vmatmul.mubr.f32.gmra.mrb[0].mxu0 %v5250
        %v5466 = vpop.f32.mrb[0].mxu0
        %v5467 = vadd.f32 0.0, %v5466
        %v5468 = vpop.f32.mrb[0].mxu0
        %5469 = vmatprep.mubr.f32.mxu0 0.0
        %5470 = vmatmul.mubr.f32.gmra.mrb[0].mxu0 %v5253
        %v5471 = vpop.f32.mrb[0].mxu0
        %v5472 = vadd.f32 0.0, %v5471
        %v5473 = vpop.f32.mrb[0].mxu0
        %5474 = vdwg.mxu0
        %s5475 = scalar_lea.vmem [#allocation7], 64
        %v5476 = vld [vmem:[%s5475] sm:$0xff]
        %v5477 = vld [vmem:[%s5475 + $0x8] sm:$0xff]
        %v5478 = vld [vmem:[%s5475 + $0x10] sm:$0xff]
        %v5479 = vld [vmem:[%s5475 + $0x18] sm:$0xff]
        %v5480 = vld [vmem:[%s5475 + $0x20] sm:$0xff]
        %v5481 = vld [vmem:[%s5475 + $0x28] sm:$0xff]
        %v5482 = vld [vmem:[%s5475 + $0x30] sm:$0xff]
        %v5483 = vld [vmem:[%s5475 + $0x38] sm:$0xff]
        %v5485 = vsel %vm1161, %v5476, 0
        %v5488 = vsel %vm1161, %v5477, 0
        %v5491 = vsel %vm1161, %v5478, 0
        %v5494 = vsel %vm1161, %v5479, 0
        %v5497 = vsel %vm1161, %v5480, 0
        %v5500 = vsel %vm1161, %v5481, 0
        %v5503 = vsel %vm1161, %v5482, 0
        %v5506 = vsel %vm1161, %v5483, 0
        %5508 = vmatprep.subr.mxu0 0.0
        %5509 = vmatpush1.msra.mxu0 %v5437
        %5510 = vmatprep.subr.mxu0 0.0
        %5511 = vmatpush1.msra.mxu0 %v5442
        %5512 = vmatprep.subr.mxu0 0.0
        %5513 = vmatpush1.msra.mxu0 %v5447
        %5514 = vmatprep.subr.mxu0 0.0
        %5515 = vmatpush1.msra.mxu0 %v5452
        %5516 = vmatprep.subr.mxu0 0.0
        %5517 = vmatpush1.msra.mxu0 %v5457
        %5518 = vmatprep.subr.mxu0 0.0
        %5519 = vmatpush1.msra.mxu0 %v5462
        %5520 = vmatprep.subr.mxu0 0.0
        %5521 = vmatpush1.msra.mxu0 %v5467
        %5522 = vmatprep.subr.mxu0 0.0
        %5523 = vmatpush1.msra.mxu0 %v5472
        %5524 = vmatprep.subr.mxu0 0.0
        %5525 = vmatpush1.msra.mxu0 0.0
        %5526 = vmatprep.subr.mxu0 0.0
        %5527 = vmatpush1.msra.mxu0 0.0
        %5528 = vmatprep.subr.mxu0 0.0
        %5529 = vmatpush1.msra.mxu0 0.0
        %5530 = vmatprep.subr.mxu0 0.0
        %5531 = vmatpush1.msra.mxu0 0.0
        %5532 = vmatprep.subr.mxu0 0.0
        %5533 = vmatpush1.msra.mxu0 0.0
        %5534 = vmatprep.subr.mxu0 0.0
        %5535 = vmatpush1.msra.mxu0 0.0
        %5536 = vmatprep.subr.mxu0 0.0
        %5537 = vmatpush1.msra.mxu0 0.0
        %5538 = vmatprep.subr.mxu0 0.0
        %5539 = vmatpush1.msra.mxu0 0.0
        %5540 = vmatprep.subr.mxu0 0.0
        %5541 = vmatpush1.msra.mxu0 0.0
        %5542 = vmatprep.subr.mxu0 0.0
        %5543 = vmatpush1.msra.mxu0 0.0
        %5544 = vmatprep.subr.mxu0 0.0
        %5545 = vmatpush1.msra.mxu0 0.0
        %5546 = vmatprep.subr.mxu0 0.0
        %5547 = vmatpush1.msra.mxu0 0.0
        %5548 = vmatprep.subr.mxu0 0.0
        %5549 = vmatpush1.msra.mxu0 0.0
        %5550 = vmatprep.subr.mxu0 0.0
        %5551 = vmatpush1.msra.mxu0 0.0
        %5552 = vmatprep.subr.mxu0 0.0
        %5553 = vmatpush1.msra.mxu0 0.0
        %5554 = vmatprep.subr.mxu0 0.0
        %5555 = vmatpush1.msra.mxu0 0.0
        %5556 = vmatprep.subr.mxu0 0.0
        %5557 = vmatpush1.msra.mxu0 0.0
        %5558 = vmatprep.subr.mxu0 0.0
        %5559 = vmatpush1.msra.mxu0 0.0
        %5560 = vmatprep.subr.mxu0 0.0
        %5561 = vmatpush1.msra.mxu0 0.0
        %5562 = vmatprep.subr.mxu0 0.0
        %5563 = vmatpush1.msra.mxu0 0.0
        %5564 = vmatprep.subr.mxu0 0.0
        %5565 = vmatpush1.msra.mxu0 0.0
        %5566 = vmatprep.subr.mxu0 0.0
        %5567 = vmatpush1.msra.mxu0 0.0
        %5568 = vmatprep.subr.mxu0 0.0
        %5569 = vmatpush1.msra.mxu0 0.0
        %5570 = vmatprep.subr.mxu0 0.0
        %5571 = vmatpush1.msra.mxu0 0.0
        %5572 = vmatprep.mubr.f32.mxu0 0.0
        %5573 = vmatmul.mubr.f32.gmra.mrb[0].mxu0 %v5485
        %v5574 = vpop.f32.mrb[0].mxu0
        %v5575 = vadd.f32 0.0, %v5574
        %v5576 = vpop.f32.mrb[0].mxu0
        %5577 = vmatprep.mubr.f32.mxu0 0.0
        %5578 = vmatmul.mubr.f32.gmra.mrb[0].mxu0 %v5488
        %v5579 = vpop.f32.mrb[0].mxu0
        %v5580 = vadd.f32 0.0, %v5579
        %v5581 = vpop.f32.mrb[0].mxu0
        %5582 = vmatprep.mubr.f32.mxu0 0.0
        %5583 = vmatmul.mubr.f32.gmra.mrb[0].mxu0 %v5491
        %v5584 = vpop.f32.mrb[0].mxu0
        %v5585 = vadd.f32 0.0, %v5584
        %v5586 = vpop.f32.mrb[0].mxu0
        %5587 = vmatprep.mubr.f32.mxu0 0.0
        %5588 = vmatmul.mubr.f32.gmra.mrb[0].mxu0 %v5494
        %v5589 = vpop.f32.mrb[0].mxu0
        %v5590 = vadd.f32 0.0, %v5589
        %v5591 = vpop.f32.mrb[0].mxu0
        %5592 = vmatprep.mubr.f32.mxu0 0.0
        %5593 = vmatmul.mubr.f32.gmra.mrb[0].mxu0 %v5497
        %v5594 = vpop.f32.mrb[0].mxu0
        %v5595 = vadd.f32 0.0, %v5594
        %v5596 = vpop.f32.mrb[0].mxu0
        %5597 = vmatprep.mubr.f32.mxu0 0.0
        %5598 = vmatmul.mubr.f32.gmra.mrb[0].mxu0 %v5500
        %v5599 = vpop.f32.mrb[0].mxu0
        %v5600 = vadd.f32 0.0, %v5599
        %v5601 = vpop.f32.mrb[0].mxu0
        %5602 = vmatprep.mubr.f32.mxu0 0.0
        %5603 = vmatmul.mubr.f32.gmra.mrb[0].mxu0 %v5503
        %v5604 = vpop.f32.mrb[0].mxu0
        %v5605 = vadd.f32 0.0, %v5604
        %v5606 = vpop.f32.mrb[0].mxu0
        %5607 = vmatprep.mubr.f32.mxu0 0.0
        %5608 = vmatmul.mubr.f32.gmra.mrb[0].mxu0 %v5506
        %v5609 = vpop.f32.mrb[0].mxu0
        %v5610 = vadd.f32 0.0, %v5609
        %v5611 = vpop.f32.mrb[0].mxu0
        %5612 = vdwg.mxu0
        %v5614 = vsel %vm1161, %v5360, 0
        %v5617 = vsel %vm1161, %v5361, 0
        %v5620 = vsel %vm1161, %v5362, 0
        %v5623 = vsel %vm1161, %v5363, 0
        %v5626 = vsel %vm1161, %v5364, 0
        %v5629 = vsel %vm1161, %v5365, 0
        %v5632 = vsel %vm1161, %v5366, 0
        %v5635 = vsel %vm1161, %v5367, 0
        %5637 = vmatprep.subr.mxu0 0.0
        %5638 = vmatpush1.msra.mxu0 %v5322
        %5639 = vmatprep.subr.mxu0 0.0
        %5640 = vmatpush1.msra.mxu0 %v5327
        %5641 = vmatprep.subr.mxu0 0.0
        %5642 = vmatpush1.msra.mxu0 %v5332
        %5643 = vmatprep.subr.mxu0 0.0
        %5644 = vmatpush1.msra.mxu0 %v5337
        %5645 = vmatprep.subr.mxu0 0.0
        %5646 = vmatpush1.msra.mxu0 %v5342
        %5647 = vmatprep.subr.mxu0 0.0
        %5648 = vmatpush1.msra.mxu0 %v5347
        %5649 = vmatprep.subr.mxu0 0.0
        %5650 = vmatpush1.msra.mxu0 %v5352
        %5651 = vmatprep.subr.mxu0 0.0
        %5652 = vmatpush1.msra.mxu0 %v5357
        %5653 = vmatprep.subr.mxu0 0.0
        %5654 = vmatpush1.msra.mxu0 0.0
        %5655 = vmatprep.subr.mxu0 0.0
        %5656 = vmatpush1.msra.mxu0 0.0
        %5657 = vmatprep.subr.mxu0 0.0
        %5658 = vmatpush1.msra.mxu0 0.0
        %5659 = vmatprep.subr.mxu0 0.0
        %5660 = vmatpush1.msra.mxu0 0.0
        %5661 = vmatprep.subr.mxu0 0.0
        %5662 = vmatpush1.msra.mxu0 0.0
        %5663 = vmatprep.subr.mxu0 0.0
        %5664 = vmatpush1.msra.mxu0 0.0
        %5665 = vmatprep.subr.mxu0 0.0
        %5666 = vmatpush1.msra.mxu0 0.0
        %5667 = vmatprep.subr.mxu0 0.0
        %5668 = vmatpush1.msra.mxu0 0.0
        %5669 = vmatprep.subr.mxu0 0.0
        %5670 = vmatpush1.msra.mxu0 0.0
        %5671 = vmatprep.subr.mxu0 0.0
        %5672 = vmatpush1.msra.mxu0 0.0
        %5673 = vmatprep.subr.mxu0 0.0
        %5674 = vmatpush1.msra.mxu0 0.0
        %5675 = vmatprep.subr.mxu0 0.0
        %5676 = vmatpush1.msra.mxu0 0.0
        %5677 = vmatprep.subr.mxu0 0.0
        %5678 = vmatpush1.msra.mxu0 0.0
        %5679 = vmatprep.subr.mxu0 0.0
        %5680 = vmatpush1.msra.mxu0 0.0
        %5681 = vmatprep.subr.mxu0 0.0
        %5682 = vmatpush1.msra.mxu0 0.0
        %5683 = vmatprep.subr.mxu0 0.0
        %5684 = vmatpush1.msra.mxu0 0.0
        %5685 = vmatprep.subr.mxu0 0.0
        %5686 = vmatpush1.msra.mxu0 0.0
        %5687 = vmatprep.subr.mxu0 0.0
        %5688 = vmatpush1.msra.mxu0 0.0
        %5689 = vmatprep.subr.mxu0 0.0
        %5690 = vmatpush1.msra.mxu0 0.0
        %5691 = vmatprep.subr.mxu0 0.0
        %5692 = vmatpush1.msra.mxu0 0.0
        %5693 = vmatprep.subr.mxu0 0.0
        %5694 = vmatpush1.msra.mxu0 0.0
        %5695 = vmatprep.subr.mxu0 0.0
        %5696 = vmatpush1.msra.mxu0 0.0
        %5697 = vmatprep.subr.mxu0 0.0
        %5698 = vmatpush1.msra.mxu0 0.0
        %5699 = vmatprep.subr.mxu0 0.0
        %5700 = vmatpush1.msra.mxu0 0.0
        %5701 = vmatprep.mubr.f32.mxu0 0.0
        %5702 = vmatmul.mubr.f32.gmra.mrb[0].mxu0 %v5614
        %v5703 = vpop.f32.mrb[0].mxu0
        %v5704 = vadd.f32 %v5575, %v5703
        %v5705 = vpop.f32.mrb[0].mxu0
        %5706 = vmatprep.mubr.f32.mxu0 0.0
        %5707 = vmatmul.mubr.f32.gmra.mrb[0].mxu0 %v5617
        %v5708 = vpop.f32.mrb[0].mxu0
        %v5709 = vadd.f32 %v5580, %v5708
        %v5710 = vpop.f32.mrb[0].mxu0
        %5711 = vmatprep.mubr.f32.mxu0 0.0
        %5712 = vmatmul.mubr.f32.gmra.mrb[0].mxu0 %v5620
        %v5713 = vpop.f32.mrb[0].mxu0
        %v5714 = vadd.f32 %v5585, %v5713
        %v5715 = vpop.f32.mrb[0].mxu0
        %5716 = vmatprep.mubr.f32.mxu0 0.0
        %5717 = vmatmul.mubr.f32.gmra.mrb[0].mxu0 %v5623
        %v5718 = vpop.f32.mrb[0].mxu0
        %v5719 = vadd.f32 %v5590, %v5718
        %v5720 = vpop.f32.mrb[0].mxu0
        %5721 = vmatprep.mubr.f32.mxu0 0.0
        %5722 = vmatmul.mubr.f32.gmra.mrb[0].mxu0 %v5626
        %v5723 = vpop.f32.mrb[0].mxu0
        %v5724 = vadd.f32 %v5595, %v5723
        %v5725 = vpop.f32.mrb[0].mxu0
        %5726 = vmatprep.mubr.f32.mxu0 0.0
        %5727 = vmatmul.mubr.f32.gmra.mrb[0].mxu0 %v5629
        %v5728 = vpop.f32.mrb[0].mxu0
        %v5729 = vadd.f32 %v5600, %v5728
        %v5730 = vpop.f32.mrb[0].mxu0
        %5731 = vmatprep.mubr.f32.mxu0 0.0
        %5732 = vmatmul.mubr.f32.gmra.mrb[0].mxu0 %v5632
        %v5733 = vpop.f32.mrb[0].mxu0
        %v5734 = vadd.f32 %v5605, %v5733
        %v5735 = vpop.f32.mrb[0].mxu0
        %5736 = vmatprep.mubr.f32.mxu0 0.0
        %5737 = vmatmul.mubr.f32.gmra.mrb[0].mxu0 %v5635
        %v5738 = vpop.f32.mrb[0].mxu0
        %v5739 = vadd.f32 %v5610, %v5738
        %v5740 = vpop.f32.mrb[0].mxu0
        %5741 = vdwg.mxu0
        %v5742 = vld [vmem:[%s1420] sm:$0xff]
        %v5743 = vld [vmem:[%s1420 + $0x8] sm:$0xff]
        %5744 = vmatprep.subr.mxu0 0.0
        %5745 = vmatpush1.msra.mxu0 %v5742
        %5746 = vmatprep.subr.mxu0 0.0
        %5747 = vmatpush1.msra.mxu0 %v5743
        %5748 = vmatprep.subr.mxu0 0.0
        %5749 = vmatpush1.msra.mxu0 0.0
        %5750 = vmatprep.subr.mxu0 0.0
        %5751 = vmatpush1.msra.mxu0 0.0
        %5752 = vmatprep.subr.mxu0 0.0
        %5753 = vmatpush1.msra.mxu0 0.0
        %5754 = vmatprep.subr.mxu0 0.0
        %5755 = vmatpush1.msra.mxu0 0.0
        %5756 = vmatprep.subr.mxu0 0.0
        %5757 = vmatpush1.msra.mxu0 0.0
        %5758 = vmatprep.subr.mxu0 0.0
        %5759 = vmatpush1.msra.mxu0 0.0
        %5760 = vmatprep.subr.mxu0 0.0
        %5761 = vmatpush1.msra.mxu0 0.0
        %5762 = vmatprep.subr.mxu0 0.0
        %5763 = vmatpush1.msra.mxu0 0.0
        %5764 = vmatprep.subr.mxu0 0.0
        %5765 = vmatpush1.msra.mxu0 0.0
        %5766 = vmatprep.subr.mxu0 0.0
        %5767 = vmatpush1.msra.mxu0 0.0
        %5768 = vmatprep.subr.mxu0 0.0
        %5769 = vmatpush1.msra.mxu0 0.0
        %5770 = vmatprep.subr.mxu0 0.0
        %5771 = vmatpush1.msra.mxu0 0.0
        %5772 = vmatprep.subr.mxu0 0.0
        %5773 = vmatpush1.msra.mxu0 0.0
        %5774 = vmatprep.subr.mxu0 0.0
        %5775 = vmatpush1.msra.mxu0 0.0
        %5776 = vmatprep.subr.mxu0 0.0
        %5777 = vmatpush1.msra.mxu0 0.0
        %5778 = vmatprep.subr.mxu0 0.0
        %5779 = vmatpush1.msra.mxu0 0.0
        %5780 = vmatprep.subr.mxu0 0.0
        %5781 = vmatpush1.msra.mxu0 0.0
        %5782 = vmatprep.subr.mxu0 0.0
        %5783 = vmatpush1.msra.mxu0 0.0
        %5784 = vmatprep.subr.mxu0 0.0
        %5785 = vmatpush1.msra.mxu0 0.0
        %5786 = vmatprep.subr.mxu0 0.0
        %5787 = vmatpush1.msra.mxu0 0.0
        %5788 = vmatprep.subr.mxu0 0.0
        %5789 = vmatpush1.msra.mxu0 0.0
        %5790 = vmatprep.subr.mxu0 0.0
        %5791 = vmatpush1.msra.mxu0 0.0
        %5792 = vmatprep.subr.mxu0 0.0
        %5793 = vmatpush1.msra.mxu0 0.0
        %5794 = vmatprep.subr.mxu0 0.0
        %5795 = vmatpush1.msra.mxu0 0.0
        %5796 = vmatprep.subr.mxu0 0.0
        %5797 = vmatpush1.msra.mxu0 0.0
        %5798 = vmatprep.subr.mxu0 0.0
        %5799 = vmatpush1.msra.mxu0 0.0
        %5800 = vmatprep.subr.mxu0 0.0
        %5801 = vmatpush1.msra.mxu0 0.0
        %5802 = vmatprep.subr.mxu0 0.0
        %5803 = vmatpush1.msra.mxu0 0.0
        %5804 = vmatprep.subr.mxu0 0.0
        %5805 = vmatpush1.msra.mxu0 0.0
        %5806 = vmatprep.subr.mxu0 0.0
        %5807 = vmatpush1.msra.mxu0 0.0
        %5808 = vmatprep.mubr.f32.mxu0 0.0
        %5809 = vmatmul.mubr.f32.gmra.mrb[0].mxu0 %v5232
        %v5810 = vpop.f32.mrb[0].mxu0
        %v5811 = vadd.f32 0.0, %v5810
        %v5812 = vpop.f32.mrb[0].mxu0
        %5813 = vmatprep.mubr.f32.mxu0 0.0
        %5814 = vmatmul.mubr.f32.gmra.mrb[0].mxu0 %v5235
        %v5815 = vpop.f32.mrb[0].mxu0
        %v5816 = vadd.f32 0.0, %v5815
        %v5817 = vpop.f32.mrb[0].mxu0
        %5818 = vmatprep.mubr.f32.mxu0 0.0
        %5819 = vmatmul.mubr.f32.gmra.mrb[0].mxu0 %v5238
        %v5820 = vpop.f32.mrb[0].mxu0
        %v5821 = vadd.f32 0.0, %v5820
        %v5822 = vpop.f32.mrb[0].mxu0
        %5823 = vmatprep.mubr.f32.mxu0 0.0
        %5824 = vmatmul.mubr.f32.gmra.mrb[0].mxu0 %v5241
        %v5825 = vpop.f32.mrb[0].mxu0
        %v5826 = vadd.f32 0.0, %v5825
        %v5827 = vpop.f32.mrb[0].mxu0
        %5828 = vmatprep.mubr.f32.mxu0 0.0
        %5829 = vmatmul.mubr.f32.gmra.mrb[0].mxu0 %v5244
        %v5830 = vpop.f32.mrb[0].mxu0
        %v5831 = vadd.f32 0.0, %v5830
        %v5832 = vpop.f32.mrb[0].mxu0
        %5833 = vmatprep.mubr.f32.mxu0 0.0
        %5834 = vmatmul.mubr.f32.gmra.mrb[0].mxu0 %v5247
        %v5835 = vpop.f32.mrb[0].mxu0
        %v5836 = vadd.f32 0.0, %v5835
        %v5837 = vpop.f32.mrb[0].mxu0
        %5838 = vmatprep.mubr.f32.mxu0 0.0
        %5839 = vmatmul.mubr.f32.gmra.mrb[0].mxu0 %v5250
        %v5840 = vpop.f32.mrb[0].mxu0
        %v5841 = vadd.f32 0.0, %v5840
        %v5842 = vpop.f32.mrb[0].mxu0
        %5843 = vmatprep.mubr.f32.mxu0 0.0
        %5844 = vmatmul.mubr.f32.gmra.mrb[0].mxu0 %v5253
        %v5845 = vpop.f32.mrb[0].mxu0
        %v5846 = vadd.f32 0.0, %v5845
        %v5847 = vpop.f32.mrb[0].mxu0
        %5848 = vdwg.mxu0
        %s5849 = scalar_lea.vmem [#allocation7], 128
        %v5850 = vld [vmem:[%s5849] sm:$0xff]
        %v5851 = vld [vmem:[%s5849 + $0x8] sm:$0xff]
        %v5852 = vld [vmem:[%s5849 + $0x10] sm:$0xff]
        %v5853 = vld [vmem:[%s5849 + $0x18] sm:$0xff]
        %v5854 = vld [vmem:[%s5849 + $0x20] sm:$0xff]
        %v5855 = vld [vmem:[%s5849 + $0x28] sm:$0xff]
        %v5856 = vld [vmem:[%s5849 + $0x30] sm:$0xff]
        %v5857 = vld [vmem:[%s5849 + $0x38] sm:$0xff]
        %v5859 = vsel %vm1161, %v5850, 0
        %v5862 = vsel %vm1161, %v5851, 0
        %v5865 = vsel %vm1161, %v5852, 0
        %v5868 = vsel %vm1161, %v5853, 0
        %v5871 = vsel %vm1161, %v5854, 0
        %v5874 = vsel %vm1161, %v5855, 0
        %v5877 = vsel %vm1161, %v5856, 0
        %v5880 = vsel %vm1161, %v5857, 0
        %5882 = vmatprep.subr.mxu0 0.0
        %5883 = vmatpush1.msra.mxu0 %v5811
        %5884 = vmatprep.subr.mxu0 0.0
        %5885 = vmatpush1.msra.mxu0 %v5816
        %5886 = vmatprep.subr.mxu0 0.0
        %5887 = vmatpush1.msra.mxu0 %v5821
        %5888 = vmatprep.subr.mxu0 0.0
        %5889 = vmatpush1.msra.mxu0 %v5826
        %5890 = vmatprep.subr.mxu0 0.0
        %5891 = vmatpush1.msra.mxu0 %v5831
        %5892 = vmatprep.subr.mxu0 0.0
        %5893 = vmatpush1.msra.mxu0 %v5836
        %5894 = vmatprep.subr.mxu0 0.0
        %5895 = vmatpush1.msra.mxu0 %v5841
        %5896 = vmatprep.subr.mxu0 0.0
        %5897 = vmatpush1.msra.mxu0 %v5846
        %5898 = vmatprep.subr.mxu0 0.0
        %5899 = vmatpush1.msra.mxu0 0.0
        %5900 = vmatprep.subr.mxu0 0.0
        %5901 = vmatpush1.msra.mxu0 0.0
        %5902 = vmatprep.subr.mxu0 0.0
        %5903 = vmatpush1.msra.mxu0 0.0
        %5904 = vmatprep.subr.mxu0 0.0
        %5905 = vmatpush1.msra.mxu0 0.0
        %5906 = vmatprep.subr.mxu0 0.0
        %5907 = vmatpush1.msra.mxu0 0.0
        %5908 = vmatprep.subr.mxu0 0.0
        %5909 = vmatpush1.msra.mxu0 0.0
        %5910 = vmatprep.subr.mxu0 0.0
        %5911 = vmatpush1.msra.mxu0 0.0
        %5912 = vmatprep.subr.mxu0 0.0
        %5913 = vmatpush1.msra.mxu0 0.0
        %5914 = vmatprep.subr.mxu0 0.0
        %5915 = vmatpush1.msra.mxu0 0.0
        %5916 = vmatprep.subr.mxu0 0.0
        %5917 = vmatpush1.msra.mxu0 0.0
        %5918 = vmatprep.subr.mxu0 0.0
        %5919 = vmatpush1.msra.mxu0 0.0
        %5920 = vmatprep.subr.mxu0 0.0
        %5921 = vmatpush1.msra.mxu0 0.0
        %5922 = vmatprep.subr.mxu0 0.0
        %5923 = vmatpush1.msra.mxu0 0.0
        %5924 = vmatprep.subr.mxu0 0.0
        %5925 = vmatpush1.msra.mxu0 0.0
        %5926 = vmatprep.subr.mxu0 0.0
        %5927 = vmatpush1.msra.mxu0 0.0
        %5928 = vmatprep.subr.mxu0 0.0
        %5929 = vmatpush1.msra.mxu0 0.0
        %5930 = vmatprep.subr.mxu0 0.0
        %5931 = vmatpush1.msra.mxu0 0.0
        %5932 = vmatprep.subr.mxu0 0.0
        %5933 = vmatpush1.msra.mxu0 0.0
        %5934 = vmatprep.subr.mxu0 0.0
        %5935 = vmatpush1.msra.mxu0 0.0
        %5936 = vmatprep.subr.mxu0 0.0
        %5937 = vmatpush1.msra.mxu0 0.0
        %5938 = vmatprep.subr.mxu0 0.0
        %5939 = vmatpush1.msra.mxu0 0.0
        %5940 = vmatprep.subr.mxu0 0.0
        %5941 = vmatpush1.msra.mxu0 0.0
        %5942 = vmatprep.subr.mxu0 0.0
        %5943 = vmatpush1.msra.mxu0 0.0
        %5944 = vmatprep.subr.mxu0 0.0
        %5945 = vmatpush1.msra.mxu0 0.0
        %5946 = vmatprep.mubr.f32.mxu0 0.0
        %5947 = vmatmul.mubr.f32.gmra.mrb[0].mxu0 %v5859
        %v5948 = vpop.f32.mrb[0].mxu0
        %v5949 = vadd.f32 0.0, %v5948
        %v5950 = vpop.f32.mrb[0].mxu0
        %5951 = vmatprep.mubr.f32.mxu0 0.0
        %5952 = vmatmul.mubr.f32.gmra.mrb[0].mxu0 %v5862
        %v5953 = vpop.f32.mrb[0].mxu0
        %v5954 = vadd.f32 0.0, %v5953
        %v5955 = vpop.f32.mrb[0].mxu0
        %5956 = vmatprep.mubr.f32.mxu0 0.0
        %5957 = vmatmul.mubr.f32.gmra.mrb[0].mxu0 %v5865
        %v5958 = vpop.f32.mrb[0].mxu0
        %v5959 = vadd.f32 0.0, %v5958
        %v5960 = vpop.f32.mrb[0].mxu0
        %5961 = vmatprep.mubr.f32.mxu0 0.0
        %5962 = vmatmul.mubr.f32.gmra.mrb[0].mxu0 %v5868
        %v5963 = vpop.f32.mrb[0].mxu0
        %v5964 = vadd.f32 0.0, %v5963
        %v5965 = vpop.f32.mrb[0].mxu0
        %5966 = vmatprep.mubr.f32.mxu0 0.0
        %5967 = vmatmul.mubr.f32.gmra.mrb[0].mxu0 %v5871
        %v5968 = vpop.f32.mrb[0].mxu0
        %v5969 = vadd.f32 0.0, %v5968
        %v5970 = vpop.f32.mrb[0].mxu0
        %5971 = vmatprep.mubr.f32.mxu0 0.0
        %5972 = vmatmul.mubr.f32.gmra.mrb[0].mxu0 %v5874
        %v5973 = vpop.f32.mrb[0].mxu0
        %v5974 = vadd.f32 0.0, %v5973
        %v5975 = vpop.f32.mrb[0].mxu0
        %5976 = vmatprep.mubr.f32.mxu0 0.0
        %5977 = vmatmul.mubr.f32.gmra.mrb[0].mxu0 %v5877
        %v5978 = vpop.f32.mrb[0].mxu0
        %v5979 = vadd.f32 0.0, %v5978
        %v5980 = vpop.f32.mrb[0].mxu0
        %5981 = vmatprep.mubr.f32.mxu0 0.0
        %5982 = vmatmul.mubr.f32.gmra.mrb[0].mxu0 %v5880
        %v5983 = vpop.f32.mrb[0].mxu0
        %v5984 = vadd.f32 0.0, %v5983
        %v5985 = vpop.f32.mrb[0].mxu0
        %5986 = vdwg.mxu0
        %v5987 = vadd.f32 %v5704, %v5949
        %v5988 = vadd.f32 %v5709, %v5954
        %v5989 = vadd.f32 %v5714, %v5959
        %v5990 = vadd.f32 %v5719, %v5964
        %v5991 = vadd.f32 %v5724, %v5969
        %v5992 = vadd.f32 %v5729, %v5974
        %v5993 = vadd.f32 %v5734, %v5979
        %v5994 = vadd.f32 %v5739, %v5984
        %v5995 = vld [vmem:[%s5] sm:$0xff]
        %v5996 = vld [vmem:[%s5 + $0x8] sm:$0xff]
        %v5997 = vld [vmem:[%s5 + $0x10] sm:$0xff]
        %v5998 = vld [vmem:[%s5 + $0x18] sm:$0xff]
        %v5999 = vld [vmem:[%s5 + $0x20] sm:$0xff]
        %v6000 = vld [vmem:[%s5 + $0x28] sm:$0xff]
        %v6001 = vld [vmem:[%s5 + $0x30] sm:$0xff]
        %v6002 = vld [vmem:[%s5 + $0x38] sm:$0xff]
        %6004 = vset.pattern.permute.xlu0 0
        %6005 = vperm.xlu0 %6004, %v5995
        %v6006 = vpop.permute.xlu0 %6005
        %6009 = vset.pattern.permute.xlu0 0
        %6010 = vperm.xlu0 %6009, %v5996
        %v6011 = vpop.permute.xlu0 %6010
        %6014 = vset.pattern.permute.xlu0 0
        %6015 = vperm.xlu0 %6014, %v5997
        %v6016 = vpop.permute.xlu0 %6015
        %6019 = vset.pattern.permute.xlu0 0
        %6020 = vperm.xlu0 %6019, %v5998
        %v6021 = vpop.permute.xlu0 %6020
        %6024 = vset.pattern.permute.xlu0 0
        %6025 = vperm.xlu0 %6024, %v5999
        %v6026 = vpop.permute.xlu0 %6025
        %6029 = vset.pattern.permute.xlu0 0
        %6030 = vperm.xlu0 %6029, %v6000
        %v6031 = vpop.permute.xlu0 %6030
        %6034 = vset.pattern.permute.xlu0 0
        %6035 = vperm.xlu0 %6034, %v6001
        %v6036 = vpop.permute.xlu0 %6035
        %6039 = vset.pattern.permute.xlu0 0
        %6040 = vperm.xlu0 %6039, %v6002
        %v6041 = vpop.permute.xlu0 %6040
        %v6043 = vadd.f32 %v5987, %v6006
        %v6044 = vadd.f32 %v5988, %v6011
        %v6045 = vadd.f32 %v5989, %v6016
        %v6046 = vadd.f32 %v5990, %v6021
        %v6047 = vadd.f32 %v5991, %v6026
        %v6048 = vadd.f32 %v5992, %v6031
        %v6049 = vadd.f32 %v5993, %v6036
        %v6050 = vadd.f32 %v5994, %v6041
        %v6051 = vadd.f32 %v6043, %v896
        %v6052 = vadd.f32 %v6044, %v897
        %v6053 = vadd.f32 %v6045, %v898
        %v6054 = vadd.f32 %v6046, %v899
        %v6055 = vadd.f32 %v6047, %v900
        %v6056 = vadd.f32 %v6048, %v901
        %v6057 = vadd.f32 %v6049, %v902
        %v6058 = vadd.f32 %v6050, %v903
        %6059 = vst.msk [vmem:[%s895] sm:$0xff] %vm906, %v6051
        %6060 = vst.msk [vmem:[%s895 + $0x8] sm:$0xff] %vm906, %v6052
        %6061 = vst.msk [vmem:[%s895 + $0x10] sm:$0xff] %vm906, %v6053
        %6062 = vst.msk [vmem:[%s895 + $0x18] sm:$0xff] %vm906, %v6054
        %6063 = vst.msk [vmem:[%s895 + $0x20] sm:$0xff] %vm906, %v6055
        %6064 = vst.msk [vmem:[%s895 + $0x28] sm:$0xff] %vm906, %v6056
        %6065 = vst.msk [vmem:[%s895 + $0x30] sm:$0xff] %vm906, %v6057
        %6066 = vst.msk [vmem:[%s895 + $0x38] sm:$0xff] %vm906, %v6058
        %p6067 = scmp.lt.s32.totalorder %s41, 1
        %s6068 = scalar_select %p6067, %s41, 1
        %s6069 = smul.addr %s6068, 8
        %s6070 = smul.addr %s6069, 8
        %s6071 = scalar_lea.vmem %s25, %s6070
        // Predicated region
        $region157: #{tpu_custom_call.1} parent=119 // pred_check
          %p6072 = pneg %p589
        $region158: #{tpu_custom_call.1} parent=119 // pred_check_branch
          %6074 = sbr.rel (%p6072) target = $region160
        $region159: #{tpu_custom_call.1} parent=119 // pred_region
          _
        $region160: #{tpu_custom_call.1} parent=119 // pred_fallthru
          _
      $region120: #{tpu_custom_call.1} parent=5 // pred_fallthru
        _
      %p6075 = scmp.le.s32.totalorder 2, %s36
      // Predicated region
      $region161: #{tpu_custom_call.1} parent=5 // pred_check
        %p6076 = pneg %p6075
      $region162: #{tpu_custom_call.1} parent=5 // pred_check_branch
        %6078 = sbr.rel (%p6076) target = $region164
      $region163: #{tpu_custom_call.1} parent=5 // pred_region
        %s6079 = ssub.s32 %s36, 2
        // Predicated region
        $region165: #{tpu_custom_call.1} parent=163 // pred_check
          %p6080 = pneg %p595
        $region166: #{tpu_custom_call.1} parent=163 // pred_check_branch
          %6082 = sbr.rel (%p6080) target = $region168
        $region167: #{tpu_custom_call.1} parent=163 // pred_region
          %p6083 = scmp.lt.s32.totalorder %s42, 1
          %s6084 = scalar_select %p6083, %s42, 1
          %s6085 = smul.addr %s6084, 8
          %s6086 = smul.addr %s6085, 8
          %s6087 = scalar_lea.vmem %s25, %s6086
        $region168: #{tpu_custom_call.1} parent=163 // pred_fallthru
          _
      $region164: #{tpu_custom_call.1} parent=5 // pred_fallthru
        _
    $region6: #{tpu_custom_call.1} parent=1 // loop_footer
      %s40 = sadd.s32 1, %s36
    $region7: #{tpu_custom_call.1} parent=1 // loop_footer_branch
      %35 = sbr.rel target = $region3
    $region8: #{tpu_custom_call.1} parent=1 // loop_exit
      _
    %6088 = vsyncpa [#allocation4], 1
    %s6089 = scalar_lea.sflag [#allocation4], 1
    %6090 = vsyncpa %s6089, 1
    %6091 = vsyncpa [#allocation6], 1
    %6092 = vsyncpa [#allocation9], 1
    %6093 = vsyncpa [#allocation12], 1
    %6094 = vsyncpa [#allocation15], 1

</llo_original>
